<compile_context>
chip_gen: v7x
topology: tpu7x:2x2x1
jax: 0.10.0
libtpu: 0.0.40
codegen_flags: <defaults>
</compile_context>

<pallas_src>
import functools

import jax
import jax.numpy as jnp
from jax.experimental import pallas as pl
from jax.experimental.pallas import tpu as pltpu

EPS = 1e-5
LANE = 128


def _round_up(c, m=LANE):
    return ((c + m - 1) // m) * m


# --------------------------------------------------------------------------
# Pallas kernels
# --------------------------------------------------------------------------
def _fused_conv_kernel(scale_ref, shift_ref, x_ref, w_ref,
                       y_ref, stats_ref, xp_ref, patch_ref, *,
                       apply_prologue):
    """Fused [BN+ReLU prologue] -> 3x3 'same' conv -> partial BN stats.

    scale_ref/shift_ref: (1, Cin)        previous layer's BN scale/shift
    x_ref:               (1, H, W, Cin)  channel-padded activation tile
    w_ref:               (9*Cin, Cout)   im2col-packed weights
    y_ref:               (1, H, W, Cout) pre-BN conv output
    stats_ref:           (1, 2, Cout)    [sum; sum of squares] over this tile
    xp_ref (scratch):    (H+2, W+2, Cin) spatially padded tile
    patch_ref (scratch): (H*W, 9*Cin)    im2col patch matrix
    """
    H = x_ref.shape[1]
    W = x_ref.shape[2]
    Cin = x_ref.shape[3]
    Cout = y_ref.shape[3]

    x = x_ref[0]                                           # (H, W, Cin)
    if apply_prologue:
        # previous layer's BatchNorm + ReLU, fused in-register
        x = jnp.maximum(x * scale_ref[0] + shift_ref[0], 0.0)

    # ---- build the 1-pixel halo in VMEM (replaces HBM-level jnp.pad) -------
    # Borders are re-zeroed every grid step (cheap) so the scratch is always
    # consistent even when the grid is split across TensorCores.
    xp_ref[0:1, :, :] = jnp.zeros((1, W + 2, Cin), jnp.float32)
    xp_ref[H + 1:H + 2, :, :] = jnp.zeros((1, W + 2, Cin), jnp.float32)
    xp_ref[:, 0:1, :] = jnp.zeros((H + 2, 1, Cin), jnp.float32)
    xp_ref[:, W + 1:W + 2, :] = jnp.zeros((H + 2, 1, Cin), jnp.float32)
    xp_ref[1:H + 1, 1:W + 1, :] = x

    # ---- im2col: one big lane-aligned patch matrix -------------------------
    for dy in range(3):
        for dx in range(3):
            t = dy * 3 + dx
            patch_ref[:, t * Cin:(t + 1) * Cin] = (
                xp_ref[dy:dy + H, dx:dx + W, :].reshape(H * W, Cin))

    # ---- single MXU matmul: (H*W, 9*Cin) @ (9*Cin, Cout) -------------------
    acc = jnp.dot(patch_ref[...], w_ref[...],
                  preferred_element_type=jnp.float32)      # (H*W, Cout)

    # NOTE: conv bias intentionally omitted — exactly cancelled by the
    # training-mode BatchNorm mean subtraction that follows.
    y_ref[0] = acc.reshape(H, W, Cout).astype(y_ref.dtype)

    # ---- per-tile partial BN statistics ------------------------------------
    stats_ref[0, 0:1, :] = jnp.sum(acc, axis=0, keepdims=True)
    stats_ref[0, 1:2, :] = jnp.sum(acc * acc, axis=0, keepdims=True)


def _bn_relu_kernel(scale_ref, shift_ref, x_ref, o_ref):
    """Final-stage epilogue: affine BN + ReLU (elementwise, lane-dense)."""
    y = x_ref[...] * scale_ref[0] + shift_ref[0]
    o_ref[...] = jnp.maximum(y, 0.0).astype(o_ref.dtype)


# --------------------------------------------------------------------------
# Wrappers
# --------------------------------------------------------------------------
def fused_conv_bn_stats(x, w, scale, shift, *, apply_prologue):
    """x: (N,H,W,Cin_pad) NHWC; w: (9*Cin_pad, Cout_pad); scale/shift: (1,Cin_pad).

    Returns (y, stats): pre-BN conv output (N,H,W,Cout_pad) and per-batch
    partial statistics (N, 2, Cout_pad).
    """
    N, H, W, Cpi = x.shape
    Cpo = w.shape[-1]
    kernel = functools.partial(_fused_conv_kernel, apply_prologue=apply_prologue)
    return pl.pallas_call(
        kernel,
        out_shape=(
            jax.ShapeDtypeStruct((N, H, W, Cpo), jnp.float32),
            jax.ShapeDtypeStruct((N, 2, Cpo), jnp.float32),
        ),
        grid=(N,),
        in_specs=[
            pl.BlockSpec((1, Cpi), lambda n: (0, 0)),                 # scale
            pl.BlockSpec((1, Cpi), lambda n: (0, 0)),                 # shift
            pl.BlockSpec((1, H, W, Cpi), lambda n: (n, 0, 0, 0)),     # x
            pl.BlockSpec((9 * Cpi, Cpo), lambda n: (0, 0)),           # weights
        ],
        out_specs=(
            pl.BlockSpec((1, H, W, Cpo), lambda n: (n, 0, 0, 0)),     # y
            pl.BlockSpec((1, 2, Cpo), lambda n: (n, 0, 0)),           # stats
        ),
        scratch_shapes=[
            pltpu.VMEM((H + 2, W + 2, Cpi), jnp.float32),             # halo tile
            pltpu.VMEM((H * W, 9 * Cpi), jnp.float32),                # im2col
        ],
        compiler_params=pltpu.CompilerParams(
            dimension_semantics=("parallel",)),
    )(scale, shift, x, w)


def bn_relu_epilogue(x, scale, shift):
    """Apply BN scale/shift + ReLU (lane-dense, grid over N)."""
    N, H, W, C = x.shape
    return pl.pallas_call(
        _bn_relu_kernel,
        out_shape=jax.ShapeDtypeStruct((N, H, W, C), x.dtype),
        grid=(N,),
        in_specs=[
            pl.BlockSpec((1, C), lambda n: (0, 0)),
            pl.BlockSpec((1, C), lambda n: (0, 0)),
            pl.BlockSpec((1, H, W, C), lambda n: (n, 0, 0, 0)),
        ],
        out_specs=pl.BlockSpec((1, H, W, C), lambda n: (n, 0, 0, 0)),
        compiler_params=pltpu.CompilerParams(
            dimension_semantics=("parallel",)),
    )(scale, shift, x)


def _bn_scale_shift(stats, gamma_p, beta_p, count):
    """Reduce per-batch partial stats into BN scale/shift (tiny, plain JAX)."""
    s = jnp.sum(stats[:, 0, :], axis=0)
    ss = jnp.sum(stats[:, 1, :], axis=0)
    mean = s / count
    var = jnp.maximum(ss / count - mean * mean, 0.0)   # biased variance
    scale = gamma_p / jnp.sqrt(var + EPS)
    shift = beta_p - mean * scale
    return scale.reshape(1, -1), shift.reshape(1, -1)


def _pack_weight(w, cpi, cpo):
    """(3,3,Cin,Cout) -> zero-padded, im2col-packed (9*Cin_pad, Cout_pad)."""
    kh, kw, cin, cout = w.shape
    wp = jnp.pad(w, ((0, 0), (0, 0), (0, cpi - cin), (0, cpo - cout)))
    return wp.reshape(kh * kw * cpi, cpo)


def _pad_vec(v, cp):
    return jnp.pad(v, (0, cp - v.shape[0]))


@jax.jit
def double_conv_forward(x_nchw, params):
    """Forward pass of double_conv. Input/output are NCHW like the PyTorch module."""
    N, Cin, H, W = x_nchw.shape
    Cout = params["gamma1"].shape[0]
    Cpi = _round_up(Cin)
    Cpo = _round_up(Cout)

    # NCHW -> NHWC; pad channels to the 128-lane width ONCE at the boundary
    # (tiny one-time copy; all per-stage HBM spatial padding is gone).
    x = jnp.transpose(x_nchw, (0, 2, 3, 1))
    x = jnp.pad(x, ((0, 0), (0, 0), (0, 0), (0, Cpi - Cin)))

    w1 = _pack_weight(params["w1"], Cpi, Cpo)
    w2 = _pack_weight(params["w2"], Cpo, Cpo)
    g1 = _pad_vec(params["gamma1"], Cpo)
    b1 = _pad_vec(params["beta1"], Cpo)
    g2 = _pad_vec(params["gamma2"], Cpo)
    b2 = _pad_vec(params["beta2"], Cpo)

    ident = jnp.zeros((1, Cpi), jnp.float32)   # prologue disabled for stage 1

    # stage 1: conv1 + in-kernel partial BN stats (bias cancelled by BN)
    y1, st1 = fused_conv_bn_stats(x, w1, ident, ident, apply_prologue=False)
    sc1, sh1 = _bn_scale_shift(st1, g1, b1, N * H * W)

    # stage 2: BN1+ReLU fused as input prologue, conv2 + partial BN stats
    y2, st2 = fused_conv_bn_stats(y1, w2, sc1, sh1, apply_prologue=True)
    sc2, sh2 = _bn_scale_shift(st2, g2, b2, N * H * W)

    # final epilogue: BN2 + ReLU
    out = bn_relu_epilogue(y2, sc2, sh2)

    # drop channel padding, NHWC -> NCHW
    return jnp.transpose(out[..., :Cout], (0, 3, 1, 2))


# --------------------------------------------------------------------------
# Pure-JAX reference (for a sanity check)
# --------------------------------------------------------------------------
def _ref_forward(x_nchw, params):
    def conv(x, w, b):  # x NCHW, w (3,3,Cin,Cout)
        w_oihw = jnp.transpose(w, (3, 2, 0, 1))
        y = jax.lax.conv_general_dilated(
            x, w_oihw, window_strides=(1, 1), padding=((1, 1), (1, 1)),
            dimension_numbers=("NCHW", "OIHW", "NCHW"))
        return y + b[None, :, None, None]

    def bn_relu_ref(x, gamma, beta):
        mean = jnp.mean(x, axis=(0, 2, 3), keepdims=True)
        var = jnp.var(x, axis=(0, 2, 3), keepdims=True)
        y = (x - mean) / jnp.sqrt(var + EPS)
        y = y * gamma[None, :, None, None] + beta[None, :, None, None]
        return jnp.maximum(y, 0.0)

    y = conv(x_nchw, params["w1"], params["b1"])
    y = bn_relu_ref(y, params["gamma1"], params["beta1"])
    y = conv(y, params["w2"], params["b2"])
    y = bn_relu_ref(y, params["gamma2"], params["beta2"])
    return y


# --------------------------------------------------------------------------
# Main
# --------------------------------------------------------------------------
if __name__ == "__main__":
    key = jax.random.PRNGKey(0)
    k_x, k_w1, k_b1, k_w2, k_b2, k_g1, k_be1, k_g2, k_be2 = jax.random.split(key, 9)

    N, Cin, H, W = 2, 4, 16, 16
    Cout = 8

    x = jax.random.normal(k_x, (N, Cin, H, W), dtype=jnp.float32)

    params = {
        # conv weights stored as (kh, kw, Cin, Cout) for the NHWC kernels
        "w1": 0.1 * jax.random.normal(k_w1, (3, 3, Cin, Cout), jnp.float32),
        "b1": 0.1 * jax.random.normal(k_b1, (Cout,), jnp.float32),
        "gamma1": 1.0 + 0.1 * jax.random.normal(k_g1, (Cout,), jnp.float32),
        "beta1": 0.1 * jax.random.normal(k_be1, (Cout,), jnp.float32),
        "w2": 0.1 * jax.random.normal(k_w2, (3, 3, Cout, Cout), jnp.float32),
        "b2": 0.1 * jax.random.normal(k_b2, (Cout,), jnp.float32),
        "gamma2": 1.0 + 0.1 * jax.random.normal(k_g2, (Cout,), jnp.float32),
        "beta2": 0.1 * jax.random.normal(k_be2, (Cout,), jnp.float32),
    }

    out = double_conv_forward(x, params)
    out = jax.block_until_ready(out)

    ref = _ref_forward(x, params)
    assert out.shape == (N, Cout, H, W), out.shape
    assert jnp.allclose(out, ref, rtol=2e-4, atol=2e-4), float(
        jnp.max(jnp.abs(out - ref)))

    print("KERNEL_OK")
</pallas_src>

<mosaic_0001>
module attributes {stable_mosaic.version = 11 : i64} {
  func.func @_fused_conv_kernel(%arg0: i32, %arg1: memref<1x128xf32, #tpu.memory_space<vmem>>, %arg2: memref<1x128xf32, #tpu.memory_space<vmem>>, %arg3: memref<1x16x16x128xf32, #tpu.memory_space<vmem>>, %arg4: memref<1152x128xf32, #tpu.memory_space<vmem>>, %arg5: memref<1x16x16x128xf32, #tpu.memory_space<vmem>>, %arg6: memref<1x2x128xf32, #tpu.memory_space<vmem>>, %arg7: memref<18x18x128xf32, #tpu.memory_space<vmem>>, %arg8: memref<256x1152xf32, #tpu.memory_space<vmem>>) attributes {dimension_semantics = [#tpu.dimension_semantics<parallel>], iteration_bounds = array<i64: 2>, scalar_prefetch = 0 : i64, scratch_operands = 2 : i64, tpu.core_type = #tpu.core_type<tc>, window_params = [{pipeline_mode = #tpu.pipeline_mode<synchronous>, transform_indices = @transform_0, window_bounds = array<i64: 1, 128>}, {pipeline_mode = #tpu.pipeline_mode<synchronous>, transform_indices = @transform_1, window_bounds = array<i64: 1, 128>}, {transform_indices = @transform_2, window_bounds = array<i64: 1, 16, 16, 128>}, {pipeline_mode = #tpu.pipeline_mode<synchronous>, transform_indices = @transform_3, window_bounds = array<i64: 1152, 128>}, {transform_indices = @transform_4, window_bounds = array<i64: 1, 16, 16, 128>}, {transform_indices = @transform_5, window_bounds = array<i64: 1, 2, 128>}]} {
    %c0 = arith.constant 0 : index
    %c0_0 = arith.constant 0 : index
    %c0_1 = arith.constant 0 : index
    %c0_2 = arith.constant 0 : index
    %0 = vector.load %arg3[%c0, %c0_0, %c0_1, %c0_2] : memref<1x16x16x128xf32, #tpu.memory_space<vmem>>, vector<1x16x16x128xf32>
    %1 = vector.shape_cast %0 : vector<1x16x16x128xf32> to vector<16x16x128xf32>
    %cst = arith.constant 0.000000e+00 : f32
    %2 = vector.broadcast %cst : f32 to vector<1x18x128xf32>
    %c0_3 = arith.constant 0 : index
    %c0_4 = arith.constant 0 : index
    %c0_5 = arith.constant 0 : index
    %3 = vector.load %arg7[%c0_3, %c0_4, %c0_5] : memref<18x18x128xf32, #tpu.memory_space<vmem>>, vector<1x18x128xf32>
    tpu.vector_store %arg7[%c0_3, %c0_4, %c0_5], %2 {strides = array<i32>} : memref<18x18x128xf32, #tpu.memory_space<vmem>>, vector<1x18x128xf32>,
    %cst_6 = arith.constant 0.000000e+00 : f32
    %4 = vector.broadcast %cst_6 : f32 to vector<1x18x128xf32>
    %c17 = arith.constant 17 : index
    %c0_7 = arith.constant 0 : index
    %c0_8 = arith.constant 0 : index
    %5 = vector.load %arg7[%c17, %c0_7, %c0_8] : memref<18x18x128xf32, #tpu.memory_space<vmem>>, vector<1x18x128xf32>
    tpu.vector_store %arg7[%c17, %c0_7, %c0_8], %4 {strides = array<i32>} : memref<18x18x128xf32, #tpu.memory_space<vmem>>, vector<1x18x128xf32>,
    %cst_9 = arith.constant 0.000000e+00 : f32
    %6 = vector.broadcast %cst_9 : f32 to vector<18x1x128xf32>
    %c0_10 = arith.constant 0 : index
    %c0_11 = arith.constant 0 : index
    %c0_12 = arith.constant 0 : index
    %7 = vector.load %arg7[%c0_10, %c0_11, %c0_12] : memref<18x18x128xf32, #tpu.memory_space<vmem>>, vector<18x1x128xf32>
    tpu.vector_store %arg7[%c0_10, %c0_11, %c0_12], %6 {strides = array<i32>} : memref<18x18x128xf32, #tpu.memory_space<vmem>>, vector<18x1x128xf32>,
    %cst_13 = arith.constant 0.000000e+00 : f32
    %8 = vector.broadcast %cst_13 : f32 to vector<18x1x128xf32>
    %c0_14 = arith.constant 0 : index
    %c17_15 = arith.constant 17 : index
    %c0_16 = arith.constant 0 : index
    %9 = vector.load %arg7[%c0_14, %c17_15, %c0_16] : memref<18x18x128xf32, #tpu.memory_space<vmem>>, vector<18x1x128xf32>
    tpu.vector_store %arg7[%c0_14, %c17_15, %c0_16], %8 {strides = array<i32>} : memref<18x18x128xf32, #tpu.memory_space<vmem>>, vector<18x1x128xf32>,
    %c1 = arith.constant 1 : index
    %c1_17 = arith.constant 1 : index
    %c0_18 = arith.constant 0 : index
    %10 = vector.load %arg7[%c1, %c1_17, %c0_18] : memref<18x18x128xf32, #tpu.memory_space<vmem>>, vector<16x16x128xf32>
    tpu.vector_store %arg7[%c1, %c1_17, %c0_18], %1 {strides = array<i32>} : memref<18x18x128xf32, #tpu.memory_space<vmem>>, vector<16x16x128xf32>,
    %c0_19 = arith.constant 0 : index
    %c0_20 = arith.constant 0 : index
    %c0_21 = arith.constant 0 : index
    %11 = vector.load %arg7[%c0_19, %c0_20, %c0_21] : memref<18x18x128xf32, #tpu.memory_space<vmem>>, vector<16x16x128xf32>
    %12 = vector.shape_cast %11 : vector<16x16x128xf32> to vector<256x128xf32>
    %c0_22 = arith.constant 0 : index
    %c0_23 = arith.constant 0 : index
    %13 = vector.load %arg8[%c0_22, %c0_23] : memref<256x1152xf32, #tpu.memory_space<vmem>>, vector<256x128xf32>
    tpu.vector_store %arg8[%c0_22, %c0_23], %12 {strides = array<i32>} : memref<256x1152xf32, #tpu.memory_space<vmem>>, vector<256x128xf32>,
    %c0_24 = arith.constant 0 : index
    %c1_25 = arith.constant 1 : index
    %c0_26 = arith.constant 0 : index
    %14 = vector.load %arg7[%c0_24, %c1_25, %c0_26] : memref<18x18x128xf32, #tpu.memory_space<vmem>>, vector<16x16x128xf32>
    %15 = vector.shape_cast %14 : vector<16x16x128xf32> to vector<256x128xf32>
    %c0_27 = arith.constant 0 : index
    %c128 = arith.constant 128 : index
    %16 = vector.load %arg8[%c0_27, %c128] : memref<256x1152xf32, #tpu.memory_space<vmem>>, vector<256x128xf32>
    tpu.vector_store %arg8[%c0_27, %c128], %15 {strides = array<i32>} : memref<256x1152xf32, #tpu.memory_space<vmem>>, vector<256x128xf32>,
    %c0_28 = arith.constant 0 : index
    %c2 = arith.constant 2 : index
    %c0_29 = arith.constant 0 : index
    %17 = vector.load %arg7[%c0_28, %c2, %c0_29] : memref<18x18x128xf32, #tpu.memory_space<vmem>>, vector<16x16x128xf32>
    %18 = vector.shape_cast %17 : vector<16x16x128xf32> to vector<256x128xf32>
    %c0_30 = arith.constant 0 : index
    %c256 = arith.constant 256 : index
    %19 = vector.load %arg8[%c0_30, %c256] : memref<256x1152xf32, #tpu.memory_space<vmem>>, vector<256x128xf32>
    tpu.vector_store %arg8[%c0_30, %c256], %18 {strides = array<i32>} : memref<256x1152xf32, #tpu.memory_space<vmem>>, vector<256x128xf32>,
    %c1_31 = arith.constant 1 : index
    %c0_32 = arith.constant 0 : index
    %c0_33 = arith.constant 0 : index
    %20 = vector.load %arg7[%c1_31, %c0_32, %c0_33] : memref<18x18x128xf32, #tpu.memory_space<vmem>>, vector<16x16x128xf32>
    %21 = vector.shape_cast %20 : vector<16x16x128xf32> to vector<256x128xf32>
    %c0_34 = arith.constant 0 : index
    %c384 = arith.constant 384 : index
    %22 = vector.load %arg8[%c0_34, %c384] : memref<256x1152xf32, #tpu.memory_space<vmem>>, vector<256x128xf32>
    tpu.vector_store %arg8[%c0_34, %c384], %21 {strides = array<i32>} : memref<256x1152xf32, #tpu.memory_space<vmem>>, vector<256x128xf32>,
    %c1_35 = arith.constant 1 : index
    %c1_36 = arith.constant 1 : index
    %c0_37 = arith.constant 0 : index
    %23 = vector.load %arg7[%c1_35, %c1_36, %c0_37] : memref<18x18x128xf32, #tpu.memory_space<vmem>>, vector<16x16x128xf32>
    %24 = vector.shape_cast %23 : vector<16x16x128xf32> to vector<256x128xf32>
    %c0_38 = arith.constant 0 : index
    %c512 = arith.constant 512 : index
    %25 = vector.load %arg8[%c0_38, %c512] : memref<256x1152xf32, #tpu.memory_space<vmem>>, vector<256x128xf32>
    tpu.vector_store %arg8[%c0_38, %c512], %24 {strides = array<i32>} : memref<256x1152xf32, #tpu.memory_space<vmem>>, vector<256x128xf32>,
    %c1_39 = arith.constant 1 : index
    %c2_40 = arith.constant 2 : index
    %c0_41 = arith.constant 0 : index
    %26 = vector.load %arg7[%c1_39, %c2_40, %c0_41] : memref<18x18x128xf32, #tpu.memory_space<vmem>>, vector<16x16x128xf32>
    %27 = vector.shape_cast %26 : vector<16x16x128xf32> to vector<256x128xf32>
    %c0_42 = arith.constant 0 : index
    %c640 = arith.constant 640 : index
    %28 = vector.load %arg8[%c0_42, %c640] : memref<256x1152xf32, #tpu.memory_space<vmem>>, vector<256x128xf32>
    tpu.vector_store %arg8[%c0_42, %c640], %27 {strides = array<i32>} : memref<256x1152xf32, #tpu.memory_space<vmem>>, vector<256x128xf32>,
    %c2_43 = arith.constant 2 : index
    %c0_44 = arith.constant 0 : index
    %c0_45 = arith.constant 0 : index
    %29 = vector.load %arg7[%c2_43, %c0_44, %c0_45] : memref<18x18x128xf32, #tpu.memory_space<vmem>>, vector<16x16x128xf32>
    %30 = vector.shape_cast %29 : vector<16x16x128xf32> to vector<256x128xf32>
    %c0_46 = arith.constant 0 : index
    %c768 = arith.constant 768 : index
    %31 = vector.load %arg8[%c0_46, %c768] : memref<256x1152xf32, #tpu.memory_space<vmem>>, vector<256x128xf32>
    tpu.vector_store %arg8[%c0_46, %c768], %30 {strides = array<i32>} : memref<256x1152xf32, #tpu.memory_space<vmem>>, vector<256x128xf32>,
    %c2_47 = arith.constant 2 : index
    %c1_48 = arith.constant 1 : index
    %c0_49 = arith.constant 0 : index
    %32 = vector.load %arg7[%c2_47, %c1_48, %c0_49] : memref<18x18x128xf32, #tpu.memory_space<vmem>>, vector<16x16x128xf32>
    %33 = vector.shape_cast %32 : vector<16x16x128xf32> to vector<256x128xf32>
    %c0_50 = arith.constant 0 : index
    %c896 = arith.constant 896 : index
    %34 = vector.load %arg8[%c0_50, %c896] : memref<256x1152xf32, #tpu.memory_space<vmem>>, vector<256x128xf32>
    tpu.vector_store %arg8[%c0_50, %c896], %33 {strides = array<i32>} : memref<256x1152xf32, #tpu.memory_space<vmem>>, vector<256x128xf32>,
    %c2_51 = arith.constant 2 : index
    %c2_52 = arith.constant 2 : index
    %c0_53 = arith.constant 0 : index
    %35 = vector.load %arg7[%c2_51, %c2_52, %c0_53] : memref<18x18x128xf32, #tpu.memory_space<vmem>>, vector<16x16x128xf32>
    %36 = vector.shape_cast %35 : vector<16x16x128xf32> to vector<256x128xf32>
    %c0_54 = arith.constant 0 : index
    %c1024 = arith.constant 1024 : index
    %37 = vector.load %arg8[%c0_54, %c1024] : memref<256x1152xf32, #tpu.memory_space<vmem>>, vector<256x128xf32>
    tpu.vector_store %arg8[%c0_54, %c1024], %36 {strides = array<i32>} : memref<256x1152xf32, #tpu.memory_space<vmem>>, vector<256x128xf32>,
    %c0_55 = arith.constant 0 : index
    %c0_56 = arith.constant 0 : index
    %38 = vector.load %arg8[%c0_55, %c0_56] : memref<256x1152xf32, #tpu.memory_space<vmem>>, vector<256x1152xf32>
    %c0_57 = arith.constant 0 : index
    %c0_58 = arith.constant 0 : index
    %39 = vector.load %arg4[%c0_57, %c0_58] : memref<1152x128xf32, #tpu.memory_space<vmem>>, vector<1152x128xf32>
    %cst_59 = arith.constant dense<0.000000e+00> : vector<256x128xf32>
    %40 = tpu.matmul %38, %39, %cst_59 {dimension_numbers = #tpu.dot_dimension_numbers<[1], [0], [0], [1], [0, 0, 1, 1], [], []>} : vector<256x1152xf32>, vector<1152x128xf32>, vector<256x128xf32> -> vector<256x128xf32>
    %41 = vector.shape_cast %40 : vector<256x128xf32> to vector<16x16x128xf32>
    %c0_60 = arith.constant 0 : index
    %c0_61 = arith.constant 0 : index
    %c0_62 = arith.constant 0 : index
    %c0_63 = arith.constant 0 : index
    %42 = vector.load %arg5[%c0_60, %c0_61, %c0_62, %c0_63] : memref<1x16x16x128xf32, #tpu.memory_space<vmem>>, vector<1x16x16x128xf32>
    %43 = vector.shape_cast %42 : vector<1x16x16x128xf32> to vector<16x16x128xf32>
    %44 = vector.shape_cast %41 : vector<16x16x128xf32> to vector<1x16x16x128xf32>
    tpu.vector_store %arg5[%c0_60, %c0_61, %c0_62, %c0_63], %44 {strides = array<i32>} : memref<1x16x16x128xf32, #tpu.memory_space<vmem>>, vector<1x16x16x128xf32>,
    %cst_64 = arith.constant dense<0.000000e+00> : vector<128xf32>
    %45 = vector.multi_reduction <add>, %40, %cst_64 [0] : vector<256x128xf32> to vector<128xf32>
    %46 = vector.shape_cast %45 : vector<128xf32> to vector<1x128xf32>
    %c0_65 = arith.constant 0 : index
    %c0_66 = arith.constant 0 : index
    %c0_67 = arith.constant 0 : index
    %47 = vector.load %arg6[%c0_65, %c0_66, %c0_67] : memref<1x2x128xf32, #tpu.memory_space<vmem>>, vector<1x1x128xf32>
    %48 = vector.shape_cast %47 : vector<1x1x128xf32> to vector<1x128xf32>
    %49 = vector.shape_cast %46 : vector<1x128xf32> to vector<1x1x128xf32>
    tpu.vector_store %arg6[%c0_65, %c0_66, %c0_67], %49 {strides = array<i32>} : memref<1x2x128xf32, #tpu.memory_space<vmem>>, vector<1x1x128xf32>,
    %50 = arith.mulf %40, %40 : vector<256x128xf32>
    %cst_68 = arith.constant dense<0.000000e+00> : vector<128xf32>
    %51 = vector.multi_reduction <add>, %50, %cst_68 [0] : vector<256x128xf32> to vector<128xf32>
    %52 = vector.shape_cast %51 : vector<128xf32> to vector<1x128xf32>
    %c0_69 = arith.constant 0 : index
    %c1_70 = arith.constant 1 : index
    %c0_71 = arith.constant 0 : index
    %53 = vector.load %arg6[%c0_69, %c1_70, %c0_71] : memref<1x2x128xf32, #tpu.memory_space<vmem>>, vector<1x1x128xf32>
    %54 = vector.shape_cast %53 : vector<1x1x128xf32> to vector<1x128xf32>
    %55 = vector.shape_cast %52 : vector<1x128xf32> to vector<1x1x128xf32>
    tpu.vector_store %arg6[%c0_69, %c1_70, %c0_71], %55 {strides = array<i32>} : memref<1x2x128xf32, #tpu.memory_space<vmem>>, vector<1x1x128xf32>,
    return
  }
  func.func @transform_0(%arg0: i32) -> (i32, i32) {
    %c0_i32 = arith.constant 0 : i32
    %c0_i32_0 = arith.constant 0 : i32
    %c0_i32_1 = arith.constant 0 : i32
    return %c0_i32, %c0_i32_0 : i32, i32
  }
  func.func @transform_1(%arg0: i32) -> (i32, i32) {
    %c0_i32 = arith.constant 0 : i32
    %c0_i32_0 = arith.constant 0 : i32
    %c0_i32_1 = arith.constant 0 : i32
    return %c0_i32, %c0_i32_0 : i32, i32
  }
  func.func @transform_2(%arg0: i32) -> (i32, i32, i32, i32) {
    %c0_i32 = arith.constant 0 : i32
    %c0_i32_0 = arith.constant 0 : i32
    %c0_i32_1 = arith.constant 0 : i32
    %c0_i32_2 = arith.constant 0 : i32
    return %arg0, %c0_i32, %c0_i32_0, %c0_i32_1 : i32, i32, i32, i32
  }
  func.func @transform_3(%arg0: i32) -> (i32, i32) {
    %c0_i32 = arith.constant 0 : i32
    %c0_i32_0 = arith.constant 0 : i32
    %c0_i32_1 = arith.constant 0 : i32
    return %c0_i32, %c0_i32_0 : i32, i32
  }
  func.func @transform_4(%arg0: i32) -> (i32, i32, i32, i32) {
    %c0_i32 = arith.constant 0 : i32
    %c0_i32_0 = arith.constant 0 : i32
    %c0_i32_1 = arith.constant 0 : i32
    %c0_i32_2 = arith.constant 0 : i32
    return %arg0, %c0_i32, %c0_i32_0, %c0_i32_1 : i32, i32, i32, i32
  }
  func.func @transform_5(%arg0: i32) -> (i32, i32, i32) {
    %c0_i32 = arith.constant 0 : i32
    %c0_i32_0 = arith.constant 0 : i32
    %c0_i32_1 = arith.constant 0 : i32
    return %arg0, %c0_i32, %c0_i32_0 : i32, i32, i32
  }
}

module attributes {stable_mosaic.version = 11 : i64} {
  func.func @_bn_relu_kernel(%arg0: i32, %arg1: memref<1x128xf32, #tpu.memory_space<vmem>>, %arg2: memref<1x128xf32, #tpu.memory_space<vmem>>, %arg3: memref<1x16x16x128xf32, #tpu.memory_space<vmem>>, %arg4: memref<1x16x16x128xf32, #tpu.memory_space<vmem>>) attributes {dimension_semantics = [#tpu.dimension_semantics<parallel>], iteration_bounds = array<i64: 2>, scalar_prefetch = 0 : i64, scratch_operands = 0 : i64, tpu.core_type = #tpu.core_type<tc>, window_params = [{pipeline_mode = #tpu.pipeline_mode<synchronous>, transform_indices = @transform_0, window_bounds = array<i64: 1, 128>}, {pipeline_mode = #tpu.pipeline_mode<synchronous>, transform_indices = @transform_1, window_bounds = array<i64: 1, 128>}, {transform_indices = @transform_2, window_bounds = array<i64: 1, 16, 16, 128>}, {transform_indices = @transform_3, window_bounds = array<i64: 1, 16, 16, 128>}]} {
    %c0 = arith.constant 0 : index
    %c0_0 = arith.constant 0 : index
    %c0_1 = arith.constant 0 : index
    %c0_2 = arith.constant 0 : index
    %0 = vector.load %arg3[%c0, %c0_0, %c0_1, %c0_2] : memref<1x16x16x128xf32, #tpu.memory_space<vmem>>, vector<1x16x16x128xf32>
    %c0_3 = arith.constant 0 : index
    %c0_4 = arith.constant 0 : index
    %1 = vector.load %arg1[%c0_3, %c0_4] : memref<1x128xf32, #tpu.memory_space<vmem>>, vector<1x128xf32>
    %2 = vector.shape_cast %1 : vector<1x128xf32> to vector<128xf32>
    %3 = vector.shape_cast %2 : vector<128xf32> to vector<1x1x1x128xf32>
    %4 = vector.broadcast %3 : vector<1x1x1x128xf32> to vector<1x16x16x128xf32>
    %5 = arith.mulf %0, %4 : vector<1x16x16x128xf32>
    %c0_5 = arith.constant 0 : index
    %c0_6 = arith.constant 0 : index
    %6 = vector.load %arg2[%c0_5, %c0_6] : memref<1x128xf32, #tpu.memory_space<vmem>>, vector<1x128xf32>
    %7 = vector.shape_cast %6 : vector<1x128xf32> to vector<128xf32>
    %8 = vector.shape_cast %7 : vector<128xf32> to vector<1x1x1x128xf32>
    %9 = vector.broadcast %8 : vector<1x1x1x128xf32> to vector<1x16x16x128xf32>
    %10 = arith.addf %5, %9 : vector<1x16x16x128xf32>
    %cst = arith.constant 0.000000e+00 : f32
    %11 = vector.broadcast %cst : f32 to vector<1x16x16x128xf32>
    %12 = arith.maximumf %10, %11 : vector<1x16x16x128xf32>
    %c0_7 = arith.constant 0 : index
    %c0_8 = arith.constant 0 : index
    %c0_9 = arith.constant 0 : index
    %c0_10 = arith.constant 0 : index
    %13 = vector.load %arg4[%c0_7, %c0_8, %c0_9, %c0_10] : memref<1x16x16x128xf32, #tpu.memory_space<vmem>>, vector<1x16x16x128xf32>
    tpu.vector_store %arg4[%c0_7, %c0_8, %c0_9, %c0_10], %12 {strides = array<i32>} : memref<1x16x16x128xf32, #tpu.memory_space<vmem>>, vector<1x16x16x128xf32>,
    return
  }
  func.func @transform_0(%arg0: i32) -> (i32, i32) {
    %c0_i32 = arith.constant 0 : i32
    %c0_i32_0 = arith.constant 0 : i32
    %c0_i32_1 = arith.constant 0 : i32
    return %c0_i32, %c0_i32_0 : i32, i32
  }
  func.func @transform_1(%arg0: i32) -> (i32, i32) {
    %c0_i32 = arith.constant 0 : i32
    %c0_i32_0 = arith.constant 0 : i32
    %c0_i32_1 = arith.constant 0 : i32
    return %c0_i32, %c0_i32_0 : i32, i32
  }
  func.func @transform_2(%arg0: i32) -> (i32, i32, i32, i32) {
    %c0_i32 = arith.constant 0 : i32
    %c0_i32_0 = arith.constant 0 : i32
    %c0_i32_1 = arith.constant 0 : i32
    %c0_i32_2 = arith.constant 0 : i32
    return %arg0, %c0_i32, %c0_i32_0, %c0_i32_1 : i32, i32, i32, i32
  }
  func.func @transform_3(%arg0: i32) -> (i32, i32, i32, i32) {
    %c0_i32 = arith.constant 0 : i32
    %c0_i32_0 = arith.constant 0 : i32
    %c0_i32_1 = arith.constant 0 : i32
    %c0_i32_2 = arith.constant 0 : i32
    return %arg0, %c0_i32, %c0_i32_0, %c0_i32_1 : i32, i32, i32, i32
  }
}

module attributes {stable_mosaic.version = 11 : i64} {
  func.func @_fused_conv_kernel(%arg0: i32, %arg1: memref<1x128xf32, #tpu.memory_space<vmem>>, %arg2: memref<1x128xf32, #tpu.memory_space<vmem>>, %arg3: memref<1x16x16x128xf32, #tpu.memory_space<vmem>>, %arg4: memref<1152x128xf32, #tpu.memory_space<vmem>>, %arg5: memref<1x16x16x128xf32, #tpu.memory_space<vmem>>, %arg6: memref<1x2x128xf32, #tpu.memory_space<vmem>>, %arg7: memref<18x18x128xf32, #tpu.memory_space<vmem>>, %arg8: memref<256x1152xf32, #tpu.memory_space<vmem>>) attributes {dimension_semantics = [#tpu.dimension_semantics<parallel>], iteration_bounds = array<i64: 2>, scalar_prefetch = 0 : i64, scratch_operands = 2 : i64, tpu.core_type = #tpu.core_type<tc>, window_params = [{pipeline_mode = #tpu.pipeline_mode<synchronous>, transform_indices = @transform_0, window_bounds = array<i64: 1, 128>}, {pipeline_mode = #tpu.pipeline_mode<synchronous>, transform_indices = @transform_1, window_bounds = array<i64: 1, 128>}, {transform_indices = @transform_2, window_bounds = array<i64: 1, 16, 16, 128>}, {pipeline_mode = #tpu.pipeline_mode<synchronous>, transform_indices = @transform_3, window_bounds = array<i64: 1152, 128>}, {transform_indices = @transform_4, window_bounds = array<i64: 1, 16, 16, 128>}, {transform_indices = @transform_5, window_bounds = array<i64: 1, 2, 128>}]} {
    %c0 = arith.constant 0 : index
    %c0_0 = arith.constant 0 : index
    %c0_1 = arith.constant 0 : index
    %c0_2 = arith.constant 0 : index
    %0 = vector.load %arg3[%c0, %c0_0, %c0_1, %c0_2] : memref<1x16x16x128xf32, #tpu.memory_space<vmem>>, vector<1x16x16x128xf32>
    %1 = vector.shape_cast %0 : vector<1x16x16x128xf32> to vector<16x16x128xf32>
    %c0_3 = arith.constant 0 : index
    %c0_4 = arith.constant 0 : index
    %2 = vector.load %arg1[%c0_3, %c0_4] : memref<1x128xf32, #tpu.memory_space<vmem>>, vector<1x128xf32>
    %3 = vector.shape_cast %2 : vector<1x128xf32> to vector<128xf32>
    %4 = vector.shape_cast %3 : vector<128xf32> to vector<1x1x128xf32>
    %5 = vector.broadcast %4 : vector<1x1x128xf32> to vector<16x16x128xf32>
    %6 = arith.mulf %1, %5 : vector<16x16x128xf32>
    %c0_5 = arith.constant 0 : index
    %c0_6 = arith.constant 0 : index
    %7 = vector.load %arg2[%c0_5, %c0_6] : memref<1x128xf32, #tpu.memory_space<vmem>>, vector<1x128xf32>
    %8 = vector.shape_cast %7 : vector<1x128xf32> to vector<128xf32>
    %9 = vector.shape_cast %8 : vector<128xf32> to vector<1x1x128xf32>
    %10 = vector.broadcast %9 : vector<1x1x128xf32> to vector<16x16x128xf32>
    %11 = arith.addf %6, %10 : vector<16x16x128xf32>
    %cst = arith.constant 0.000000e+00 : f32
    %12 = vector.broadcast %cst : f32 to vector<16x16x128xf32>
    %13 = arith.maximumf %11, %12 : vector<16x16x128xf32>
    %cst_7 = arith.constant 0.000000e+00 : f32
    %14 = vector.broadcast %cst_7 : f32 to vector<1x18x128xf32>
    %c0_8 = arith.constant 0 : index
    %c0_9 = arith.constant 0 : index
    %c0_10 = arith.constant 0 : index
    %15 = vector.load %arg7[%c0_8, %c0_9, %c0_10] : memref<18x18x128xf32, #tpu.memory_space<vmem>>, vector<1x18x128xf32>
    tpu.vector_store %arg7[%c0_8, %c0_9, %c0_10], %14 {strides = array<i32>} : memref<18x18x128xf32, #tpu.memory_space<vmem>>, vector<1x18x128xf32>,
    %cst_11 = arith.constant 0.000000e+00 : f32
    %16 = vector.broadcast %cst_11 : f32 to vector<1x18x128xf32>
    %c17 = arith.constant 17 : index
    %c0_12 = arith.constant 0 : index
    %c0_13 = arith.constant 0 : index
    %17 = vector.load %arg7[%c17, %c0_12, %c0_13] : memref<18x18x128xf32, #tpu.memory_space<vmem>>, vector<1x18x128xf32>
    tpu.vector_store %arg7[%c17, %c0_12, %c0_13], %16 {strides = array<i32>} : memref<18x18x128xf32, #tpu.memory_space<vmem>>, vector<1x18x128xf32>,
    %cst_14 = arith.constant 0.000000e+00 : f32
    %18 = vector.broadcast %cst_14 : f32 to vector<18x1x128xf32>
    %c0_15 = arith.constant 0 : index
    %c0_16 = arith.constant 0 : index
    %c0_17 = arith.constant 0 : index
    %19 = vector.load %arg7[%c0_15, %c0_16, %c0_17] : memref<18x18x128xf32, #tpu.memory_space<vmem>>, vector<18x1x128xf32>
    tpu.vector_store %arg7[%c0_15, %c0_16, %c0_17], %18 {strides = array<i32>} : memref<18x18x128xf32, #tpu.memory_space<vmem>>, vector<18x1x128xf32>,
    %cst_18 = arith.constant 0.000000e+00 : f32
    %20 = vector.broadcast %cst_18 : f32 to vector<18x1x128xf32>
    %c0_19 = arith.constant 0 : index
    %c17_20 = arith.constant 17 : index
    %c0_21 = arith.constant 0 : index
    %21 = vector.load %arg7[%c0_19, %c17_20, %c0_21] : memref<18x18x128xf32, #tpu.memory_space<vmem>>, vector<18x1x128xf32>
    tpu.vector_store %arg7[%c0_19, %c17_20, %c0_21], %20 {strides = array<i32>} : memref<18x18x128xf32, #tpu.memory_space<vmem>>, vector<18x1x128xf32>,
    %c1 = arith.constant 1 : index
    %c1_22 = arith.constant 1 : index
    %c0_23 = arith.constant 0 : index
    %22 = vector.load %arg7[%c1, %c1_22, %c0_23] : memref<18x18x128xf32, #tpu.memory_space<vmem>>, vector<16x16x128xf32>
    tpu.vector_store %arg7[%c1, %c1_22, %c0_23], %13 {strides = array<i32>} : memref<18x18x128xf32, #tpu.memory_space<vmem>>, vector<16x16x128xf32>,
    %c0_24 = arith.constant 0 : index
    %c0_25 = arith.constant 0 : index
    %c0_26 = arith.constant 0 : index
    %23 = vector.load %arg7[%c0_24, %c0_25, %c0_26] : memref<18x18x128xf32, #tpu.memory_space<vmem>>, vector<16x16x128xf32>
    %24 = vector.shape_cast %23 : vector<16x16x128xf32> to vector<256x128xf32>
    %c0_27 = arith.constant 0 : index
    %c0_28 = arith.constant 0 : index
    %25 = vector.load %arg8[%c0_27, %c0_28] : memref<256x1152xf32, #tpu.memory_space<vmem>>, vector<256x128xf32>
    tpu.vector_store %arg8[%c0_27, %c0_28], %24 {strides = array<i32>} : memref<256x1152xf32, #tpu.memory_space<vmem>>, vector<256x128xf32>,
    %c0_29 = arith.constant 0 : index
    %c1_30 = arith.constant 1 : index
    %c0_31 = arith.constant 0 : index
    %26 = vector.load %arg7[%c0_29, %c1_30, %c0_31] : memref<18x18x128xf32, #tpu.memory_space<vmem>>, vector<16x16x128xf32>
    %27 = vector.shape_cast %26 : vector<16x16x128xf32> to vector<256x128xf32>
    %c0_32 = arith.constant 0 : index
    %c128 = arith.constant 128 : index
    %28 = vector.load %arg8[%c0_32, %c128] : memref<256x1152xf32, #tpu.memory_space<vmem>>, vector<256x128xf32>
    tpu.vector_store %arg8[%c0_32, %c128], %27 {strides = array<i32>} : memref<256x1152xf32, #tpu.memory_space<vmem>>, vector<256x128xf32>,
    %c0_33 = arith.constant 0 : index
    %c2 = arith.constant 2 : index
    %c0_34 = arith.constant 0 : index
    %29 = vector.load %arg7[%c0_33, %c2, %c0_34] : memref<18x18x128xf32, #tpu.memory_space<vmem>>, vector<16x16x128xf32>
    %30 = vector.shape_cast %29 : vector<16x16x128xf32> to vector<256x128xf32>
    %c0_35 = arith.constant 0 : index
    %c256 = arith.constant 256 : index
    %31 = vector.load %arg8[%c0_35, %c256] : memref<256x1152xf32, #tpu.memory_space<vmem>>, vector<256x128xf32>
    tpu.vector_store %arg8[%c0_35, %c256], %30 {strides = array<i32>} : memref<256x1152xf32, #tpu.memory_space<vmem>>, vector<256x128xf32>,
    %c1_36 = arith.constant 1 : index
    %c0_37 = arith.constant 0 : index
    %c0_38 = arith.constant 0 : index
    %32 = vector.load %arg7[%c1_36, %c0_37, %c0_38] : memref<18x18x128xf32, #tpu.memory_space<vmem>>, vector<16x16x128xf32>
    %33 = vector.shape_cast %32 : vector<16x16x128xf32> to vector<256x128xf32>
    %c0_39 = arith.constant 0 : index
    %c384 = arith.constant 384 : index
    %34 = vector.load %arg8[%c0_39, %c384] : memref<256x1152xf32, #tpu.memory_space<vmem>>, vector<256x128xf32>
    tpu.vector_store %arg8[%c0_39, %c384], %33 {strides = array<i32>} : memref<256x1152xf32, #tpu.memory_space<vmem>>, vector<256x128xf32>,
    %c1_40 = arith.constant 1 : index
    %c1_41 = arith.constant 1 : index
    %c0_42 = arith.constant 0 : index
    %35 = vector.load %arg7[%c1_40, %c1_41, %c0_42] : memref<18x18x128xf32, #tpu.memory_space<vmem>>, vector<16x16x128xf32>
    %36 = vector.shape_cast %35 : vector<16x16x128xf32> to vector<256x128xf32>
    %c0_43 = arith.constant 0 : index
    %c512 = arith.constant 512 : index
    %37 = vector.load %arg8[%c0_43, %c512] : memref<256x1152xf32, #tpu.memory_space<vmem>>, vector<256x128xf32>
    tpu.vector_store %arg8[%c0_43, %c512], %36 {strides = array<i32>} : memref<256x1152xf32, #tpu.memory_space<vmem>>, vector<256x128xf32>,
    %c1_44 = arith.constant 1 : index
    %c2_45 = arith.constant 2 : index
    %c0_46 = arith.constant 0 : index
    %38 = vector.load %arg7[%c1_44, %c2_45, %c0_46] : memref<18x18x128xf32, #tpu.memory_space<vmem>>, vector<16x16x128xf32>
    %39 = vector.shape_cast %38 : vector<16x16x128xf32> to vector<256x128xf32>
    %c0_47 = arith.constant 0 : index
    %c640 = arith.constant 640 : index
    %40 = vector.load %arg8[%c0_47, %c640] : memref<256x1152xf32, #tpu.memory_space<vmem>>, vector<256x128xf32>
    tpu.vector_store %arg8[%c0_47, %c640], %39 {strides = array<i32>} : memref<256x1152xf32, #tpu.memory_space<vmem>>, vector<256x128xf32>,
    %c2_48 = arith.constant 2 : index
    %c0_49 = arith.constant 0 : index
    %c0_50 = arith.constant 0 : index
    %41 = vector.load %arg7[%c2_48, %c0_49, %c0_50] : memref<18x18x128xf32, #tpu.memory_space<vmem>>, vector<16x16x128xf32>
    %42 = vector.shape_cast %41 : vector<16x16x128xf32> to vector<256x128xf32>
    %c0_51 = arith.constant 0 : index
    %c768 = arith.constant 768 : index
    %43 = vector.load %arg8[%c0_51, %c768] : memref<256x1152xf32, #tpu.memory_space<vmem>>, vector<256x128xf32>
    tpu.vector_store %arg8[%c0_51, %c768], %42 {strides = array<i32>} : memref<256x1152xf32, #tpu.memory_space<vmem>>, vector<256x128xf32>,
    %c2_52 = arith.constant 2 : index
    %c1_53 = arith.constant 1 : index
    %c0_54 = arith.constant 0 : index
    %44 = vector.load %arg7[%c2_52, %c1_53, %c0_54] : memref<18x18x128xf32, #tpu.memory_space<vmem>>, vector<16x16x128xf32>
    %45 = vector.shape_cast %44 : vector<16x16x128xf32> to vector<256x128xf32>
    %c0_55 = arith.constant 0 : index
    %c896 = arith.constant 896 : index
    %46 = vector.load %arg8[%c0_55, %c896] : memref<256x1152xf32, #tpu.memory_space<vmem>>, vector<256x128xf32>
    tpu.vector_store %arg8[%c0_55, %c896], %45 {strides = array<i32>} : memref<256x1152xf32, #tpu.memory_space<vmem>>, vector<256x128xf32>,
    %c2_56 = arith.constant 2 : index
    %c2_57 = arith.constant 2 : index
    %c0_58 = arith.constant 0 : index
    %47 = vector.load %arg7[%c2_56, %c2_57, %c0_58] : memref<18x18x128xf32, #tpu.memory_space<vmem>>, vector<16x16x128xf32>
    %48 = vector.shape_cast %47 : vector<16x16x128xf32> to vector<256x128xf32>
    %c0_59 = arith.constant 0 : index
    %c1024 = arith.constant 1024 : index
    %49 = vector.load %arg8[%c0_59, %c1024] : memref<256x1152xf32, #tpu.memory_space<vmem>>, vector<256x128xf32>
    tpu.vector_store %arg8[%c0_59, %c1024], %48 {strides = array<i32>} : memref<256x1152xf32, #tpu.memory_space<vmem>>, vector<256x128xf32>,
    %c0_60 = arith.constant 0 : index
    %c0_61 = arith.constant 0 : index
    %50 = vector.load %arg8[%c0_60, %c0_61] : memref<256x1152xf32, #tpu.memory_space<vmem>>, vector<256x1152xf32>
    %c0_62 = arith.constant 0 : index
    %c0_63 = arith.constant 0 : index
    %51 = vector.load %arg4[%c0_62, %c0_63] : memref<1152x128xf32, #tpu.memory_space<vmem>>, vector<1152x128xf32>
    %cst_64 = arith.constant dense<0.000000e+00> : vector<256x128xf32>
    %52 = tpu.matmul %50, %51, %cst_64 {dimension_numbers = #tpu.dot_dimension_numbers<[1], [0], [0], [1], [0, 0, 1, 1], [], []>} : vector<256x1152xf32>, vector<1152x128xf32>, vector<256x128xf32> -> vector<256x128xf32>
    %53 = vector.shape_cast %52 : vector<256x128xf32> to vector<16x16x128xf32>
    %c0_65 = arith.constant 0 : index
    %c0_66 = arith.constant 0 : index
    %c0_67 = arith.constant 0 : index
    %c0_68 = arith.constant 0 : index
    %54 = vector.load %arg5[%c0_65, %c0_66, %c0_67, %c0_68] : memref<1x16x16x128xf32, #tpu.memory_space<vmem>>, vector<1x16x16x128xf32>
    %55 = vector.shape_cast %54 : vector<1x16x16x128xf32> to vector<16x16x128xf32>
    %56 = vector.shape_cast %53 : vector<16x16x128xf32> to vector<1x16x16x128xf32>
    tpu.vector_store %arg5[%c0_65, %c0_66, %c0_67, %c0_68], %56 {strides = array<i32>} : memref<1x16x16x128xf32, #tpu.memory_space<vmem>>, vector<1x16x16x128xf32>,
    %cst_69 = arith.constant dense<0.000000e+00> : vector<128xf32>
    %57 = vector.multi_reduction <add>, %52, %cst_69 [0] : vector<256x128xf32> to vector<128xf32>
    %58 = vector.shape_cast %57 : vector<128xf32> to vector<1x128xf32>
    %c0_70 = arith.constant 0 : index
    %c0_71 = arith.constant 0 : index
    %c0_72 = arith.constant 0 : index
    %59 = vector.load %arg6[%c0_70, %c0_71, %c0_72] : memref<1x2x128xf32, #tpu.memory_space<vmem>>, vector<1x1x128xf32>
    %60 = vector.shape_cast %59 : vector<1x1x128xf32> to vector<1x128xf32>
    %61 = vector.shape_cast %58 : vector<1x128xf32> to vector<1x1x128xf32>
    tpu.vector_store %arg6[%c0_70, %c0_71, %c0_72], %61 {strides = array<i32>} : memref<1x2x128xf32, #tpu.memory_space<vmem>>, vector<1x1x128xf32>,
    %62 = arith.mulf %52, %52 : vector<256x128xf32>
    %cst_73 = arith.constant dense<0.000000e+00> : vector<128xf32>
    %63 = vector.multi_reduction <add>, %62, %cst_73 [0] : vector<256x128xf32> to vector<128xf32>
    %64 = vector.shape_cast %63 : vector<128xf32> to vector<1x128xf32>
    %c0_74 = arith.constant 0 : index
    %c1_75 = arith.constant 1 : index
    %c0_76 = arith.constant 0 : index
    %65 = vector.load %arg6[%c0_74, %c1_75, %c0_76] : memref<1x2x128xf32, #tpu.memory_space<vmem>>, vector<1x1x128xf32>
    %66 = vector.shape_cast %65 : vector<1x1x128xf32> to vector<1x128xf32>
    %67 = vector.shape_cast %64 : vector<1x128xf32> to vector<1x1x128xf32>
    tpu.vector_store %arg6[%c0_74, %c1_75, %c0_76], %67 {strides = array<i32>} : memref<1x2x128xf32, #tpu.memory_space<vmem>>, vector<1x1x128xf32>,
    return
  }
  func.func @transform_0(%arg0: i32) -> (i32, i32) {
    %c0_i32 = arith.constant 0 : i32
    %c0_i32_0 = arith.constant 0 : i32
    %c0_i32_1 = arith.constant 0 : i32
    return %c0_i32, %c0_i32_0 : i32, i32
  }
  func.func @transform_1(%arg0: i32) -> (i32, i32) {
    %c0_i32 = arith.constant 0 : i32
    %c0_i32_0 = arith.constant 0 : i32
    %c0_i32_1 = arith.constant 0 : i32
    return %c0_i32, %c0_i32_0 : i32, i32
  }
  func.func @transform_2(%arg0: i32) -> (i32, i32, i32, i32) {
    %c0_i32 = arith.constant 0 : i32
    %c0_i32_0 = arith.constant 0 : i32
    %c0_i32_1 = arith.constant 0 : i32
    %c0_i32_2 = arith.constant 0 : i32
    return %arg0, %c0_i32, %c0_i32_0, %c0_i32_1 : i32, i32, i32, i32
  }
  func.func @transform_3(%arg0: i32) -> (i32, i32) {
    %c0_i32 = arith.constant 0 : i32
    %c0_i32_0 = arith.constant 0 : i32
    %c0_i32_1 = arith.constant 0 : i32
    return %c0_i32, %c0_i32_0 : i32, i32
  }
  func.func @transform_4(%arg0: i32) -> (i32, i32, i32, i32) {
    %c0_i32 = arith.constant 0 : i32
    %c0_i32_0 = arith.constant 0 : i32
    %c0_i32_1 = arith.constant 0 : i32
    %c0_i32_2 = arith.constant 0 : i32
    return %arg0, %c0_i32, %c0_i32_0, %c0_i32_1 : i32, i32, i32, i32
  }
  func.func @transform_5(%arg0: i32) -> (i32, i32, i32) {
    %c0_i32 = arith.constant 0 : i32
    %c0_i32_0 = arith.constant 0 : i32
    %c0_i32_1 = arith.constant 0 : i32
    return %arg0, %c0_i32, %c0_i32_0 : i32, i32, i32
  }
}

</mosaic_0001>

<llo_original>
// kernel: double_conv_forward.5
$region0: #{double_conv_forward.5}
  #allocation0 [shape = 'u32[]', space=smem, size = 0x4, offset = 0x4, fixed_abs, tag = 'smem constant byte address 0x4 - core index']
  #allocation1 [shape = 'u32[144,128]{1,0:T(1,128)}', space=vmem, size = 0x12000, scoped, tag = 'internal scratch']
  %s0 = inlined_call_operand.vmem [shape: f32[1,128], index: 0, kind: input, shape index: {}]
  %s1 = inlined_call_operand.vmem [shape: f32[1,128], index: 1, kind: input, shape index: {}]
  %s2 = inlined_call_operand.vmem [shape: f32[2,16,16,128], index: 2, kind: input, shape index: {}]
  %s3 = inlined_call_operand.vmem [shape: f32[2,16,16,128], index: 3, kind: output, shape index: {}]
  %s4 = sld [smem:[#allocation0]]
  $region45: #{double_conv_forward.5} parent=0
    _
  %s6 = ssub.s32 1, %s4
  %s7 = scalar_select 0, %s6, %s4
  loop: start=0, step=1, limit=4
  $region2: #{double_conv_forward.5} parent=0 // loop_pre_header
    _
  $region3: #{double_conv_forward.5} parent=0 // loop_header
    %s9 = sphi 0, %s13
    %p10 = scmp.ge.s32.totalorder %s9, 4
    %s17 = sphi 0, %s17
    %s19 = sphi 0, %s17
    %s20 = sphi 0, %s19
    %s34 = sphi 0, %s20
    %s38 = sphi 0, %s38
    %s40 = sphi 0, %s38
    %s41 = sphi 0, %s40
    %s55 = sphi 0, %s41
    %s61 = sphi 0, %s63
    %s64 = sphi 0, %s61
    %s65 = sphi 0, %s64
    %s81 = sphi 0, %s65
    %s87 = sphi 0, %s89
    %s90 = sphi 0, %s87
    %s91 = sphi 0, %s90
    %s107 = sphi 0, %s91
  $region4: #{double_conv_forward.5} parent=0 // loop_header_branch
    %12 = sbr.rel (%p10) target = $region8
  $region5: #{double_conv_forward.5} parent=0 // loop_body
    %s14 = ssub.s32 %s9, 1
    %s15 = ssub.s32 %s9, 2
    %s16 = sadd.s32 %s9, 1
    %s18 = sadd.s32 %s17, 1
    %p21 = scmp.eq.s32.totalorder %s9, 1
    %p22 = scmp.ne.s32.totalorder %s17, %s19
    %p23 = scmp.eq.s32.totalorder %s9, 0
    %p24 = por %p22, %p23
    %p25 = scmp.ne.s32.totalorder %s17, %s19
    %p26 = scmp.eq.s32.totalorder %s14, 1
    %p27 = por %p25, %p26
    %p28 = scmp.ne.s32.totalorder %s19, %s20
    %p29 = scmp.eq.s32.totalorder %s14, 0
    %p30 = por %p28, %p29
    %p31 = scmp.ne.s32.totalorder %s19, %s20
    %p32 = scmp.eq.s32.totalorder %s15, 1
    %p33 = por %p31, %p32
    %p35 = scmp.ne.s32.totalorder %s20, %s34
    %p36 = scmp.eq.s32.totalorder %s15, 0
    %p37 = por %p35, %p36
    %s39 = sadd.s32 %s38, 1
    %p42 = scmp.eq.s32.totalorder %s9, 1
    %p43 = scmp.ne.s32.totalorder %s38, %s40
    %p44 = scmp.eq.s32.totalorder %s9, 0
    %p45 = por %p43, %p44
    %p46 = scmp.ne.s32.totalorder %s38, %s40
    %p47 = scmp.eq.s32.totalorder %s14, 1
    %p48 = por %p46, %p47
    %p49 = scmp.ne.s32.totalorder %s40, %s41
    %p50 = scmp.eq.s32.totalorder %s14, 0
    %p51 = por %p49, %p50
    %p52 = scmp.ne.s32.totalorder %s40, %s41
    %p53 = scmp.eq.s32.totalorder %s15, 1
    %p54 = por %p52, %p53
    %p56 = scmp.ne.s32.totalorder %s41, %s55
    %p57 = scmp.eq.s32.totalorder %s15, 0
    %p58 = por %p56, %p57
    %s59 = ssub.s32 %s9, %s16
    %p60 = scmp.eq.s32.totalorder %s59, 0
    %s62 = sadd.s32 %s61, 1
    %s63 = scalar_select %p60, %s61, %s62
    %p66 = pneg %p60
    %p67 = scmp.eq.s32.totalorder %s9, 1
    %p68 = por %p66, %p67
    %p69 = scmp.ne.s32.totalorder %s61, %s64
    %p70 = scmp.eq.s32.totalorder %s9, 0
    %p71 = por %p69, %p70
    %p72 = scmp.ne.s32.totalorder %s61, %s64
    %p73 = scmp.eq.s32.totalorder %s14, 1
    %p74 = por %p72, %p73
    %p75 = scmp.ne.s32.totalorder %s64, %s65
    %p76 = scmp.eq.s32.totalorder %s14, 0
    %p77 = por %p75, %p76
    %p78 = scmp.ne.s32.totalorder %s64, %s65
    %p79 = scmp.eq.s32.totalorder %s15, 1
    %p80 = por %p78, %p79
    %p82 = scmp.ne.s32.totalorder %s65, %s81
    %p83 = scmp.eq.s32.totalorder %s15, 0
    %p84 = por %p82, %p83
    %s85 = ssub.s32 %s9, %s16
    %p86 = scmp.eq.s32.totalorder %s85, 0
    %s88 = sadd.s32 %s87, 1
    %s89 = scalar_select %p86, %s87, %s88
    %p92 = pneg %p86
    %p93 = scmp.eq.s32.totalorder %s9, 1
    %p94 = por %p92, %p93
    %p95 = scmp.ne.s32.totalorder %s87, %s90
    %p96 = scmp.eq.s32.totalorder %s9, 0
    %p97 = por %p95, %p96
    %p98 = scmp.ne.s32.totalorder %s87, %s90
    %p99 = scmp.eq.s32.totalorder %s14, 1
    %p100 = por %p98, %p99
    %p101 = scmp.ne.s32.totalorder %s90, %s91
    %p102 = scmp.eq.s32.totalorder %s14, 0
    %p103 = por %p101, %p102
    %p104 = scmp.ne.s32.totalorder %s90, %s91
    %p105 = scmp.eq.s32.totalorder %s15, 1
    %p106 = por %p104, %p105
    %p108 = scmp.ne.s32.totalorder %s91, %s107
    %p109 = scmp.eq.s32.totalorder %s15, 0
    %p110 = por %p108, %p109
    %p111 = scmp.le.s32.totalorder 1, %s9
    %p112 = scmp.lt.s32.totalorder %s9, 3
    %p113 = pnand %p111, %p112
    %p114 = pneg %p113
    // Predicated region
    $region9: #{double_conv_forward.5} parent=5 // pred_check
      _
    $region10: #{double_conv_forward.5} parent=5 // pred_check_branch
      %116 = sbr.rel (%p113) target = $region12
    $region11: #{double_conv_forward.5} parent=5 // pred_region
      %s117 = ssub.s32 %s9, 1
      // Predicated region
      $region13: #{double_conv_forward.5} parent=11 // pred_check
        %p118 = pneg %p30
      $region14: #{double_conv_forward.5} parent=11 // pred_check_branch
        %120 = sbr.rel (%p118) target = $region16
      $region15: #{double_conv_forward.5} parent=11 // pred_region
        _
      $region16: #{double_conv_forward.5} parent=11 // pred_fallthru
        _
      // Predicated region
      $region17: #{double_conv_forward.5} parent=11 // pred_check
        %p121 = pneg %p51
      $region18: #{double_conv_forward.5} parent=11 // pred_check_branch
        %123 = sbr.rel (%p121) target = $region20
      $region19: #{double_conv_forward.5} parent=11 // pred_region
        _
      $region20: #{double_conv_forward.5} parent=11 // pred_fallthru
        _
    $region12: #{double_conv_forward.5} parent=5 // pred_fallthru
      _
    %p124 = scmp.lt.s32.totalorder %s9, 2
    // Predicated region
    $region21: #{double_conv_forward.5} parent=5 // pred_check
      %p125 = pneg %p124
    $region22: #{double_conv_forward.5} parent=5 // pred_check_branch
      %127 = sbr.rel (%p125) target = $region24
    $region23: #{double_conv_forward.5} parent=5 // pred_region
      // Predicated region
      $region25: #{double_conv_forward.5} parent=23 // pred_check
        %p128 = pneg %p71
      $region26: #{double_conv_forward.5} parent=23 // pred_check_branch
        %130 = sbr.rel (%p128) target = $region28
      $region27: #{double_conv_forward.5} parent=23 // pred_region
        %p131 = scmp.lt.s32.totalorder %s9, 1
        %s132 = scalar_select %p131, %s9, 1
        %s133 = smul.addr %s132, 32
        %s134 = smul.addr %s133, 8
        %s135 = scalar_lea.vmem %s2, %s134
      $region28: #{double_conv_forward.5} parent=23 // pred_fallthru
        _
    $region24: #{double_conv_forward.5} parent=5 // pred_fallthru
      _
    %p136 = scmp.le.s32.totalorder 1, %s9
    %p137 = scmp.lt.s32.totalorder %s9, 3
    %p138 = pnand %p136, %p137
    %p139 = pneg %p138
    // Predicated region
    $region29: #{double_conv_forward.5} parent=5 // pred_check
      _
    $region30: #{double_conv_forward.5} parent=5 // pred_check_branch
      %141 = sbr.rel (%p138) target = $region32
    $region31: #{double_conv_forward.5} parent=5 // pred_region
      %s142 = ssub.s32 %s9, 1
      %p143 = pneg %p30
      %p144 = pneg %p27
      %p145 = pneg %p51
      %p146 = pneg %p48
      %p147 = scmp.lt.s32.totalorder %s14, 1
      %s148 = scalar_select %p147, %s14, 1
      %s149 = smul.addr %s148, 32
      %s150 = smul.addr %s149, 8
      %s151 = scalar_lea.vmem %s2, %s150
      %p152 = pneg %p77
      %p153 = pneg %p74
      %p154 = pneg %p103
      %p155 = pneg %p100
      %p156 = scmp.lt.s32.totalorder %s14, 1
      %s157 = scalar_select %p156, %s14, 1
      %s158 = smul.addr %s157, 32
      %s159 = smul.addr %s158, 8
      %s160 = scalar_lea.vmem %s3, %s159
      %p161 = scmp.lt.s32.totalorder %s14, 1
      %s162 = scalar_select %p161, %s14, 1
      %s163 = smul.addr %s162, 32
      %s164 = smul.addr %s163, 8
      %s165 = scalar_lea.vmem %s2, %s164
      %p166 = scmp.lt.s32.totalorder %s14, 1
      %s167 = scalar_select %p166, %s14, 1
      %s168 = smul.addr %s167, 32
      %s169 = smul.addr %s168, 8
      %s170 = scalar_lea.vmem %s3, %s169
      %v171 = vld [vmem:[%s165] sm:$0xff]
      %v172 = vld [vmem:[%s165 + $0x8] sm:$0xff]
      %v173 = vld [vmem:[%s165 + $0x10] sm:$0xff]
      %v174 = vld [vmem:[%s165 + $0x18] sm:$0xff]
      %v175 = vld [vmem:[%s165 + $0x20] sm:$0xff]
      %v176 = vld [vmem:[%s165 + $0x28] sm:$0xff]
      %v177 = vld [vmem:[%s165 + $0x30] sm:$0xff]
      %v178 = vld [vmem:[%s165 + $0x38] sm:$0xff]
      %v179 = vld [vmem:[%s165 + $0x40] sm:$0xff]
      %v180 = vld [vmem:[%s165 + $0x48] sm:$0xff]
      %v181 = vld [vmem:[%s165 + $0x50] sm:$0xff]
      %v182 = vld [vmem:[%s165 + $0x58] sm:$0xff]
      %v183 = vld [vmem:[%s165 + $0x60] sm:$0xff]
      %v184 = vld [vmem:[%s165 + $0x68] sm:$0xff]
      %v185 = vld [vmem:[%s165 + $0x70] sm:$0xff]
      %v186 = vld [vmem:[%s165 + $0x78] sm:$0xff]
      %v187 = vld [vmem:[%s165 + $0x80] sm:$0xff]
      %v188 = vld [vmem:[%s165 + $0x88] sm:$0xff]
      %v189 = vld [vmem:[%s165 + $0x90] sm:$0xff]
      %v190 = vld [vmem:[%s165 + $0x98] sm:$0xff]
      %v191 = vld [vmem:[%s165 + $0xa0] sm:$0xff]
      %v192 = vld [vmem:[%s165 + $0xa8] sm:$0xff]
      %v193 = vld [vmem:[%s165 + $0xb0] sm:$0xff]
      %v194 = vld [vmem:[%s165 + $0xb8] sm:$0xff]
      %v195 = vld [vmem:[%s165 + $0xc0] sm:$0xff]
      %v196 = vld [vmem:[%s165 + $0xc8] sm:$0xff]
      %v197 = vld [vmem:[%s165 + $0xd0] sm:$0xff]
      %v198 = vld [vmem:[%s165 + $0xd8] sm:$0xff]
      %v199 = vld [vmem:[%s165 + $0xe0] sm:$0xff]
      %v200 = vld [vmem:[%s165 + $0xe8] sm:$0xff]
      %v201 = vld [vmem:[%s165 + $0xf0] sm:$0xff]
      %v202 = vld [vmem:[%s165 + $0xf8] sm:$0xff]
      %v203 = vld [vmem:[%s0] sm:$0x1]
      %v205 = vlaneseq
      %v206 = vshrl.u32 %v205, 7
      %v207 = vsub.s32 0, %v206
      %v208 = vrot.slane %v203, %v207
      %v210 = vmul.f32 %v171, %v208
      %v211 = vmul.f32 %v172, %v208
      %v212 = vmul.f32 %v173, %v208
      %v213 = vmul.f32 %v174, %v208
      %v214 = vmul.f32 %v175, %v208
      %v215 = vmul.f32 %v176, %v208
      %v216 = vmul.f32 %v177, %v208
      %v217 = vmul.f32 %v178, %v208
      %v218 = vmul.f32 %v179, %v208
      %v219 = vmul.f32 %v180, %v208
      %v220 = vmul.f32 %v181, %v208
      %v221 = vmul.f32 %v182, %v208
      %v222 = vmul.f32 %v183, %v208
      %v223 = vmul.f32 %v184, %v208
      %v224 = vmul.f32 %v185, %v208
      %v225 = vmul.f32 %v186, %v208
      %v226 = vmul.f32 %v187, %v208
      %v227 = vmul.f32 %v188, %v208
      %v228 = vmul.f32 %v189, %v208
      %v229 = vmul.f32 %v190, %v208
      %v230 = vmul.f32 %v191, %v208
      %v231 = vmul.f32 %v192, %v208
      %v232 = vmul.f32 %v193, %v208
      %v233 = vmul.f32 %v194, %v208
      %v234 = vmul.f32 %v195, %v208
      %v235 = vmul.f32 %v196, %v208
      %v236 = vmul.f32 %v197, %v208
      %v237 = vmul.f32 %v198, %v208
      %v238 = vmul.f32 %v199, %v208
      %v239 = vmul.f32 %v200, %v208
      %v240 = vmul.f32 %v201, %v208
      %v241 = vmul.f32 %v202, %v208
      %v242 = vld [vmem:[%s1] sm:$0x1]
      %v244 = vlaneseq
      %v245 = vshrl.u32 %v244, 7
      %v246 = vsub.s32 0, %v245
      %v247 = vrot.slane %v242, %v246
      %v249 = vadd.f32 %v210, %v247
      %v250 = vadd.f32 %v211, %v247
      %v251 = vadd.f32 %v212, %v247
      %v252 = vadd.f32 %v213, %v247
      %v253 = vadd.f32 %v214, %v247
      %v254 = vadd.f32 %v215, %v247
      %v255 = vadd.f32 %v216, %v247
      %v256 = vadd.f32 %v217, %v247
      %v257 = vadd.f32 %v218, %v247
      %v258 = vadd.f32 %v219, %v247
      %v259 = vadd.f32 %v220, %v247
      %v260 = vadd.f32 %v221, %v247
      %v261 = vadd.f32 %v222, %v247
      %v262 = vadd.f32 %v223, %v247
      %v263 = vadd.f32 %v224, %v247
      %v264 = vadd.f32 %v225, %v247
      %v265 = vadd.f32 %v226, %v247
      %v266 = vadd.f32 %v227, %v247
      %v267 = vadd.f32 %v228, %v247
      %v268 = vadd.f32 %v229, %v247
      %v269 = vadd.f32 %v230, %v247
      %v270 = vadd.f32 %v231, %v247
      %v271 = vadd.f32 %v232, %v247
      %v272 = vadd.f32 %v233, %v247
      %v273 = vadd.f32 %v234, %v247
      %v274 = vadd.f32 %v235, %v247
      %v275 = vadd.f32 %v236, %v247
      %v276 = vadd.f32 %v237, %v247
      %v277 = vadd.f32 %v238, %v247
      %v278 = vadd.f32 %v239, %v247
      %v279 = vadd.f32 %v240, %v247
      %v280 = vadd.f32 %v241, %v247
      %v281 = vmax.f32 %v249, 0.0
      %v282 = vmax.f32 %v250, 0.0
      %v283 = vmax.f32 %v251, 0.0
      %v284 = vmax.f32 %v252, 0.0
      %v285 = vmax.f32 %v253, 0.0
      %v286 = vmax.f32 %v254, 0.0
      %v287 = vmax.f32 %v255, 0.0
      %v288 = vmax.f32 %v256, 0.0
      %v289 = vmax.f32 %v257, 0.0
      %v290 = vmax.f32 %v258, 0.0
      %v291 = vmax.f32 %v259, 0.0
      %v292 = vmax.f32 %v260, 0.0
      %v293 = vmax.f32 %v261, 0.0
      %v294 = vmax.f32 %v262, 0.0
      %v295 = vmax.f32 %v263, 0.0
      %v296 = vmax.f32 %v264, 0.0
      %v297 = vmax.f32 %v265, 0.0
      %v298 = vmax.f32 %v266, 0.0
      %v299 = vmax.f32 %v267, 0.0
      %v300 = vmax.f32 %v268, 0.0
      %v301 = vmax.f32 %v269, 0.0
      %v302 = vmax.f32 %v270, 0.0
      %v303 = vmax.f32 %v271, 0.0
      %v304 = vmax.f32 %v272, 0.0
      %v305 = vmax.f32 %v273, 0.0
      %v306 = vmax.f32 %v274, 0.0
      %v307 = vmax.f32 %v275, 0.0
      %v308 = vmax.f32 %v276, 0.0
      %v309 = vmax.f32 %v277, 0.0
      %v310 = vmax.f32 %v278, 0.0
      %v311 = vmax.f32 %v279, 0.0
      %v312 = vmax.f32 %v280, 0.0
      %313 = vst [vmem:[%s170] sm:$0xff] %v281
      %314 = vst [vmem:[%s170 + $0x8] sm:$0xff] %v282
      %315 = vst [vmem:[%s170 + $0x10] sm:$0xff] %v283
      %316 = vst [vmem:[%s170 + $0x18] sm:$0xff] %v284
      %317 = vst [vmem:[%s170 + $0x20] sm:$0xff] %v285
      %318 = vst [vmem:[%s170 + $0x28] sm:$0xff] %v286
      %319 = vst [vmem:[%s170 + $0x30] sm:$0xff] %v287
      %320 = vst [vmem:[%s170 + $0x38] sm:$0xff] %v288
      %321 = vst [vmem:[%s170 + $0x40] sm:$0xff] %v289
      %322 = vst [vmem:[%s170 + $0x48] sm:$0xff] %v290
      %323 = vst [vmem:[%s170 + $0x50] sm:$0xff] %v291
      %324 = vst [vmem:[%s170 + $0x58] sm:$0xff] %v292
      %325 = vst [vmem:[%s170 + $0x60] sm:$0xff] %v293
      %326 = vst [vmem:[%s170 + $0x68] sm:$0xff] %v294
      %327 = vst [vmem:[%s170 + $0x70] sm:$0xff] %v295
      %328 = vst [vmem:[%s170 + $0x78] sm:$0xff] %v296
      %329 = vst [vmem:[%s170 + $0x80] sm:$0xff] %v297
      %330 = vst [vmem:[%s170 + $0x88] sm:$0xff] %v298
      %331 = vst [vmem:[%s170 + $0x90] sm:$0xff] %v299
      %332 = vst [vmem:[%s170 + $0x98] sm:$0xff] %v300
      %333 = vst [vmem:[%s170 + $0xa0] sm:$0xff] %v301
      %334 = vst [vmem:[%s170 + $0xa8] sm:$0xff] %v302
      %335 = vst [vmem:[%s170 + $0xb0] sm:$0xff] %v303
      %336 = vst [vmem:[%s170 + $0xb8] sm:$0xff] %v304
      %337 = vst [vmem:[%s170 + $0xc0] sm:$0xff] %v305
      %338 = vst [vmem:[%s170 + $0xc8] sm:$0xff] %v306
      %339 = vst [vmem:[%s170 + $0xd0] sm:$0xff] %v307
      %340 = vst [vmem:[%s170 + $0xd8] sm:$0xff] %v308
      %341 = vst [vmem:[%s170 + $0xe0] sm:$0xff] %v309
      %342 = vst [vmem:[%s170 + $0xe8] sm:$0xff] %v310
      %343 = vst [vmem:[%s170 + $0xf0] sm:$0xff] %v311
      %344 = vst [vmem:[%s170 + $0xf8] sm:$0xff] %v312
      %p345 = scmp.lt.s32.totalorder %s14, 1
      %s346 = scalar_select %p345, %s14, 1
      %s347 = smul.addr %s346, 32
      %s348 = smul.addr %s347, 8
      %s349 = scalar_lea.vmem %s3, %s348
      // Predicated region
      $region33: #{double_conv_forward.5} parent=31 // pred_check
        %p350 = pneg %p100
      $region34: #{double_conv_forward.5} parent=31 // pred_check_branch
        %352 = sbr.rel (%p350) target = $region36
      $region35: #{double_conv_forward.5} parent=31 // pred_region
        _
      $region36: #{double_conv_forward.5} parent=31 // pred_fallthru
        _
    $region32: #{double_conv_forward.5} parent=5 // pred_fallthru
      _
    %p353 = scmp.le.s32.totalorder 2, %s9
    // Predicated region
    $region37: #{double_conv_forward.5} parent=5 // pred_check
      %p354 = pneg %p353
    $region38: #{double_conv_forward.5} parent=5 // pred_check_branch
      %356 = sbr.rel (%p354) target = $region40
    $region39: #{double_conv_forward.5} parent=5 // pred_region
      %s357 = ssub.s32 %s9, 2
      // Predicated region
      $region41: #{double_conv_forward.5} parent=39 // pred_check
        %p358 = pneg %p106
      $region42: #{double_conv_forward.5} parent=39 // pred_check_branch
        %360 = sbr.rel (%p358) target = $region44
      $region43: #{double_conv_forward.5} parent=39 // pred_region
        %p361 = scmp.lt.s32.totalorder %s15, 1
        %s362 = scalar_select %p361, %s15, 1
        %s363 = smul.addr %s362, 32
        %s364 = smul.addr %s363, 8
        %s365 = scalar_lea.vmem %s3, %s364
      $region44: #{double_conv_forward.5} parent=39 // pred_fallthru
        _
    $region40: #{double_conv_forward.5} parent=5 // pred_fallthru
      _
  $region6: #{double_conv_forward.5} parent=0 // loop_footer
    %s13 = sadd.s32 1, %s9
  $region7: #{double_conv_forward.5} parent=0 // loop_footer_branch
    %8 = sbr.rel target = $region3
  $region8: #{double_conv_forward.5} parent=0 // loop_exit
    _

// kernel: double_conv_forward.3
$region0: #{double_conv_forward.3}
  #allocation0 [shape = 'u32[]', space=smem, size = 0x4, offset = 0x4, fixed_abs, tag = 'smem constant byte address 0x4 - core index']
  #allocation1 [shape = 'u32[144,128]{1,0:T(1,128)}', space=vmem, size = 0x12000, scoped, tag = 'internal scratch']
  #allocation2 [shape = 'f32[18,18,128]{2,1,0:T(8,128)}', space=vmem, size = 0x36000, scoped, tag = 'scratch operand']
  #allocation3 [shape = 'f32[256,1152]{1,0:T(8,128)}', space=vmem, size = 0x120000, scoped, tag = 'scratch operand']
  %s0 = inlined_call_operand.vmem [shape: f32[1,128], index: 0, kind: input, shape index: {}, may-alias: {0,1}]
  %s1 = inlined_call_operand.vmem [shape: f32[1,128], index: 1, kind: input, shape index: {}, may-alias: {0,1}]
  %s2 = inlined_call_operand.vmem [shape: f32[2,16,16,128], index: 2, kind: input, shape index: {}]
  %s3 = inlined_call_operand.vmem [shape: f32[1152,128], index: 3, kind: input, shape index: {}]
  %s4 = inlined_call_operand.vmem [shape: f32[2,16,16,128], index: 4, kind: output, shape index: {0}]
  %s5 = inlined_call_operand.vmem [shape: f32[2,2,128], index: 5, kind: output, shape index: {1}]
  %6 = xla_tuple %s4, %s5
  %s7 = sld [smem:[#allocation0]]
  $region57: #{double_conv_forward.3} parent=0
    _
  %s9 = ssub.s32 1, %s7
  %s10 = scalar_select 0, %s9, %s7
  loop: start=0, step=1, limit=4
  $region2: #{double_conv_forward.3} parent=0 // loop_pre_header
    _
  $region3: #{double_conv_forward.3} parent=0 // loop_header
    %s12 = sphi 0, %s16
    %p13 = scmp.ge.s32.totalorder %s12, 4
    %s20 = sphi 0, %s20
    %s22 = sphi 0, %s20
    %s23 = sphi 0, %s22
    %s37 = sphi 0, %s23
    %s41 = sphi 0, %s41
    %s43 = sphi 0, %s41
    %s44 = sphi 0, %s43
    %s58 = sphi 0, %s44
    %s64 = sphi 0, %s66
    %s67 = sphi 0, %s64
    %s68 = sphi 0, %s67
    %s84 = sphi 0, %s68
    %s88 = sphi 0, %s88
    %s90 = sphi 0, %s88
    %s91 = sphi 0, %s90
    %s105 = sphi 0, %s91
    %s111 = sphi 0, %s113
    %s114 = sphi 0, %s111
    %s115 = sphi 0, %s114
    %s131 = sphi 0, %s115
    %s137 = sphi 0, %s139
    %s140 = sphi 0, %s137
    %s141 = sphi 0, %s140
    %s157 = sphi 0, %s141
  $region4: #{double_conv_forward.3} parent=0 // loop_header_branch
    %15 = sbr.rel (%p13) target = $region8
  $region5: #{double_conv_forward.3} parent=0 // loop_body
    %s17 = ssub.s32 %s12, 1
    %s18 = ssub.s32 %s12, 2
    %s19 = sadd.s32 %s12, 1
    %s21 = sadd.s32 %s20, 1
    %p24 = scmp.eq.s32.totalorder %s12, 1
    %p25 = scmp.ne.s32.totalorder %s20, %s22
    %p26 = scmp.eq.s32.totalorder %s12, 0
    %p27 = por %p25, %p26
    %p28 = scmp.ne.s32.totalorder %s20, %s22
    %p29 = scmp.eq.s32.totalorder %s17, 1
    %p30 = por %p28, %p29
    %p31 = scmp.ne.s32.totalorder %s22, %s23
    %p32 = scmp.eq.s32.totalorder %s17, 0
    %p33 = por %p31, %p32
    %p34 = scmp.ne.s32.totalorder %s22, %s23
    %p35 = scmp.eq.s32.totalorder %s18, 1
    %p36 = por %p34, %p35
    %p38 = scmp.ne.s32.totalorder %s23, %s37
    %p39 = scmp.eq.s32.totalorder %s18, 0
    %p40 = por %p38, %p39
    %s42 = sadd.s32 %s41, 1
    %p45 = scmp.eq.s32.totalorder %s12, 1
    %p46 = scmp.ne.s32.totalorder %s41, %s43
    %p47 = scmp.eq.s32.totalorder %s12, 0
    %p48 = por %p46, %p47
    %p49 = scmp.ne.s32.totalorder %s41, %s43
    %p50 = scmp.eq.s32.totalorder %s17, 1
    %p51 = por %p49, %p50
    %p52 = scmp.ne.s32.totalorder %s43, %s44
    %p53 = scmp.eq.s32.totalorder %s17, 0
    %p54 = por %p52, %p53
    %p55 = scmp.ne.s32.totalorder %s43, %s44
    %p56 = scmp.eq.s32.totalorder %s18, 1
    %p57 = por %p55, %p56
    %p59 = scmp.ne.s32.totalorder %s44, %s58
    %p60 = scmp.eq.s32.totalorder %s18, 0
    %p61 = por %p59, %p60
    %s62 = ssub.s32 %s12, %s19
    %p63 = scmp.eq.s32.totalorder %s62, 0
    %s65 = sadd.s32 %s64, 1
    %s66 = scalar_select %p63, %s64, %s65
    %p69 = pneg %p63
    %p70 = scmp.eq.s32.totalorder %s12, 1
    %p71 = por %p69, %p70
    %p72 = scmp.ne.s32.totalorder %s64, %s67
    %p73 = scmp.eq.s32.totalorder %s12, 0
    %p74 = por %p72, %p73
    %p75 = scmp.ne.s32.totalorder %s64, %s67
    %p76 = scmp.eq.s32.totalorder %s17, 1
    %p77 = por %p75, %p76
    %p78 = scmp.ne.s32.totalorder %s67, %s68
    %p79 = scmp.eq.s32.totalorder %s17, 0
    %p80 = por %p78, %p79
    %p81 = scmp.ne.s32.totalorder %s67, %s68
    %p82 = scmp.eq.s32.totalorder %s18, 1
    %p83 = por %p81, %p82
    %p85 = scmp.ne.s32.totalorder %s68, %s84
    %p86 = scmp.eq.s32.totalorder %s18, 0
    %p87 = por %p85, %p86
    %s89 = sadd.s32 %s88, 1
    %p92 = scmp.eq.s32.totalorder %s12, 1
    %p93 = scmp.ne.s32.totalorder %s88, %s90
    %p94 = scmp.eq.s32.totalorder %s12, 0
    %p95 = por %p93, %p94
    %p96 = scmp.ne.s32.totalorder %s88, %s90
    %p97 = scmp.eq.s32.totalorder %s17, 1
    %p98 = por %p96, %p97
    %p99 = scmp.ne.s32.totalorder %s90, %s91
    %p100 = scmp.eq.s32.totalorder %s17, 0
    %p101 = por %p99, %p100
    %p102 = scmp.ne.s32.totalorder %s90, %s91
    %p103 = scmp.eq.s32.totalorder %s18, 1
    %p104 = por %p102, %p103
    %p106 = scmp.ne.s32.totalorder %s91, %s105
    %p107 = scmp.eq.s32.totalorder %s18, 0
    %p108 = por %p106, %p107
    %s109 = ssub.s32 %s12, %s19
    %p110 = scmp.eq.s32.totalorder %s109, 0
    %s112 = sadd.s32 %s111, 1
    %s113 = scalar_select %p110, %s111, %s112
    %p116 = pneg %p110
    %p117 = scmp.eq.s32.totalorder %s12, 1
    %p118 = por %p116, %p117
    %p119 = scmp.ne.s32.totalorder %s111, %s114
    %p120 = scmp.eq.s32.totalorder %s12, 0
    %p121 = por %p119, %p120
    %p122 = scmp.ne.s32.totalorder %s111, %s114
    %p123 = scmp.eq.s32.totalorder %s17, 1
    %p124 = por %p122, %p123
    %p125 = scmp.ne.s32.totalorder %s114, %s115
    %p126 = scmp.eq.s32.totalorder %s17, 0
    %p127 = por %p125, %p126
    %p128 = scmp.ne.s32.totalorder %s114, %s115
    %p129 = scmp.eq.s32.totalorder %s18, 1
    %p130 = por %p128, %p129
    %p132 = scmp.ne.s32.totalorder %s115, %s131
    %p133 = scmp.eq.s32.totalorder %s18, 0
    %p134 = por %p132, %p133
    %s135 = ssub.s32 %s12, %s19
    %p136 = scmp.eq.s32.totalorder %s135, 0
    %s138 = sadd.s32 %s137, 1
    %s139 = scalar_select %p136, %s137, %s138
    %p142 = pneg %p136
    %p143 = scmp.eq.s32.totalorder %s12, 1
    %p144 = por %p142, %p143
    %p145 = scmp.ne.s32.totalorder %s137, %s140
    %p146 = scmp.eq.s32.totalorder %s12, 0
    %p147 = por %p145, %p146
    %p148 = scmp.ne.s32.totalorder %s137, %s140
    %p149 = scmp.eq.s32.totalorder %s17, 1
    %p150 = por %p148, %p149
    %p151 = scmp.ne.s32.totalorder %s140, %s141
    %p152 = scmp.eq.s32.totalorder %s17, 0
    %p153 = por %p151, %p152
    %p154 = scmp.ne.s32.totalorder %s140, %s141
    %p155 = scmp.eq.s32.totalorder %s18, 1
    %p156 = por %p154, %p155
    %p158 = scmp.ne.s32.totalorder %s141, %s157
    %p159 = scmp.eq.s32.totalorder %s18, 0
    %p160 = por %p158, %p159
    %p161 = scmp.le.s32.totalorder 1, %s12
    %p162 = scmp.lt.s32.totalorder %s12, 3
    %p163 = pnand %p161, %p162
    %p164 = pneg %p163
    // Predicated region
    $region9: #{double_conv_forward.3} parent=5 // pred_check
      _
    $region10: #{double_conv_forward.3} parent=5 // pred_check_branch
      %166 = sbr.rel (%p163) target = $region12
    $region11: #{double_conv_forward.3} parent=5 // pred_region
      %s167 = ssub.s32 %s12, 1
      // Predicated region
      $region13: #{double_conv_forward.3} parent=11 // pred_check
        %p168 = pneg %p33
      $region14: #{double_conv_forward.3} parent=11 // pred_check_branch
        %170 = sbr.rel (%p168) target = $region16
      $region15: #{double_conv_forward.3} parent=11 // pred_region
        _
      $region16: #{double_conv_forward.3} parent=11 // pred_fallthru
        _
      // Predicated region
      $region17: #{double_conv_forward.3} parent=11 // pred_check
        %p171 = pneg %p54
      $region18: #{double_conv_forward.3} parent=11 // pred_check_branch
        %173 = sbr.rel (%p171) target = $region20
      $region19: #{double_conv_forward.3} parent=11 // pred_region
        _
      $region20: #{double_conv_forward.3} parent=11 // pred_fallthru
        _
      // Predicated region
      $region21: #{double_conv_forward.3} parent=11 // pred_check
        %p174 = pneg %p101
      $region22: #{double_conv_forward.3} parent=11 // pred_check_branch
        %176 = sbr.rel (%p174) target = $region24
      $region23: #{double_conv_forward.3} parent=11 // pred_region
        _
      $region24: #{double_conv_forward.3} parent=11 // pred_fallthru
        _
    $region12: #{double_conv_forward.3} parent=5 // pred_fallthru
      _
    %p177 = scmp.lt.s32.totalorder %s12, 2
    // Predicated region
    $region25: #{double_conv_forward.3} parent=5 // pred_check
      %p178 = pneg %p177
    $region26: #{double_conv_forward.3} parent=5 // pred_check_branch
      %180 = sbr.rel (%p178) target = $region28
    $region27: #{double_conv_forward.3} parent=5 // pred_region
      // Predicated region
      $region29: #{double_conv_forward.3} parent=27 // pred_check
        %p181 = pneg %p74
      $region30: #{double_conv_forward.3} parent=27 // pred_check_branch
        %183 = sbr.rel (%p181) target = $region32
      $region31: #{double_conv_forward.3} parent=27 // pred_region
        %p184 = scmp.lt.s32.totalorder %s12, 1
        %s185 = scalar_select %p184, %s12, 1
        %s186 = smul.addr %s185, 32
        %s187 = smul.addr %s186, 8
        %s188 = scalar_lea.vmem %s2, %s187
      $region32: #{double_conv_forward.3} parent=27 // pred_fallthru
        _
    $region28: #{double_conv_forward.3} parent=5 // pred_fallthru
      _
    %p189 = scmp.le.s32.totalorder 1, %s12
    %p190 = scmp.lt.s32.totalorder %s12, 3
    %p191 = pnand %p189, %p190
    %p192 = pneg %p191
    // Predicated region
    $region33: #{double_conv_forward.3} parent=5 // pred_check
      _
    $region34: #{double_conv_forward.3} parent=5 // pred_check_branch
      %194 = sbr.rel (%p191) target = $region36
    $region35: #{double_conv_forward.3} parent=5 // pred_region
      %s195 = ssub.s32 %s12, 1
      %p196 = pneg %p33
      %p197 = pneg %p30
      %p198 = pneg %p54
      %p199 = pneg %p51
      %p200 = scmp.lt.s32.totalorder %s17, 1
      %s201 = scalar_select %p200, %s17, 1
      %s202 = smul.addr %s201, 32
      %s203 = smul.addr %s202, 8
      %s204 = scalar_lea.vmem %s2, %s203
      %p205 = pneg %p80
      %p206 = pneg %p77
      %p207 = pneg %p101
      %p208 = pneg %p98
      %p209 = pneg %p127
      %p210 = pneg %p124
      %p211 = scmp.lt.s32.totalorder %s17, 1
      %s212 = scalar_select %p211, %s17, 1
      %s213 = smul.addr %s212, 32
      %s214 = smul.addr %s213, 8
      %s215 = scalar_lea.vmem %s4, %s214
      %p216 = pneg %p153
      %p217 = pneg %p150
      %p218 = scmp.lt.s32.totalorder %s17, 1
      %s219 = scalar_select %p218, %s17, 1
      %s220 = smul.addr %s219, 2
      %s221 = scalar_lea.vmem %s5, %s220
      %p222 = scmp.lt.s32.totalorder %s17, 1
      %s223 = scalar_select %p222, %s17, 1
      %s224 = smul.addr %s223, 32
      %s225 = smul.addr %s224, 8
      %s226 = scalar_lea.vmem %s2, %s225
      %p227 = scmp.lt.s32.totalorder %s17, 1
      %s228 = scalar_select %p227, %s17, 1
      %s229 = smul.addr %s228, 32
      %s230 = smul.addr %s229, 8
      %s231 = scalar_lea.vmem %s4, %s230
      %p232 = scmp.lt.s32.totalorder %s17, 1
      %s233 = scalar_select %p232, %s17, 1
      %s234 = smul.addr %s233, 2
      %s235 = scalar_lea.vmem %s5, %s234
      %v236 = vld [vmem:[%s226] sm:$0xff]
      %v237 = vld [vmem:[%s226 + $0x8] sm:$0xff]
      %v238 = vld [vmem:[%s226 + $0x10] sm:$0xff]
      %v239 = vld [vmem:[%s226 + $0x18] sm:$0xff]
      %v240 = vld [vmem:[%s226 + $0x20] sm:$0xff]
      %v241 = vld [vmem:[%s226 + $0x28] sm:$0xff]
      %v242 = vld [vmem:[%s226 + $0x30] sm:$0xff]
      %v243 = vld [vmem:[%s226 + $0x38] sm:$0xff]
      %v244 = vld [vmem:[%s226 + $0x40] sm:$0xff]
      %v245 = vld [vmem:[%s226 + $0x48] sm:$0xff]
      %v246 = vld [vmem:[%s226 + $0x50] sm:$0xff]
      %v247 = vld [vmem:[%s226 + $0x58] sm:$0xff]
      %v248 = vld [vmem:[%s226 + $0x60] sm:$0xff]
      %v249 = vld [vmem:[%s226 + $0x68] sm:$0xff]
      %v250 = vld [vmem:[%s226 + $0x70] sm:$0xff]
      %v251 = vld [vmem:[%s226 + $0x78] sm:$0xff]
      %v252 = vld [vmem:[%s226 + $0x80] sm:$0xff]
      %v253 = vld [vmem:[%s226 + $0x88] sm:$0xff]
      %v254 = vld [vmem:[%s226 + $0x90] sm:$0xff]
      %v255 = vld [vmem:[%s226 + $0x98] sm:$0xff]
      %v256 = vld [vmem:[%s226 + $0xa0] sm:$0xff]
      %v257 = vld [vmem:[%s226 + $0xa8] sm:$0xff]
      %v258 = vld [vmem:[%s226 + $0xb0] sm:$0xff]
      %v259 = vld [vmem:[%s226 + $0xb8] sm:$0xff]
      %v260 = vld [vmem:[%s226 + $0xc0] sm:$0xff]
      %v261 = vld [vmem:[%s226 + $0xc8] sm:$0xff]
      %v262 = vld [vmem:[%s226 + $0xd0] sm:$0xff]
      %v263 = vld [vmem:[%s226 + $0xd8] sm:$0xff]
      %v264 = vld [vmem:[%s226 + $0xe0] sm:$0xff]
      %v265 = vld [vmem:[%s226 + $0xe8] sm:$0xff]
      %v266 = vld [vmem:[%s226 + $0xf0] sm:$0xff]
      %v267 = vld [vmem:[%s226 + $0xf8] sm:$0xff]
      %268 = vst [vmem:[#allocation2] sm:$0xff] 0.0
      %269 = vst [vmem:[#allocation2 + $0x8] sm:$0xff] 0.0
      %270 = vst [vmem:[#allocation2 + $0x10] sm:$0x3] 0.0
      %s271 = scalar_lea.vmem [#allocation2], 408
      %272 = vst [vmem:[%s271] sm:$0xff] 0.0
      %273 = vst [vmem:[%s271 + $0x8] sm:$0xff] 0.0
      %274 = vst [vmem:[%s271 + $0x10] sm:$0x3] 0.0
      %275 = vst [vmem:[#allocation2] sm:$0x1] 0.0
      %276 = vst [vmem:[#allocation2 + $0x18] sm:$0x1] 0.0
      %277 = vst [vmem:[#allocation2 + $0x30] sm:$0x1] 0.0
      %278 = vst [vmem:[#allocation2 + $0x48] sm:$0x1] 0.0
      %279 = vst [vmem:[#allocation2 + $0x60] sm:$0x1] 0.0
      %280 = vst [vmem:[#allocation2 + $0x78] sm:$0x1] 0.0
      %281 = vst [vmem:[#allocation2 + $0x90] sm:$0x1] 0.0
      %282 = vst [vmem:[#allocation2 + $0xa8] sm:$0x1] 0.0
      %283 = vst [vmem:[#allocation2 + $0xc0] sm:$0x1] 0.0
      %284 = vst [vmem:[#allocation2 + $0xd8] sm:$0x1] 0.0
      %285 = vst [vmem:[#allocation2 + $0xf0] sm:$0x1] 0.0
      %286 = vst [vmem:[#allocation2 + $0x108] sm:$0x1] 0.0
      %287 = vst [vmem:[#allocation2 + $0x120] sm:$0x1] 0.0
      %288 = vst [vmem:[#allocation2 + $0x138] sm:$0x1] 0.0
      %289 = vst [vmem:[#allocation2 + $0x150] sm:$0x1] 0.0
      %290 = vst [vmem:[#allocation2 + $0x168] sm:$0x1] 0.0
      %291 = vst [vmem:[#allocation2 + $0x180] sm:$0x1] 0.0
      %292 = vst [vmem:[#allocation2 + $0x198] sm:$0x1] 0.0
      %293 = vst [vmem:[#allocation2 + $0x11] sm:$0x1] 0.0
      %294 = vst [vmem:[#allocation2 + $0x29] sm:$0x1] 0.0
      %295 = vst [vmem:[#allocation2 + $0x41] sm:$0x1] 0.0
      %296 = vst [vmem:[#allocation2 + $0x59] sm:$0x1] 0.0
      %297 = vst [vmem:[#allocation2 + $0x71] sm:$0x1] 0.0
      %298 = vst [vmem:[#allocation2 + $0x89] sm:$0x1] 0.0
      %299 = vst [vmem:[#allocation2 + $0xa1] sm:$0x1] 0.0
      %300 = vst [vmem:[#allocation2 + $0xb9] sm:$0x1] 0.0
      %301 = vst [vmem:[#allocation2 + $0xd1] sm:$0x1] 0.0
      %302 = vst [vmem:[#allocation2 + $0xe9] sm:$0x1] 0.0
      %303 = vst [vmem:[#allocation2 + $0x101] sm:$0x1] 0.0
      %304 = vst [vmem:[#allocation2 + $0x119] sm:$0x1] 0.0
      %305 = vst [vmem:[#allocation2 + $0x131] sm:$0x1] 0.0
      %306 = vst [vmem:[#allocation2 + $0x149] sm:$0x1] 0.0
      %307 = vst [vmem:[#allocation2 + $0x161] sm:$0x1] 0.0
      %308 = vst [vmem:[#allocation2 + $0x179] sm:$0x1] 0.0
      %309 = vst [vmem:[#allocation2 + $0x191] sm:$0x1] 0.0
      %310 = vst [vmem:[#allocation2 + $0x1a9] sm:$0x1] 0.0
      %s311 = scalar_lea.vmem [#allocation2], 24
      %312 = vst [vmem:[%s311 + $0x1] sm:$0xff] %v236
      %313 = vst [vmem:[%s311 + $0x9] sm:$0xff] %v237
      %314 = vst [vmem:[%s311 + $0x19] sm:$0xff] %v238
      %315 = vst [vmem:[%s311 + $0x21] sm:$0xff] %v239
      %316 = vst [vmem:[%s311 + $0x31] sm:$0xff] %v240
      %317 = vst [vmem:[%s311 + $0x39] sm:$0xff] %v241
      %318 = vst [vmem:[%s311 + $0x49] sm:$0xff] %v242
      %319 = vst [vmem:[%s311 + $0x51] sm:$0xff] %v243
      %320 = vst [vmem:[%s311 + $0x61] sm:$0xff] %v244
      %321 = vst [vmem:[%s311 + $0x69] sm:$0xff] %v245
      %322 = vst [vmem:[%s311 + $0x79] sm:$0xff] %v246
      %323 = vst [vmem:[%s311 + $0x81] sm:$0xff] %v247
      %324 = vst [vmem:[%s311 + $0x91] sm:$0xff] %v248
      %325 = vst [vmem:[%s311 + $0x99] sm:$0xff] %v249
      %326 = vst [vmem:[%s311 + $0xa9] sm:$0xff] %v250
      %327 = vst [vmem:[%s311 + $0xb1] sm:$0xff] %v251
      %328 = vst [vmem:[%s311 + $0xc1] sm:$0xff] %v252
      %329 = vst [vmem:[%s311 + $0xc9] sm:$0xff] %v253
      %330 = vst [vmem:[%s311 + $0xd9] sm:$0xff] %v254
      %331 = vst [vmem:[%s311 + $0xe1] sm:$0xff] %v255
      %332 = vst [vmem:[%s311 + $0xf1] sm:$0xff] %v256
      %333 = vst [vmem:[%s311 + $0xf9] sm:$0xff] %v257
      %334 = vst [vmem:[%s311 + $0x109] sm:$0xff] %v258
      %335 = vst [vmem:[%s311 + $0x111] sm:$0xff] %v259
      %336 = vst [vmem:[%s311 + $0x121] sm:$0xff] %v260
      %337 = vst [vmem:[%s311 + $0x129] sm:$0xff] %v261
      %338 = vst [vmem:[%s311 + $0x139] sm:$0xff] %v262
      %339 = vst [vmem:[%s311 + $0x141] sm:$0xff] %v263
      %340 = vst [vmem:[%s311 + $0x151] sm:$0xff] %v264
      %341 = vst [vmem:[%s311 + $0x159] sm:$0xff] %v265
      %342 = vst [vmem:[%s311 + $0x169] sm:$0xff] %v266
      %343 = vst [vmem:[%s311 + $0x171] sm:$0xff] %v267
      %v344 = vld [vmem:[#allocation2] sm:$0xff]
      %v345 = vld [vmem:[#allocation2 + $0x8] sm:$0xff]
      %v346 = vld [vmem:[#allocation2 + $0x18] sm:$0xff]
      %v347 = vld [vmem:[#allocation2 + $0x20] sm:$0xff]
      %v348 = vld [vmem:[#allocation2 + $0x30] sm:$0xff]
      %v349 = vld [vmem:[#allocation2 + $0x38] sm:$0xff]
      %v350 = vld [vmem:[#allocation2 + $0x48] sm:$0xff]
      %v351 = vld [vmem:[#allocation2 + $0x50] sm:$0xff]
      %v352 = vld [vmem:[#allocation2 + $0x60] sm:$0xff]
      %v353 = vld [vmem:[#allocation2 + $0x68] sm:$0xff]
      %v354 = vld [vmem:[#allocation2 + $0x78] sm:$0xff]
      %v355 = vld [vmem:[#allocation2 + $0x80] sm:$0xff]
      %v356 = vld [vmem:[#allocation2 + $0x90] sm:$0xff]
      %v357 = vld [vmem:[#allocation2 + $0x98] sm:$0xff]
      %v358 = vld [vmem:[#allocation2 + $0xa8] sm:$0xff]
      %v359 = vld [vmem:[#allocation2 + $0xb0] sm:$0xff]
      %v360 = vld [vmem:[#allocation2 + $0xc0] sm:$0xff]
      %v361 = vld [vmem:[#allocation2 + $0xc8] sm:$0xff]
      %v362 = vld [vmem:[#allocation2 + $0xd8] sm:$0xff]
      %v363 = vld [vmem:[#allocation2 + $0xe0] sm:$0xff]
      %v364 = vld [vmem:[#allocation2 + $0xf0] sm:$0xff]
      %v365 = vld [vmem:[#allocation2 + $0xf8] sm:$0xff]
      %v366 = vld [vmem:[#allocation2 + $0x108] sm:$0xff]
      %v367 = vld [vmem:[#allocation2 + $0x110] sm:$0xff]
      %v368 = vld [vmem:[#allocation2 + $0x120] sm:$0xff]
      %v369 = vld [vmem:[#allocation2 + $0x128] sm:$0xff]
      %v370 = vld [vmem:[#allocation2 + $0x138] sm:$0xff]
      %v371 = vld [vmem:[#allocation2 + $0x140] sm:$0xff]
      %v372 = vld [vmem:[#allocation2 + $0x150] sm:$0xff]
      %v373 = vld [vmem:[#allocation2 + $0x158] sm:$0xff]
      %v374 = vld [vmem:[#allocation2 + $0x168] sm:$0xff]
      %v375 = vld [vmem:[#allocation2 + $0x170] sm:$0xff]
      %376 = vst [vmem:[#allocation3] sm:$0xff] %v344
      %377 = vst [vmem:[#allocation3 + $0x48] sm:$0xff] %v345
      %378 = vst [vmem:[#allocation3 + $0x90] sm:$0xff] %v346
      %379 = vst [vmem:[#allocation3 + $0xd8] sm:$0xff] %v347
      %380 = vst [vmem:[#allocation3 + $0x120] sm:$0xff] %v348
      %381 = vst [vmem:[#allocation3 + $0x168] sm:$0xff] %v349
      %382 = vst [vmem:[#allocation3 + $0x1b0] sm:$0xff] %v350
      %383 = vst [vmem:[#allocation3 + $0x1f8] sm:$0xff] %v351
      %384 = vst [vmem:[#allocation3 + $0x240] sm:$0xff] %v352
      %385 = vst [vmem:[#allocation3 + $0x288] sm:$0xff] %v353
      %386 = vst [vmem:[#allocation3 + $0x2d0] sm:$0xff] %v354
      %387 = vst [vmem:[#allocation3 + $0x318] sm:$0xff] %v355
      %388 = vst [vmem:[#allocation3 + $0x360] sm:$0xff] %v356
      %389 = vst [vmem:[#allocation3 + $0x3a8] sm:$0xff] %v357
      %390 = vst [vmem:[#allocation3 + $0x3f0] sm:$0xff] %v358
      %391 = vst [vmem:[#allocation3 + $0x438] sm:$0xff] %v359
      %392 = vst [vmem:[#allocation3 + $0x480] sm:$0xff] %v360
      %393 = vst [vmem:[#allocation3 + $0x4c8] sm:$0xff] %v361
      %394 = vst [vmem:[#allocation3 + $0x510] sm:$0xff] %v362
      %395 = vst [vmem:[#allocation3 + $0x558] sm:$0xff] %v363
      %396 = vst [vmem:[#allocation3 + $0x5a0] sm:$0xff] %v364
      %397 = vst [vmem:[#allocation3 + $0x5e8] sm:$0xff] %v365
      %398 = vst [vmem:[#allocation3 + $0x630] sm:$0xff] %v366
      %399 = vst [vmem:[#allocation3 + $0x678] sm:$0xff] %v367
      %400 = vst [vmem:[#allocation3 + $0x6c0] sm:$0xff] %v368
      %401 = vst [vmem:[#allocation3 + $0x708] sm:$0xff] %v369
      %402 = vst [vmem:[#allocation3 + $0x750] sm:$0xff] %v370
      %403 = vst [vmem:[#allocation3 + $0x798] sm:$0xff] %v371
      %404 = vst [vmem:[#allocation3 + $0x7e0] sm:$0xff] %v372
      %405 = vst [vmem:[#allocation3 + $0x828] sm:$0xff] %v373
      %406 = vst [vmem:[#allocation3 + $0x870] sm:$0xff] %v374
      %407 = vst [vmem:[#allocation3 + $0x8b8] sm:$0xff] %v375
      %v408 = vld [vmem:[#allocation2 + $0x1] sm:$0xff]
      %v409 = vld [vmem:[#allocation2 + $0x9] sm:$0xff]
      %v410 = vld [vmem:[#allocation2 + $0x19] sm:$0xff]
      %v411 = vld [vmem:[#allocation2 + $0x21] sm:$0xff]
      %v412 = vld [vmem:[#allocation2 + $0x31] sm:$0xff]
      %v413 = vld [vmem:[#allocation2 + $0x39] sm:$0xff]
      %v414 = vld [vmem:[#allocation2 + $0x49] sm:$0xff]
      %v415 = vld [vmem:[#allocation2 + $0x51] sm:$0xff]
      %v416 = vld [vmem:[#allocation2 + $0x61] sm:$0xff]
      %v417 = vld [vmem:[#allocation2 + $0x69] sm:$0xff]
      %v418 = vld [vmem:[#allocation2 + $0x79] sm:$0xff]
      %v419 = vld [vmem:[#allocation2 + $0x81] sm:$0xff]
      %v420 = vld [vmem:[#allocation2 + $0x91] sm:$0xff]
      %v421 = vld [vmem:[#allocation2 + $0x99] sm:$0xff]
      %v422 = vld [vmem:[#allocation2 + $0xa9] sm:$0xff]
      %v423 = vld [vmem:[#allocation2 + $0xb1] sm:$0xff]
      %v424 = vld [vmem:[#allocation2 + $0xc1] sm:$0xff]
      %v425 = vld [vmem:[#allocation2 + $0xc9] sm:$0xff]
      %v426 = vld [vmem:[#allocation2 + $0xd9] sm:$0xff]
      %v427 = vld [vmem:[#allocation2 + $0xe1] sm:$0xff]
      %v428 = vld [vmem:[#allocation2 + $0xf1] sm:$0xff]
      %v429 = vld [vmem:[#allocation2 + $0xf9] sm:$0xff]
      %v430 = vld [vmem:[#allocation2 + $0x109] sm:$0xff]
      %v431 = vld [vmem:[#allocation2 + $0x111] sm:$0xff]
      %v432 = vld [vmem:[#allocation2 + $0x121] sm:$0xff]
      %v433 = vld [vmem:[#allocation2 + $0x129] sm:$0xff]
      %v434 = vld [vmem:[#allocation2 + $0x139] sm:$0xff]
      %v435 = vld [vmem:[#allocation2 + $0x141] sm:$0xff]
      %v436 = vld [vmem:[#allocation2 + $0x151] sm:$0xff]
      %v437 = vld [vmem:[#allocation2 + $0x159] sm:$0xff]
      %v438 = vld [vmem:[#allocation2 + $0x169] sm:$0xff]
      %v439 = vld [vmem:[#allocation2 + $0x171] sm:$0xff]
      %440 = vst [vmem:[#allocation3 + $0x8] sm:$0xff] %v408
      %441 = vst [vmem:[#allocation3 + $0x50] sm:$0xff] %v409
      %442 = vst [vmem:[#allocation3 + $0x98] sm:$0xff] %v410
      %443 = vst [vmem:[#allocation3 + $0xe0] sm:$0xff] %v411
      %444 = vst [vmem:[#allocation3 + $0x128] sm:$0xff] %v412
      %445 = vst [vmem:[#allocation3 + $0x170] sm:$0xff] %v413
      %446 = vst [vmem:[#allocation3 + $0x1b8] sm:$0xff] %v414
      %447 = vst [vmem:[#allocation3 + $0x200] sm:$0xff] %v415
      %448 = vst [vmem:[#allocation3 + $0x248] sm:$0xff] %v416
      %449 = vst [vmem:[#allocation3 + $0x290] sm:$0xff] %v417
      %450 = vst [vmem:[#allocation3 + $0x2d8] sm:$0xff] %v418
      %451 = vst [vmem:[#allocation3 + $0x320] sm:$0xff] %v419
      %452 = vst [vmem:[#allocation3 + $0x368] sm:$0xff] %v420
      %453 = vst [vmem:[#allocation3 + $0x3b0] sm:$0xff] %v421
      %454 = vst [vmem:[#allocation3 + $0x3f8] sm:$0xff] %v422
      %455 = vst [vmem:[#allocation3 + $0x440] sm:$0xff] %v423
      %456 = vst [vmem:[#allocation3 + $0x488] sm:$0xff] %v424
      %457 = vst [vmem:[#allocation3 + $0x4d0] sm:$0xff] %v425
      %458 = vst [vmem:[#allocation3 + $0x518] sm:$0xff] %v426
      %459 = vst [vmem:[#allocation3 + $0x560] sm:$0xff] %v427
      %460 = vst [vmem:[#allocation3 + $0x5a8] sm:$0xff] %v428
      %461 = vst [vmem:[#allocation3 + $0x5f0] sm:$0xff] %v429
      %462 = vst [vmem:[#allocation3 + $0x638] sm:$0xff] %v430
      %463 = vst [vmem:[#allocation3 + $0x680] sm:$0xff] %v431
      %464 = vst [vmem:[#allocation3 + $0x6c8] sm:$0xff] %v432
      %465 = vst [vmem:[#allocation3 + $0x710] sm:$0xff] %v433
      %466 = vst [vmem:[#allocation3 + $0x758] sm:$0xff] %v434
      %467 = vst [vmem:[#allocation3 + $0x7a0] sm:$0xff] %v435
      %468 = vst [vmem:[#allocation3 + $0x7e8] sm:$0xff] %v436
      %469 = vst [vmem:[#allocation3 + $0x830] sm:$0xff] %v437
      %470 = vst [vmem:[#allocation3 + $0x878] sm:$0xff] %v438
      %471 = vst [vmem:[#allocation3 + $0x8c0] sm:$0xff] %v439
      %v472 = vld [vmem:[#allocation2 + $0x2] sm:$0xff]
      %v473 = vld [vmem:[#allocation2 + $0xa] sm:$0xff]
      %v474 = vld [vmem:[#allocation2 + $0x1a] sm:$0xff]
      %v475 = vld [vmem:[#allocation2 + $0x22] sm:$0xff]
      %v476 = vld [vmem:[#allocation2 + $0x32] sm:$0xff]
      %v477 = vld [vmem:[#allocation2 + $0x3a] sm:$0xff]
      %v478 = vld [vmem:[#allocation2 + $0x4a] sm:$0xff]
      %v479 = vld [vmem:[#allocation2 + $0x52] sm:$0xff]
      %v480 = vld [vmem:[#allocation2 + $0x62] sm:$0xff]
      %v481 = vld [vmem:[#allocation2 + $0x6a] sm:$0xff]
      %v482 = vld [vmem:[#allocation2 + $0x7a] sm:$0xff]
      %v483 = vld [vmem:[#allocation2 + $0x82] sm:$0xff]
      %v484 = vld [vmem:[#allocation2 + $0x92] sm:$0xff]
      %v485 = vld [vmem:[#allocation2 + $0x9a] sm:$0xff]
      %v486 = vld [vmem:[#allocation2 + $0xaa] sm:$0xff]
      %v487 = vld [vmem:[#allocation2 + $0xb2] sm:$0xff]
      %v488 = vld [vmem:[#allocation2 + $0xc2] sm:$0xff]
      %v489 = vld [vmem:[#allocation2 + $0xca] sm:$0xff]
      %v490 = vld [vmem:[#allocation2 + $0xda] sm:$0xff]
      %v491 = vld [vmem:[#allocation2 + $0xe2] sm:$0xff]
      %v492 = vld [vmem:[#allocation2 + $0xf2] sm:$0xff]
      %v493 = vld [vmem:[#allocation2 + $0xfa] sm:$0xff]
      %v494 = vld [vmem:[#allocation2 + $0x10a] sm:$0xff]
      %v495 = vld [vmem:[#allocation2 + $0x112] sm:$0xff]
      %v496 = vld [vmem:[#allocation2 + $0x122] sm:$0xff]
      %v497 = vld [vmem:[#allocation2 + $0x12a] sm:$0xff]
      %v498 = vld [vmem:[#allocation2 + $0x13a] sm:$0xff]
      %v499 = vld [vmem:[#allocation2 + $0x142] sm:$0xff]
      %v500 = vld [vmem:[#allocation2 + $0x152] sm:$0xff]
      %v501 = vld [vmem:[#allocation2 + $0x15a] sm:$0xff]
      %v502 = vld [vmem:[#allocation2 + $0x16a] sm:$0xff]
      %v503 = vld [vmem:[#allocation2 + $0x172] sm:$0xff]
      %504 = vst [vmem:[#allocation3 + $0x10] sm:$0xff] %v472
      %505 = vst [vmem:[#allocation3 + $0x58] sm:$0xff] %v473
      %506 = vst [vmem:[#allocation3 + $0xa0] sm:$0xff] %v474
      %507 = vst [vmem:[#allocation3 + $0xe8] sm:$0xff] %v475
      %508 = vst [vmem:[#allocation3 + $0x130] sm:$0xff] %v476
      %509 = vst [vmem:[#allocation3 + $0x178] sm:$0xff] %v477
      %510 = vst [vmem:[#allocation3 + $0x1c0] sm:$0xff] %v478
      %511 = vst [vmem:[#allocation3 + $0x208] sm:$0xff] %v479
      %512 = vst [vmem:[#allocation3 + $0x250] sm:$0xff] %v480
      %513 = vst [vmem:[#allocation3 + $0x298] sm:$0xff] %v481
      %514 = vst [vmem:[#allocation3 + $0x2e0] sm:$0xff] %v482
      %515 = vst [vmem:[#allocation3 + $0x328] sm:$0xff] %v483
      %516 = vst [vmem:[#allocation3 + $0x370] sm:$0xff] %v484
      %517 = vst [vmem:[#allocation3 + $0x3b8] sm:$0xff] %v485
      %518 = vst [vmem:[#allocation3 + $0x400] sm:$0xff] %v486
      %519 = vst [vmem:[#allocation3 + $0x448] sm:$0xff] %v487
      %520 = vst [vmem:[#allocation3 + $0x490] sm:$0xff] %v488
      %521 = vst [vmem:[#allocation3 + $0x4d8] sm:$0xff] %v489
      %522 = vst [vmem:[#allocation3 + $0x520] sm:$0xff] %v490
      %523 = vst [vmem:[#allocation3 + $0x568] sm:$0xff] %v491
      %524 = vst [vmem:[#allocation3 + $0x5b0] sm:$0xff] %v492
      %525 = vst [vmem:[#allocation3 + $0x5f8] sm:$0xff] %v493
      %526 = vst [vmem:[#allocation3 + $0x640] sm:$0xff] %v494
      %527 = vst [vmem:[#allocation3 + $0x688] sm:$0xff] %v495
      %528 = vst [vmem:[#allocation3 + $0x6d0] sm:$0xff] %v496
      %529 = vst [vmem:[#allocation3 + $0x718] sm:$0xff] %v497
      %530 = vst [vmem:[#allocation3 + $0x760] sm:$0xff] %v498
      %531 = vst [vmem:[#allocation3 + $0x7a8] sm:$0xff] %v499
      %532 = vst [vmem:[#allocation3 + $0x7f0] sm:$0xff] %v500
      %533 = vst [vmem:[#allocation3 + $0x838] sm:$0xff] %v501
      %534 = vst [vmem:[#allocation3 + $0x880] sm:$0xff] %v502
      %535 = vst [vmem:[#allocation3 + $0x8c8] sm:$0xff] %v503
      %v536 = vld [vmem:[%s311] sm:$0xff]
      %v537 = vld [vmem:[%s311 + $0x8] sm:$0xff]
      %v538 = vld [vmem:[%s311 + $0x18] sm:$0xff]
      %v539 = vld [vmem:[%s311 + $0x20] sm:$0xff]
      %v540 = vld [vmem:[%s311 + $0x30] sm:$0xff]
      %v541 = vld [vmem:[%s311 + $0x38] sm:$0xff]
      %v542 = vld [vmem:[%s311 + $0x48] sm:$0xff]
      %v543 = vld [vmem:[%s311 + $0x50] sm:$0xff]
      %v544 = vld [vmem:[%s311 + $0x60] sm:$0xff]
      %v545 = vld [vmem:[%s311 + $0x68] sm:$0xff]
      %v546 = vld [vmem:[%s311 + $0x78] sm:$0xff]
      %v547 = vld [vmem:[%s311 + $0x80] sm:$0xff]
      %v548 = vld [vmem:[%s311 + $0x90] sm:$0xff]
      %v549 = vld [vmem:[%s311 + $0x98] sm:$0xff]
      %v550 = vld [vmem:[%s311 + $0xa8] sm:$0xff]
      %v551 = vld [vmem:[%s311 + $0xb0] sm:$0xff]
      %v552 = vld [vmem:[%s311 + $0xc0] sm:$0xff]
      %v553 = vld [vmem:[%s311 + $0xc8] sm:$0xff]
      %v554 = vld [vmem:[%s311 + $0xd8] sm:$0xff]
      %v555 = vld [vmem:[%s311 + $0xe0] sm:$0xff]
      %v556 = vld [vmem:[%s311 + $0xf0] sm:$0xff]
      %v557 = vld [vmem:[%s311 + $0xf8] sm:$0xff]
      %v558 = vld [vmem:[%s311 + $0x108] sm:$0xff]
      %v559 = vld [vmem:[%s311 + $0x110] sm:$0xff]
      %v560 = vld [vmem:[%s311 + $0x120] sm:$0xff]
      %v561 = vld [vmem:[%s311 + $0x128] sm:$0xff]
      %v562 = vld [vmem:[%s311 + $0x138] sm:$0xff]
      %v563 = vld [vmem:[%s311 + $0x140] sm:$0xff]
      %v564 = vld [vmem:[%s311 + $0x150] sm:$0xff]
      %v565 = vld [vmem:[%s311 + $0x158] sm:$0xff]
      %v566 = vld [vmem:[%s311 + $0x168] sm:$0xff]
      %v567 = vld [vmem:[%s311 + $0x170] sm:$0xff]
      %568 = vst [vmem:[#allocation3 + $0x18] sm:$0xff] %v536
      %569 = vst [vmem:[#allocation3 + $0x60] sm:$0xff] %v537
      %570 = vst [vmem:[#allocation3 + $0xa8] sm:$0xff] %v538
      %571 = vst [vmem:[#allocation3 + $0xf0] sm:$0xff] %v539
      %572 = vst [vmem:[#allocation3 + $0x138] sm:$0xff] %v540
      %573 = vst [vmem:[#allocation3 + $0x180] sm:$0xff] %v541
      %574 = vst [vmem:[#allocation3 + $0x1c8] sm:$0xff] %v542
      %575 = vst [vmem:[#allocation3 + $0x210] sm:$0xff] %v543
      %576 = vst [vmem:[#allocation3 + $0x258] sm:$0xff] %v544
      %577 = vst [vmem:[#allocation3 + $0x2a0] sm:$0xff] %v545
      %578 = vst [vmem:[#allocation3 + $0x2e8] sm:$0xff] %v546
      %579 = vst [vmem:[#allocation3 + $0x330] sm:$0xff] %v547
      %580 = vst [vmem:[#allocation3 + $0x378] sm:$0xff] %v548
      %581 = vst [vmem:[#allocation3 + $0x3c0] sm:$0xff] %v549
      %582 = vst [vmem:[#allocation3 + $0x408] sm:$0xff] %v550
      %583 = vst [vmem:[#allocation3 + $0x450] sm:$0xff] %v551
      %584 = vst [vmem:[#allocation3 + $0x498] sm:$0xff] %v552
      %585 = vst [vmem:[#allocation3 + $0x4e0] sm:$0xff] %v553
      %586 = vst [vmem:[#allocation3 + $0x528] sm:$0xff] %v554
      %587 = vst [vmem:[#allocation3 + $0x570] sm:$0xff] %v555
      %588 = vst [vmem:[#allocation3 + $0x5b8] sm:$0xff] %v556
      %589 = vst [vmem:[#allocation3 + $0x600] sm:$0xff] %v557
      %590 = vst [vmem:[#allocation3 + $0x648] sm:$0xff] %v558
      %591 = vst [vmem:[#allocation3 + $0x690] sm:$0xff] %v559
      %592 = vst [vmem:[#allocation3 + $0x6d8] sm:$0xff] %v560
      %593 = vst [vmem:[#allocation3 + $0x720] sm:$0xff] %v561
      %594 = vst [vmem:[#allocation3 + $0x768] sm:$0xff] %v562
      %595 = vst [vmem:[#allocation3 + $0x7b0] sm:$0xff] %v563
      %596 = vst [vmem:[#allocation3 + $0x7f8] sm:$0xff] %v564
      %597 = vst [vmem:[#allocation3 + $0x840] sm:$0xff] %v565
      %598 = vst [vmem:[#allocation3 + $0x888] sm:$0xff] %v566
      %599 = vst [vmem:[#allocation3 + $0x8d0] sm:$0xff] %v567
      %v600 = vld [vmem:[%s311 + $0x1] sm:$0xff]
      %v601 = vld [vmem:[%s311 + $0x9] sm:$0xff]
      %v602 = vld [vmem:[%s311 + $0x19] sm:$0xff]
      %v603 = vld [vmem:[%s311 + $0x21] sm:$0xff]
      %v604 = vld [vmem:[%s311 + $0x31] sm:$0xff]
      %v605 = vld [vmem:[%s311 + $0x39] sm:$0xff]
      %v606 = vld [vmem:[%s311 + $0x49] sm:$0xff]
      %v607 = vld [vmem:[%s311 + $0x51] sm:$0xff]
      %v608 = vld [vmem:[%s311 + $0x61] sm:$0xff]
      %v609 = vld [vmem:[%s311 + $0x69] sm:$0xff]
      %v610 = vld [vmem:[%s311 + $0x79] sm:$0xff]
      %v611 = vld [vmem:[%s311 + $0x81] sm:$0xff]
      %v612 = vld [vmem:[%s311 + $0x91] sm:$0xff]
      %v613 = vld [vmem:[%s311 + $0x99] sm:$0xff]
      %v614 = vld [vmem:[%s311 + $0xa9] sm:$0xff]
      %v615 = vld [vmem:[%s311 + $0xb1] sm:$0xff]
      %v616 = vld [vmem:[%s311 + $0xc1] sm:$0xff]
      %v617 = vld [vmem:[%s311 + $0xc9] sm:$0xff]
      %v618 = vld [vmem:[%s311 + $0xd9] sm:$0xff]
      %v619 = vld [vmem:[%s311 + $0xe1] sm:$0xff]
      %v620 = vld [vmem:[%s311 + $0xf1] sm:$0xff]
      %v621 = vld [vmem:[%s311 + $0xf9] sm:$0xff]
      %v622 = vld [vmem:[%s311 + $0x109] sm:$0xff]
      %v623 = vld [vmem:[%s311 + $0x111] sm:$0xff]
      %v624 = vld [vmem:[%s311 + $0x121] sm:$0xff]
      %v625 = vld [vmem:[%s311 + $0x129] sm:$0xff]
      %v626 = vld [vmem:[%s311 + $0x139] sm:$0xff]
      %v627 = vld [vmem:[%s311 + $0x141] sm:$0xff]
      %v628 = vld [vmem:[%s311 + $0x151] sm:$0xff]
      %v629 = vld [vmem:[%s311 + $0x159] sm:$0xff]
      %v630 = vld [vmem:[%s311 + $0x169] sm:$0xff]
      %v631 = vld [vmem:[%s311 + $0x171] sm:$0xff]
      %632 = vst [vmem:[#allocation3 + $0x20] sm:$0xff] %v600
      %633 = vst [vmem:[#allocation3 + $0x68] sm:$0xff] %v601
      %634 = vst [vmem:[#allocation3 + $0xb0] sm:$0xff] %v602
      %635 = vst [vmem:[#allocation3 + $0xf8] sm:$0xff] %v603
      %636 = vst [vmem:[#allocation3 + $0x140] sm:$0xff] %v604
      %637 = vst [vmem:[#allocation3 + $0x188] sm:$0xff] %v605
      %638 = vst [vmem:[#allocation3 + $0x1d0] sm:$0xff] %v606
      %639 = vst [vmem:[#allocation3 + $0x218] sm:$0xff] %v607
      %640 = vst [vmem:[#allocation3 + $0x260] sm:$0xff] %v608
      %641 = vst [vmem:[#allocation3 + $0x2a8] sm:$0xff] %v609
      %642 = vst [vmem:[#allocation3 + $0x2f0] sm:$0xff] %v610
      %643 = vst [vmem:[#allocation3 + $0x338] sm:$0xff] %v611
      %644 = vst [vmem:[#allocation3 + $0x380] sm:$0xff] %v612
      %645 = vst [vmem:[#allocation3 + $0x3c8] sm:$0xff] %v613
      %646 = vst [vmem:[#allocation3 + $0x410] sm:$0xff] %v614
      %647 = vst [vmem:[#allocation3 + $0x458] sm:$0xff] %v615
      %648 = vst [vmem:[#allocation3 + $0x4a0] sm:$0xff] %v616
      %649 = vst [vmem:[#allocation3 + $0x4e8] sm:$0xff] %v617
      %650 = vst [vmem:[#allocation3 + $0x530] sm:$0xff] %v618
      %651 = vst [vmem:[#allocation3 + $0x578] sm:$0xff] %v619
      %652 = vst [vmem:[#allocation3 + $0x5c0] sm:$0xff] %v620
      %653 = vst [vmem:[#allocation3 + $0x608] sm:$0xff] %v621
      %654 = vst [vmem:[#allocation3 + $0x650] sm:$0xff] %v622
      %655 = vst [vmem:[#allocation3 + $0x698] sm:$0xff] %v623
      %656 = vst [vmem:[#allocation3 + $0x6e0] sm:$0xff] %v624
      %657 = vst [vmem:[#allocation3 + $0x728] sm:$0xff] %v625
      %658 = vst [vmem:[#allocation3 + $0x770] sm:$0xff] %v626
      %659 = vst [vmem:[#allocation3 + $0x7b8] sm:$0xff] %v627
      %660 = vst [vmem:[#allocation3 + $0x800] sm:$0xff] %v628
      %661 = vst [vmem:[#allocation3 + $0x848] sm:$0xff] %v629
      %662 = vst [vmem:[#allocation3 + $0x890] sm:$0xff] %v630
      %663 = vst [vmem:[#allocation3 + $0x8d8] sm:$0xff] %v631
      %v664 = vld [vmem:[%s311 + $0x2] sm:$0xff]
      %v665 = vld [vmem:[%s311 + $0xa] sm:$0xff]
      %v666 = vld [vmem:[%s311 + $0x1a] sm:$0xff]
      %v667 = vld [vmem:[%s311 + $0x22] sm:$0xff]
      %v668 = vld [vmem:[%s311 + $0x32] sm:$0xff]
      %v669 = vld [vmem:[%s311 + $0x3a] sm:$0xff]
      %v670 = vld [vmem:[%s311 + $0x4a] sm:$0xff]
      %v671 = vld [vmem:[%s311 + $0x52] sm:$0xff]
      %v672 = vld [vmem:[%s311 + $0x62] sm:$0xff]
      %v673 = vld [vmem:[%s311 + $0x6a] sm:$0xff]
      %v674 = vld [vmem:[%s311 + $0x7a] sm:$0xff]
      %v675 = vld [vmem:[%s311 + $0x82] sm:$0xff]
      %v676 = vld [vmem:[%s311 + $0x92] sm:$0xff]
      %v677 = vld [vmem:[%s311 + $0x9a] sm:$0xff]
      %v678 = vld [vmem:[%s311 + $0xaa] sm:$0xff]
      %v679 = vld [vmem:[%s311 + $0xb2] sm:$0xff]
      %v680 = vld [vmem:[%s311 + $0xc2] sm:$0xff]
      %v681 = vld [vmem:[%s311 + $0xca] sm:$0xff]
      %v682 = vld [vmem:[%s311 + $0xda] sm:$0xff]
      %v683 = vld [vmem:[%s311 + $0xe2] sm:$0xff]
      %v684 = vld [vmem:[%s311 + $0xf2] sm:$0xff]
      %v685 = vld [vmem:[%s311 + $0xfa] sm:$0xff]
      %v686 = vld [vmem:[%s311 + $0x10a] sm:$0xff]
      %v687 = vld [vmem:[%s311 + $0x112] sm:$0xff]
      %v688 = vld [vmem:[%s311 + $0x122] sm:$0xff]
      %v689 = vld [vmem:[%s311 + $0x12a] sm:$0xff]
      %v690 = vld [vmem:[%s311 + $0x13a] sm:$0xff]
      %v691 = vld [vmem:[%s311 + $0x142] sm:$0xff]
      %v692 = vld [vmem:[%s311 + $0x152] sm:$0xff]
      %v693 = vld [vmem:[%s311 + $0x15a] sm:$0xff]
      %v694 = vld [vmem:[%s311 + $0x16a] sm:$0xff]
      %v695 = vld [vmem:[%s311 + $0x172] sm:$0xff]
      %696 = vst [vmem:[#allocation3 + $0x28] sm:$0xff] %v664
      %697 = vst [vmem:[#allocation3 + $0x70] sm:$0xff] %v665
      %698 = vst [vmem:[#allocation3 + $0xb8] sm:$0xff] %v666
      %699 = vst [vmem:[#allocation3 + $0x100] sm:$0xff] %v667
      %700 = vst [vmem:[#allocation3 + $0x148] sm:$0xff] %v668
      %701 = vst [vmem:[#allocation3 + $0x190] sm:$0xff] %v669
      %702 = vst [vmem:[#allocation3 + $0x1d8] sm:$0xff] %v670
      %703 = vst [vmem:[#allocation3 + $0x220] sm:$0xff] %v671
      %704 = vst [vmem:[#allocation3 + $0x268] sm:$0xff] %v672
      %705 = vst [vmem:[#allocation3 + $0x2b0] sm:$0xff] %v673
      %706 = vst [vmem:[#allocation3 + $0x2f8] sm:$0xff] %v674
      %707 = vst [vmem:[#allocation3 + $0x340] sm:$0xff] %v675
      %708 = vst [vmem:[#allocation3 + $0x388] sm:$0xff] %v676
      %709 = vst [vmem:[#allocation3 + $0x3d0] sm:$0xff] %v677
      %710 = vst [vmem:[#allocation3 + $0x418] sm:$0xff] %v678
      %711 = vst [vmem:[#allocation3 + $0x460] sm:$0xff] %v679
      %712 = vst [vmem:[#allocation3 + $0x4a8] sm:$0xff] %v680
      %713 = vst [vmem:[#allocation3 + $0x4f0] sm:$0xff] %v681
      %714 = vst [vmem:[#allocation3 + $0x538] sm:$0xff] %v682
      %715 = vst [vmem:[#allocation3 + $0x580] sm:$0xff] %v683
      %716 = vst [vmem:[#allocation3 + $0x5c8] sm:$0xff] %v684
      %717 = vst [vmem:[#allocation3 + $0x610] sm:$0xff] %v685
      %718 = vst [vmem:[#allocation3 + $0x658] sm:$0xff] %v686
      %719 = vst [vmem:[#allocation3 + $0x6a0] sm:$0xff] %v687
      %720 = vst [vmem:[#allocation3 + $0x6e8] sm:$0xff] %v688
      %721 = vst [vmem:[#allocation3 + $0x730] sm:$0xff] %v689
      %722 = vst [vmem:[#allocation3 + $0x778] sm:$0xff] %v690
      %723 = vst [vmem:[#allocation3 + $0x7c0] sm:$0xff] %v691
      %724 = vst [vmem:[#allocation3 + $0x808] sm:$0xff] %v692
      %725 = vst [vmem:[#allocation3 + $0x850] sm:$0xff] %v693
      %726 = vst [vmem:[#allocation3 + $0x898] sm:$0xff] %v694
      %727 = vst [vmem:[#allocation3 + $0x8e0] sm:$0xff] %v695
      %s728 = scalar_lea.vmem [#allocation2], 48
      %v729 = vld [vmem:[%s728] sm:$0xff]
      %v730 = vld [vmem:[%s728 + $0x8] sm:$0xff]
      %v731 = vld [vmem:[%s728 + $0x18] sm:$0xff]
      %v732 = vld [vmem:[%s728 + $0x20] sm:$0xff]
      %v733 = vld [vmem:[%s728 + $0x30] sm:$0xff]
      %v734 = vld [vmem:[%s728 + $0x38] sm:$0xff]
      %v735 = vld [vmem:[%s728 + $0x48] sm:$0xff]
      %v736 = vld [vmem:[%s728 + $0x50] sm:$0xff]
      %v737 = vld [vmem:[%s728 + $0x60] sm:$0xff]
      %v738 = vld [vmem:[%s728 + $0x68] sm:$0xff]
      %v739 = vld [vmem:[%s728 + $0x78] sm:$0xff]
      %v740 = vld [vmem:[%s728 + $0x80] sm:$0xff]
      %v741 = vld [vmem:[%s728 + $0x90] sm:$0xff]
      %v742 = vld [vmem:[%s728 + $0x98] sm:$0xff]
      %v743 = vld [vmem:[%s728 + $0xa8] sm:$0xff]
      %v744 = vld [vmem:[%s728 + $0xb0] sm:$0xff]
      %v745 = vld [vmem:[%s728 + $0xc0] sm:$0xff]
      %v746 = vld [vmem:[%s728 + $0xc8] sm:$0xff]
      %v747 = vld [vmem:[%s728 + $0xd8] sm:$0xff]
      %v748 = vld [vmem:[%s728 + $0xe0] sm:$0xff]
      %v749 = vld [vmem:[%s728 + $0xf0] sm:$0xff]
      %v750 = vld [vmem:[%s728 + $0xf8] sm:$0xff]
      %v751 = vld [vmem:[%s728 + $0x108] sm:$0xff]
      %v752 = vld [vmem:[%s728 + $0x110] sm:$0xff]
      %v753 = vld [vmem:[%s728 + $0x120] sm:$0xff]
      %v754 = vld [vmem:[%s728 + $0x128] sm:$0xff]
      %v755 = vld [vmem:[%s728 + $0x138] sm:$0xff]
      %v756 = vld [vmem:[%s728 + $0x140] sm:$0xff]
      %v757 = vld [vmem:[%s728 + $0x150] sm:$0xff]
      %v758 = vld [vmem:[%s728 + $0x158] sm:$0xff]
      %v759 = vld [vmem:[%s728 + $0x168] sm:$0xff]
      %v760 = vld [vmem:[%s728 + $0x170] sm:$0xff]
      %761 = vst [vmem:[#allocation3 + $0x30] sm:$0xff] %v729
      %762 = vst [vmem:[#allocation3 + $0x78] sm:$0xff] %v730
      %763 = vst [vmem:[#allocation3 + $0xc0] sm:$0xff] %v731
      %764 = vst [vmem:[#allocation3 + $0x108] sm:$0xff] %v732
      %765 = vst [vmem:[#allocation3 + $0x150] sm:$0xff] %v733
      %766 = vst [vmem:[#allocation3 + $0x198] sm:$0xff] %v734
      %767 = vst [vmem:[#allocation3 + $0x1e0] sm:$0xff] %v735
      %768 = vst [vmem:[#allocation3 + $0x228] sm:$0xff] %v736
      %769 = vst [vmem:[#allocation3 + $0x270] sm:$0xff] %v737
      %770 = vst [vmem:[#allocation3 + $0x2b8] sm:$0xff] %v738
      %771 = vst [vmem:[#allocation3 + $0x300] sm:$0xff] %v739
      %772 = vst [vmem:[#allocation3 + $0x348] sm:$0xff] %v740
      %773 = vst [vmem:[#allocation3 + $0x390] sm:$0xff] %v741
      %774 = vst [vmem:[#allocation3 + $0x3d8] sm:$0xff] %v742
      %775 = vst [vmem:[#allocation3 + $0x420] sm:$0xff] %v743
      %776 = vst [vmem:[#allocation3 + $0x468] sm:$0xff] %v744
      %777 = vst [vmem:[#allocation3 + $0x4b0] sm:$0xff] %v745
      %778 = vst [vmem:[#allocation3 + $0x4f8] sm:$0xff] %v746
      %779 = vst [vmem:[#allocation3 + $0x540] sm:$0xff] %v747
      %780 = vst [vmem:[#allocation3 + $0x588] sm:$0xff] %v748
      %781 = vst [vmem:[#allocation3 + $0x5d0] sm:$0xff] %v749
      %782 = vst [vmem:[#allocation3 + $0x618] sm:$0xff] %v750
      %783 = vst [vmem:[#allocation3 + $0x660] sm:$0xff] %v751
      %784 = vst [vmem:[#allocation3 + $0x6a8] sm:$0xff] %v752
      %785 = vst [vmem:[#allocation3 + $0x6f0] sm:$0xff] %v753
      %786 = vst [vmem:[#allocation3 + $0x738] sm:$0xff] %v754
      %787 = vst [vmem:[#allocation3 + $0x780] sm:$0xff] %v755
      %788 = vst [vmem:[#allocation3 + $0x7c8] sm:$0xff] %v756
      %789 = vst [vmem:[#allocation3 + $0x810] sm:$0xff] %v757
      %790 = vst [vmem:[#allocation3 + $0x858] sm:$0xff] %v758
      %791 = vst [vmem:[#allocation3 + $0x8a0] sm:$0xff] %v759
      %792 = vst [vmem:[#allocation3 + $0x8e8] sm:$0xff] %v760
      %v793 = vld [vmem:[%s728 + $0x1] sm:$0xff]
      %v794 = vld [vmem:[%s728 + $0x9] sm:$0xff]
      %v795 = vld [vmem:[%s728 + $0x19] sm:$0xff]
      %v796 = vld [vmem:[%s728 + $0x21] sm:$0xff]
      %v797 = vld [vmem:[%s728 + $0x31] sm:$0xff]
      %v798 = vld [vmem:[%s728 + $0x39] sm:$0xff]
      %v799 = vld [vmem:[%s728 + $0x49] sm:$0xff]
      %v800 = vld [vmem:[%s728 + $0x51] sm:$0xff]
      %v801 = vld [vmem:[%s728 + $0x61] sm:$0xff]
      %v802 = vld [vmem:[%s728 + $0x69] sm:$0xff]
      %v803 = vld [vmem:[%s728 + $0x79] sm:$0xff]
      %v804 = vld [vmem:[%s728 + $0x81] sm:$0xff]
      %v805 = vld [vmem:[%s728 + $0x91] sm:$0xff]
      %v806 = vld [vmem:[%s728 + $0x99] sm:$0xff]
      %v807 = vld [vmem:[%s728 + $0xa9] sm:$0xff]
      %v808 = vld [vmem:[%s728 + $0xb1] sm:$0xff]
      %v809 = vld [vmem:[%s728 + $0xc1] sm:$0xff]
      %v810 = vld [vmem:[%s728 + $0xc9] sm:$0xff]
      %v811 = vld [vmem:[%s728 + $0xd9] sm:$0xff]
      %v812 = vld [vmem:[%s728 + $0xe1] sm:$0xff]
      %v813 = vld [vmem:[%s728 + $0xf1] sm:$0xff]
      %v814 = vld [vmem:[%s728 + $0xf9] sm:$0xff]
      %v815 = vld [vmem:[%s728 + $0x109] sm:$0xff]
      %v816 = vld [vmem:[%s728 + $0x111] sm:$0xff]
      %v817 = vld [vmem:[%s728 + $0x121] sm:$0xff]
      %v818 = vld [vmem:[%s728 + $0x129] sm:$0xff]
      %v819 = vld [vmem:[%s728 + $0x139] sm:$0xff]
      %v820 = vld [vmem:[%s728 + $0x141] sm:$0xff]
      %v821 = vld [vmem:[%s728 + $0x151] sm:$0xff]
      %v822 = vld [vmem:[%s728 + $0x159] sm:$0xff]
      %v823 = vld [vmem:[%s728 + $0x169] sm:$0xff]
      %v824 = vld [vmem:[%s728 + $0x171] sm:$0xff]
      %825 = vst [vmem:[#allocation3 + $0x38] sm:$0xff] %v793
      %826 = vst [vmem:[#allocation3 + $0x80] sm:$0xff] %v794
      %827 = vst [vmem:[#allocation3 + $0xc8] sm:$0xff] %v795
      %828 = vst [vmem:[#allocation3 + $0x110] sm:$0xff] %v796
      %829 = vst [vmem:[#allocation3 + $0x158] sm:$0xff] %v797
      %830 = vst [vmem:[#allocation3 + $0x1a0] sm:$0xff] %v798
      %831 = vst [vmem:[#allocation3 + $0x1e8] sm:$0xff] %v799
      %832 = vst [vmem:[#allocation3 + $0x230] sm:$0xff] %v800
      %833 = vst [vmem:[#allocation3 + $0x278] sm:$0xff] %v801
      %834 = vst [vmem:[#allocation3 + $0x2c0] sm:$0xff] %v802
      %835 = vst [vmem:[#allocation3 + $0x308] sm:$0xff] %v803
      %836 = vst [vmem:[#allocation3 + $0x350] sm:$0xff] %v804
      %837 = vst [vmem:[#allocation3 + $0x398] sm:$0xff] %v805
      %838 = vst [vmem:[#allocation3 + $0x3e0] sm:$0xff] %v806
      %839 = vst [vmem:[#allocation3 + $0x428] sm:$0xff] %v807
      %840 = vst [vmem:[#allocation3 + $0x470] sm:$0xff] %v808
      %841 = vst [vmem:[#allocation3 + $0x4b8] sm:$0xff] %v809
      %842 = vst [vmem:[#allocation3 + $0x500] sm:$0xff] %v810
      %843 = vst [vmem:[#allocation3 + $0x548] sm:$0xff] %v811
      %844 = vst [vmem:[#allocation3 + $0x590] sm:$0xff] %v812
      %845 = vst [vmem:[#allocation3 + $0x5d8] sm:$0xff] %v813
      %846 = vst [vmem:[#allocation3 + $0x620] sm:$0xff] %v814
      %847 = vst [vmem:[#allocation3 + $0x668] sm:$0xff] %v815
      %848 = vst [vmem:[#allocation3 + $0x6b0] sm:$0xff] %v816
      %849 = vst [vmem:[#allocation3 + $0x6f8] sm:$0xff] %v817
      %850 = vst [vmem:[#allocation3 + $0x740] sm:$0xff] %v818
      %851 = vst [vmem:[#allocation3 + $0x788] sm:$0xff] %v819
      %852 = vst [vmem:[#allocation3 + $0x7d0] sm:$0xff] %v820
      %853 = vst [vmem:[#allocation3 + $0x818] sm:$0xff] %v821
      %854 = vst [vmem:[#allocation3 + $0x860] sm:$0xff] %v822
      %855 = vst [vmem:[#allocation3 + $0x8a8] sm:$0xff] %v823
      %856 = vst [vmem:[#allocation3 + $0x8f0] sm:$0xff] %v824
      %v857 = vld [vmem:[%s728 + $0x2] sm:$0xff]
      %v858 = vld [vmem:[%s728 + $0xa] sm:$0xff]
      %v859 = vld [vmem:[%s728 + $0x1a] sm:$0xff]
      %v860 = vld [vmem:[%s728 + $0x22] sm:$0xff]
      %v861 = vld [vmem:[%s728 + $0x32] sm:$0xff]
      %v862 = vld [vmem:[%s728 + $0x3a] sm:$0xff]
      %v863 = vld [vmem:[%s728 + $0x4a] sm:$0xff]
      %v864 = vld [vmem:[%s728 + $0x52] sm:$0xff]
      %v865 = vld [vmem:[%s728 + $0x62] sm:$0xff]
      %v866 = vld [vmem:[%s728 + $0x6a] sm:$0xff]
      %v867 = vld [vmem:[%s728 + $0x7a] sm:$0xff]
      %v868 = vld [vmem:[%s728 + $0x82] sm:$0xff]
      %v869 = vld [vmem:[%s728 + $0x92] sm:$0xff]
      %v870 = vld [vmem:[%s728 + $0x9a] sm:$0xff]
      %v871 = vld [vmem:[%s728 + $0xaa] sm:$0xff]
      %v872 = vld [vmem:[%s728 + $0xb2] sm:$0xff]
      %v873 = vld [vmem:[%s728 + $0xc2] sm:$0xff]
      %v874 = vld [vmem:[%s728 + $0xca] sm:$0xff]
      %v875 = vld [vmem:[%s728 + $0xda] sm:$0xff]
      %v876 = vld [vmem:[%s728 + $0xe2] sm:$0xff]
      %v877 = vld [vmem:[%s728 + $0xf2] sm:$0xff]
      %v878 = vld [vmem:[%s728 + $0xfa] sm:$0xff]
      %v879 = vld [vmem:[%s728 + $0x10a] sm:$0xff]
      %v880 = vld [vmem:[%s728 + $0x112] sm:$0xff]
      %v881 = vld [vmem:[%s728 + $0x122] sm:$0xff]
      %v882 = vld [vmem:[%s728 + $0x12a] sm:$0xff]
      %v883 = vld [vmem:[%s728 + $0x13a] sm:$0xff]
      %v884 = vld [vmem:[%s728 + $0x142] sm:$0xff]
      %v885 = vld [vmem:[%s728 + $0x152] sm:$0xff]
      %v886 = vld [vmem:[%s728 + $0x15a] sm:$0xff]
      %v887 = vld [vmem:[%s728 + $0x16a] sm:$0xff]
      %v888 = vld [vmem:[%s728 + $0x172] sm:$0xff]
      %889 = vst [vmem:[#allocation3 + $0x40] sm:$0xff] %v857
      %890 = vst [vmem:[#allocation3 + $0x88] sm:$0xff] %v858
      %891 = vst [vmem:[#allocation3 + $0xd0] sm:$0xff] %v859
      %892 = vst [vmem:[#allocation3 + $0x118] sm:$0xff] %v860
      %893 = vst [vmem:[#allocation3 + $0x160] sm:$0xff] %v861
      %894 = vst [vmem:[#allocation3 + $0x1a8] sm:$0xff] %v862
      %895 = vst [vmem:[#allocation3 + $0x1f0] sm:$0xff] %v863
      %896 = vst [vmem:[#allocation3 + $0x238] sm:$0xff] %v864
      %897 = vst [vmem:[#allocation3 + $0x280] sm:$0xff] %v865
      %898 = vst [vmem:[#allocation3 + $0x2c8] sm:$0xff] %v866
      %899 = vst [vmem:[#allocation3 + $0x310] sm:$0xff] %v867
      %900 = vst [vmem:[#allocation3 + $0x358] sm:$0xff] %v868
      %901 = vst [vmem:[#allocation3 + $0x3a0] sm:$0xff] %v869
      %902 = vst [vmem:[#allocation3 + $0x3e8] sm:$0xff] %v870
      %903 = vst [vmem:[#allocation3 + $0x430] sm:$0xff] %v871
      %904 = vst [vmem:[#allocation3 + $0x478] sm:$0xff] %v872
      %905 = vst [vmem:[#allocation3 + $0x4c0] sm:$0xff] %v873
      %906 = vst [vmem:[#allocation3 + $0x508] sm:$0xff] %v874
      %907 = vst [vmem:[#allocation3 + $0x550] sm:$0xff] %v875
      %908 = vst [vmem:[#allocation3 + $0x598] sm:$0xff] %v876
      %909 = vst [vmem:[#allocation3 + $0x5e0] sm:$0xff] %v877
      %910 = vst [vmem:[#allocation3 + $0x628] sm:$0xff] %v878
      %911 = vst [vmem:[#allocation3 + $0x670] sm:$0xff] %v879
      %912 = vst [vmem:[#allocation3 + $0x6b8] sm:$0xff] %v880
      %913 = vst [vmem:[#allocation3 + $0x700] sm:$0xff] %v881
      %914 = vst [vmem:[#allocation3 + $0x748] sm:$0xff] %v882
      %915 = vst [vmem:[#allocation3 + $0x790] sm:$0xff] %v883
      %916 = vst [vmem:[#allocation3 + $0x7d8] sm:$0xff] %v884
      %917 = vst [vmem:[#allocation3 + $0x820] sm:$0xff] %v885
      %918 = vst [vmem:[#allocation3 + $0x868] sm:$0xff] %v886
      %919 = vst [vmem:[#allocation3 + $0x8b0] sm:$0xff] %v887
      %920 = vst [vmem:[#allocation3 + $0x8f8] sm:$0xff] %v888
      %v921 = vld [vmem:[#allocation3] sm:$0xff]
      %v922 = vld [vmem:[#allocation3 + $0x8] sm:$0xff]
      %v923 = vld [vmem:[#allocation3 + $0x10] sm:$0xff]
      %v924 = vld [vmem:[#allocation3 + $0x18] sm:$0xff]
      %v925 = vld [vmem:[#allocation3 + $0x20] sm:$0xff]
      %v926 = vld [vmem:[#allocation3 + $0x28] sm:$0xff]
      %v927 = vld [vmem:[#allocation3 + $0x30] sm:$0xff]
      %v928 = vld [vmem:[#allocation3 + $0x38] sm:$0xff]
      %v929 = vld [vmem:[#allocation3 + $0x40] sm:$0xff]
      %v930 = vld [vmem:[#allocation3 + $0x48] sm:$0xff]
      %v931 = vld [vmem:[#allocation3 + $0x50] sm:$0xff]
      %v932 = vld [vmem:[#allocation3 + $0x58] sm:$0xff]
      %v933 = vld [vmem:[#allocation3 + $0x60] sm:$0xff]
      %v934 = vld [vmem:[#allocation3 + $0x68] sm:$0xff]
      %v935 = vld [vmem:[#allocation3 + $0x70] sm:$0xff]
      %v936 = vld [vmem:[#allocation3 + $0x78] sm:$0xff]
      %v937 = vld [vmem:[#allocation3 + $0x80] sm:$0xff]
      %v938 = vld [vmem:[#allocation3 + $0x88] sm:$0xff]
      %v939 = vld [vmem:[#allocation3 + $0x90] sm:$0xff]
      %v940 = vld [vmem:[#allocation3 + $0x98] sm:$0xff]
      %v941 = vld [vmem:[#allocation3 + $0xa0] sm:$0xff]
      %v942 = vld [vmem:[#allocation3 + $0xa8] sm:$0xff]
      %v943 = vld [vmem:[#allocation3 + $0xb0] sm:$0xff]
      %v944 = vld [vmem:[#allocation3 + $0xb8] sm:$0xff]
      %v945 = vld [vmem:[#allocation3 + $0xc0] sm:$0xff]
      %v946 = vld [vmem:[#allocation3 + $0xc8] sm:$0xff]
      %v947 = vld [vmem:[#allocation3 + $0xd0] sm:$0xff]
      %v948 = vld [vmem:[#allocation3 + $0xd8] sm:$0xff]
      %v949 = vld [vmem:[#allocation3 + $0xe0] sm:$0xff]
      %v950 = vld [vmem:[#allocation3 + $0xe8] sm:$0xff]
      %v951 = vld [vmem:[#allocation3 + $0xf0] sm:$0xff]
      %v952 = vld [vmem:[#allocation3 + $0xf8] sm:$0xff]
      %v953 = vld [vmem:[#allocation3 + $0x100] sm:$0xff]
      %v954 = vld [vmem:[#allocation3 + $0x108] sm:$0xff]
      %v955 = vld [vmem:[#allocation3 + $0x110] sm:$0xff]
      %v956 = vld [vmem:[#allocation3 + $0x118] sm:$0xff]
      %v957 = vld [vmem:[#allocation3 + $0x120] sm:$0xff]
      %v958 = vld [vmem:[#allocation3 + $0x128] sm:$0xff]
      %v959 = vld [vmem:[#allocation3 + $0x130] sm:$0xff]
      %v960 = vld [vmem:[#allocation3 + $0x138] sm:$0xff]
      %v961 = vld [vmem:[#allocation3 + $0x140] sm:$0xff]
      %v962 = vld [vmem:[#allocation3 + $0x148] sm:$0xff]
      %v963 = vld [vmem:[#allocation3 + $0x150] sm:$0xff]
      %v964 = vld [vmem:[#allocation3 + $0x158] sm:$0xff]
      %v965 = vld [vmem:[#allocation3 + $0x160] sm:$0xff]
      %v966 = vld [vmem:[#allocation3 + $0x168] sm:$0xff]
      %v967 = vld [vmem:[#allocation3 + $0x170] sm:$0xff]
      %v968 = vld [vmem:[#allocation3 + $0x178] sm:$0xff]
      %v969 = vld [vmem:[#allocation3 + $0x180] sm:$0xff]
      %v970 = vld [vmem:[#allocation3 + $0x188] sm:$0xff]
      %v971 = vld [vmem:[#allocation3 + $0x190] sm:$0xff]
      %v972 = vld [vmem:[#allocation3 + $0x198] sm:$0xff]
      %v973 = vld [vmem:[#allocation3 + $0x1a0] sm:$0xff]
      %v974 = vld [vmem:[#allocation3 + $0x1a8] sm:$0xff]
      %v975 = vld [vmem:[#allocation3 + $0x1b0] sm:$0xff]
      %v976 = vld [vmem:[#allocation3 + $0x1b8] sm:$0xff]
      %v977 = vld [vmem:[#allocation3 + $0x1c0] sm:$0xff]
      %v978 = vld [vmem:[#allocation3 + $0x1c8] sm:$0xff]
      %v979 = vld [vmem:[#allocation3 + $0x1d0] sm:$0xff]
      %v980 = vld [vmem:[#allocation3 + $0x1d8] sm:$0xff]
      %v981 = vld [vmem:[#allocation3 + $0x1e0] sm:$0xff]
      %v982 = vld [vmem:[#allocation3 + $0x1e8] sm:$0xff]
      %v983 = vld [vmem:[#allocation3 + $0x1f0] sm:$0xff]
      %v984 = vld [vmem:[#allocation3 + $0x1f8] sm:$0xff]
      %v985 = vld [vmem:[#allocation3 + $0x200] sm:$0xff]
      %v986 = vld [vmem:[#allocation3 + $0x208] sm:$0xff]
      %v987 = vld [vmem:[#allocation3 + $0x210] sm:$0xff]
      %v988 = vld [vmem:[#allocation3 + $0x218] sm:$0xff]
      %v989 = vld [vmem:[#allocation3 + $0x220] sm:$0xff]
      %v990 = vld [vmem:[#allocation3 + $0x228] sm:$0xff]
      %v991 = vld [vmem:[#allocation3 + $0x230] sm:$0xff]
      %v992 = vld [vmem:[#allocation3 + $0x238] sm:$0xff]
      %v993 = vld [vmem:[#allocation3 + $0x240] sm:$0xff]
      %v994 = vld [vmem:[#allocation3 + $0x248] sm:$0xff]
      %v995 = vld [vmem:[#allocation3 + $0x250] sm:$0xff]
      %v996 = vld [vmem:[#allocation3 + $0x258] sm:$0xff]
      %v997 = vld [vmem:[#allocation3 + $0x260] sm:$0xff]
      %v998 = vld [vmem:[#allocation3 + $0x268] sm:$0xff]
      %v999 = vld [vmem:[#allocation3 + $0x270] sm:$0xff]
      %v1000 = vld [vmem:[#allocation3 + $0x278] sm:$0xff]
      %v1001 = vld [vmem:[#allocation3 + $0x280] sm:$0xff]
      %v1002 = vld [vmem:[#allocation3 + $0x288] sm:$0xff]
      %v1003 = vld [vmem:[#allocation3 + $0x290] sm:$0xff]
      %v1004 = vld [vmem:[#allocation3 + $0x298] sm:$0xff]
      %v1005 = vld [vmem:[#allocation3 + $0x2a0] sm:$0xff]
      %v1006 = vld [vmem:[#allocation3 + $0x2a8] sm:$0xff]
      %v1007 = vld [vmem:[#allocation3 + $0x2b0] sm:$0xff]
      %v1008 = vld [vmem:[#allocation3 + $0x2b8] sm:$0xff]
      %v1009 = vld [vmem:[#allocation3 + $0x2c0] sm:$0xff]
      %v1010 = vld [vmem:[#allocation3 + $0x2c8] sm:$0xff]
      %v1011 = vld [vmem:[#allocation3 + $0x2d0] sm:$0xff]
      %v1012 = vld [vmem:[#allocation3 + $0x2d8] sm:$0xff]
      %v1013 = vld [vmem:[#allocation3 + $0x2e0] sm:$0xff]
      %v1014 = vld [vmem:[#allocation3 + $0x2e8] sm:$0xff]
      %v1015 = vld [vmem:[#allocation3 + $0x2f0] sm:$0xff]
      %v1016 = vld [vmem:[#allocation3 + $0x2f8] sm:$0xff]
      %v1017 = vld [vmem:[#allocation3 + $0x300] sm:$0xff]
      %v1018 = vld [vmem:[#allocation3 + $0x308] sm:$0xff]
      %v1019 = vld [vmem:[#allocation3 + $0x310] sm:$0xff]
      %v1020 = vld [vmem:[#allocation3 + $0x318] sm:$0xff]
      %v1021 = vld [vmem:[#allocation3 + $0x320] sm:$0xff]
      %v1022 = vld [vmem:[#allocation3 + $0x328] sm:$0xff]
      %v1023 = vld [vmem:[#allocation3 + $0x330] sm:$0xff]
      %v1024 = vld [vmem:[#allocation3 + $0x338] sm:$0xff]
      %v1025 = vld [vmem:[#allocation3 + $0x340] sm:$0xff]
      %v1026 = vld [vmem:[#allocation3 + $0x348] sm:$0xff]
      %v1027 = vld [vmem:[#allocation3 + $0x350] sm:$0xff]
      %v1028 = vld [vmem:[#allocation3 + $0x358] sm:$0xff]
      %v1029 = vld [vmem:[#allocation3 + $0x360] sm:$0xff]
      %v1030 = vld [vmem:[#allocation3 + $0x368] sm:$0xff]
      %v1031 = vld [vmem:[#allocation3 + $0x370] sm:$0xff]
      %v1032 = vld [vmem:[#allocation3 + $0x378] sm:$0xff]
      %v1033 = vld [vmem:[#allocation3 + $0x380] sm:$0xff]
      %v1034 = vld [vmem:[#allocation3 + $0x388] sm:$0xff]
      %v1035 = vld [vmem:[#allocation3 + $0x390] sm:$0xff]
      %v1036 = vld [vmem:[#allocation3 + $0x398] sm:$0xff]
      %v1037 = vld [vmem:[#allocation3 + $0x3a0] sm:$0xff]
      %v1038 = vld [vmem:[#allocation3 + $0x3a8] sm:$0xff]
      %v1039 = vld [vmem:[#allocation3 + $0x3b0] sm:$0xff]
      %v1040 = vld [vmem:[#allocation3 + $0x3b8] sm:$0xff]
      %v1041 = vld [vmem:[#allocation3 + $0x3c0] sm:$0xff]
      %v1042 = vld [vmem:[#allocation3 + $0x3c8] sm:$0xff]
      %v1043 = vld [vmem:[#allocation3 + $0x3d0] sm:$0xff]
      %v1044 = vld [vmem:[#allocation3 + $0x3d8] sm:$0xff]
      %v1045 = vld [vmem:[#allocation3 + $0x3e0] sm:$0xff]
      %v1046 = vld [vmem:[#allocation3 + $0x3e8] sm:$0xff]
      %v1047 = vld [vmem:[#allocation3 + $0x3f0] sm:$0xff]
      %v1048 = vld [vmem:[#allocation3 + $0x3f8] sm:$0xff]
      %v1049 = vld [vmem:[#allocation3 + $0x400] sm:$0xff]
      %v1050 = vld [vmem:[#allocation3 + $0x408] sm:$0xff]
      %v1051 = vld [vmem:[#allocation3 + $0x410] sm:$0xff]
      %v1052 = vld [vmem:[#allocation3 + $0x418] sm:$0xff]
      %v1053 = vld [vmem:[#allocation3 + $0x420] sm:$0xff]
      %v1054 = vld [vmem:[#allocation3 + $0x428] sm:$0xff]
      %v1055 = vld [vmem:[#allocation3 + $0x430] sm:$0xff]
      %v1056 = vld [vmem:[#allocation3 + $0x438] sm:$0xff]
      %v1057 = vld [vmem:[#allocation3 + $0x440] sm:$0xff]
      %v1058 = vld [vmem:[#allocation3 + $0x448] sm:$0xff]
      %v1059 = vld [vmem:[#allocation3 + $0x450] sm:$0xff]
      %v1060 = vld [vmem:[#allocation3 + $0x458] sm:$0xff]
      %v1061 = vld [vmem:[#allocation3 + $0x460] sm:$0xff]
      %v1062 = vld [vmem:[#allocation3 + $0x468] sm:$0xff]
      %v1063 = vld [vmem:[#allocation3 + $0x470] sm:$0xff]
      %v1064 = vld [vmem:[#allocation3 + $0x478] sm:$0xff]
      %v1065 = vld [vmem:[#allocation3 + $0x480] sm:$0xff]
      %v1066 = vld [vmem:[#allocation3 + $0x488] sm:$0xff]
      %v1067 = vld [vmem:[#allocation3 + $0x490] sm:$0xff]
      %v1068 = vld [vmem:[#allocation3 + $0x498] sm:$0xff]
      %v1069 = vld [vmem:[#allocation3 + $0x4a0] sm:$0xff]
      %v1070 = vld [vmem:[#allocation3 + $0x4a8] sm:$0xff]
      %v1071 = vld [vmem:[#allocation3 + $0x4b0] sm:$0xff]
      %v1072 = vld [vmem:[#allocation3 + $0x4b8] sm:$0xff]
      %v1073 = vld [vmem:[#allocation3 + $0x4c0] sm:$0xff]
      %v1074 = vld [vmem:[#allocation3 + $0x4c8] sm:$0xff]
      %v1075 = vld [vmem:[#allocation3 + $0x4d0] sm:$0xff]
      %v1076 = vld [vmem:[#allocation3 + $0x4d8] sm:$0xff]
      %v1077 = vld [vmem:[#allocation3 + $0x4e0] sm:$0xff]
      %v1078 = vld [vmem:[#allocation3 + $0x4e8] sm:$0xff]
      %v1079 = vld [vmem:[#allocation3 + $0x4f0] sm:$0xff]
      %v1080 = vld [vmem:[#allocation3 + $0x4f8] sm:$0xff]
      %v1081 = vld [vmem:[#allocation3 + $0x500] sm:$0xff]
      %v1082 = vld [vmem:[#allocation3 + $0x508] sm:$0xff]
      %v1083 = vld [vmem:[#allocation3 + $0x510] sm:$0xff]
      %v1084 = vld [vmem:[#allocation3 + $0x518] sm:$0xff]
      %v1085 = vld [vmem:[#allocation3 + $0x520] sm:$0xff]
      %v1086 = vld [vmem:[#allocation3 + $0x528] sm:$0xff]
      %v1087 = vld [vmem:[#allocation3 + $0x530] sm:$0xff]
      %v1088 = vld [vmem:[#allocation3 + $0x538] sm:$0xff]
      %v1089 = vld [vmem:[#allocation3 + $0x540] sm:$0xff]
      %v1090 = vld [vmem:[#allocation3 + $0x548] sm:$0xff]
      %v1091 = vld [vmem:[#allocation3 + $0x550] sm:$0xff]
      %v1092 = vld [vmem:[#allocation3 + $0x558] sm:$0xff]
      %v1093 = vld [vmem:[#allocation3 + $0x560] sm:$0xff]
      %v1094 = vld [vmem:[#allocation3 + $0x568] sm:$0xff]
      %v1095 = vld [vmem:[#allocation3 + $0x570] sm:$0xff]
      %v1096 = vld [vmem:[#allocation3 + $0x578] sm:$0xff]
      %v1097 = vld [vmem:[#allocation3 + $0x580] sm:$0xff]
      %v1098 = vld [vmem:[#allocation3 + $0x588] sm:$0xff]
      %v1099 = vld [vmem:[#allocation3 + $0x590] sm:$0xff]
      %v1100 = vld [vmem:[#allocation3 + $0x598] sm:$0xff]
      %v1101 = vld [vmem:[#allocation3 + $0x5a0] sm:$0xff]
      %v1102 = vld [vmem:[#allocation3 + $0x5a8] sm:$0xff]
      %v1103 = vld [vmem:[#allocation3 + $0x5b0] sm:$0xff]
      %v1104 = vld [vmem:[#allocation3 + $0x5b8] sm:$0xff]
      %v1105 = vld [vmem:[#allocation3 + $0x5c0] sm:$0xff]
      %v1106 = vld [vmem:[#allocation3 + $0x5c8] sm:$0xff]
      %v1107 = vld [vmem:[#allocation3 + $0x5d0] sm:$0xff]
      %v1108 = vld [vmem:[#allocation3 + $0x5d8] sm:$0xff]
      %v1109 = vld [vmem:[#allocation3 + $0x5e0] sm:$0xff]
      %v1110 = vld [vmem:[#allocation3 + $0x5e8] sm:$0xff]
      %v1111 = vld [vmem:[#allocation3 + $0x5f0] sm:$0xff]
      %v1112 = vld [vmem:[#allocation3 + $0x5f8] sm:$0xff]
      %v1113 = vld [vmem:[#allocation3 + $0x600] sm:$0xff]
      %v1114 = vld [vmem:[#allocation3 + $0x608] sm:$0xff]
      %v1115 = vld [vmem:[#allocation3 + $0x610] sm:$0xff]
      %v1116 = vld [vmem:[#allocation3 + $0x618] sm:$0xff]
      %v1117 = vld [vmem:[#allocation3 + $0x620] sm:$0xff]
      %v1118 = vld [vmem:[#allocation3 + $0x628] sm:$0xff]
      %v1119 = vld [vmem:[#allocation3 + $0x630] sm:$0xff]
      %v1120 = vld [vmem:[#allocation3 + $0x638] sm:$0xff]
      %v1121 = vld [vmem:[#allocation3 + $0x640] sm:$0xff]
      %v1122 = vld [vmem:[#allocation3 + $0x648] sm:$0xff]
      %v1123 = vld [vmem:[#allocation3 + $0x650] sm:$0xff]
      %v1124 = vld [vmem:[#allocation3 + $0x658] sm:$0xff]
      %v1125 = vld [vmem:[#allocation3 + $0x660] sm:$0xff]
      %v1126 = vld [vmem:[#allocation3 + $0x668] sm:$0xff]
      %v1127 = vld [vmem:[#allocation3 + $0x670] sm:$0xff]
      %v1128 = vld [vmem:[#allocation3 + $0x678] sm:$0xff]
      %v1129 = vld [vmem:[#allocation3 + $0x680] sm:$0xff]
      %v1130 = vld [vmem:[#allocation3 + $0x688] sm:$0xff]
      %v1131 = vld [vmem:[#allocation3 + $0x690] sm:$0xff]
      %v1132 = vld [vmem:[#allocation3 + $0x698] sm:$0xff]
      %v1133 = vld [vmem:[#allocation3 + $0x6a0] sm:$0xff]
      %v1134 = vld [vmem:[#allocation3 + $0x6a8] sm:$0xff]
      %v1135 = vld [vmem:[#allocation3 + $0x6b0] sm:$0xff]
      %v1136 = vld [vmem:[#allocation3 + $0x6b8] sm:$0xff]
      %v1137 = vld [vmem:[#allocation3 + $0x6c0] sm:$0xff]
      %v1138 = vld [vmem:[#allocation3 + $0x6c8] sm:$0xff]
      %v1139 = vld [vmem:[#allocation3 + $0x6d0] sm:$0xff]
      %v1140 = vld [vmem:[#allocation3 + $0x6d8] sm:$0xff]
      %v1141 = vld [vmem:[#allocation3 + $0x6e0] sm:$0xff]
      %v1142 = vld [vmem:[#allocation3 + $0x6e8] sm:$0xff]
      %v1143 = vld [vmem:[#allocation3 + $0x6f0] sm:$0xff]
      %v1144 = vld [vmem:[#allocation3 + $0x6f8] sm:$0xff]
      %v1145 = vld [vmem:[#allocation3 + $0x700] sm:$0xff]
      %v1146 = vld [vmem:[#allocation3 + $0x708] sm:$0xff]
      %v1147 = vld [vmem:[#allocation3 + $0x710] sm:$0xff]
      %v1148 = vld [vmem:[#allocation3 + $0x718] sm:$0xff]
      %v1149 = vld [vmem:[#allocation3 + $0x720] sm:$0xff]
      %v1150 = vld [vmem:[#allocation3 + $0x728] sm:$0xff]
      %v1151 = vld [vmem:[#allocation3 + $0x730] sm:$0xff]
      %v1152 = vld [vmem:[#allocation3 + $0x738] sm:$0xff]
      %v1153 = vld [vmem:[#allocation3 + $0x740] sm:$0xff]
      %v1154 = vld [vmem:[#allocation3 + $0x748] sm:$0xff]
      %v1155 = vld [vmem:[#allocation3 + $0x750] sm:$0xff]
      %v1156 = vld [vmem:[#allocation3 + $0x758] sm:$0xff]
      %v1157 = vld [vmem:[#allocation3 + $0x760] sm:$0xff]
      %v1158 = vld [vmem:[#allocation3 + $0x768] sm:$0xff]
      %v1159 = vld [vmem:[#allocation3 + $0x770] sm:$0xff]
      %v1160 = vld [vmem:[#allocation3 + $0x778] sm:$0xff]
      %v1161 = vld [vmem:[#allocation3 + $0x780] sm:$0xff]
      %v1162 = vld [vmem:[#allocation3 + $0x788] sm:$0xff]
      %v1163 = vld [vmem:[#allocation3 + $0x790] sm:$0xff]
      %v1164 = vld [vmem:[#allocation3 + $0x798] sm:$0xff]
      %v1165 = vld [vmem:[#allocation3 + $0x7a0] sm:$0xff]
      %v1166 = vld [vmem:[#allocation3 + $0x7a8] sm:$0xff]
      %v1167 = vld [vmem:[#allocation3 + $0x7b0] sm:$0xff]
      %v1168 = vld [vmem:[#allocation3 + $0x7b8] sm:$0xff]
      %v1169 = vld [vmem:[#allocation3 + $0x7c0] sm:$0xff]
      %v1170 = vld [vmem:[#allocation3 + $0x7c8] sm:$0xff]
      %v1171 = vld [vmem:[#allocation3 + $0x7d0] sm:$0xff]
      %v1172 = vld [vmem:[#allocation3 + $0x7d8] sm:$0xff]
      %v1173 = vld [vmem:[#allocation3 + $0x7e0] sm:$0xff]
      %v1174 = vld [vmem:[#allocation3 + $0x7e8] sm:$0xff]
      %v1175 = vld [vmem:[#allocation3 + $0x7f0] sm:$0xff]
      %v1176 = vld [vmem:[#allocation3 + $0x7f8] sm:$0xff]
      %v1177 = vld [vmem:[#allocation3 + $0x800] sm:$0xff]
      %v1178 = vld [vmem:[#allocation3 + $0x808] sm:$0xff]
      %v1179 = vld [vmem:[#allocation3 + $0x810] sm:$0xff]
      %v1180 = vld [vmem:[#allocation3 + $0x818] sm:$0xff]
      %v1181 = vld [vmem:[#allocation3 + $0x820] sm:$0xff]
      %v1182 = vld [vmem:[#allocation3 + $0x828] sm:$0xff]
      %v1183 = vld [vmem:[#allocation3 + $0x830] sm:$0xff]
      %v1184 = vld [vmem:[#allocation3 + $0x838] sm:$0xff]
      %v1185 = vld [vmem:[#allocation3 + $0x840] sm:$0xff]
      %v1186 = vld [vmem:[#allocation3 + $0x848] sm:$0xff]
      %v1187 = vld [vmem:[#allocation3 + $0x850] sm:$0xff]
      %v1188 = vld [vmem:[#allocation3 + $0x858] sm:$0xff]
      %v1189 = vld [vmem:[#allocation3 + $0x860] sm:$0xff]
      %v1190 = vld [vmem:[#allocation3 + $0x868] sm:$0xff]
      %v1191 = vld [vmem:[#allocation3 + $0x870] sm:$0xff]
      %v1192 = vld [vmem:[#allocation3 + $0x878] sm:$0xff]
      %v1193 = vld [vmem:[#allocation3 + $0x880] sm:$0xff]
      %v1194 = vld [vmem:[#allocation3 + $0x888] sm:$0xff]
      %v1195 = vld [vmem:[#allocation3 + $0x890] sm:$0xff]
      %v1196 = vld [vmem:[#allocation3 + $0x898] sm:$0xff]
      %v1197 = vld [vmem:[#allocation3 + $0x8a0] sm:$0xff]
      %v1198 = vld [vmem:[#allocation3 + $0x8a8] sm:$0xff]
      %v1199 = vld [vmem:[#allocation3 + $0x8b0] sm:$0xff]
      %v1200 = vld [vmem:[#allocation3 + $0x8b8] sm:$0xff]
      %v1201 = vld [vmem:[#allocation3 + $0x8c0] sm:$0xff]
      %v1202 = vld [vmem:[#allocation3 + $0x8c8] sm:$0xff]
      %v1203 = vld [vmem:[#allocation3 + $0x8d0] sm:$0xff]
      %v1204 = vld [vmem:[#allocation3 + $0x8d8] sm:$0xff]
      %v1205 = vld [vmem:[#allocation3 + $0x8e0] sm:$0xff]
      %v1206 = vld [vmem:[#allocation3 + $0x8e8] sm:$0xff]
      %v1207 = vld [vmem:[#allocation3 + $0x8f0] sm:$0xff]
      %v1208 = vld [vmem:[#allocation3 + $0x8f8] sm:$0xff]
      %v1209 = vld [vmem:[%s3] sm:$0xff]
      %v1210 = vld [vmem:[%s3 + $0x8] sm:$0xff]
      %v1211 = vld [vmem:[%s3 + $0x10] sm:$0xff]
      %v1212 = vld [vmem:[%s3 + $0x18] sm:$0xff]
      %v1213 = vld [vmem:[%s3 + $0x20] sm:$0xff]
      %v1214 = vld [vmem:[%s3 + $0x28] sm:$0xff]
      %v1215 = vld [vmem:[%s3 + $0x30] sm:$0xff]
      %v1216 = vld [vmem:[%s3 + $0x38] sm:$0xff]
      %v1217 = vld [vmem:[%s3 + $0x40] sm:$0xff]
      %v1218 = vld [vmem:[%s3 + $0x48] sm:$0xff]
      %v1219 = vld [vmem:[%s3 + $0x50] sm:$0xff]
      %v1220 = vld [vmem:[%s3 + $0x58] sm:$0xff]
      %v1221 = vld [vmem:[%s3 + $0x60] sm:$0xff]
      %v1222 = vld [vmem:[%s3 + $0x68] sm:$0xff]
      %v1223 = vld [vmem:[%s3 + $0x70] sm:$0xff]
      %v1224 = vld [vmem:[%s3 + $0x78] sm:$0xff]
      %v1225 = vld [vmem:[%s3 + $0x80] sm:$0xff]
      %v1226 = vld [vmem:[%s3 + $0x88] sm:$0xff]
      %v1227 = vld [vmem:[%s3 + $0x90] sm:$0xff]
      %v1228 = vld [vmem:[%s3 + $0x98] sm:$0xff]
      %v1229 = vld [vmem:[%s3 + $0xa0] sm:$0xff]
      %v1230 = vld [vmem:[%s3 + $0xa8] sm:$0xff]
      %v1231 = vld [vmem:[%s3 + $0xb0] sm:$0xff]
      %v1232 = vld [vmem:[%s3 + $0xb8] sm:$0xff]
      %v1233 = vld [vmem:[%s3 + $0xc0] sm:$0xff]
      %v1234 = vld [vmem:[%s3 + $0xc8] sm:$0xff]
      %v1235 = vld [vmem:[%s3 + $0xd0] sm:$0xff]
      %v1236 = vld [vmem:[%s3 + $0xd8] sm:$0xff]
      %v1237 = vld [vmem:[%s3 + $0xe0] sm:$0xff]
      %v1238 = vld [vmem:[%s3 + $0xe8] sm:$0xff]
      %v1239 = vld [vmem:[%s3 + $0xf0] sm:$0xff]
      %v1240 = vld [vmem:[%s3 + $0xf8] sm:$0xff]
      %v1241 = vld [vmem:[%s3 + $0x100] sm:$0xff]
      %v1242 = vld [vmem:[%s3 + $0x108] sm:$0xff]
      %v1243 = vld [vmem:[%s3 + $0x110] sm:$0xff]
      %v1244 = vld [vmem:[%s3 + $0x118] sm:$0xff]
      %v1245 = vld [vmem:[%s3 + $0x120] sm:$0xff]
      %v1246 = vld [vmem:[%s3 + $0x128] sm:$0xff]
      %v1247 = vld [vmem:[%s3 + $0x130] sm:$0xff]
      %v1248 = vld [vmem:[%s3 + $0x138] sm:$0xff]
      %v1249 = vld [vmem:[%s3 + $0x140] sm:$0xff]
      %v1250 = vld [vmem:[%s3 + $0x148] sm:$0xff]
      %v1251 = vld [vmem:[%s3 + $0x150] sm:$0xff]
      %v1252 = vld [vmem:[%s3 + $0x158] sm:$0xff]
      %v1253 = vld [vmem:[%s3 + $0x160] sm:$0xff]
      %v1254 = vld [vmem:[%s3 + $0x168] sm:$0xff]
      %v1255 = vld [vmem:[%s3 + $0x170] sm:$0xff]
      %v1256 = vld [vmem:[%s3 + $0x178] sm:$0xff]
      %v1257 = vld [vmem:[%s3 + $0x180] sm:$0xff]
      %v1258 = vld [vmem:[%s3 + $0x188] sm:$0xff]
      %v1259 = vld [vmem:[%s3 + $0x190] sm:$0xff]
      %v1260 = vld [vmem:[%s3 + $0x198] sm:$0xff]
      %v1261 = vld [vmem:[%s3 + $0x1a0] sm:$0xff]
      %v1262 = vld [vmem:[%s3 + $0x1a8] sm:$0xff]
      %v1263 = vld [vmem:[%s3 + $0x1b0] sm:$0xff]
      %v1264 = vld [vmem:[%s3 + $0x1b8] sm:$0xff]
      %v1265 = vld [vmem:[%s3 + $0x1c0] sm:$0xff]
      %v1266 = vld [vmem:[%s3 + $0x1c8] sm:$0xff]
      %v1267 = vld [vmem:[%s3 + $0x1d0] sm:$0xff]
      %v1268 = vld [vmem:[%s3 + $0x1d8] sm:$0xff]
      %v1269 = vld [vmem:[%s3 + $0x1e0] sm:$0xff]
      %v1270 = vld [vmem:[%s3 + $0x1e8] sm:$0xff]
      %v1271 = vld [vmem:[%s3 + $0x1f0] sm:$0xff]
      %v1272 = vld [vmem:[%s3 + $0x1f8] sm:$0xff]
      %v1273 = vld [vmem:[%s3 + $0x200] sm:$0xff]
      %v1274 = vld [vmem:[%s3 + $0x208] sm:$0xff]
      %v1275 = vld [vmem:[%s3 + $0x210] sm:$0xff]
      %v1276 = vld [vmem:[%s3 + $0x218] sm:$0xff]
      %v1277 = vld [vmem:[%s3 + $0x220] sm:$0xff]
      %v1278 = vld [vmem:[%s3 + $0x228] sm:$0xff]
      %v1279 = vld [vmem:[%s3 + $0x230] sm:$0xff]
      %v1280 = vld [vmem:[%s3 + $0x238] sm:$0xff]
      %v1281 = vld [vmem:[%s3 + $0x240] sm:$0xff]
      %v1282 = vld [vmem:[%s3 + $0x248] sm:$0xff]
      %v1283 = vld [vmem:[%s3 + $0x250] sm:$0xff]
      %v1284 = vld [vmem:[%s3 + $0x258] sm:$0xff]
      %v1285 = vld [vmem:[%s3 + $0x260] sm:$0xff]
      %v1286 = vld [vmem:[%s3 + $0x268] sm:$0xff]
      %v1287 = vld [vmem:[%s3 + $0x270] sm:$0xff]
      %v1288 = vld [vmem:[%s3 + $0x278] sm:$0xff]
      %v1289 = vld [vmem:[%s3 + $0x280] sm:$0xff]
      %v1290 = vld [vmem:[%s3 + $0x288] sm:$0xff]
      %v1291 = vld [vmem:[%s3 + $0x290] sm:$0xff]
      %v1292 = vld [vmem:[%s3 + $0x298] sm:$0xff]
      %v1293 = vld [vmem:[%s3 + $0x2a0] sm:$0xff]
      %v1294 = vld [vmem:[%s3 + $0x2a8] sm:$0xff]
      %v1295 = vld [vmem:[%s3 + $0x2b0] sm:$0xff]
      %v1296 = vld [vmem:[%s3 + $0x2b8] sm:$0xff]
      %v1297 = vld [vmem:[%s3 + $0x2c0] sm:$0xff]
      %v1298 = vld [vmem:[%s3 + $0x2c8] sm:$0xff]
      %v1299 = vld [vmem:[%s3 + $0x2d0] sm:$0xff]
      %v1300 = vld [vmem:[%s3 + $0x2d8] sm:$0xff]
      %v1301 = vld [vmem:[%s3 + $0x2e0] sm:$0xff]
      %v1302 = vld [vmem:[%s3 + $0x2e8] sm:$0xff]
      %v1303 = vld [vmem:[%s3 + $0x2f0] sm:$0xff]
      %v1304 = vld [vmem:[%s3 + $0x2f8] sm:$0xff]
      %v1305 = vld [vmem:[%s3 + $0x300] sm:$0xff]
      %v1306 = vld [vmem:[%s3 + $0x308] sm:$0xff]
      %v1307 = vld [vmem:[%s3 + $0x310] sm:$0xff]
      %v1308 = vld [vmem:[%s3 + $0x318] sm:$0xff]
      %v1309 = vld [vmem:[%s3 + $0x320] sm:$0xff]
      %v1310 = vld [vmem:[%s3 + $0x328] sm:$0xff]
      %v1311 = vld [vmem:[%s3 + $0x330] sm:$0xff]
      %v1312 = vld [vmem:[%s3 + $0x338] sm:$0xff]
      %v1313 = vld [vmem:[%s3 + $0x340] sm:$0xff]
      %v1314 = vld [vmem:[%s3 + $0x348] sm:$0xff]
      %v1315 = vld [vmem:[%s3 + $0x350] sm:$0xff]
      %v1316 = vld [vmem:[%s3 + $0x358] sm:$0xff]
      %v1317 = vld [vmem:[%s3 + $0x360] sm:$0xff]
      %v1318 = vld [vmem:[%s3 + $0x368] sm:$0xff]
      %v1319 = vld [vmem:[%s3 + $0x370] sm:$0xff]
      %v1320 = vld [vmem:[%s3 + $0x378] sm:$0xff]
      %v1321 = vld [vmem:[%s3 + $0x380] sm:$0xff]
      %v1322 = vld [vmem:[%s3 + $0x388] sm:$0xff]
      %v1323 = vld [vmem:[%s3 + $0x390] sm:$0xff]
      %v1324 = vld [vmem:[%s3 + $0x398] sm:$0xff]
      %v1325 = vld [vmem:[%s3 + $0x3a0] sm:$0xff]
      %v1326 = vld [vmem:[%s3 + $0x3a8] sm:$0xff]
      %v1327 = vld [vmem:[%s3 + $0x3b0] sm:$0xff]
      %v1328 = vld [vmem:[%s3 + $0x3b8] sm:$0xff]
      %v1329 = vld [vmem:[%s3 + $0x3c0] sm:$0xff]
      %v1330 = vld [vmem:[%s3 + $0x3c8] sm:$0xff]
      %v1331 = vld [vmem:[%s3 + $0x3d0] sm:$0xff]
      %v1332 = vld [vmem:[%s3 + $0x3d8] sm:$0xff]
      %v1333 = vld [vmem:[%s3 + $0x3e0] sm:$0xff]
      %v1334 = vld [vmem:[%s3 + $0x3e8] sm:$0xff]
      %v1335 = vld [vmem:[%s3 + $0x3f0] sm:$0xff]
      %v1336 = vld [vmem:[%s3 + $0x3f8] sm:$0xff]
      %v1337 = vld [vmem:[%s3 + $0x400] sm:$0xff]
      %v1338 = vld [vmem:[%s3 + $0x408] sm:$0xff]
      %v1339 = vld [vmem:[%s3 + $0x410] sm:$0xff]
      %v1340 = vld [vmem:[%s3 + $0x418] sm:$0xff]
      %v1341 = vld [vmem:[%s3 + $0x420] sm:$0xff]
      %v1342 = vld [vmem:[%s3 + $0x428] sm:$0xff]
      %v1343 = vld [vmem:[%s3 + $0x430] sm:$0xff]
      %v1344 = vld [vmem:[%s3 + $0x438] sm:$0xff]
      %v1345 = vld [vmem:[%s3 + $0x440] sm:$0xff]
      %v1346 = vld [vmem:[%s3 + $0x448] sm:$0xff]
      %v1347 = vld [vmem:[%s3 + $0x450] sm:$0xff]
      %v1348 = vld [vmem:[%s3 + $0x458] sm:$0xff]
      %v1349 = vld [vmem:[%s3 + $0x460] sm:$0xff]
      %v1350 = vld [vmem:[%s3 + $0x468] sm:$0xff]
      %v1351 = vld [vmem:[%s3 + $0x470] sm:$0xff]
      %v1352 = vld [vmem:[%s3 + $0x478] sm:$0xff]
      %1353 = vmatprep.subr.mxu0 0.0
      %1354 = vmatpush1.msra.mxu0 %v1209
      %1355 = vmatprep.subr.mxu0 0.0
      %1356 = vmatpush1.msra.mxu0 %v1210
      %1357 = vmatprep.subr.mxu0 0.0
      %1358 = vmatpush1.msra.mxu0 %v1211
      %1359 = vmatprep.subr.mxu0 0.0
      %1360 = vmatpush1.msra.mxu0 %v1212
      %1361 = vmatprep.subr.mxu0 0.0
      %1362 = vmatpush1.msra.mxu0 %v1213
      %1363 = vmatprep.subr.mxu0 0.0
      %1364 = vmatpush1.msra.mxu0 %v1214
      %1365 = vmatprep.subr.mxu0 0.0
      %1366 = vmatpush1.msra.mxu0 %v1215
      %1367 = vmatprep.subr.mxu0 0.0
      %1368 = vmatpush1.msra.mxu0 %v1216
      %1369 = vmatprep.subr.mxu0 0.0
      %1370 = vmatpush1.msra.mxu0 %v1217
      %1371 = vmatprep.subr.mxu0 0.0
      %1372 = vmatpush1.msra.mxu0 %v1218
      %1373 = vmatprep.subr.mxu0 0.0
      %1374 = vmatpush1.msra.mxu0 %v1219
      %1375 = vmatprep.subr.mxu0 0.0
      %1376 = vmatpush1.msra.mxu0 %v1220
      %1377 = vmatprep.subr.mxu0 0.0
      %1378 = vmatpush1.msra.mxu0 %v1221
      %1379 = vmatprep.subr.mxu0 0.0
      %1380 = vmatpush1.msra.mxu0 %v1222
      %1381 = vmatprep.subr.mxu0 0.0
      %1382 = vmatpush1.msra.mxu0 %v1223
      %1383 = vmatprep.subr.mxu0 0.0
      %1384 = vmatpush1.msra.mxu0 %v1224
      %1385 = vmatprep.subr.mxu0 0.0
      %1386 = vmatpush1.msra.mxu0 %v1225
      %1387 = vmatprep.subr.mxu0 0.0
      %1388 = vmatpush1.msra.mxu0 %v1226
      %1389 = vmatprep.subr.mxu0 0.0
      %1390 = vmatpush1.msra.mxu0 %v1227
      %1391 = vmatprep.subr.mxu0 0.0
      %1392 = vmatpush1.msra.mxu0 %v1228
      %1393 = vmatprep.subr.mxu0 0.0
      %1394 = vmatpush1.msra.mxu0 %v1229
      %1395 = vmatprep.subr.mxu0 0.0
      %1396 = vmatpush1.msra.mxu0 %v1230
      %1397 = vmatprep.subr.mxu0 0.0
      %1398 = vmatpush1.msra.mxu0 %v1231
      %1399 = vmatprep.subr.mxu0 0.0
      %1400 = vmatpush1.msra.mxu0 %v1232
      %1401 = vmatprep.subr.mxu0 0.0
      %1402 = vmatpush1.msra.mxu0 %v1233
      %1403 = vmatprep.subr.mxu0 0.0
      %1404 = vmatpush1.msra.mxu0 %v1234
      %1405 = vmatprep.subr.mxu0 0.0
      %1406 = vmatpush1.msra.mxu0 %v1235
      %1407 = vmatprep.subr.mxu0 0.0
      %1408 = vmatpush1.msra.mxu0 %v1236
      %1409 = vmatprep.subr.mxu0 0.0
      %1410 = vmatpush1.msra.mxu0 %v1237
      %1411 = vmatprep.subr.mxu0 0.0
      %1412 = vmatpush1.msra.mxu0 %v1238
      %1413 = vmatprep.subr.mxu0 0.0
      %1414 = vmatpush1.msra.mxu0 %v1239
      %1415 = vmatprep.subr.mxu0 0.0
      %1416 = vmatpush1.msra.mxu0 %v1240
      %1417 = vmatprep.mubr.f32.mxu0 %v922
      %1418 = vmatmul.mubr.f32.gmra.mrb[0].mxu0 %v921
      %v1419 = vpop.f32.mrb[0].mxu0
      %v1420 = vadd.f32 0.0, %v1419
      %v1421 = vpop.f32.mrb[0].mxu0
      %1422 = vmatprep.mubr.f32.mxu0 %v931
      %1423 = vmatmul.mubr.f32.gmra.mrb[0].mxu0 %v930
      %v1424 = vpop.f32.mrb[0].mxu0
      %v1425 = vadd.f32 0.0, %v1424
      %v1426 = vpop.f32.mrb[0].mxu0
      %1427 = vmatprep.mubr.f32.mxu0 %v940
      %1428 = vmatmul.mubr.f32.gmra.mrb[0].mxu0 %v939
      %v1429 = vpop.f32.mrb[0].mxu0
      %v1430 = vadd.f32 0.0, %v1429
      %v1431 = vpop.f32.mrb[0].mxu0
      %1432 = vmatprep.mubr.f32.mxu0 %v949
      %1433 = vmatmul.mubr.f32.gmra.mrb[0].mxu0 %v948
      %v1434 = vpop.f32.mrb[0].mxu0
      %v1435 = vadd.f32 0.0, %v1434
      %v1436 = vpop.f32.mrb[0].mxu0
      %1437 = vmatprep.mubr.f32.mxu0 %v958
      %1438 = vmatmul.mubr.f32.gmra.mrb[0].mxu0 %v957
      %v1439 = vpop.f32.mrb[0].mxu0
      %v1440 = vadd.f32 0.0, %v1439
      %v1441 = vpop.f32.mrb[0].mxu0
      %1442 = vmatprep.mubr.f32.mxu0 %v967
      %1443 = vmatmul.mubr.f32.gmra.mrb[0].mxu0 %v966
      %v1444 = vpop.f32.mrb[0].mxu0
      %v1445 = vadd.f32 0.0, %v1444
      %v1446 = vpop.f32.mrb[0].mxu0
      %1447 = vmatprep.mubr.f32.mxu0 %v976
      %1448 = vmatmul.mubr.f32.gmra.mrb[0].mxu0 %v975
      %v1449 = vpop.f32.mrb[0].mxu0
      %v1450 = vadd.f32 0.0, %v1449
      %v1451 = vpop.f32.mrb[0].mxu0
      %1452 = vmatprep.mubr.f32.mxu0 %v985
      %1453 = vmatmul.mubr.f32.gmra.mrb[0].mxu0 %v984
      %v1454 = vpop.f32.mrb[0].mxu0
      %v1455 = vadd.f32 0.0, %v1454
      %v1456 = vpop.f32.mrb[0].mxu0
      %1457 = vmatprep.mubr.f32.mxu0 %v994
      %1458 = vmatmul.mubr.f32.gmra.mrb[0].mxu0 %v993
      %v1459 = vpop.f32.mrb[0].mxu0
      %v1460 = vadd.f32 0.0, %v1459
      %v1461 = vpop.f32.mrb[0].mxu0
      %1462 = vmatprep.mubr.f32.mxu0 %v1003
      %1463 = vmatmul.mubr.f32.gmra.mrb[0].mxu0 %v1002
      %v1464 = vpop.f32.mrb[0].mxu0
      %v1465 = vadd.f32 0.0, %v1464
      %v1466 = vpop.f32.mrb[0].mxu0
      %1467 = vmatprep.mubr.f32.mxu0 %v1012
      %1468 = vmatmul.mubr.f32.gmra.mrb[0].mxu0 %v1011
      %v1469 = vpop.f32.mrb[0].mxu0
      %v1470 = vadd.f32 0.0, %v1469
      %v1471 = vpop.f32.mrb[0].mxu0
      %1472 = vmatprep.mubr.f32.mxu0 %v1021
      %1473 = vmatmul.mubr.f32.gmra.mrb[0].mxu0 %v1020
      %v1474 = vpop.f32.mrb[0].mxu0
      %v1475 = vadd.f32 0.0, %v1474
      %v1476 = vpop.f32.mrb[0].mxu0
      %1477 = vmatprep.mubr.f32.mxu0 %v1030
      %1478 = vmatmul.mubr.f32.gmra.mrb[0].mxu0 %v1029
      %v1479 = vpop.f32.mrb[0].mxu0
      %v1480 = vadd.f32 0.0, %v1479
      %v1481 = vpop.f32.mrb[0].mxu0
      %1482 = vmatprep.mubr.f32.mxu0 %v1039
      %1483 = vmatmul.mubr.f32.gmra.mrb[0].mxu0 %v1038
      %v1484 = vpop.f32.mrb[0].mxu0
      %v1485 = vadd.f32 0.0, %v1484
      %v1486 = vpop.f32.mrb[0].mxu0
      %1487 = vmatprep.mubr.f32.mxu0 %v1048
      %1488 = vmatmul.mubr.f32.gmra.mrb[0].mxu0 %v1047
      %v1489 = vpop.f32.mrb[0].mxu0
      %v1490 = vadd.f32 0.0, %v1489
      %v1491 = vpop.f32.mrb[0].mxu0
      %1492 = vmatprep.mubr.f32.mxu0 %v1057
      %1493 = vmatmul.mubr.f32.gmra.mrb[0].mxu0 %v1056
      %v1494 = vpop.f32.mrb[0].mxu0
      %v1495 = vadd.f32 0.0, %v1494
      %v1496 = vpop.f32.mrb[0].mxu0
      %1497 = vmatprep.mubr.f32.mxu0 %v1066
      %1498 = vmatmul.mubr.f32.gmra.mrb[0].mxu0 %v1065
      %v1499 = vpop.f32.mrb[0].mxu0
      %v1500 = vadd.f32 0.0, %v1499
      %v1501 = vpop.f32.mrb[0].mxu0
      %1502 = vmatprep.mubr.f32.mxu0 %v1075
      %1503 = vmatmul.mubr.f32.gmra.mrb[0].mxu0 %v1074
      %v1504 = vpop.f32.mrb[0].mxu0
      %v1505 = vadd.f32 0.0, %v1504
      %v1506 = vpop.f32.mrb[0].mxu0
      %1507 = vmatprep.mubr.f32.mxu0 %v1084
      %1508 = vmatmul.mubr.f32.gmra.mrb[0].mxu0 %v1083
      %v1509 = vpop.f32.mrb[0].mxu0
      %v1510 = vadd.f32 0.0, %v1509
      %v1511 = vpop.f32.mrb[0].mxu0
      %1512 = vmatprep.mubr.f32.mxu0 %v1093
      %1513 = vmatmul.mubr.f32.gmra.mrb[0].mxu0 %v1092
      %v1514 = vpop.f32.mrb[0].mxu0
      %v1515 = vadd.f32 0.0, %v1514
      %v1516 = vpop.f32.mrb[0].mxu0
      %1517 = vmatprep.mubr.f32.mxu0 %v1102
      %1518 = vmatmul.mubr.f32.gmra.mrb[0].mxu0 %v1101
      %v1519 = vpop.f32.mrb[0].mxu0
      %v1520 = vadd.f32 0.0, %v1519
      %v1521 = vpop.f32.mrb[0].mxu0
      %1522 = vmatprep.mubr.f32.mxu0 %v1111
      %1523 = vmatmul.mubr.f32.gmra.mrb[0].mxu0 %v1110
      %v1524 = vpop.f32.mrb[0].mxu0
      %v1525 = vadd.f32 0.0, %v1524
      %v1526 = vpop.f32.mrb[0].mxu0
      %1527 = vmatprep.mubr.f32.mxu0 %v1120
      %1528 = vmatmul.mubr.f32.gmra.mrb[0].mxu0 %v1119
      %v1529 = vpop.f32.mrb[0].mxu0
      %v1530 = vadd.f32 0.0, %v1529
      %v1531 = vpop.f32.mrb[0].mxu0
      %1532 = vmatprep.mubr.f32.mxu0 %v1129
      %1533 = vmatmul.mubr.f32.gmra.mrb[0].mxu0 %v1128
      %v1534 = vpop.f32.mrb[0].mxu0
      %v1535 = vadd.f32 0.0, %v1534
      %v1536 = vpop.f32.mrb[0].mxu0
      %1537 = vmatprep.mubr.f32.mxu0 %v1138
      %1538 = vmatmul.mubr.f32.gmra.mrb[0].mxu0 %v1137
      %v1539 = vpop.f32.mrb[0].mxu0
      %v1540 = vadd.f32 0.0, %v1539
      %v1541 = vpop.f32.mrb[0].mxu0
      %1542 = vmatprep.mubr.f32.mxu0 %v1147
      %1543 = vmatmul.mubr.f32.gmra.mrb[0].mxu0 %v1146
      %v1544 = vpop.f32.mrb[0].mxu0
      %v1545 = vadd.f32 0.0, %v1544
      %v1546 = vpop.f32.mrb[0].mxu0
      %1547 = vmatprep.mubr.f32.mxu0 %v1156
      %1548 = vmatmul.mubr.f32.gmra.mrb[0].mxu0 %v1155
      %v1549 = vpop.f32.mrb[0].mxu0
      %v1550 = vadd.f32 0.0, %v1549
      %v1551 = vpop.f32.mrb[0].mxu0
      %1552 = vmatprep.mubr.f32.mxu0 %v1165
      %1553 = vmatmul.mubr.f32.gmra.mrb[0].mxu0 %v1164
      %v1554 = vpop.f32.mrb[0].mxu0
      %v1555 = vadd.f32 0.0, %v1554
      %v1556 = vpop.f32.mrb[0].mxu0
      %1557 = vmatprep.mubr.f32.mxu0 %v1174
      %1558 = vmatmul.mubr.f32.gmra.mrb[0].mxu0 %v1173
      %v1559 = vpop.f32.mrb[0].mxu0
      %v1560 = vadd.f32 0.0, %v1559
      %v1561 = vpop.f32.mrb[0].mxu0
      %1562 = vmatprep.mubr.f32.mxu0 %v1183
      %1563 = vmatmul.mubr.f32.gmra.mrb[0].mxu0 %v1182
      %v1564 = vpop.f32.mrb[0].mxu0
      %v1565 = vadd.f32 0.0, %v1564
      %v1566 = vpop.f32.mrb[0].mxu0
      %1567 = vmatprep.mubr.f32.mxu0 %v1192
      %1568 = vmatmul.mubr.f32.gmra.mrb[0].mxu0 %v1191
      %v1569 = vpop.f32.mrb[0].mxu0
      %v1570 = vadd.f32 0.0, %v1569
      %v1571 = vpop.f32.mrb[0].mxu0
      %1572 = vmatprep.mubr.f32.mxu0 %v1201
      %1573 = vmatmul.mubr.f32.gmra.mrb[0].mxu0 %v1200
      %v1574 = vpop.f32.mrb[0].mxu0
      %v1575 = vadd.f32 0.0, %v1574
      %v1576 = vpop.f32.mrb[0].mxu0
      %1577 = vdwg.mxu0
      %1578 = vmatprep.subr.mxu0 0.0
      %1579 = vmatpush1.msra.mxu0 %v1241
      %1580 = vmatprep.subr.mxu0 0.0
      %1581 = vmatpush1.msra.mxu0 %v1242
      %1582 = vmatprep.subr.mxu0 0.0
      %1583 = vmatpush1.msra.mxu0 %v1243
      %1584 = vmatprep.subr.mxu0 0.0
      %1585 = vmatpush1.msra.mxu0 %v1244
      %1586 = vmatprep.subr.mxu0 0.0
      %1587 = vmatpush1.msra.mxu0 %v1245
      %1588 = vmatprep.subr.mxu0 0.0
      %1589 = vmatpush1.msra.mxu0 %v1246
      %1590 = vmatprep.subr.mxu0 0.0
      %1591 = vmatpush1.msra.mxu0 %v1247
      %1592 = vmatprep.subr.mxu0 0.0
      %1593 = vmatpush1.msra.mxu0 %v1248
      %1594 = vmatprep.subr.mxu0 0.0
      %1595 = vmatpush1.msra.mxu0 %v1249
      %1596 = vmatprep.subr.mxu0 0.0
      %1597 = vmatpush1.msra.mxu0 %v1250
      %1598 = vmatprep.subr.mxu0 0.0
      %1599 = vmatpush1.msra.mxu0 %v1251
      %1600 = vmatprep.subr.mxu0 0.0
      %1601 = vmatpush1.msra.mxu0 %v1252
      %1602 = vmatprep.subr.mxu0 0.0
      %1603 = vmatpush1.msra.mxu0 %v1253
      %1604 = vmatprep.subr.mxu0 0.0
      %1605 = vmatpush1.msra.mxu0 %v1254
      %1606 = vmatprep.subr.mxu0 0.0
      %1607 = vmatpush1.msra.mxu0 %v1255
      %1608 = vmatprep.subr.mxu0 0.0
      %1609 = vmatpush1.msra.mxu0 %v1256
      %1610 = vmatprep.subr.mxu0 0.0
      %1611 = vmatpush1.msra.mxu0 %v1257
      %1612 = vmatprep.subr.mxu0 0.0
      %1613 = vmatpush1.msra.mxu0 %v1258
      %1614 = vmatprep.subr.mxu0 0.0
      %1615 = vmatpush1.msra.mxu0 %v1259
      %1616 = vmatprep.subr.mxu0 0.0
      %1617 = vmatpush1.msra.mxu0 %v1260
      %1618 = vmatprep.subr.mxu0 0.0
      %1619 = vmatpush1.msra.mxu0 %v1261
      %1620 = vmatprep.subr.mxu0 0.0
      %1621 = vmatpush1.msra.mxu0 %v1262
      %1622 = vmatprep.subr.mxu0 0.0
      %1623 = vmatpush1.msra.mxu0 %v1263
      %1624 = vmatprep.subr.mxu0 0.0
      %1625 = vmatpush1.msra.mxu0 %v1264
      %1626 = vmatprep.subr.mxu0 0.0
      %1627 = vmatpush1.msra.mxu0 %v1265
      %1628 = vmatprep.subr.mxu0 0.0
      %1629 = vmatpush1.msra.mxu0 %v1266
      %1630 = vmatprep.subr.mxu0 0.0
      %1631 = vmatpush1.msra.mxu0 %v1267
      %1632 = vmatprep.subr.mxu0 0.0
      %1633 = vmatpush1.msra.mxu0 %v1268
      %1634 = vmatprep.subr.mxu0 0.0
      %1635 = vmatpush1.msra.mxu0 %v1269
      %1636 = vmatprep.subr.mxu0 0.0
      %1637 = vmatpush1.msra.mxu0 %v1270
      %1638 = vmatprep.subr.mxu0 0.0
      %1639 = vmatpush1.msra.mxu0 %v1271
      %1640 = vmatprep.subr.mxu0 0.0
      %1641 = vmatpush1.msra.mxu0 %v1272
      %1642 = vmatprep.mubr.f32.mxu0 %v924
      %1643 = vmatmul.mubr.f32.gmra.mrb[0].mxu0 %v923
      %v1644 = vpop.f32.mrb[0].mxu0
      %v1645 = vadd.f32 %v1420, %v1644
      %v1646 = vpop.f32.mrb[0].mxu0
      %1647 = vmatprep.mubr.f32.mxu0 %v933
      %1648 = vmatmul.mubr.f32.gmra.mrb[0].mxu0 %v932
      %v1649 = vpop.f32.mrb[0].mxu0
      %v1650 = vadd.f32 %v1425, %v1649
      %v1651 = vpop.f32.mrb[0].mxu0
      %1652 = vmatprep.mubr.f32.mxu0 %v942
      %1653 = vmatmul.mubr.f32.gmra.mrb[0].mxu0 %v941
      %v1654 = vpop.f32.mrb[0].mxu0
      %v1655 = vadd.f32 %v1430, %v1654
      %v1656 = vpop.f32.mrb[0].mxu0
      %1657 = vmatprep.mubr.f32.mxu0 %v951
      %1658 = vmatmul.mubr.f32.gmra.mrb[0].mxu0 %v950
      %v1659 = vpop.f32.mrb[0].mxu0
      %v1660 = vadd.f32 %v1435, %v1659
      %v1661 = vpop.f32.mrb[0].mxu0
      %1662 = vmatprep.mubr.f32.mxu0 %v960
      %1663 = vmatmul.mubr.f32.gmra.mrb[0].mxu0 %v959
      %v1664 = vpop.f32.mrb[0].mxu0
      %v1665 = vadd.f32 %v1440, %v1664
      %v1666 = vpop.f32.mrb[0].mxu0
      %1667 = vmatprep.mubr.f32.mxu0 %v969
      %1668 = vmatmul.mubr.f32.gmra.mrb[0].mxu0 %v968
      %v1669 = vpop.f32.mrb[0].mxu0
      %v1670 = vadd.f32 %v1445, %v1669
      %v1671 = vpop.f32.mrb[0].mxu0
      %1672 = vmatprep.mubr.f32.mxu0 %v978
      %1673 = vmatmul.mubr.f32.gmra.mrb[0].mxu0 %v977
      %v1674 = vpop.f32.mrb[0].mxu0
      %v1675 = vadd.f32 %v1450, %v1674
      %v1676 = vpop.f32.mrb[0].mxu0
      %1677 = vmatprep.mubr.f32.mxu0 %v987
      %1678 = vmatmul.mubr.f32.gmra.mrb[0].mxu0 %v986
      %v1679 = vpop.f32.mrb[0].mxu0
      %v1680 = vadd.f32 %v1455, %v1679
      %v1681 = vpop.f32.mrb[0].mxu0
      %1682 = vmatprep.mubr.f32.mxu0 %v996
      %1683 = vmatmul.mubr.f32.gmra.mrb[0].mxu0 %v995
      %v1684 = vpop.f32.mrb[0].mxu0
      %v1685 = vadd.f32 %v1460, %v1684
      %v1686 = vpop.f32.mrb[0].mxu0
      %1687 = vmatprep.mubr.f32.mxu0 %v1005
      %1688 = vmatmul.mubr.f32.gmra.mrb[0].mxu0 %v1004
      %v1689 = vpop.f32.mrb[0].mxu0
      %v1690 = vadd.f32 %v1465, %v1689
      %v1691 = vpop.f32.mrb[0].mxu0
      %1692 = vmatprep.mubr.f32.mxu0 %v1014
      %1693 = vmatmul.mubr.f32.gmra.mrb[0].mxu0 %v1013
      %v1694 = vpop.f32.mrb[0].mxu0
      %v1695 = vadd.f32 %v1470, %v1694
      %v1696 = vpop.f32.mrb[0].mxu0
      %1697 = vmatprep.mubr.f32.mxu0 %v1023
      %1698 = vmatmul.mubr.f32.gmra.mrb[0].mxu0 %v1022
      %v1699 = vpop.f32.mrb[0].mxu0
      %v1700 = vadd.f32 %v1475, %v1699
      %v1701 = vpop.f32.mrb[0].mxu0
      %1702 = vmatprep.mubr.f32.mxu0 %v1032
      %1703 = vmatmul.mubr.f32.gmra.mrb[0].mxu0 %v1031
      %v1704 = vpop.f32.mrb[0].mxu0
      %v1705 = vadd.f32 %v1480, %v1704
      %v1706 = vpop.f32.mrb[0].mxu0
      %1707 = vmatprep.mubr.f32.mxu0 %v1041
      %1708 = vmatmul.mubr.f32.gmra.mrb[0].mxu0 %v1040
      %v1709 = vpop.f32.mrb[0].mxu0
      %v1710 = vadd.f32 %v1485, %v1709
      %v1711 = vpop.f32.mrb[0].mxu0
      %1712 = vmatprep.mubr.f32.mxu0 %v1050
      %1713 = vmatmul.mubr.f32.gmra.mrb[0].mxu0 %v1049
      %v1714 = vpop.f32.mrb[0].mxu0
      %v1715 = vadd.f32 %v1490, %v1714
      %v1716 = vpop.f32.mrb[0].mxu0
      %1717 = vmatprep.mubr.f32.mxu0 %v1059
      %1718 = vmatmul.mubr.f32.gmra.mrb[0].mxu0 %v1058
      %v1719 = vpop.f32.mrb[0].mxu0
      %v1720 = vadd.f32 %v1495, %v1719
      %v1721 = vpop.f32.mrb[0].mxu0
      %1722 = vmatprep.mubr.f32.mxu0 %v1068
      %1723 = vmatmul.mubr.f32.gmra.mrb[0].mxu0 %v1067
      %v1724 = vpop.f32.mrb[0].mxu0
      %v1725 = vadd.f32 %v1500, %v1724
      %v1726 = vpop.f32.mrb[0].mxu0
      %1727 = vmatprep.mubr.f32.mxu0 %v1077
      %1728 = vmatmul.mubr.f32.gmra.mrb[0].mxu0 %v1076
      %v1729 = vpop.f32.mrb[0].mxu0
      %v1730 = vadd.f32 %v1505, %v1729
      %v1731 = vpop.f32.mrb[0].mxu0
      %1732 = vmatprep.mubr.f32.mxu0 %v1086
      %1733 = vmatmul.mubr.f32.gmra.mrb[0].mxu0 %v1085
      %v1734 = vpop.f32.mrb[0].mxu0
      %v1735 = vadd.f32 %v1510, %v1734
      %v1736 = vpop.f32.mrb[0].mxu0
      %1737 = vmatprep.mubr.f32.mxu0 %v1095
      %1738 = vmatmul.mubr.f32.gmra.mrb[0].mxu0 %v1094
      %v1739 = vpop.f32.mrb[0].mxu0
      %v1740 = vadd.f32 %v1515, %v1739
      %v1741 = vpop.f32.mrb[0].mxu0
      %1742 = vmatprep.mubr.f32.mxu0 %v1104
      %1743 = vmatmul.mubr.f32.gmra.mrb[0].mxu0 %v1103
      %v1744 = vpop.f32.mrb[0].mxu0
      %v1745 = vadd.f32 %v1520, %v1744
      %v1746 = vpop.f32.mrb[0].mxu0
      %1747 = vmatprep.mubr.f32.mxu0 %v1113
      %1748 = vmatmul.mubr.f32.gmra.mrb[0].mxu0 %v1112
      %v1749 = vpop.f32.mrb[0].mxu0
      %v1750 = vadd.f32 %v1525, %v1749
      %v1751 = vpop.f32.mrb[0].mxu0
      %1752 = vmatprep.mubr.f32.mxu0 %v1122
      %1753 = vmatmul.mubr.f32.gmra.mrb[0].mxu0 %v1121
      %v1754 = vpop.f32.mrb[0].mxu0
      %v1755 = vadd.f32 %v1530, %v1754
      %v1756 = vpop.f32.mrb[0].mxu0
      %1757 = vmatprep.mubr.f32.mxu0 %v1131
      %1758 = vmatmul.mubr.f32.gmra.mrb[0].mxu0 %v1130
      %v1759 = vpop.f32.mrb[0].mxu0
      %v1760 = vadd.f32 %v1535, %v1759
      %v1761 = vpop.f32.mrb[0].mxu0
      %1762 = vmatprep.mubr.f32.mxu0 %v1140
      %1763 = vmatmul.mubr.f32.gmra.mrb[0].mxu0 %v1139
      %v1764 = vpop.f32.mrb[0].mxu0
      %v1765 = vadd.f32 %v1540, %v1764
      %v1766 = vpop.f32.mrb[0].mxu0
      %1767 = vmatprep.mubr.f32.mxu0 %v1149
      %1768 = vmatmul.mubr.f32.gmra.mrb[0].mxu0 %v1148
      %v1769 = vpop.f32.mrb[0].mxu0
      %v1770 = vadd.f32 %v1545, %v1769
      %v1771 = vpop.f32.mrb[0].mxu0
      %1772 = vmatprep.mubr.f32.mxu0 %v1158
      %1773 = vmatmul.mubr.f32.gmra.mrb[0].mxu0 %v1157
      %v1774 = vpop.f32.mrb[0].mxu0
      %v1775 = vadd.f32 %v1550, %v1774
      %v1776 = vpop.f32.mrb[0].mxu0
      %1777 = vmatprep.mubr.f32.mxu0 %v1167
      %1778 = vmatmul.mubr.f32.gmra.mrb[0].mxu0 %v1166
      %v1779 = vpop.f32.mrb[0].mxu0
      %v1780 = vadd.f32 %v1555, %v1779
      %v1781 = vpop.f32.mrb[0].mxu0
      %1782 = vmatprep.mubr.f32.mxu0 %v1176
      %1783 = vmatmul.mubr.f32.gmra.mrb[0].mxu0 %v1175
      %v1784 = vpop.f32.mrb[0].mxu0
      %v1785 = vadd.f32 %v1560, %v1784
      %v1786 = vpop.f32.mrb[0].mxu0
      %1787 = vmatprep.mubr.f32.mxu0 %v1185
      %1788 = vmatmul.mubr.f32.gmra.mrb[0].mxu0 %v1184
      %v1789 = vpop.f32.mrb[0].mxu0
      %v1790 = vadd.f32 %v1565, %v1789
      %v1791 = vpop.f32.mrb[0].mxu0
      %1792 = vmatprep.mubr.f32.mxu0 %v1194
      %1793 = vmatmul.mubr.f32.gmra.mrb[0].mxu0 %v1193
      %v1794 = vpop.f32.mrb[0].mxu0
      %v1795 = vadd.f32 %v1570, %v1794
      %v1796 = vpop.f32.mrb[0].mxu0
      %1797 = vmatprep.mubr.f32.mxu0 %v1203
      %1798 = vmatmul.mubr.f32.gmra.mrb[0].mxu0 %v1202
      %v1799 = vpop.f32.mrb[0].mxu0
      %v1800 = vadd.f32 %v1575, %v1799
      %v1801 = vpop.f32.mrb[0].mxu0
      %1802 = vdwg.mxu0
      %1803 = vmatprep.subr.mxu0 0.0
      %1804 = vmatpush1.msra.mxu0 %v1273
      %1805 = vmatprep.subr.mxu0 0.0
      %1806 = vmatpush1.msra.mxu0 %v1274
      %1807 = vmatprep.subr.mxu0 0.0
      %1808 = vmatpush1.msra.mxu0 %v1275
      %1809 = vmatprep.subr.mxu0 0.0
      %1810 = vmatpush1.msra.mxu0 %v1276
      %1811 = vmatprep.subr.mxu0 0.0
      %1812 = vmatpush1.msra.mxu0 %v1277
      %1813 = vmatprep.subr.mxu0 0.0
      %1814 = vmatpush1.msra.mxu0 %v1278
      %1815 = vmatprep.subr.mxu0 0.0
      %1816 = vmatpush1.msra.mxu0 %v1279
      %1817 = vmatprep.subr.mxu0 0.0
      %1818 = vmatpush1.msra.mxu0 %v1280
      %1819 = vmatprep.subr.mxu0 0.0
      %1820 = vmatpush1.msra.mxu0 %v1281
      %1821 = vmatprep.subr.mxu0 0.0
      %1822 = vmatpush1.msra.mxu0 %v1282
      %1823 = vmatprep.subr.mxu0 0.0
      %1824 = vmatpush1.msra.mxu0 %v1283
      %1825 = vmatprep.subr.mxu0 0.0
      %1826 = vmatpush1.msra.mxu0 %v1284
      %1827 = vmatprep.subr.mxu0 0.0
      %1828 = vmatpush1.msra.mxu0 %v1285
      %1829 = vmatprep.subr.mxu0 0.0
      %1830 = vmatpush1.msra.mxu0 %v1286
      %1831 = vmatprep.subr.mxu0 0.0
      %1832 = vmatpush1.msra.mxu0 %v1287
      %1833 = vmatprep.subr.mxu0 0.0
      %1834 = vmatpush1.msra.mxu0 %v1288
      %1835 = vmatprep.subr.mxu0 0.0
      %1836 = vmatpush1.msra.mxu0 %v1289
      %1837 = vmatprep.subr.mxu0 0.0
      %1838 = vmatpush1.msra.mxu0 %v1290
      %1839 = vmatprep.subr.mxu0 0.0
      %1840 = vmatpush1.msra.mxu0 %v1291
      %1841 = vmatprep.subr.mxu0 0.0
      %1842 = vmatpush1.msra.mxu0 %v1292
      %1843 = vmatprep.subr.mxu0 0.0
      %1844 = vmatpush1.msra.mxu0 %v1293
      %1845 = vmatprep.subr.mxu0 0.0
      %1846 = vmatpush1.msra.mxu0 %v1294
      %1847 = vmatprep.subr.mxu0 0.0
      %1848 = vmatpush1.msra.mxu0 %v1295
      %1849 = vmatprep.subr.mxu0 0.0
      %1850 = vmatpush1.msra.mxu0 %v1296
      %1851 = vmatprep.subr.mxu0 0.0
      %1852 = vmatpush1.msra.mxu0 %v1297
      %1853 = vmatprep.subr.mxu0 0.0
      %1854 = vmatpush1.msra.mxu0 %v1298
      %1855 = vmatprep.subr.mxu0 0.0
      %1856 = vmatpush1.msra.mxu0 %v1299
      %1857 = vmatprep.subr.mxu0 0.0
      %1858 = vmatpush1.msra.mxu0 %v1300
      %1859 = vmatprep.subr.mxu0 0.0
      %1860 = vmatpush1.msra.mxu0 %v1301
      %1861 = vmatprep.subr.mxu0 0.0
      %1862 = vmatpush1.msra.mxu0 %v1302
      %1863 = vmatprep.subr.mxu0 0.0
      %1864 = vmatpush1.msra.mxu0 %v1303
      %1865 = vmatprep.subr.mxu0 0.0
      %1866 = vmatpush1.msra.mxu0 %v1304
      %1867 = vmatprep.mubr.f32.mxu0 %v926
      %1868 = vmatmul.mubr.f32.gmra.mrb[0].mxu0 %v925
      %v1869 = vpop.f32.mrb[0].mxu0
      %v1870 = vadd.f32 %v1645, %v1869
      %v1871 = vpop.f32.mrb[0].mxu0
      %1872 = vmatprep.mubr.f32.mxu0 %v935
      %1873 = vmatmul.mubr.f32.gmra.mrb[0].mxu0 %v934
      %v1874 = vpop.f32.mrb[0].mxu0
      %v1875 = vadd.f32 %v1650, %v1874
      %v1876 = vpop.f32.mrb[0].mxu0
      %1877 = vmatprep.mubr.f32.mxu0 %v944
      %1878 = vmatmul.mubr.f32.gmra.mrb[0].mxu0 %v943
      %v1879 = vpop.f32.mrb[0].mxu0
      %v1880 = vadd.f32 %v1655, %v1879
      %v1881 = vpop.f32.mrb[0].mxu0
      %1882 = vmatprep.mubr.f32.mxu0 %v953
      %1883 = vmatmul.mubr.f32.gmra.mrb[0].mxu0 %v952
      %v1884 = vpop.f32.mrb[0].mxu0
      %v1885 = vadd.f32 %v1660, %v1884
      %v1886 = vpop.f32.mrb[0].mxu0
      %1887 = vmatprep.mubr.f32.mxu0 %v962
      %1888 = vmatmul.mubr.f32.gmra.mrb[0].mxu0 %v961
      %v1889 = vpop.f32.mrb[0].mxu0
      %v1890 = vadd.f32 %v1665, %v1889
      %v1891 = vpop.f32.mrb[0].mxu0
      %1892 = vmatprep.mubr.f32.mxu0 %v971
      %1893 = vmatmul.mubr.f32.gmra.mrb[0].mxu0 %v970
      %v1894 = vpop.f32.mrb[0].mxu0
      %v1895 = vadd.f32 %v1670, %v1894
      %v1896 = vpop.f32.mrb[0].mxu0
      %1897 = vmatprep.mubr.f32.mxu0 %v980
      %1898 = vmatmul.mubr.f32.gmra.mrb[0].mxu0 %v979
      %v1899 = vpop.f32.mrb[0].mxu0
      %v1900 = vadd.f32 %v1675, %v1899
      %v1901 = vpop.f32.mrb[0].mxu0
      %1902 = vmatprep.mubr.f32.mxu0 %v989
      %1903 = vmatmul.mubr.f32.gmra.mrb[0].mxu0 %v988
      %v1904 = vpop.f32.mrb[0].mxu0
      %v1905 = vadd.f32 %v1680, %v1904
      %v1906 = vpop.f32.mrb[0].mxu0
      %1907 = vmatprep.mubr.f32.mxu0 %v998
      %1908 = vmatmul.mubr.f32.gmra.mrb[0].mxu0 %v997
      %v1909 = vpop.f32.mrb[0].mxu0
      %v1910 = vadd.f32 %v1685, %v1909
      %v1911 = vpop.f32.mrb[0].mxu0
      %1912 = vmatprep.mubr.f32.mxu0 %v1007
      %1913 = vmatmul.mubr.f32.gmra.mrb[0].mxu0 %v1006
      %v1914 = vpop.f32.mrb[0].mxu0
      %v1915 = vadd.f32 %v1690, %v1914
      %v1916 = vpop.f32.mrb[0].mxu0
      %1917 = vmatprep.mubr.f32.mxu0 %v1016
      %1918 = vmatmul.mubr.f32.gmra.mrb[0].mxu0 %v1015
      %v1919 = vpop.f32.mrb[0].mxu0
      %v1920 = vadd.f32 %v1695, %v1919
      %v1921 = vpop.f32.mrb[0].mxu0
      %1922 = vmatprep.mubr.f32.mxu0 %v1025
      %1923 = vmatmul.mubr.f32.gmra.mrb[0].mxu0 %v1024
      %v1924 = vpop.f32.mrb[0].mxu0
      %v1925 = vadd.f32 %v1700, %v1924
      %v1926 = vpop.f32.mrb[0].mxu0
      %1927 = vmatprep.mubr.f32.mxu0 %v1034
      %1928 = vmatmul.mubr.f32.gmra.mrb[0].mxu0 %v1033
      %v1929 = vpop.f32.mrb[0].mxu0
      %v1930 = vadd.f32 %v1705, %v1929
      %v1931 = vpop.f32.mrb[0].mxu0
      %1932 = vmatprep.mubr.f32.mxu0 %v1043
      %1933 = vmatmul.mubr.f32.gmra.mrb[0].mxu0 %v1042
      %v1934 = vpop.f32.mrb[0].mxu0
      %v1935 = vadd.f32 %v1710, %v1934
      %v1936 = vpop.f32.mrb[0].mxu0
      %1937 = vmatprep.mubr.f32.mxu0 %v1052
      %1938 = vmatmul.mubr.f32.gmra.mrb[0].mxu0 %v1051
      %v1939 = vpop.f32.mrb[0].mxu0
      %v1940 = vadd.f32 %v1715, %v1939
      %v1941 = vpop.f32.mrb[0].mxu0
      %1942 = vmatprep.mubr.f32.mxu0 %v1061
      %1943 = vmatmul.mubr.f32.gmra.mrb[0].mxu0 %v1060
      %v1944 = vpop.f32.mrb[0].mxu0
      %v1945 = vadd.f32 %v1720, %v1944
      %v1946 = vpop.f32.mrb[0].mxu0
      %1947 = vmatprep.mubr.f32.mxu0 %v1070
      %1948 = vmatmul.mubr.f32.gmra.mrb[0].mxu0 %v1069
      %v1949 = vpop.f32.mrb[0].mxu0
      %v1950 = vadd.f32 %v1725, %v1949
      %v1951 = vpop.f32.mrb[0].mxu0
      %1952 = vmatprep.mubr.f32.mxu0 %v1079
      %1953 = vmatmul.mubr.f32.gmra.mrb[0].mxu0 %v1078
      %v1954 = vpop.f32.mrb[0].mxu0
      %v1955 = vadd.f32 %v1730, %v1954
      %v1956 = vpop.f32.mrb[0].mxu0
      %1957 = vmatprep.mubr.f32.mxu0 %v1088
      %1958 = vmatmul.mubr.f32.gmra.mrb[0].mxu0 %v1087
      %v1959 = vpop.f32.mrb[0].mxu0
      %v1960 = vadd.f32 %v1735, %v1959
      %v1961 = vpop.f32.mrb[0].mxu0
      %1962 = vmatprep.mubr.f32.mxu0 %v1097
      %1963 = vmatmul.mubr.f32.gmra.mrb[0].mxu0 %v1096
      %v1964 = vpop.f32.mrb[0].mxu0
      %v1965 = vadd.f32 %v1740, %v1964
      %v1966 = vpop.f32.mrb[0].mxu0
      %1967 = vmatprep.mubr.f32.mxu0 %v1106
      %1968 = vmatmul.mubr.f32.gmra.mrb[0].mxu0 %v1105
      %v1969 = vpop.f32.mrb[0].mxu0
      %v1970 = vadd.f32 %v1745, %v1969
      %v1971 = vpop.f32.mrb[0].mxu0
      %1972 = vmatprep.mubr.f32.mxu0 %v1115
      %1973 = vmatmul.mubr.f32.gmra.mrb[0].mxu0 %v1114
      %v1974 = vpop.f32.mrb[0].mxu0
      %v1975 = vadd.f32 %v1750, %v1974
      %v1976 = vpop.f32.mrb[0].mxu0
      %1977 = vmatprep.mubr.f32.mxu0 %v1124
      %1978 = vmatmul.mubr.f32.gmra.mrb[0].mxu0 %v1123
      %v1979 = vpop.f32.mrb[0].mxu0
      %v1980 = vadd.f32 %v1755, %v1979
      %v1981 = vpop.f32.mrb[0].mxu0
      %1982 = vmatprep.mubr.f32.mxu0 %v1133
      %1983 = vmatmul.mubr.f32.gmra.mrb[0].mxu0 %v1132
      %v1984 = vpop.f32.mrb[0].mxu0
      %v1985 = vadd.f32 %v1760, %v1984
      %v1986 = vpop.f32.mrb[0].mxu0
      %1987 = vmatprep.mubr.f32.mxu0 %v1142
      %1988 = vmatmul.mubr.f32.gmra.mrb[0].mxu0 %v1141
      %v1989 = vpop.f32.mrb[0].mxu0
      %v1990 = vadd.f32 %v1765, %v1989
      %v1991 = vpop.f32.mrb[0].mxu0
      %1992 = vmatprep.mubr.f32.mxu0 %v1151
      %1993 = vmatmul.mubr.f32.gmra.mrb[0].mxu0 %v1150
      %v1994 = vpop.f32.mrb[0].mxu0
      %v1995 = vadd.f32 %v1770, %v1994
      %v1996 = vpop.f32.mrb[0].mxu0
      %1997 = vmatprep.mubr.f32.mxu0 %v1160
      %1998 = vmatmul.mubr.f32.gmra.mrb[0].mxu0 %v1159
      %v1999 = vpop.f32.mrb[0].mxu0
      %v2000 = vadd.f32 %v1775, %v1999
      %v2001 = vpop.f32.mrb[0].mxu0
      %2002 = vmatprep.mubr.f32.mxu0 %v1169
      %2003 = vmatmul.mubr.f32.gmra.mrb[0].mxu0 %v1168
      %v2004 = vpop.f32.mrb[0].mxu0
      %v2005 = vadd.f32 %v1780, %v2004
      %v2006 = vpop.f32.mrb[0].mxu0
      %2007 = vmatprep.mubr.f32.mxu0 %v1178
      %2008 = vmatmul.mubr.f32.gmra.mrb[0].mxu0 %v1177
      %v2009 = vpop.f32.mrb[0].mxu0
      %v2010 = vadd.f32 %v1785, %v2009
      %v2011 = vpop.f32.mrb[0].mxu0
      %2012 = vmatprep.mubr.f32.mxu0 %v1187
      %2013 = vmatmul.mubr.f32.gmra.mrb[0].mxu0 %v1186
      %v2014 = vpop.f32.mrb[0].mxu0
      %v2015 = vadd.f32 %v1790, %v2014
      %v2016 = vpop.f32.mrb[0].mxu0
      %2017 = vmatprep.mubr.f32.mxu0 %v1196
      %2018 = vmatmul.mubr.f32.gmra.mrb[0].mxu0 %v1195
      %v2019 = vpop.f32.mrb[0].mxu0
      %v2020 = vadd.f32 %v1795, %v2019
      %v2021 = vpop.f32.mrb[0].mxu0
      %2022 = vmatprep.mubr.f32.mxu0 %v1205
      %2023 = vmatmul.mubr.f32.gmra.mrb[0].mxu0 %v1204
      %v2024 = vpop.f32.mrb[0].mxu0
      %v2025 = vadd.f32 %v1800, %v2024
      %v2026 = vpop.f32.mrb[0].mxu0
      %2027 = vdwg.mxu0
      %2028 = vmatprep.subr.mxu0 0.0
      %2029 = vmatpush1.msra.mxu0 %v1305
      %2030 = vmatprep.subr.mxu0 0.0
      %2031 = vmatpush1.msra.mxu0 %v1306
      %2032 = vmatprep.subr.mxu0 0.0
      %2033 = vmatpush1.msra.mxu0 %v1307
      %2034 = vmatprep.subr.mxu0 0.0
      %2035 = vmatpush1.msra.mxu0 %v1308
      %2036 = vmatprep.subr.mxu0 0.0
      %2037 = vmatpush1.msra.mxu0 %v1309
      %2038 = vmatprep.subr.mxu0 0.0
      %2039 = vmatpush1.msra.mxu0 %v1310
      %2040 = vmatprep.subr.mxu0 0.0
      %2041 = vmatpush1.msra.mxu0 %v1311
      %2042 = vmatprep.subr.mxu0 0.0
      %2043 = vmatpush1.msra.mxu0 %v1312
      %2044 = vmatprep.subr.mxu0 0.0
      %2045 = vmatpush1.msra.mxu0 %v1313
      %2046 = vmatprep.subr.mxu0 0.0
      %2047 = vmatpush1.msra.mxu0 %v1314
      %2048 = vmatprep.subr.mxu0 0.0
      %2049 = vmatpush1.msra.mxu0 %v1315
      %2050 = vmatprep.subr.mxu0 0.0
      %2051 = vmatpush1.msra.mxu0 %v1316
      %2052 = vmatprep.subr.mxu0 0.0
      %2053 = vmatpush1.msra.mxu0 %v1317
      %2054 = vmatprep.subr.mxu0 0.0
      %2055 = vmatpush1.msra.mxu0 %v1318
      %2056 = vmatprep.subr.mxu0 0.0
      %2057 = vmatpush1.msra.mxu0 %v1319
      %2058 = vmatprep.subr.mxu0 0.0
      %2059 = vmatpush1.msra.mxu0 %v1320
      %2060 = vmatprep.subr.mxu0 0.0
      %2061 = vmatpush1.msra.mxu0 %v1321
      %2062 = vmatprep.subr.mxu0 0.0
      %2063 = vmatpush1.msra.mxu0 %v1322
      %2064 = vmatprep.subr.mxu0 0.0
      %2065 = vmatpush1.msra.mxu0 %v1323
      %2066 = vmatprep.subr.mxu0 0.0
      %2067 = vmatpush1.msra.mxu0 %v1324
      %2068 = vmatprep.subr.mxu0 0.0
      %2069 = vmatpush1.msra.mxu0 %v1325
      %2070 = vmatprep.subr.mxu0 0.0
      %2071 = vmatpush1.msra.mxu0 %v1326
      %2072 = vmatprep.subr.mxu0 0.0
      %2073 = vmatpush1.msra.mxu0 %v1327
      %2074 = vmatprep.subr.mxu0 0.0
      %2075 = vmatpush1.msra.mxu0 %v1328
      %2076 = vmatprep.subr.mxu0 0.0
      %2077 = vmatpush1.msra.mxu0 %v1329
      %2078 = vmatprep.subr.mxu0 0.0
      %2079 = vmatpush1.msra.mxu0 %v1330
      %2080 = vmatprep.subr.mxu0 0.0
      %2081 = vmatpush1.msra.mxu0 %v1331
      %2082 = vmatprep.subr.mxu0 0.0
      %2083 = vmatpush1.msra.mxu0 %v1332
      %2084 = vmatprep.subr.mxu0 0.0
      %2085 = vmatpush1.msra.mxu0 %v1333
      %2086 = vmatprep.subr.mxu0 0.0
      %2087 = vmatpush1.msra.mxu0 %v1334
      %2088 = vmatprep.subr.mxu0 0.0
      %2089 = vmatpush1.msra.mxu0 %v1335
      %2090 = vmatprep.subr.mxu0 0.0
      %2091 = vmatpush1.msra.mxu0 %v1336
      %2092 = vmatprep.mubr.f32.mxu0 %v928
      %2093 = vmatmul.mubr.f32.gmra.mrb[0].mxu0 %v927
      %v2094 = vpop.f32.mrb[0].mxu0
      %v2095 = vadd.f32 %v1870, %v2094
      %v2096 = vpop.f32.mrb[0].mxu0
      %2097 = vmatprep.mubr.f32.mxu0 %v937
      %2098 = vmatmul.mubr.f32.gmra.mrb[0].mxu0 %v936
      %v2099 = vpop.f32.mrb[0].mxu0
      %v2100 = vadd.f32 %v1875, %v2099
      %v2101 = vpop.f32.mrb[0].mxu0
      %2102 = vmatprep.mubr.f32.mxu0 %v946
      %2103 = vmatmul.mubr.f32.gmra.mrb[0].mxu0 %v945
      %v2104 = vpop.f32.mrb[0].mxu0
      %v2105 = vadd.f32 %v1880, %v2104
      %v2106 = vpop.f32.mrb[0].mxu0
      %2107 = vmatprep.mubr.f32.mxu0 %v955
      %2108 = vmatmul.mubr.f32.gmra.mrb[0].mxu0 %v954
      %v2109 = vpop.f32.mrb[0].mxu0
      %v2110 = vadd.f32 %v1885, %v2109
      %v2111 = vpop.f32.mrb[0].mxu0
      %2112 = vmatprep.mubr.f32.mxu0 %v964
      %2113 = vmatmul.mubr.f32.gmra.mrb[0].mxu0 %v963
      %v2114 = vpop.f32.mrb[0].mxu0
      %v2115 = vadd.f32 %v1890, %v2114
      %v2116 = vpop.f32.mrb[0].mxu0
      %2117 = vmatprep.mubr.f32.mxu0 %v973
      %2118 = vmatmul.mubr.f32.gmra.mrb[0].mxu0 %v972
      %v2119 = vpop.f32.mrb[0].mxu0
      %v2120 = vadd.f32 %v1895, %v2119
      %v2121 = vpop.f32.mrb[0].mxu0
      %2122 = vmatprep.mubr.f32.mxu0 %v982
      %2123 = vmatmul.mubr.f32.gmra.mrb[0].mxu0 %v981
      %v2124 = vpop.f32.mrb[0].mxu0
      %v2125 = vadd.f32 %v1900, %v2124
      %v2126 = vpop.f32.mrb[0].mxu0
      %2127 = vmatprep.mubr.f32.mxu0 %v991
      %2128 = vmatmul.mubr.f32.gmra.mrb[0].mxu0 %v990
      %v2129 = vpop.f32.mrb[0].mxu0
      %v2130 = vadd.f32 %v1905, %v2129
      %v2131 = vpop.f32.mrb[0].mxu0
      %2132 = vmatprep.mubr.f32.mxu0 %v1000
      %2133 = vmatmul.mubr.f32.gmra.mrb[0].mxu0 %v999
      %v2134 = vpop.f32.mrb[0].mxu0
      %v2135 = vadd.f32 %v1910, %v2134
      %v2136 = vpop.f32.mrb[0].mxu0
      %2137 = vmatprep.mubr.f32.mxu0 %v1009
      %2138 = vmatmul.mubr.f32.gmra.mrb[0].mxu0 %v1008
      %v2139 = vpop.f32.mrb[0].mxu0
      %v2140 = vadd.f32 %v1915, %v2139
      %v2141 = vpop.f32.mrb[0].mxu0
      %2142 = vmatprep.mubr.f32.mxu0 %v1018
      %2143 = vmatmul.mubr.f32.gmra.mrb[0].mxu0 %v1017
      %v2144 = vpop.f32.mrb[0].mxu0
      %v2145 = vadd.f32 %v1920, %v2144
      %v2146 = vpop.f32.mrb[0].mxu0
      %2147 = vmatprep.mubr.f32.mxu0 %v1027
      %2148 = vmatmul.mubr.f32.gmra.mrb[0].mxu0 %v1026
      %v2149 = vpop.f32.mrb[0].mxu0
      %v2150 = vadd.f32 %v1925, %v2149
      %v2151 = vpop.f32.mrb[0].mxu0
      %2152 = vmatprep.mubr.f32.mxu0 %v1036
      %2153 = vmatmul.mubr.f32.gmra.mrb[0].mxu0 %v1035
      %v2154 = vpop.f32.mrb[0].mxu0
      %v2155 = vadd.f32 %v1930, %v2154
      %v2156 = vpop.f32.mrb[0].mxu0
      %2157 = vmatprep.mubr.f32.mxu0 %v1045
      %2158 = vmatmul.mubr.f32.gmra.mrb[0].mxu0 %v1044
      %v2159 = vpop.f32.mrb[0].mxu0
      %v2160 = vadd.f32 %v1935, %v2159
      %v2161 = vpop.f32.mrb[0].mxu0
      %2162 = vmatprep.mubr.f32.mxu0 %v1054
      %2163 = vmatmul.mubr.f32.gmra.mrb[0].mxu0 %v1053
      %v2164 = vpop.f32.mrb[0].mxu0
      %v2165 = vadd.f32 %v1940, %v2164
      %v2166 = vpop.f32.mrb[0].mxu0
      %2167 = vmatprep.mubr.f32.mxu0 %v1063
      %2168 = vmatmul.mubr.f32.gmra.mrb[0].mxu0 %v1062
      %v2169 = vpop.f32.mrb[0].mxu0
      %v2170 = vadd.f32 %v1945, %v2169
      %v2171 = vpop.f32.mrb[0].mxu0
      %2172 = vmatprep.mubr.f32.mxu0 %v1072
      %2173 = vmatmul.mubr.f32.gmra.mrb[0].mxu0 %v1071
      %v2174 = vpop.f32.mrb[0].mxu0
      %v2175 = vadd.f32 %v1950, %v2174
      %v2176 = vpop.f32.mrb[0].mxu0
      %2177 = vmatprep.mubr.f32.mxu0 %v1081
      %2178 = vmatmul.mubr.f32.gmra.mrb[0].mxu0 %v1080
      %v2179 = vpop.f32.mrb[0].mxu0
      %v2180 = vadd.f32 %v1955, %v2179
      %v2181 = vpop.f32.mrb[0].mxu0
      %2182 = vmatprep.mubr.f32.mxu0 %v1090
      %2183 = vmatmul.mubr.f32.gmra.mrb[0].mxu0 %v1089
      %v2184 = vpop.f32.mrb[0].mxu0
      %v2185 = vadd.f32 %v1960, %v2184
      %v2186 = vpop.f32.mrb[0].mxu0
      %2187 = vmatprep.mubr.f32.mxu0 %v1099
      %2188 = vmatmul.mubr.f32.gmra.mrb[0].mxu0 %v1098
      %v2189 = vpop.f32.mrb[0].mxu0
      %v2190 = vadd.f32 %v1965, %v2189
      %v2191 = vpop.f32.mrb[0].mxu0
      %2192 = vmatprep.mubr.f32.mxu0 %v1108
      %2193 = vmatmul.mubr.f32.gmra.mrb[0].mxu0 %v1107
      %v2194 = vpop.f32.mrb[0].mxu0
      %v2195 = vadd.f32 %v1970, %v2194
      %v2196 = vpop.f32.mrb[0].mxu0
      %2197 = vmatprep.mubr.f32.mxu0 %v1117
      %2198 = vmatmul.mubr.f32.gmra.mrb[0].mxu0 %v1116
      %v2199 = vpop.f32.mrb[0].mxu0
      %v2200 = vadd.f32 %v1975, %v2199
      %v2201 = vpop.f32.mrb[0].mxu0
      %2202 = vmatprep.mubr.f32.mxu0 %v1126
      %2203 = vmatmul.mubr.f32.gmra.mrb[0].mxu0 %v1125
      %v2204 = vpop.f32.mrb[0].mxu0
      %v2205 = vadd.f32 %v1980, %v2204
      %v2206 = vpop.f32.mrb[0].mxu0
      %2207 = vmatprep.mubr.f32.mxu0 %v1135
      %2208 = vmatmul.mubr.f32.gmra.mrb[0].mxu0 %v1134
      %v2209 = vpop.f32.mrb[0].mxu0
      %v2210 = vadd.f32 %v1985, %v2209
      %v2211 = vpop.f32.mrb[0].mxu0
      %2212 = vmatprep.mubr.f32.mxu0 %v1144
      %2213 = vmatmul.mubr.f32.gmra.mrb[0].mxu0 %v1143
      %v2214 = vpop.f32.mrb[0].mxu0
      %v2215 = vadd.f32 %v1990, %v2214
      %v2216 = vpop.f32.mrb[0].mxu0
      %2217 = vmatprep.mubr.f32.mxu0 %v1153
      %2218 = vmatmul.mubr.f32.gmra.mrb[0].mxu0 %v1152
      %v2219 = vpop.f32.mrb[0].mxu0
      %v2220 = vadd.f32 %v1995, %v2219
      %v2221 = vpop.f32.mrb[0].mxu0
      %2222 = vmatprep.mubr.f32.mxu0 %v1162
      %2223 = vmatmul.mubr.f32.gmra.mrb[0].mxu0 %v1161
      %v2224 = vpop.f32.mrb[0].mxu0
      %v2225 = vadd.f32 %v2000, %v2224
      %v2226 = vpop.f32.mrb[0].mxu0
      %2227 = vmatprep.mubr.f32.mxu0 %v1171
      %2228 = vmatmul.mubr.f32.gmra.mrb[0].mxu0 %v1170
      %v2229 = vpop.f32.mrb[0].mxu0
      %v2230 = vadd.f32 %v2005, %v2229
      %v2231 = vpop.f32.mrb[0].mxu0
      %2232 = vmatprep.mubr.f32.mxu0 %v1180
      %2233 = vmatmul.mubr.f32.gmra.mrb[0].mxu0 %v1179
      %v2234 = vpop.f32.mrb[0].mxu0
      %v2235 = vadd.f32 %v2010, %v2234
      %v2236 = vpop.f32.mrb[0].mxu0
      %2237 = vmatprep.mubr.f32.mxu0 %v1189
      %2238 = vmatmul.mubr.f32.gmra.mrb[0].mxu0 %v1188
      %v2239 = vpop.f32.mrb[0].mxu0
      %v2240 = vadd.f32 %v2015, %v2239
      %v2241 = vpop.f32.mrb[0].mxu0
      %2242 = vmatprep.mubr.f32.mxu0 %v1198
      %2243 = vmatmul.mubr.f32.gmra.mrb[0].mxu0 %v1197
      %v2244 = vpop.f32.mrb[0].mxu0
      %v2245 = vadd.f32 %v2020, %v2244
      %v2246 = vpop.f32.mrb[0].mxu0
      %2247 = vmatprep.mubr.f32.mxu0 %v1207
      %2248 = vmatmul.mubr.f32.gmra.mrb[0].mxu0 %v1206
      %v2249 = vpop.f32.mrb[0].mxu0
      %v2250 = vadd.f32 %v2025, %v2249
      %v2251 = vpop.f32.mrb[0].mxu0
      %2252 = vdwg.mxu0
      %2253 = vmatprep.subr.mxu0 0.0
      %2254 = vmatpush1.msra.mxu0 %v1337
      %2255 = vmatprep.subr.mxu0 0.0
      %2256 = vmatpush1.msra.mxu0 %v1338
      %2257 = vmatprep.subr.mxu0 0.0
      %2258 = vmatpush1.msra.mxu0 %v1339
      %2259 = vmatprep.subr.mxu0 0.0
      %2260 = vmatpush1.msra.mxu0 %v1340
      %2261 = vmatprep.subr.mxu0 0.0
      %2262 = vmatpush1.msra.mxu0 %v1341
      %2263 = vmatprep.subr.mxu0 0.0
      %2264 = vmatpush1.msra.mxu0 %v1342
      %2265 = vmatprep.subr.mxu0 0.0
      %2266 = vmatpush1.msra.mxu0 %v1343
      %2267 = vmatprep.subr.mxu0 0.0
      %2268 = vmatpush1.msra.mxu0 %v1344
      %2269 = vmatprep.subr.mxu0 0.0
      %2270 = vmatpush1.msra.mxu0 %v1345
      %2271 = vmatprep.subr.mxu0 0.0
      %2272 = vmatpush1.msra.mxu0 %v1346
      %2273 = vmatprep.subr.mxu0 0.0
      %2274 = vmatpush1.msra.mxu0 %v1347
      %2275 = vmatprep.subr.mxu0 0.0
      %2276 = vmatpush1.msra.mxu0 %v1348
      %2277 = vmatprep.subr.mxu0 0.0
      %2278 = vmatpush1.msra.mxu0 %v1349
      %2279 = vmatprep.subr.mxu0 0.0
      %2280 = vmatpush1.msra.mxu0 %v1350
      %2281 = vmatprep.subr.mxu0 0.0
      %2282 = vmatpush1.msra.mxu0 %v1351
      %2283 = vmatprep.subr.mxu0 0.0
      %2284 = vmatpush1.msra.mxu0 %v1352
      %2285 = vmatprep.subr.mxu0 0.0
      %2286 = vmatpush1.msra.mxu0 0.0
      %2287 = vmatprep.subr.mxu0 0.0
      %2288 = vmatpush1.msra.mxu0 0.0
      %2289 = vmatprep.subr.mxu0 0.0
      %2290 = vmatpush1.msra.mxu0 0.0
      %2291 = vmatprep.subr.mxu0 0.0
      %2292 = vmatpush1.msra.mxu0 0.0
      %2293 = vmatprep.subr.mxu0 0.0
      %2294 = vmatpush1.msra.mxu0 0.0
      %2295 = vmatprep.subr.mxu0 0.0
      %2296 = vmatpush1.msra.mxu0 0.0
      %2297 = vmatprep.subr.mxu0 0.0
      %2298 = vmatpush1.msra.mxu0 0.0
      %2299 = vmatprep.subr.mxu0 0.0
      %2300 = vmatpush1.msra.mxu0 0.0
      %2301 = vmatprep.subr.mxu0 0.0
      %2302 = vmatpush1.msra.mxu0 0.0
      %2303 = vmatprep.subr.mxu0 0.0
      %2304 = vmatpush1.msra.mxu0 0.0
      %2305 = vmatprep.subr.mxu0 0.0
      %2306 = vmatpush1.msra.mxu0 0.0
      %2307 = vmatprep.subr.mxu0 0.0
      %2308 = vmatpush1.msra.mxu0 0.0
      %2309 = vmatprep.subr.mxu0 0.0
      %2310 = vmatpush1.msra.mxu0 0.0
      %2311 = vmatprep.subr.mxu0 0.0
      %2312 = vmatpush1.msra.mxu0 0.0
      %2313 = vmatprep.subr.mxu0 0.0
      %2314 = vmatpush1.msra.mxu0 0.0
      %2315 = vmatprep.subr.mxu0 0.0
      %2316 = vmatpush1.msra.mxu0 0.0
      %2317 = vmatprep.mubr.f32.mxu0 0.0
      %2318 = vmatmul.mubr.f32.gmra.mrb[0].mxu0 %v929
      %v2319 = vpop.f32.mrb[0].mxu0
      %v2320 = vadd.f32 %v2095, %v2319
      %v2321 = vpop.f32.mrb[0].mxu0
      %2322 = vmatprep.mubr.f32.mxu0 0.0
      %2323 = vmatmul.mubr.f32.gmra.mrb[0].mxu0 %v938
      %v2324 = vpop.f32.mrb[0].mxu0
      %v2325 = vadd.f32 %v2100, %v2324
      %v2326 = vpop.f32.mrb[0].mxu0
      %2327 = vmatprep.mubr.f32.mxu0 0.0
      %2328 = vmatmul.mubr.f32.gmra.mrb[0].mxu0 %v947
      %v2329 = vpop.f32.mrb[0].mxu0
      %v2330 = vadd.f32 %v2105, %v2329
      %v2331 = vpop.f32.mrb[0].mxu0
      %2332 = vmatprep.mubr.f32.mxu0 0.0
      %2333 = vmatmul.mubr.f32.gmra.mrb[0].mxu0 %v956
      %v2334 = vpop.f32.mrb[0].mxu0
      %v2335 = vadd.f32 %v2110, %v2334
      %v2336 = vpop.f32.mrb[0].mxu0
      %2337 = vmatprep.mubr.f32.mxu0 0.0
      %2338 = vmatmul.mubr.f32.gmra.mrb[0].mxu0 %v965
      %v2339 = vpop.f32.mrb[0].mxu0
      %v2340 = vadd.f32 %v2115, %v2339
      %v2341 = vpop.f32.mrb[0].mxu0
      %2342 = vmatprep.mubr.f32.mxu0 0.0
      %2343 = vmatmul.mubr.f32.gmra.mrb[0].mxu0 %v974
      %v2344 = vpop.f32.mrb[0].mxu0
      %v2345 = vadd.f32 %v2120, %v2344
      %v2346 = vpop.f32.mrb[0].mxu0
      %2347 = vmatprep.mubr.f32.mxu0 0.0
      %2348 = vmatmul.mubr.f32.gmra.mrb[0].mxu0 %v983
      %v2349 = vpop.f32.mrb[0].mxu0
      %v2350 = vadd.f32 %v2125, %v2349
      %v2351 = vpop.f32.mrb[0].mxu0
      %2352 = vmatprep.mubr.f32.mxu0 0.0
      %2353 = vmatmul.mubr.f32.gmra.mrb[0].mxu0 %v992
      %v2354 = vpop.f32.mrb[0].mxu0
      %v2355 = vadd.f32 %v2130, %v2354
      %v2356 = vpop.f32.mrb[0].mxu0
      %2357 = vmatprep.mubr.f32.mxu0 0.0
      %2358 = vmatmul.mubr.f32.gmra.mrb[0].mxu0 %v1001
      %v2359 = vpop.f32.mrb[0].mxu0
      %v2360 = vadd.f32 %v2135, %v2359
      %v2361 = vpop.f32.mrb[0].mxu0
      %2362 = vmatprep.mubr.f32.mxu0 0.0
      %2363 = vmatmul.mubr.f32.gmra.mrb[0].mxu0 %v1010
      %v2364 = vpop.f32.mrb[0].mxu0
      %v2365 = vadd.f32 %v2140, %v2364
      %v2366 = vpop.f32.mrb[0].mxu0
      %2367 = vmatprep.mubr.f32.mxu0 0.0
      %2368 = vmatmul.mubr.f32.gmra.mrb[0].mxu0 %v1019
      %v2369 = vpop.f32.mrb[0].mxu0
      %v2370 = vadd.f32 %v2145, %v2369
      %v2371 = vpop.f32.mrb[0].mxu0
      %2372 = vmatprep.mubr.f32.mxu0 0.0
      %2373 = vmatmul.mubr.f32.gmra.mrb[0].mxu0 %v1028
      %v2374 = vpop.f32.mrb[0].mxu0
      %v2375 = vadd.f32 %v2150, %v2374
      %v2376 = vpop.f32.mrb[0].mxu0
      %2377 = vmatprep.mubr.f32.mxu0 0.0
      %2378 = vmatmul.mubr.f32.gmra.mrb[0].mxu0 %v1037
      %v2379 = vpop.f32.mrb[0].mxu0
      %v2380 = vadd.f32 %v2155, %v2379
      %v2381 = vpop.f32.mrb[0].mxu0
      %2382 = vmatprep.mubr.f32.mxu0 0.0
      %2383 = vmatmul.mubr.f32.gmra.mrb[0].mxu0 %v1046
      %v2384 = vpop.f32.mrb[0].mxu0
      %v2385 = vadd.f32 %v2160, %v2384
      %v2386 = vpop.f32.mrb[0].mxu0
      %2387 = vmatprep.mubr.f32.mxu0 0.0
      %2388 = vmatmul.mubr.f32.gmra.mrb[0].mxu0 %v1055
      %v2389 = vpop.f32.mrb[0].mxu0
      %v2390 = vadd.f32 %v2165, %v2389
      %v2391 = vpop.f32.mrb[0].mxu0
      %2392 = vmatprep.mubr.f32.mxu0 0.0
      %2393 = vmatmul.mubr.f32.gmra.mrb[0].mxu0 %v1064
      %v2394 = vpop.f32.mrb[0].mxu0
      %v2395 = vadd.f32 %v2170, %v2394
      %v2396 = vpop.f32.mrb[0].mxu0
      %2397 = vmatprep.mubr.f32.mxu0 0.0
      %2398 = vmatmul.mubr.f32.gmra.mrb[0].mxu0 %v1073
      %v2399 = vpop.f32.mrb[0].mxu0
      %v2400 = vadd.f32 %v2175, %v2399
      %v2401 = vpop.f32.mrb[0].mxu0
      %2402 = vmatprep.mubr.f32.mxu0 0.0
      %2403 = vmatmul.mubr.f32.gmra.mrb[0].mxu0 %v1082
      %v2404 = vpop.f32.mrb[0].mxu0
      %v2405 = vadd.f32 %v2180, %v2404
      %v2406 = vpop.f32.mrb[0].mxu0
      %2407 = vmatprep.mubr.f32.mxu0 0.0
      %2408 = vmatmul.mubr.f32.gmra.mrb[0].mxu0 %v1091
      %v2409 = vpop.f32.mrb[0].mxu0
      %v2410 = vadd.f32 %v2185, %v2409
      %v2411 = vpop.f32.mrb[0].mxu0
      %2412 = vmatprep.mubr.f32.mxu0 0.0
      %2413 = vmatmul.mubr.f32.gmra.mrb[0].mxu0 %v1100
      %v2414 = vpop.f32.mrb[0].mxu0
      %v2415 = vadd.f32 %v2190, %v2414
      %v2416 = vpop.f32.mrb[0].mxu0
      %2417 = vmatprep.mubr.f32.mxu0 0.0
      %2418 = vmatmul.mubr.f32.gmra.mrb[0].mxu0 %v1109
      %v2419 = vpop.f32.mrb[0].mxu0
      %v2420 = vadd.f32 %v2195, %v2419
      %v2421 = vpop.f32.mrb[0].mxu0
      %2422 = vmatprep.mubr.f32.mxu0 0.0
      %2423 = vmatmul.mubr.f32.gmra.mrb[0].mxu0 %v1118
      %v2424 = vpop.f32.mrb[0].mxu0
      %v2425 = vadd.f32 %v2200, %v2424
      %v2426 = vpop.f32.mrb[0].mxu0
      %2427 = vmatprep.mubr.f32.mxu0 0.0
      %2428 = vmatmul.mubr.f32.gmra.mrb[0].mxu0 %v1127
      %v2429 = vpop.f32.mrb[0].mxu0
      %v2430 = vadd.f32 %v2205, %v2429
      %v2431 = vpop.f32.mrb[0].mxu0
      %2432 = vmatprep.mubr.f32.mxu0 0.0
      %2433 = vmatmul.mubr.f32.gmra.mrb[0].mxu0 %v1136
      %v2434 = vpop.f32.mrb[0].mxu0
      %v2435 = vadd.f32 %v2210, %v2434
      %v2436 = vpop.f32.mrb[0].mxu0
      %2437 = vmatprep.mubr.f32.mxu0 0.0
      %2438 = vmatmul.mubr.f32.gmra.mrb[0].mxu0 %v1145
      %v2439 = vpop.f32.mrb[0].mxu0
      %v2440 = vadd.f32 %v2215, %v2439
      %v2441 = vpop.f32.mrb[0].mxu0
      %2442 = vmatprep.mubr.f32.mxu0 0.0
      %2443 = vmatmul.mubr.f32.gmra.mrb[0].mxu0 %v1154
      %v2444 = vpop.f32.mrb[0].mxu0
      %v2445 = vadd.f32 %v2220, %v2444
      %v2446 = vpop.f32.mrb[0].mxu0
      %2447 = vmatprep.mubr.f32.mxu0 0.0
      %2448 = vmatmul.mubr.f32.gmra.mrb[0].mxu0 %v1163
      %v2449 = vpop.f32.mrb[0].mxu0
      %v2450 = vadd.f32 %v2225, %v2449
      %v2451 = vpop.f32.mrb[0].mxu0
      %2452 = vmatprep.mubr.f32.mxu0 0.0
      %2453 = vmatmul.mubr.f32.gmra.mrb[0].mxu0 %v1172
      %v2454 = vpop.f32.mrb[0].mxu0
      %v2455 = vadd.f32 %v2230, %v2454
      %v2456 = vpop.f32.mrb[0].mxu0
      %2457 = vmatprep.mubr.f32.mxu0 0.0
      %2458 = vmatmul.mubr.f32.gmra.mrb[0].mxu0 %v1181
      %v2459 = vpop.f32.mrb[0].mxu0
      %v2460 = vadd.f32 %v2235, %v2459
      %v2461 = vpop.f32.mrb[0].mxu0
      %2462 = vmatprep.mubr.f32.mxu0 0.0
      %2463 = vmatmul.mubr.f32.gmra.mrb[0].mxu0 %v1190
      %v2464 = vpop.f32.mrb[0].mxu0
      %v2465 = vadd.f32 %v2240, %v2464
      %v2466 = vpop.f32.mrb[0].mxu0
      %2467 = vmatprep.mubr.f32.mxu0 0.0
      %2468 = vmatmul.mubr.f32.gmra.mrb[0].mxu0 %v1199
      %v2469 = vpop.f32.mrb[0].mxu0
      %v2470 = vadd.f32 %v2245, %v2469
      %v2471 = vpop.f32.mrb[0].mxu0
      %2472 = vmatprep.mubr.f32.mxu0 0.0
      %2473 = vmatmul.mubr.f32.gmra.mrb[0].mxu0 %v1208
      %v2474 = vpop.f32.mrb[0].mxu0
      %v2475 = vadd.f32 %v2250, %v2474
      %v2476 = vpop.f32.mrb[0].mxu0
      %2477 = vdwg.mxu0
      %2478 = vst [vmem:[%s231] sm:$0xff] %v2320
      %2479 = vst [vmem:[%s231 + $0x8] sm:$0xff] %v2325
      %2480 = vst [vmem:[%s231 + $0x10] sm:$0xff] %v2330
      %2481 = vst [vmem:[%s231 + $0x18] sm:$0xff] %v2335
      %2482 = vst [vmem:[%s231 + $0x20] sm:$0xff] %v2340
      %2483 = vst [vmem:[%s231 + $0x28] sm:$0xff] %v2345
      %2484 = vst [vmem:[%s231 + $0x30] sm:$0xff] %v2350
      %2485 = vst [vmem:[%s231 + $0x38] sm:$0xff] %v2355
      %2486 = vst [vmem:[%s231 + $0x40] sm:$0xff] %v2360
      %2487 = vst [vmem:[%s231 + $0x48] sm:$0xff] %v2365
      %2488 = vst [vmem:[%s231 + $0x50] sm:$0xff] %v2370
      %2489 = vst [vmem:[%s231 + $0x58] sm:$0xff] %v2375
      %2490 = vst [vmem:[%s231 + $0x60] sm:$0xff] %v2380
      %2491 = vst [vmem:[%s231 + $0x68] sm:$0xff] %v2385
      %2492 = vst [vmem:[%s231 + $0x70] sm:$0xff] %v2390
      %2493 = vst [vmem:[%s231 + $0x78] sm:$0xff] %v2395
      %2494 = vst [vmem:[%s231 + $0x80] sm:$0xff] %v2400
      %2495 = vst [vmem:[%s231 + $0x88] sm:$0xff] %v2405
      %2496 = vst [vmem:[%s231 + $0x90] sm:$0xff] %v2410
      %2497 = vst [vmem:[%s231 + $0x98] sm:$0xff] %v2415
      %2498 = vst [vmem:[%s231 + $0xa0] sm:$0xff] %v2420
      %2499 = vst [vmem:[%s231 + $0xa8] sm:$0xff] %v2425
      %2500 = vst [vmem:[%s231 + $0xb0] sm:$0xff] %v2430
      %2501 = vst [vmem:[%s231 + $0xb8] sm:$0xff] %v2435
      %2502 = vst [vmem:[%s231 + $0xc0] sm:$0xff] %v2440
      %2503 = vst [vmem:[%s231 + $0xc8] sm:$0xff] %v2445
      %2504 = vst [vmem:[%s231 + $0xd0] sm:$0xff] %v2450
      %2505 = vst [vmem:[%s231 + $0xd8] sm:$0xff] %v2455
      %2506 = vst [vmem:[%s231 + $0xe0] sm:$0xff] %v2460
      %2507 = vst [vmem:[%s231 + $0xe8] sm:$0xff] %v2465
      %2508 = vst [vmem:[%s231 + $0xf0] sm:$0xff] %v2470
      %2509 = vst [vmem:[%s231 + $0xf8] sm:$0xff] %v2475
      %v2510 = vadd.f32 %v2320, %v2325
      %v2511 = vadd.f32 %v2510, %v2330
      %v2512 = vadd.f32 %v2511, %v2335
      %v2513 = vadd.f32 %v2512, %v2340
      %v2514 = vadd.f32 %v2513, %v2345
      %v2515 = vadd.f32 %v2514, %v2350
      %v2516 = vadd.f32 %v2515, %v2355
      %v2517 = vadd.f32 %v2516, %v2360
      %v2518 = vadd.f32 %v2517, %v2365
      %v2519 = vadd.f32 %v2518, %v2370
      %v2520 = vadd.f32 %v2519, %v2375
      %v2521 = vadd.f32 %v2520, %v2380
      %v2522 = vadd.f32 %v2521, %v2385
      %v2523 = vadd.f32 %v2522, %v2390
      %v2524 = vadd.f32 %v2523, %v2395
      %v2525 = vadd.f32 %v2524, %v2400
      %v2526 = vadd.f32 %v2525, %v2405
      %v2527 = vadd.f32 %v2526, %v2410
      %v2528 = vadd.f32 %v2527, %v2415
      %v2529 = vadd.f32 %v2528, %v2420
      %v2530 = vadd.f32 %v2529, %v2425
      %v2531 = vadd.f32 %v2530, %v2430
      %v2532 = vadd.f32 %v2531, %v2435
      %v2533 = vadd.f32 %v2532, %v2440
      %v2534 = vadd.f32 %v2533, %v2445
      %v2535 = vadd.f32 %v2534, %v2450
      %v2536 = vadd.f32 %v2535, %v2455
      %v2537 = vadd.f32 %v2536, %v2460
      %v2538 = vadd.f32 %v2537, %v2465
      %v2539 = vadd.f32 %v2538, %v2470
      %v2540 = vadd.f32 %v2539, %v2475
      %v2541 = vrot.slane %v2540, 4
      %v2542 = vadd.f32 %v2540, %v2541
      %v2543 = vrot.slane %v2542, 2
      %v2544 = vadd.f32 %v2542, %v2543
      %v2545 = vrot.slane %v2544, 1
      %v2546 = vadd.f32 %v2544, %v2545
      %2547 = vst [vmem:[%s235] sm:$0x1] %v2546
      %v2548 = vmul.f32 %v2320, %v2320
      %v2549 = vmul.f32 %v2325, %v2325
      %v2550 = vmul.f32 %v2330, %v2330
      %v2551 = vmul.f32 %v2335, %v2335
      %v2552 = vmul.f32 %v2340, %v2340
      %v2553 = vmul.f32 %v2345, %v2345
      %v2554 = vmul.f32 %v2350, %v2350
      %v2555 = vmul.f32 %v2355, %v2355
      %v2556 = vmul.f32 %v2360, %v2360
      %v2557 = vmul.f32 %v2365, %v2365
      %v2558 = vmul.f32 %v2370, %v2370
      %v2559 = vmul.f32 %v2375, %v2375
      %v2560 = vmul.f32 %v2380, %v2380
      %v2561 = vmul.f32 %v2385, %v2385
      %v2562 = vmul.f32 %v2390, %v2390
      %v2563 = vmul.f32 %v2395, %v2395
      %v2564 = vmul.f32 %v2400, %v2400
      %v2565 = vmul.f32 %v2405, %v2405
      %v2566 = vmul.f32 %v2410, %v2410
      %v2567 = vmul.f32 %v2415, %v2415
      %v2568 = vmul.f32 %v2420, %v2420
      %v2569 = vmul.f32 %v2425, %v2425
      %v2570 = vmul.f32 %v2430, %v2430
      %v2571 = vmul.f32 %v2435, %v2435
      %v2572 = vmul.f32 %v2440, %v2440
      %v2573 = vmul.f32 %v2445, %v2445
      %v2574 = vmul.f32 %v2450, %v2450
      %v2575 = vmul.f32 %v2455, %v2455
      %v2576 = vmul.f32 %v2460, %v2460
      %v2577 = vmul.f32 %v2465, %v2465
      %v2578 = vmul.f32 %v2470, %v2470
      %v2579 = vmul.f32 %v2475, %v2475
      %v2580 = vadd.f32 %v2548, %v2549
      %v2581 = vadd.f32 %v2580, %v2550
      %v2582 = vadd.f32 %v2581, %v2551
      %v2583 = vadd.f32 %v2582, %v2552
      %v2584 = vadd.f32 %v2583, %v2553
      %v2585 = vadd.f32 %v2584, %v2554
      %v2586 = vadd.f32 %v2585, %v2555
      %v2587 = vadd.f32 %v2586, %v2556
      %v2588 = vadd.f32 %v2587, %v2557
      %v2589 = vadd.f32 %v2588, %v2558
      %v2590 = vadd.f32 %v2589, %v2559
      %v2591 = vadd.f32 %v2590, %v2560
      %v2592 = vadd.f32 %v2591, %v2561
      %v2593 = vadd.f32 %v2592, %v2562
      %v2594 = vadd.f32 %v2593, %v2563
      %v2595 = vadd.f32 %v2594, %v2564
      %v2596 = vadd.f32 %v2595, %v2565
      %v2597 = vadd.f32 %v2596, %v2566
      %v2598 = vadd.f32 %v2597, %v2567
      %v2599 = vadd.f32 %v2598, %v2568
      %v2600 = vadd.f32 %v2599, %v2569
      %v2601 = vadd.f32 %v2600, %v2570
      %v2602 = vadd.f32 %v2601, %v2571
      %v2603 = vadd.f32 %v2602, %v2572
      %v2604 = vadd.f32 %v2603, %v2573
      %v2605 = vadd.f32 %v2604, %v2574
      %v2606 = vadd.f32 %v2605, %v2575
      %v2607 = vadd.f32 %v2606, %v2576
      %v2608 = vadd.f32 %v2607, %v2577
      %v2609 = vadd.f32 %v2608, %v2578
      %v2610 = vadd.f32 %v2609, %v2579
      %v2611 = vrot.slane %v2610, 4
      %v2612 = vadd.f32 %v2610, %v2611
      %v2613 = vrot.slane %v2612, 2
      %v2614 = vadd.f32 %v2612, %v2613
      %v2615 = vrot.slane %v2614, 1
      %v2616 = vadd.f32 %v2614, %v2615
      %2617 = vst [vmem:[%s235 + $0x1] sm:$0x1] %v2616
      %p2618 = scmp.lt.s32.totalorder %s17, 1
      %s2619 = scalar_select %p2618, %s17, 1
      %s2620 = smul.addr %s2619, 32
      %s2621 = smul.addr %s2620, 8
      %s2622 = scalar_lea.vmem %s4, %s2621
      %p2623 = scmp.lt.s32.totalorder %s17, 1
      %s2624 = scalar_select %p2623, %s17, 1
      %s2625 = smul.addr %s2624, 2
      %s2626 = scalar_lea.vmem %s5, %s2625
      // Predicated region
      $region37: #{double_conv_forward.3} parent=35 // pred_check
        %p2627 = pneg %p124
      $region38: #{double_conv_forward.3} parent=35 // pred_check_branch
        %2629 = sbr.rel (%p2627) target = $region40
      $region39: #{double_conv_forward.3} parent=35 // pred_region
        _
      $region40: #{double_conv_forward.3} parent=35 // pred_fallthru
        _
      // Predicated region
      $region41: #{double_conv_forward.3} parent=35 // pred_check
        %p2630 = pneg %p150
      $region42: #{double_conv_forward.3} parent=35 // pred_check_branch
        %2632 = sbr.rel (%p2630) target = $region44
      $region43: #{double_conv_forward.3} parent=35 // pred_region
        _
      $region44: #{double_conv_forward.3} parent=35 // pred_fallthru
        _
    $region36: #{double_conv_forward.3} parent=5 // pred_fallthru
      _
    %p2633 = scmp.le.s32.totalorder 2, %s12
    // Predicated region
    $region45: #{double_conv_forward.3} parent=5 // pred_check
      %p2634 = pneg %p2633
    $region46: #{double_conv_forward.3} parent=5 // pred_check_branch
      %2636 = sbr.rel (%p2634) target = $region48
    $region47: #{double_conv_forward.3} parent=5 // pred_region
      %s2637 = ssub.s32 %s12, 2
      // Predicated region
      $region49: #{double_conv_forward.3} parent=47 // pred_check
        %p2638 = pneg %p130
      $region50: #{double_conv_forward.3} parent=47 // pred_check_branch
        %2640 = sbr.rel (%p2638) target = $region52
      $region51: #{double_conv_forward.3} parent=47 // pred_region
        %p2641 = scmp.lt.s32.totalorder %s18, 1
        %s2642 = scalar_select %p2641, %s18, 1
        %s2643 = smul.addr %s2642, 32
        %s2644 = smul.addr %s2643, 8
        %s2645 = scalar_lea.vmem %s4, %s2644
      $region52: #{double_conv_forward.3} parent=47 // pred_fallthru
        _
      // Predicated region
      $region53: #{double_conv_forward.3} parent=47 // pred_check
        %p2646 = pneg %p156
      $region54: #{double_conv_forward.3} parent=47 // pred_check_branch
        %2648 = sbr.rel (%p2646) target = $region56
      $region55: #{double_conv_forward.3} parent=47 // pred_region
        %p2649 = scmp.lt.s32.totalorder %s18, 1
        %s2650 = scalar_select %p2649, %s18, 1
        %s2651 = smul.addr %s2650, 2
        %s2652 = scalar_lea.vmem %s5, %s2651
      $region56: #{double_conv_forward.3} parent=47 // pred_fallthru
        _
    $region48: #{double_conv_forward.3} parent=5 // pred_fallthru
      _
  $region6: #{double_conv_forward.3} parent=0 // loop_footer
    %s16 = sadd.s32 1, %s12
  $region7: #{double_conv_forward.3} parent=0 // loop_footer_branch
    %11 = sbr.rel target = $region3
  $region8: #{double_conv_forward.3} parent=0 // loop_exit
    _

// kernel: double_conv_forward.4
$region0: #{double_conv_forward.4}
  #allocation0 [shape = 'u32[]', space=smem, size = 0x4, offset = 0x4, fixed_abs, tag = 'smem constant byte address 0x4 - core index']
  #allocation1 [shape = 'u32[144,128]{1,0:T(1,128)}', space=vmem, size = 0x12000, scoped, tag = 'internal scratch']
  #allocation2 [shape = 'f32[18,18,128]{2,1,0:T(8,128)}', space=vmem, size = 0x36000, scoped, tag = 'scratch operand']
  #allocation3 [shape = 'f32[256,1152]{1,0:T(8,128)}', space=vmem, size = 0x120000, scoped, tag = 'scratch operand']
  %s0 = inlined_call_operand.vmem [shape: f32[1,128], index: 0, kind: input, shape index: {}]
  %s1 = inlined_call_operand.vmem [shape: f32[1,128], index: 1, kind: input, shape index: {}]
  %s2 = inlined_call_operand.vmem [shape: f32[2,16,16,128], index: 2, kind: input, shape index: {}]
  %s3 = inlined_call_operand.vmem [shape: f32[1152,128], index: 3, kind: input, shape index: {}]
  %s4 = inlined_call_operand.vmem [shape: f32[2,16,16,128], index: 4, kind: output, shape index: {0}]
  %s5 = inlined_call_operand.vmem [shape: f32[2,2,128], index: 5, kind: output, shape index: {1}]
  %6 = xla_tuple %s4, %s5
  %s7 = sld [smem:[#allocation0]]
  $region57: #{double_conv_forward.4} parent=0
    _
  %s9 = ssub.s32 1, %s7
  %s10 = scalar_select 0, %s9, %s7
  loop: start=0, step=1, limit=4
  $region2: #{double_conv_forward.4} parent=0 // loop_pre_header
    _
  $region3: #{double_conv_forward.4} parent=0 // loop_header
    %s12 = sphi 0, %s16
    %p13 = scmp.ge.s32.totalorder %s12, 4
    %s20 = sphi 0, %s20
    %s22 = sphi 0, %s20
    %s23 = sphi 0, %s22
    %s37 = sphi 0, %s23
    %s41 = sphi 0, %s41
    %s43 = sphi 0, %s41
    %s44 = sphi 0, %s43
    %s58 = sphi 0, %s44
    %s64 = sphi 0, %s66
    %s67 = sphi 0, %s64
    %s68 = sphi 0, %s67
    %s84 = sphi 0, %s68
    %s88 = sphi 0, %s88
    %s90 = sphi 0, %s88
    %s91 = sphi 0, %s90
    %s105 = sphi 0, %s91
    %s111 = sphi 0, %s113
    %s114 = sphi 0, %s111
    %s115 = sphi 0, %s114
    %s131 = sphi 0, %s115
    %s137 = sphi 0, %s139
    %s140 = sphi 0, %s137
    %s141 = sphi 0, %s140
    %s157 = sphi 0, %s141
  $region4: #{double_conv_forward.4} parent=0 // loop_header_branch
    %15 = sbr.rel (%p13) target = $region8
  $region5: #{double_conv_forward.4} parent=0 // loop_body
    %s17 = ssub.s32 %s12, 1
    %s18 = ssub.s32 %s12, 2
    %s19 = sadd.s32 %s12, 1
    %s21 = sadd.s32 %s20, 1
    %p24 = scmp.eq.s32.totalorder %s12, 1
    %p25 = scmp.ne.s32.totalorder %s20, %s22
    %p26 = scmp.eq.s32.totalorder %s12, 0
    %p27 = por %p25, %p26
    %p28 = scmp.ne.s32.totalorder %s20, %s22
    %p29 = scmp.eq.s32.totalorder %s17, 1
    %p30 = por %p28, %p29
    %p31 = scmp.ne.s32.totalorder %s22, %s23
    %p32 = scmp.eq.s32.totalorder %s17, 0
    %p33 = por %p31, %p32
    %p34 = scmp.ne.s32.totalorder %s22, %s23
    %p35 = scmp.eq.s32.totalorder %s18, 1
    %p36 = por %p34, %p35
    %p38 = scmp.ne.s32.totalorder %s23, %s37
    %p39 = scmp.eq.s32.totalorder %s18, 0
    %p40 = por %p38, %p39
    %s42 = sadd.s32 %s41, 1
    %p45 = scmp.eq.s32.totalorder %s12, 1
    %p46 = scmp.ne.s32.totalorder %s41, %s43
    %p47 = scmp.eq.s32.totalorder %s12, 0
    %p48 = por %p46, %p47
    %p49 = scmp.ne.s32.totalorder %s41, %s43
    %p50 = scmp.eq.s32.totalorder %s17, 1
    %p51 = por %p49, %p50
    %p52 = scmp.ne.s32.totalorder %s43, %s44
    %p53 = scmp.eq.s32.totalorder %s17, 0
    %p54 = por %p52, %p53
    %p55 = scmp.ne.s32.totalorder %s43, %s44
    %p56 = scmp.eq.s32.totalorder %s18, 1
    %p57 = por %p55, %p56
    %p59 = scmp.ne.s32.totalorder %s44, %s58
    %p60 = scmp.eq.s32.totalorder %s18, 0
    %p61 = por %p59, %p60
    %s62 = ssub.s32 %s12, %s19
    %p63 = scmp.eq.s32.totalorder %s62, 0
    %s65 = sadd.s32 %s64, 1
    %s66 = scalar_select %p63, %s64, %s65
    %p69 = pneg %p63
    %p70 = scmp.eq.s32.totalorder %s12, 1
    %p71 = por %p69, %p70
    %p72 = scmp.ne.s32.totalorder %s64, %s67
    %p73 = scmp.eq.s32.totalorder %s12, 0
    %p74 = por %p72, %p73
    %p75 = scmp.ne.s32.totalorder %s64, %s67
    %p76 = scmp.eq.s32.totalorder %s17, 1
    %p77 = por %p75, %p76
    %p78 = scmp.ne.s32.totalorder %s67, %s68
    %p79 = scmp.eq.s32.totalorder %s17, 0
    %p80 = por %p78, %p79
    %p81 = scmp.ne.s32.totalorder %s67, %s68
    %p82 = scmp.eq.s32.totalorder %s18, 1
    %p83 = por %p81, %p82
    %p85 = scmp.ne.s32.totalorder %s68, %s84
    %p86 = scmp.eq.s32.totalorder %s18, 0
    %p87 = por %p85, %p86
    %s89 = sadd.s32 %s88, 1
    %p92 = scmp.eq.s32.totalorder %s12, 1
    %p93 = scmp.ne.s32.totalorder %s88, %s90
    %p94 = scmp.eq.s32.totalorder %s12, 0
    %p95 = por %p93, %p94
    %p96 = scmp.ne.s32.totalorder %s88, %s90
    %p97 = scmp.eq.s32.totalorder %s17, 1
    %p98 = por %p96, %p97
    %p99 = scmp.ne.s32.totalorder %s90, %s91
    %p100 = scmp.eq.s32.totalorder %s17, 0
    %p101 = por %p99, %p100
    %p102 = scmp.ne.s32.totalorder %s90, %s91
    %p103 = scmp.eq.s32.totalorder %s18, 1
    %p104 = por %p102, %p103
    %p106 = scmp.ne.s32.totalorder %s91, %s105
    %p107 = scmp.eq.s32.totalorder %s18, 0
    %p108 = por %p106, %p107
    %s109 = ssub.s32 %s12, %s19
    %p110 = scmp.eq.s32.totalorder %s109, 0
    %s112 = sadd.s32 %s111, 1
    %s113 = scalar_select %p110, %s111, %s112
    %p116 = pneg %p110
    %p117 = scmp.eq.s32.totalorder %s12, 1
    %p118 = por %p116, %p117
    %p119 = scmp.ne.s32.totalorder %s111, %s114
    %p120 = scmp.eq.s32.totalorder %s12, 0
    %p121 = por %p119, %p120
    %p122 = scmp.ne.s32.totalorder %s111, %s114
    %p123 = scmp.eq.s32.totalorder %s17, 1
    %p124 = por %p122, %p123
    %p125 = scmp.ne.s32.totalorder %s114, %s115
    %p126 = scmp.eq.s32.totalorder %s17, 0
    %p127 = por %p125, %p126
    %p128 = scmp.ne.s32.totalorder %s114, %s115
    %p129 = scmp.eq.s32.totalorder %s18, 1
    %p130 = por %p128, %p129
    %p132 = scmp.ne.s32.totalorder %s115, %s131
    %p133 = scmp.eq.s32.totalorder %s18, 0
    %p134 = por %p132, %p133
    %s135 = ssub.s32 %s12, %s19
    %p136 = scmp.eq.s32.totalorder %s135, 0
    %s138 = sadd.s32 %s137, 1
    %s139 = scalar_select %p136, %s137, %s138
    %p142 = pneg %p136
    %p143 = scmp.eq.s32.totalorder %s12, 1
    %p144 = por %p142, %p143
    %p145 = scmp.ne.s32.totalorder %s137, %s140
    %p146 = scmp.eq.s32.totalorder %s12, 0
    %p147 = por %p145, %p146
    %p148 = scmp.ne.s32.totalorder %s137, %s140
    %p149 = scmp.eq.s32.totalorder %s17, 1
    %p150 = por %p148, %p149
    %p151 = scmp.ne.s32.totalorder %s140, %s141
    %p152 = scmp.eq.s32.totalorder %s17, 0
    %p153 = por %p151, %p152
    %p154 = scmp.ne.s32.totalorder %s140, %s141
    %p155 = scmp.eq.s32.totalorder %s18, 1
    %p156 = por %p154, %p155
    %p158 = scmp.ne.s32.totalorder %s141, %s157
    %p159 = scmp.eq.s32.totalorder %s18, 0
    %p160 = por %p158, %p159
    %p161 = scmp.le.s32.totalorder 1, %s12
    %p162 = scmp.lt.s32.totalorder %s12, 3
    %p163 = pnand %p161, %p162
    %p164 = pneg %p163
    // Predicated region
    $region9: #{double_conv_forward.4} parent=5 // pred_check
      _
    $region10: #{double_conv_forward.4} parent=5 // pred_check_branch
      %166 = sbr.rel (%p163) target = $region12
    $region11: #{double_conv_forward.4} parent=5 // pred_region
      %s167 = ssub.s32 %s12, 1
      // Predicated region
      $region13: #{double_conv_forward.4} parent=11 // pred_check
        %p168 = pneg %p33
      $region14: #{double_conv_forward.4} parent=11 // pred_check_branch
        %170 = sbr.rel (%p168) target = $region16
      $region15: #{double_conv_forward.4} parent=11 // pred_region
        _
      $region16: #{double_conv_forward.4} parent=11 // pred_fallthru
        _
      // Predicated region
      $region17: #{double_conv_forward.4} parent=11 // pred_check
        %p171 = pneg %p54
      $region18: #{double_conv_forward.4} parent=11 // pred_check_branch
        %173 = sbr.rel (%p171) target = $region20
      $region19: #{double_conv_forward.4} parent=11 // pred_region
        _
      $region20: #{double_conv_forward.4} parent=11 // pred_fallthru
        _
      // Predicated region
      $region21: #{double_conv_forward.4} parent=11 // pred_check
        %p174 = pneg %p101
      $region22: #{double_conv_forward.4} parent=11 // pred_check_branch
        %176 = sbr.rel (%p174) target = $region24
      $region23: #{double_conv_forward.4} parent=11 // pred_region
        _
      $region24: #{double_conv_forward.4} parent=11 // pred_fallthru
        _
    $region12: #{double_conv_forward.4} parent=5 // pred_fallthru
      _
    %p177 = scmp.lt.s32.totalorder %s12, 2
    // Predicated region
    $region25: #{double_conv_forward.4} parent=5 // pred_check
      %p178 = pneg %p177
    $region26: #{double_conv_forward.4} parent=5 // pred_check_branch
      %180 = sbr.rel (%p178) target = $region28
    $region27: #{double_conv_forward.4} parent=5 // pred_region
      // Predicated region
      $region29: #{double_conv_forward.4} parent=27 // pred_check
        %p181 = pneg %p74
      $region30: #{double_conv_forward.4} parent=27 // pred_check_branch
        %183 = sbr.rel (%p181) target = $region32
      $region31: #{double_conv_forward.4} parent=27 // pred_region
        %p184 = scmp.lt.s32.totalorder %s12, 1
        %s185 = scalar_select %p184, %s12, 1
        %s186 = smul.addr %s185, 32
        %s187 = smul.addr %s186, 8
        %s188 = scalar_lea.vmem %s2, %s187
      $region32: #{double_conv_forward.4} parent=27 // pred_fallthru
        _
    $region28: #{double_conv_forward.4} parent=5 // pred_fallthru
      _
    %p189 = scmp.le.s32.totalorder 1, %s12
    %p190 = scmp.lt.s32.totalorder %s12, 3
    %p191 = pnand %p189, %p190
    %p192 = pneg %p191
    // Predicated region
    $region33: #{double_conv_forward.4} parent=5 // pred_check
      _
    $region34: #{double_conv_forward.4} parent=5 // pred_check_branch
      %194 = sbr.rel (%p191) target = $region36
    $region35: #{double_conv_forward.4} parent=5 // pred_region
      %s195 = ssub.s32 %s12, 1
      %p196 = pneg %p33
      %p197 = pneg %p30
      %p198 = pneg %p54
      %p199 = pneg %p51
      %p200 = scmp.lt.s32.totalorder %s17, 1
      %s201 = scalar_select %p200, %s17, 1
      %s202 = smul.addr %s201, 32
      %s203 = smul.addr %s202, 8
      %s204 = scalar_lea.vmem %s2, %s203
      %p205 = pneg %p80
      %p206 = pneg %p77
      %p207 = pneg %p101
      %p208 = pneg %p98
      %p209 = pneg %p127
      %p210 = pneg %p124
      %p211 = scmp.lt.s32.totalorder %s17, 1
      %s212 = scalar_select %p211, %s17, 1
      %s213 = smul.addr %s212, 32
      %s214 = smul.addr %s213, 8
      %s215 = scalar_lea.vmem %s4, %s214
      %p216 = pneg %p153
      %p217 = pneg %p150
      %p218 = scmp.lt.s32.totalorder %s17, 1
      %s219 = scalar_select %p218, %s17, 1
      %s220 = smul.addr %s219, 2
      %s221 = scalar_lea.vmem %s5, %s220
      %p222 = scmp.lt.s32.totalorder %s17, 1
      %s223 = scalar_select %p222, %s17, 1
      %s224 = smul.addr %s223, 32
      %s225 = smul.addr %s224, 8
      %s226 = scalar_lea.vmem %s2, %s225
      %p227 = scmp.lt.s32.totalorder %s17, 1
      %s228 = scalar_select %p227, %s17, 1
      %s229 = smul.addr %s228, 32
      %s230 = smul.addr %s229, 8
      %s231 = scalar_lea.vmem %s4, %s230
      %p232 = scmp.lt.s32.totalorder %s17, 1
      %s233 = scalar_select %p232, %s17, 1
      %s234 = smul.addr %s233, 2
      %s235 = scalar_lea.vmem %s5, %s234
      %v236 = vld [vmem:[%s226] sm:$0xff]
      %v237 = vld [vmem:[%s226 + $0x8] sm:$0xff]
      %v238 = vld [vmem:[%s226 + $0x10] sm:$0xff]
      %v239 = vld [vmem:[%s226 + $0x18] sm:$0xff]
      %v240 = vld [vmem:[%s226 + $0x20] sm:$0xff]
      %v241 = vld [vmem:[%s226 + $0x28] sm:$0xff]
      %v242 = vld [vmem:[%s226 + $0x30] sm:$0xff]
      %v243 = vld [vmem:[%s226 + $0x38] sm:$0xff]
      %v244 = vld [vmem:[%s226 + $0x40] sm:$0xff]
      %v245 = vld [vmem:[%s226 + $0x48] sm:$0xff]
      %v246 = vld [vmem:[%s226 + $0x50] sm:$0xff]
      %v247 = vld [vmem:[%s226 + $0x58] sm:$0xff]
      %v248 = vld [vmem:[%s226 + $0x60] sm:$0xff]
      %v249 = vld [vmem:[%s226 + $0x68] sm:$0xff]
      %v250 = vld [vmem:[%s226 + $0x70] sm:$0xff]
      %v251 = vld [vmem:[%s226 + $0x78] sm:$0xff]
      %v252 = vld [vmem:[%s226 + $0x80] sm:$0xff]
      %v253 = vld [vmem:[%s226 + $0x88] sm:$0xff]
      %v254 = vld [vmem:[%s226 + $0x90] sm:$0xff]
      %v255 = vld [vmem:[%s226 + $0x98] sm:$0xff]
      %v256 = vld [vmem:[%s226 + $0xa0] sm:$0xff]
      %v257 = vld [vmem:[%s226 + $0xa8] sm:$0xff]
      %v258 = vld [vmem:[%s226 + $0xb0] sm:$0xff]
      %v259 = vld [vmem:[%s226 + $0xb8] sm:$0xff]
      %v260 = vld [vmem:[%s226 + $0xc0] sm:$0xff]
      %v261 = vld [vmem:[%s226 + $0xc8] sm:$0xff]
      %v262 = vld [vmem:[%s226 + $0xd0] sm:$0xff]
      %v263 = vld [vmem:[%s226 + $0xd8] sm:$0xff]
      %v264 = vld [vmem:[%s226 + $0xe0] sm:$0xff]
      %v265 = vld [vmem:[%s226 + $0xe8] sm:$0xff]
      %v266 = vld [vmem:[%s226 + $0xf0] sm:$0xff]
      %v267 = vld [vmem:[%s226 + $0xf8] sm:$0xff]
      %v268 = vld [vmem:[%s0] sm:$0x1]
      %v270 = vlaneseq
      %v271 = vshrl.u32 %v270, 7
      %v272 = vsub.s32 0, %v271
      %v273 = vrot.slane %v268, %v272
      %v275 = vmul.f32 %v236, %v273
      %v276 = vmul.f32 %v237, %v273
      %v277 = vmul.f32 %v238, %v273
      %v278 = vmul.f32 %v239, %v273
      %v279 = vmul.f32 %v240, %v273
      %v280 = vmul.f32 %v241, %v273
      %v281 = vmul.f32 %v242, %v273
      %v282 = vmul.f32 %v243, %v273
      %v283 = vmul.f32 %v244, %v273
      %v284 = vmul.f32 %v245, %v273
      %v285 = vmul.f32 %v246, %v273
      %v286 = vmul.f32 %v247, %v273
      %v287 = vmul.f32 %v248, %v273
      %v288 = vmul.f32 %v249, %v273
      %v289 = vmul.f32 %v250, %v273
      %v290 = vmul.f32 %v251, %v273
      %v291 = vmul.f32 %v252, %v273
      %v292 = vmul.f32 %v253, %v273
      %v293 = vmul.f32 %v254, %v273
      %v294 = vmul.f32 %v255, %v273
      %v295 = vmul.f32 %v256, %v273
      %v296 = vmul.f32 %v257, %v273
      %v297 = vmul.f32 %v258, %v273
      %v298 = vmul.f32 %v259, %v273
      %v299 = vmul.f32 %v260, %v273
      %v300 = vmul.f32 %v261, %v273
      %v301 = vmul.f32 %v262, %v273
      %v302 = vmul.f32 %v263, %v273
      %v303 = vmul.f32 %v264, %v273
      %v304 = vmul.f32 %v265, %v273
      %v305 = vmul.f32 %v266, %v273
      %v306 = vmul.f32 %v267, %v273
      %v307 = vld [vmem:[%s1] sm:$0x1]
      %v309 = vlaneseq
      %v310 = vshrl.u32 %v309, 7
      %v311 = vsub.s32 0, %v310
      %v312 = vrot.slane %v307, %v311
      %v314 = vadd.f32 %v275, %v312
      %v315 = vadd.f32 %v276, %v312
      %v316 = vadd.f32 %v277, %v312
      %v317 = vadd.f32 %v278, %v312
      %v318 = vadd.f32 %v279, %v312
      %v319 = vadd.f32 %v280, %v312
      %v320 = vadd.f32 %v281, %v312
      %v321 = vadd.f32 %v282, %v312
      %v322 = vadd.f32 %v283, %v312
      %v323 = vadd.f32 %v284, %v312
      %v324 = vadd.f32 %v285, %v312
      %v325 = vadd.f32 %v286, %v312
      %v326 = vadd.f32 %v287, %v312
      %v327 = vadd.f32 %v288, %v312
      %v328 = vadd.f32 %v289, %v312
      %v329 = vadd.f32 %v290, %v312
      %v330 = vadd.f32 %v291, %v312
      %v331 = vadd.f32 %v292, %v312
      %v332 = vadd.f32 %v293, %v312
      %v333 = vadd.f32 %v294, %v312
      %v334 = vadd.f32 %v295, %v312
      %v335 = vadd.f32 %v296, %v312
      %v336 = vadd.f32 %v297, %v312
      %v337 = vadd.f32 %v298, %v312
      %v338 = vadd.f32 %v299, %v312
      %v339 = vadd.f32 %v300, %v312
      %v340 = vadd.f32 %v301, %v312
      %v341 = vadd.f32 %v302, %v312
      %v342 = vadd.f32 %v303, %v312
      %v343 = vadd.f32 %v304, %v312
      %v344 = vadd.f32 %v305, %v312
      %v345 = vadd.f32 %v306, %v312
      %v346 = vmax.f32 %v314, 0.0
      %v347 = vmax.f32 %v315, 0.0
      %v348 = vmax.f32 %v316, 0.0
      %v349 = vmax.f32 %v317, 0.0
      %v350 = vmax.f32 %v318, 0.0
      %v351 = vmax.f32 %v319, 0.0
      %v352 = vmax.f32 %v320, 0.0
      %v353 = vmax.f32 %v321, 0.0
      %v354 = vmax.f32 %v322, 0.0
      %v355 = vmax.f32 %v323, 0.0
      %v356 = vmax.f32 %v324, 0.0
      %v357 = vmax.f32 %v325, 0.0
      %v358 = vmax.f32 %v326, 0.0
      %v359 = vmax.f32 %v327, 0.0
      %v360 = vmax.f32 %v328, 0.0
      %v361 = vmax.f32 %v329, 0.0
      %v362 = vmax.f32 %v330, 0.0
      %v363 = vmax.f32 %v331, 0.0
      %v364 = vmax.f32 %v332, 0.0
      %v365 = vmax.f32 %v333, 0.0
      %v366 = vmax.f32 %v334, 0.0
      %v367 = vmax.f32 %v335, 0.0
      %v368 = vmax.f32 %v336, 0.0
      %v369 = vmax.f32 %v337, 0.0
      %v370 = vmax.f32 %v338, 0.0
      %v371 = vmax.f32 %v339, 0.0
      %v372 = vmax.f32 %v340, 0.0
      %v373 = vmax.f32 %v341, 0.0
      %v374 = vmax.f32 %v342, 0.0
      %v375 = vmax.f32 %v343, 0.0
      %v376 = vmax.f32 %v344, 0.0
      %v377 = vmax.f32 %v345, 0.0
      %378 = vst [vmem:[#allocation2] sm:$0xff] 0.0
      %379 = vst [vmem:[#allocation2 + $0x8] sm:$0xff] 0.0
      %380 = vst [vmem:[#allocation2 + $0x10] sm:$0x3] 0.0
      %s381 = scalar_lea.vmem [#allocation2], 408
      %382 = vst [vmem:[%s381] sm:$0xff] 0.0
      %383 = vst [vmem:[%s381 + $0x8] sm:$0xff] 0.0
      %384 = vst [vmem:[%s381 + $0x10] sm:$0x3] 0.0
      %385 = vst [vmem:[#allocation2] sm:$0x1] 0.0
      %386 = vst [vmem:[#allocation2 + $0x18] sm:$0x1] 0.0
      %387 = vst [vmem:[#allocation2 + $0x30] sm:$0x1] 0.0
      %388 = vst [vmem:[#allocation2 + $0x48] sm:$0x1] 0.0
      %389 = vst [vmem:[#allocation2 + $0x60] sm:$0x1] 0.0
      %390 = vst [vmem:[#allocation2 + $0x78] sm:$0x1] 0.0
      %391 = vst [vmem:[#allocation2 + $0x90] sm:$0x1] 0.0
      %392 = vst [vmem:[#allocation2 + $0xa8] sm:$0x1] 0.0
      %393 = vst [vmem:[#allocation2 + $0xc0] sm:$0x1] 0.0
      %394 = vst [vmem:[#allocation2 + $0xd8] sm:$0x1] 0.0
      %395 = vst [vmem:[#allocation2 + $0xf0] sm:$0x1] 0.0
      %396 = vst [vmem:[#allocation2 + $0x108] sm:$0x1] 0.0
      %397 = vst [vmem:[#allocation2 + $0x120] sm:$0x1] 0.0
      %398 = vst [vmem:[#allocation2 + $0x138] sm:$0x1] 0.0
      %399 = vst [vmem:[#allocation2 + $0x150] sm:$0x1] 0.0
      %400 = vst [vmem:[#allocation2 + $0x168] sm:$0x1] 0.0
      %401 = vst [vmem:[#allocation2 + $0x180] sm:$0x1] 0.0
      %402 = vst [vmem:[#allocation2 + $0x198] sm:$0x1] 0.0
      %403 = vst [vmem:[#allocation2 + $0x11] sm:$0x1] 0.0
      %404 = vst [vmem:[#allocation2 + $0x29] sm:$0x1] 0.0
      %405 = vst [vmem:[#allocation2 + $0x41] sm:$0x1] 0.0
      %406 = vst [vmem:[#allocation2 + $0x59] sm:$0x1] 0.0
      %407 = vst [vmem:[#allocation2 + $0x71] sm:$0x1] 0.0
      %408 = vst [vmem:[#allocation2 + $0x89] sm:$0x1] 0.0
      %409 = vst [vmem:[#allocation2 + $0xa1] sm:$0x1] 0.0
      %410 = vst [vmem:[#allocation2 + $0xb9] sm:$0x1] 0.0
      %411 = vst [vmem:[#allocation2 + $0xd1] sm:$0x1] 0.0
      %412 = vst [vmem:[#allocation2 + $0xe9] sm:$0x1] 0.0
      %413 = vst [vmem:[#allocation2 + $0x101] sm:$0x1] 0.0
      %414 = vst [vmem:[#allocation2 + $0x119] sm:$0x1] 0.0
      %415 = vst [vmem:[#allocation2 + $0x131] sm:$0x1] 0.0
      %416 = vst [vmem:[#allocation2 + $0x149] sm:$0x1] 0.0
      %417 = vst [vmem:[#allocation2 + $0x161] sm:$0x1] 0.0
      %418 = vst [vmem:[#allocation2 + $0x179] sm:$0x1] 0.0
      %419 = vst [vmem:[#allocation2 + $0x191] sm:$0x1] 0.0
      %420 = vst [vmem:[#allocation2 + $0x1a9] sm:$0x1] 0.0
      %s421 = scalar_lea.vmem [#allocation2], 24
      %422 = vst [vmem:[%s421 + $0x1] sm:$0xff] %v346
      %423 = vst [vmem:[%s421 + $0x9] sm:$0xff] %v347
      %424 = vst [vmem:[%s421 + $0x19] sm:$0xff] %v348
      %425 = vst [vmem:[%s421 + $0x21] sm:$0xff] %v349
      %426 = vst [vmem:[%s421 + $0x31] sm:$0xff] %v350
      %427 = vst [vmem:[%s421 + $0x39] sm:$0xff] %v351
      %428 = vst [vmem:[%s421 + $0x49] sm:$0xff] %v352
      %429 = vst [vmem:[%s421 + $0x51] sm:$0xff] %v353
      %430 = vst [vmem:[%s421 + $0x61] sm:$0xff] %v354
      %431 = vst [vmem:[%s421 + $0x69] sm:$0xff] %v355
      %432 = vst [vmem:[%s421 + $0x79] sm:$0xff] %v356
      %433 = vst [vmem:[%s421 + $0x81] sm:$0xff] %v357
      %434 = vst [vmem:[%s421 + $0x91] sm:$0xff] %v358
      %435 = vst [vmem:[%s421 + $0x99] sm:$0xff] %v359
      %436 = vst [vmem:[%s421 + $0xa9] sm:$0xff] %v360
      %437 = vst [vmem:[%s421 + $0xb1] sm:$0xff] %v361
      %438 = vst [vmem:[%s421 + $0xc1] sm:$0xff] %v362
      %439 = vst [vmem:[%s421 + $0xc9] sm:$0xff] %v363
      %440 = vst [vmem:[%s421 + $0xd9] sm:$0xff] %v364
      %441 = vst [vmem:[%s421 + $0xe1] sm:$0xff] %v365
      %442 = vst [vmem:[%s421 + $0xf1] sm:$0xff] %v366
      %443 = vst [vmem:[%s421 + $0xf9] sm:$0xff] %v367
      %444 = vst [vmem:[%s421 + $0x109] sm:$0xff] %v368
      %445 = vst [vmem:[%s421 + $0x111] sm:$0xff] %v369
      %446 = vst [vmem:[%s421 + $0x121] sm:$0xff] %v370
      %447 = vst [vmem:[%s421 + $0x129] sm:$0xff] %v371
      %448 = vst [vmem:[%s421 + $0x139] sm:$0xff] %v372
      %449 = vst [vmem:[%s421 + $0x141] sm:$0xff] %v373
      %450 = vst [vmem:[%s421 + $0x151] sm:$0xff] %v374
      %451 = vst [vmem:[%s421 + $0x159] sm:$0xff] %v375
      %452 = vst [vmem:[%s421 + $0x169] sm:$0xff] %v376
      %453 = vst [vmem:[%s421 + $0x171] sm:$0xff] %v377
      %v454 = vld [vmem:[#allocation2] sm:$0xff]
      %v455 = vld [vmem:[#allocation2 + $0x8] sm:$0xff]
      %v456 = vld [vmem:[#allocation2 + $0x18] sm:$0xff]
      %v457 = vld [vmem:[#allocation2 + $0x20] sm:$0xff]
      %v458 = vld [vmem:[#allocation2 + $0x30] sm:$0xff]
      %v459 = vld [vmem:[#allocation2 + $0x38] sm:$0xff]
      %v460 = vld [vmem:[#allocation2 + $0x48] sm:$0xff]
      %v461 = vld [vmem:[#allocation2 + $0x50] sm:$0xff]
      %v462 = vld [vmem:[#allocation2 + $0x60] sm:$0xff]
      %v463 = vld [vmem:[#allocation2 + $0x68] sm:$0xff]
      %v464 = vld [vmem:[#allocation2 + $0x78] sm:$0xff]
      %v465 = vld [vmem:[#allocation2 + $0x80] sm:$0xff]
      %v466 = vld [vmem:[#allocation2 + $0x90] sm:$0xff]
      %v467 = vld [vmem:[#allocation2 + $0x98] sm:$0xff]
      %v468 = vld [vmem:[#allocation2 + $0xa8] sm:$0xff]
      %v469 = vld [vmem:[#allocation2 + $0xb0] sm:$0xff]
      %v470 = vld [vmem:[#allocation2 + $0xc0] sm:$0xff]
      %v471 = vld [vmem:[#allocation2 + $0xc8] sm:$0xff]
      %v472 = vld [vmem:[#allocation2 + $0xd8] sm:$0xff]
      %v473 = vld [vmem:[#allocation2 + $0xe0] sm:$0xff]
      %v474 = vld [vmem:[#allocation2 + $0xf0] sm:$0xff]
      %v475 = vld [vmem:[#allocation2 + $0xf8] sm:$0xff]
      %v476 = vld [vmem:[#allocation2 + $0x108] sm:$0xff]
      %v477 = vld [vmem:[#allocation2 + $0x110] sm:$0xff]
      %v478 = vld [vmem:[#allocation2 + $0x120] sm:$0xff]
      %v479 = vld [vmem:[#allocation2 + $0x128] sm:$0xff]
      %v480 = vld [vmem:[#allocation2 + $0x138] sm:$0xff]
      %v481 = vld [vmem:[#allocation2 + $0x140] sm:$0xff]
      %v482 = vld [vmem:[#allocation2 + $0x150] sm:$0xff]
      %v483 = vld [vmem:[#allocation2 + $0x158] sm:$0xff]
      %v484 = vld [vmem:[#allocation2 + $0x168] sm:$0xff]
      %v485 = vld [vmem:[#allocation2 + $0x170] sm:$0xff]
      %486 = vst [vmem:[#allocation3] sm:$0xff] %v454
      %487 = vst [vmem:[#allocation3 + $0x48] sm:$0xff] %v455
      %488 = vst [vmem:[#allocation3 + $0x90] sm:$0xff] %v456
      %489 = vst [vmem:[#allocation3 + $0xd8] sm:$0xff] %v457
      %490 = vst [vmem:[#allocation3 + $0x120] sm:$0xff] %v458
      %491 = vst [vmem:[#allocation3 + $0x168] sm:$0xff] %v459
      %492 = vst [vmem:[#allocation3 + $0x1b0] sm:$0xff] %v460
      %493 = vst [vmem:[#allocation3 + $0x1f8] sm:$0xff] %v461
      %494 = vst [vmem:[#allocation3 + $0x240] sm:$0xff] %v462
      %495 = vst [vmem:[#allocation3 + $0x288] sm:$0xff] %v463
      %496 = vst [vmem:[#allocation3 + $0x2d0] sm:$0xff] %v464
      %497 = vst [vmem:[#allocation3 + $0x318] sm:$0xff] %v465
      %498 = vst [vmem:[#allocation3 + $0x360] sm:$0xff] %v466
      %499 = vst [vmem:[#allocation3 + $0x3a8] sm:$0xff] %v467
      %500 = vst [vmem:[#allocation3 + $0x3f0] sm:$0xff] %v468
      %501 = vst [vmem:[#allocation3 + $0x438] sm:$0xff] %v469
      %502 = vst [vmem:[#allocation3 + $0x480] sm:$0xff] %v470
      %503 = vst [vmem:[#allocation3 + $0x4c8] sm:$0xff] %v471
      %504 = vst [vmem:[#allocation3 + $0x510] sm:$0xff] %v472
      %505 = vst [vmem:[#allocation3 + $0x558] sm:$0xff] %v473
      %506 = vst [vmem:[#allocation3 + $0x5a0] sm:$0xff] %v474
      %507 = vst [vmem:[#allocation3 + $0x5e8] sm:$0xff] %v475
      %508 = vst [vmem:[#allocation3 + $0x630] sm:$0xff] %v476
      %509 = vst [vmem:[#allocation3 + $0x678] sm:$0xff] %v477
      %510 = vst [vmem:[#allocation3 + $0x6c0] sm:$0xff] %v478
      %511 = vst [vmem:[#allocation3 + $0x708] sm:$0xff] %v479
      %512 = vst [vmem:[#allocation3 + $0x750] sm:$0xff] %v480
      %513 = vst [vmem:[#allocation3 + $0x798] sm:$0xff] %v481
      %514 = vst [vmem:[#allocation3 + $0x7e0] sm:$0xff] %v482
      %515 = vst [vmem:[#allocation3 + $0x828] sm:$0xff] %v483
      %516 = vst [vmem:[#allocation3 + $0x870] sm:$0xff] %v484
      %517 = vst [vmem:[#allocation3 + $0x8b8] sm:$0xff] %v485
      %v518 = vld [vmem:[#allocation2 + $0x1] sm:$0xff]
      %v519 = vld [vmem:[#allocation2 + $0x9] sm:$0xff]
      %v520 = vld [vmem:[#allocation2 + $0x19] sm:$0xff]
      %v521 = vld [vmem:[#allocation2 + $0x21] sm:$0xff]
      %v522 = vld [vmem:[#allocation2 + $0x31] sm:$0xff]
      %v523 = vld [vmem:[#allocation2 + $0x39] sm:$0xff]
      %v524 = vld [vmem:[#allocation2 + $0x49] sm:$0xff]
      %v525 = vld [vmem:[#allocation2 + $0x51] sm:$0xff]
      %v526 = vld [vmem:[#allocation2 + $0x61] sm:$0xff]
      %v527 = vld [vmem:[#allocation2 + $0x69] sm:$0xff]
      %v528 = vld [vmem:[#allocation2 + $0x79] sm:$0xff]
      %v529 = vld [vmem:[#allocation2 + $0x81] sm:$0xff]
      %v530 = vld [vmem:[#allocation2 + $0x91] sm:$0xff]
      %v531 = vld [vmem:[#allocation2 + $0x99] sm:$0xff]
      %v532 = vld [vmem:[#allocation2 + $0xa9] sm:$0xff]
      %v533 = vld [vmem:[#allocation2 + $0xb1] sm:$0xff]
      %v534 = vld [vmem:[#allocation2 + $0xc1] sm:$0xff]
      %v535 = vld [vmem:[#allocation2 + $0xc9] sm:$0xff]
      %v536 = vld [vmem:[#allocation2 + $0xd9] sm:$0xff]
      %v537 = vld [vmem:[#allocation2 + $0xe1] sm:$0xff]
      %v538 = vld [vmem:[#allocation2 + $0xf1] sm:$0xff]
      %v539 = vld [vmem:[#allocation2 + $0xf9] sm:$0xff]
      %v540 = vld [vmem:[#allocation2 + $0x109] sm:$0xff]
      %v541 = vld [vmem:[#allocation2 + $0x111] sm:$0xff]
      %v542 = vld [vmem:[#allocation2 + $0x121] sm:$0xff]
      %v543 = vld [vmem:[#allocation2 + $0x129] sm:$0xff]
      %v544 = vld [vmem:[#allocation2 + $0x139] sm:$0xff]
      %v545 = vld [vmem:[#allocation2 + $0x141] sm:$0xff]
      %v546 = vld [vmem:[#allocation2 + $0x151] sm:$0xff]
      %v547 = vld [vmem:[#allocation2 + $0x159] sm:$0xff]
      %v548 = vld [vmem:[#allocation2 + $0x169] sm:$0xff]
      %v549 = vld [vmem:[#allocation2 + $0x171] sm:$0xff]
      %550 = vst [vmem:[#allocation3 + $0x8] sm:$0xff] %v518
      %551 = vst [vmem:[#allocation3 + $0x50] sm:$0xff] %v519
      %552 = vst [vmem:[#allocation3 + $0x98] sm:$0xff] %v520
      %553 = vst [vmem:[#allocation3 + $0xe0] sm:$0xff] %v521
      %554 = vst [vmem:[#allocation3 + $0x128] sm:$0xff] %v522
      %555 = vst [vmem:[#allocation3 + $0x170] sm:$0xff] %v523
      %556 = vst [vmem:[#allocation3 + $0x1b8] sm:$0xff] %v524
      %557 = vst [vmem:[#allocation3 + $0x200] sm:$0xff] %v525
      %558 = vst [vmem:[#allocation3 + $0x248] sm:$0xff] %v526
      %559 = vst [vmem:[#allocation3 + $0x290] sm:$0xff] %v527
      %560 = vst [vmem:[#allocation3 + $0x2d8] sm:$0xff] %v528
      %561 = vst [vmem:[#allocation3 + $0x320] sm:$0xff] %v529
      %562 = vst [vmem:[#allocation3 + $0x368] sm:$0xff] %v530
      %563 = vst [vmem:[#allocation3 + $0x3b0] sm:$0xff] %v531
      %564 = vst [vmem:[#allocation3 + $0x3f8] sm:$0xff] %v532
      %565 = vst [vmem:[#allocation3 + $0x440] sm:$0xff] %v533
      %566 = vst [vmem:[#allocation3 + $0x488] sm:$0xff] %v534
      %567 = vst [vmem:[#allocation3 + $0x4d0] sm:$0xff] %v535
      %568 = vst [vmem:[#allocation3 + $0x518] sm:$0xff] %v536
      %569 = vst [vmem:[#allocation3 + $0x560] sm:$0xff] %v537
      %570 = vst [vmem:[#allocation3 + $0x5a8] sm:$0xff] %v538
      %571 = vst [vmem:[#allocation3 + $0x5f0] sm:$0xff] %v539
      %572 = vst [vmem:[#allocation3 + $0x638] sm:$0xff] %v540
      %573 = vst [vmem:[#allocation3 + $0x680] sm:$0xff] %v541
      %574 = vst [vmem:[#allocation3 + $0x6c8] sm:$0xff] %v542
      %575 = vst [vmem:[#allocation3 + $0x710] sm:$0xff] %v543
      %576 = vst [vmem:[#allocation3 + $0x758] sm:$0xff] %v544
      %577 = vst [vmem:[#allocation3 + $0x7a0] sm:$0xff] %v545
      %578 = vst [vmem:[#allocation3 + $0x7e8] sm:$0xff] %v546
      %579 = vst [vmem:[#allocation3 + $0x830] sm:$0xff] %v547
      %580 = vst [vmem:[#allocation3 + $0x878] sm:$0xff] %v548
      %581 = vst [vmem:[#allocation3 + $0x8c0] sm:$0xff] %v549
      %v582 = vld [vmem:[#allocation2 + $0x2] sm:$0xff]
      %v583 = vld [vmem:[#allocation2 + $0xa] sm:$0xff]
      %v584 = vld [vmem:[#allocation2 + $0x1a] sm:$0xff]
      %v585 = vld [vmem:[#allocation2 + $0x22] sm:$0xff]
      %v586 = vld [vmem:[#allocation2 + $0x32] sm:$0xff]
      %v587 = vld [vmem:[#allocation2 + $0x3a] sm:$0xff]
      %v588 = vld [vmem:[#allocation2 + $0x4a] sm:$0xff]
      %v589 = vld [vmem:[#allocation2 + $0x52] sm:$0xff]
      %v590 = vld [vmem:[#allocation2 + $0x62] sm:$0xff]
      %v591 = vld [vmem:[#allocation2 + $0x6a] sm:$0xff]
      %v592 = vld [vmem:[#allocation2 + $0x7a] sm:$0xff]
      %v593 = vld [vmem:[#allocation2 + $0x82] sm:$0xff]
      %v594 = vld [vmem:[#allocation2 + $0x92] sm:$0xff]
      %v595 = vld [vmem:[#allocation2 + $0x9a] sm:$0xff]
      %v596 = vld [vmem:[#allocation2 + $0xaa] sm:$0xff]
      %v597 = vld [vmem:[#allocation2 + $0xb2] sm:$0xff]
      %v598 = vld [vmem:[#allocation2 + $0xc2] sm:$0xff]
      %v599 = vld [vmem:[#allocation2 + $0xca] sm:$0xff]
      %v600 = vld [vmem:[#allocation2 + $0xda] sm:$0xff]
      %v601 = vld [vmem:[#allocation2 + $0xe2] sm:$0xff]
      %v602 = vld [vmem:[#allocation2 + $0xf2] sm:$0xff]
      %v603 = vld [vmem:[#allocation2 + $0xfa] sm:$0xff]
      %v604 = vld [vmem:[#allocation2 + $0x10a] sm:$0xff]
      %v605 = vld [vmem:[#allocation2 + $0x112] sm:$0xff]
      %v606 = vld [vmem:[#allocation2 + $0x122] sm:$0xff]
      %v607 = vld [vmem:[#allocation2 + $0x12a] sm:$0xff]
      %v608 = vld [vmem:[#allocation2 + $0x13a] sm:$0xff]
      %v609 = vld [vmem:[#allocation2 + $0x142] sm:$0xff]
      %v610 = vld [vmem:[#allocation2 + $0x152] sm:$0xff]
      %v611 = vld [vmem:[#allocation2 + $0x15a] sm:$0xff]
      %v612 = vld [vmem:[#allocation2 + $0x16a] sm:$0xff]
      %v613 = vld [vmem:[#allocation2 + $0x172] sm:$0xff]
      %614 = vst [vmem:[#allocation3 + $0x10] sm:$0xff] %v582
      %615 = vst [vmem:[#allocation3 + $0x58] sm:$0xff] %v583
      %616 = vst [vmem:[#allocation3 + $0xa0] sm:$0xff] %v584
      %617 = vst [vmem:[#allocation3 + $0xe8] sm:$0xff] %v585
      %618 = vst [vmem:[#allocation3 + $0x130] sm:$0xff] %v586
      %619 = vst [vmem:[#allocation3 + $0x178] sm:$0xff] %v587
      %620 = vst [vmem:[#allocation3 + $0x1c0] sm:$0xff] %v588
      %621 = vst [vmem:[#allocation3 + $0x208] sm:$0xff] %v589
      %622 = vst [vmem:[#allocation3 + $0x250] sm:$0xff] %v590
      %623 = vst [vmem:[#allocation3 + $0x298] sm:$0xff] %v591
      %624 = vst [vmem:[#allocation3 + $0x2e0] sm:$0xff] %v592
      %625 = vst [vmem:[#allocation3 + $0x328] sm:$0xff] %v593
      %626 = vst [vmem:[#allocation3 + $0x370] sm:$0xff] %v594
      %627 = vst [vmem:[#allocation3 + $0x3b8] sm:$0xff] %v595
      %628 = vst [vmem:[#allocation3 + $0x400] sm:$0xff] %v596
      %629 = vst [vmem:[#allocation3 + $0x448] sm:$0xff] %v597
      %630 = vst [vmem:[#allocation3 + $0x490] sm:$0xff] %v598
      %631 = vst [vmem:[#allocation3 + $0x4d8] sm:$0xff] %v599
      %632 = vst [vmem:[#allocation3 + $0x520] sm:$0xff] %v600
      %633 = vst [vmem:[#allocation3 + $0x568] sm:$0xff] %v601
      %634 = vst [vmem:[#allocation3 + $0x5b0] sm:$0xff] %v602
      %635 = vst [vmem:[#allocation3 + $0x5f8] sm:$0xff] %v603
      %636 = vst [vmem:[#allocation3 + $0x640] sm:$0xff] %v604
      %637 = vst [vmem:[#allocation3 + $0x688] sm:$0xff] %v605
      %638 = vst [vmem:[#allocation3 + $0x6d0] sm:$0xff] %v606
      %639 = vst [vmem:[#allocation3 + $0x718] sm:$0xff] %v607
      %640 = vst [vmem:[#allocation3 + $0x760] sm:$0xff] %v608
      %641 = vst [vmem:[#allocation3 + $0x7a8] sm:$0xff] %v609
      %642 = vst [vmem:[#allocation3 + $0x7f0] sm:$0xff] %v610
      %643 = vst [vmem:[#allocation3 + $0x838] sm:$0xff] %v611
      %644 = vst [vmem:[#allocation3 + $0x880] sm:$0xff] %v612
      %645 = vst [vmem:[#allocation3 + $0x8c8] sm:$0xff] %v613
      %v646 = vld [vmem:[%s421] sm:$0xff]
      %v647 = vld [vmem:[%s421 + $0x8] sm:$0xff]
      %v648 = vld [vmem:[%s421 + $0x18] sm:$0xff]
      %v649 = vld [vmem:[%s421 + $0x20] sm:$0xff]
      %v650 = vld [vmem:[%s421 + $0x30] sm:$0xff]
      %v651 = vld [vmem:[%s421 + $0x38] sm:$0xff]
      %v652 = vld [vmem:[%s421 + $0x48] sm:$0xff]
      %v653 = vld [vmem:[%s421 + $0x50] sm:$0xff]
      %v654 = vld [vmem:[%s421 + $0x60] sm:$0xff]
      %v655 = vld [vmem:[%s421 + $0x68] sm:$0xff]
      %v656 = vld [vmem:[%s421 + $0x78] sm:$0xff]
      %v657 = vld [vmem:[%s421 + $0x80] sm:$0xff]
      %v658 = vld [vmem:[%s421 + $0x90] sm:$0xff]
      %v659 = vld [vmem:[%s421 + $0x98] sm:$0xff]
      %v660 = vld [vmem:[%s421 + $0xa8] sm:$0xff]
      %v661 = vld [vmem:[%s421 + $0xb0] sm:$0xff]
      %v662 = vld [vmem:[%s421 + $0xc0] sm:$0xff]
      %v663 = vld [vmem:[%s421 + $0xc8] sm:$0xff]
      %v664 = vld [vmem:[%s421 + $0xd8] sm:$0xff]
      %v665 = vld [vmem:[%s421 + $0xe0] sm:$0xff]
      %v666 = vld [vmem:[%s421 + $0xf0] sm:$0xff]
      %v667 = vld [vmem:[%s421 + $0xf8] sm:$0xff]
      %v668 = vld [vmem:[%s421 + $0x108] sm:$0xff]
      %v669 = vld [vmem:[%s421 + $0x110] sm:$0xff]
      %v670 = vld [vmem:[%s421 + $0x120] sm:$0xff]
      %v671 = vld [vmem:[%s421 + $0x128] sm:$0xff]
      %v672 = vld [vmem:[%s421 + $0x138] sm:$0xff]
      %v673 = vld [vmem:[%s421 + $0x140] sm:$0xff]
      %v674 = vld [vmem:[%s421 + $0x150] sm:$0xff]
      %v675 = vld [vmem:[%s421 + $0x158] sm:$0xff]
      %v676 = vld [vmem:[%s421 + $0x168] sm:$0xff]
      %v677 = vld [vmem:[%s421 + $0x170] sm:$0xff]
      %678 = vst [vmem:[#allocation3 + $0x18] sm:$0xff] %v646
      %679 = vst [vmem:[#allocation3 + $0x60] sm:$0xff] %v647
      %680 = vst [vmem:[#allocation3 + $0xa8] sm:$0xff] %v648
      %681 = vst [vmem:[#allocation3 + $0xf0] sm:$0xff] %v649
      %682 = vst [vmem:[#allocation3 + $0x138] sm:$0xff] %v650
      %683 = vst [vmem:[#allocation3 + $0x180] sm:$0xff] %v651
      %684 = vst [vmem:[#allocation3 + $0x1c8] sm:$0xff] %v652
      %685 = vst [vmem:[#allocation3 + $0x210] sm:$0xff] %v653
      %686 = vst [vmem:[#allocation3 + $0x258] sm:$0xff] %v654
      %687 = vst [vmem:[#allocation3 + $0x2a0] sm:$0xff] %v655
      %688 = vst [vmem:[#allocation3 + $0x2e8] sm:$0xff] %v656
      %689 = vst [vmem:[#allocation3 + $0x330] sm:$0xff] %v657
      %690 = vst [vmem:[#allocation3 + $0x378] sm:$0xff] %v658
      %691 = vst [vmem:[#allocation3 + $0x3c0] sm:$0xff] %v659
      %692 = vst [vmem:[#allocation3 + $0x408] sm:$0xff] %v660
      %693 = vst [vmem:[#allocation3 + $0x450] sm:$0xff] %v661
      %694 = vst [vmem:[#allocation3 + $0x498] sm:$0xff] %v662
      %695 = vst [vmem:[#allocation3 + $0x4e0] sm:$0xff] %v663
      %696 = vst [vmem:[#allocation3 + $0x528] sm:$0xff] %v664
      %697 = vst [vmem:[#allocation3 + $0x570] sm:$0xff] %v665
      %698 = vst [vmem:[#allocation3 + $0x5b8] sm:$0xff] %v666
      %699 = vst [vmem:[#allocation3 + $0x600] sm:$0xff] %v667
      %700 = vst [vmem:[#allocation3 + $0x648] sm:$0xff] %v668
      %701 = vst [vmem:[#allocation3 + $0x690] sm:$0xff] %v669
      %702 = vst [vmem:[#allocation3 + $0x6d8] sm:$0xff] %v670
      %703 = vst [vmem:[#allocation3 + $0x720] sm:$0xff] %v671
      %704 = vst [vmem:[#allocation3 + $0x768] sm:$0xff] %v672
      %705 = vst [vmem:[#allocation3 + $0x7b0] sm:$0xff] %v673
      %706 = vst [vmem:[#allocation3 + $0x7f8] sm:$0xff] %v674
      %707 = vst [vmem:[#allocation3 + $0x840] sm:$0xff] %v675
      %708 = vst [vmem:[#allocation3 + $0x888] sm:$0xff] %v676
      %709 = vst [vmem:[#allocation3 + $0x8d0] sm:$0xff] %v677
      %v710 = vld [vmem:[%s421 + $0x1] sm:$0xff]
      %v711 = vld [vmem:[%s421 + $0x9] sm:$0xff]
      %v712 = vld [vmem:[%s421 + $0x19] sm:$0xff]
      %v713 = vld [vmem:[%s421 + $0x21] sm:$0xff]
      %v714 = vld [vmem:[%s421 + $0x31] sm:$0xff]
      %v715 = vld [vmem:[%s421 + $0x39] sm:$0xff]
      %v716 = vld [vmem:[%s421 + $0x49] sm:$0xff]
      %v717 = vld [vmem:[%s421 + $0x51] sm:$0xff]
      %v718 = vld [vmem:[%s421 + $0x61] sm:$0xff]
      %v719 = vld [vmem:[%s421 + $0x69] sm:$0xff]
      %v720 = vld [vmem:[%s421 + $0x79] sm:$0xff]
      %v721 = vld [vmem:[%s421 + $0x81] sm:$0xff]
      %v722 = vld [vmem:[%s421 + $0x91] sm:$0xff]
      %v723 = vld [vmem:[%s421 + $0x99] sm:$0xff]
      %v724 = vld [vmem:[%s421 + $0xa9] sm:$0xff]
      %v725 = vld [vmem:[%s421 + $0xb1] sm:$0xff]
      %v726 = vld [vmem:[%s421 + $0xc1] sm:$0xff]
      %v727 = vld [vmem:[%s421 + $0xc9] sm:$0xff]
      %v728 = vld [vmem:[%s421 + $0xd9] sm:$0xff]
      %v729 = vld [vmem:[%s421 + $0xe1] sm:$0xff]
      %v730 = vld [vmem:[%s421 + $0xf1] sm:$0xff]
      %v731 = vld [vmem:[%s421 + $0xf9] sm:$0xff]
      %v732 = vld [vmem:[%s421 + $0x109] sm:$0xff]
      %v733 = vld [vmem:[%s421 + $0x111] sm:$0xff]
      %v734 = vld [vmem:[%s421 + $0x121] sm:$0xff]
      %v735 = vld [vmem:[%s421 + $0x129] sm:$0xff]
      %v736 = vld [vmem:[%s421 + $0x139] sm:$0xff]
      %v737 = vld [vmem:[%s421 + $0x141] sm:$0xff]
      %v738 = vld [vmem:[%s421 + $0x151] sm:$0xff]
      %v739 = vld [vmem:[%s421 + $0x159] sm:$0xff]
      %v740 = vld [vmem:[%s421 + $0x169] sm:$0xff]
      %v741 = vld [vmem:[%s421 + $0x171] sm:$0xff]
      %742 = vst [vmem:[#allocation3 + $0x20] sm:$0xff] %v710
      %743 = vst [vmem:[#allocation3 + $0x68] sm:$0xff] %v711
      %744 = vst [vmem:[#allocation3 + $0xb0] sm:$0xff] %v712
      %745 = vst [vmem:[#allocation3 + $0xf8] sm:$0xff] %v713
      %746 = vst [vmem:[#allocation3 + $0x140] sm:$0xff] %v714
      %747 = vst [vmem:[#allocation3 + $0x188] sm:$0xff] %v715
      %748 = vst [vmem:[#allocation3 + $0x1d0] sm:$0xff] %v716
      %749 = vst [vmem:[#allocation3 + $0x218] sm:$0xff] %v717
      %750 = vst [vmem:[#allocation3 + $0x260] sm:$0xff] %v718
      %751 = vst [vmem:[#allocation3 + $0x2a8] sm:$0xff] %v719
      %752 = vst [vmem:[#allocation3 + $0x2f0] sm:$0xff] %v720
      %753 = vst [vmem:[#allocation3 + $0x338] sm:$0xff] %v721
      %754 = vst [vmem:[#allocation3 + $0x380] sm:$0xff] %v722
      %755 = vst [vmem:[#allocation3 + $0x3c8] sm:$0xff] %v723
      %756 = vst [vmem:[#allocation3 + $0x410] sm:$0xff] %v724
      %757 = vst [vmem:[#allocation3 + $0x458] sm:$0xff] %v725
      %758 = vst [vmem:[#allocation3 + $0x4a0] sm:$0xff] %v726
      %759 = vst [vmem:[#allocation3 + $0x4e8] sm:$0xff] %v727
      %760 = vst [vmem:[#allocation3 + $0x530] sm:$0xff] %v728
      %761 = vst [vmem:[#allocation3 + $0x578] sm:$0xff] %v729
      %762 = vst [vmem:[#allocation3 + $0x5c0] sm:$0xff] %v730
      %763 = vst [vmem:[#allocation3 + $0x608] sm:$0xff] %v731
      %764 = vst [vmem:[#allocation3 + $0x650] sm:$0xff] %v732
      %765 = vst [vmem:[#allocation3 + $0x698] sm:$0xff] %v733
      %766 = vst [vmem:[#allocation3 + $0x6e0] sm:$0xff] %v734
      %767 = vst [vmem:[#allocation3 + $0x728] sm:$0xff] %v735
      %768 = vst [vmem:[#allocation3 + $0x770] sm:$0xff] %v736
      %769 = vst [vmem:[#allocation3 + $0x7b8] sm:$0xff] %v737
      %770 = vst [vmem:[#allocation3 + $0x800] sm:$0xff] %v738
      %771 = vst [vmem:[#allocation3 + $0x848] sm:$0xff] %v739
      %772 = vst [vmem:[#allocation3 + $0x890] sm:$0xff] %v740
      %773 = vst [vmem:[#allocation3 + $0x8d8] sm:$0xff] %v741
      %v774 = vld [vmem:[%s421 + $0x2] sm:$0xff]
      %v775 = vld [vmem:[%s421 + $0xa] sm:$0xff]
      %v776 = vld [vmem:[%s421 + $0x1a] sm:$0xff]
      %v777 = vld [vmem:[%s421 + $0x22] sm:$0xff]
      %v778 = vld [vmem:[%s421 + $0x32] sm:$0xff]
      %v779 = vld [vmem:[%s421 + $0x3a] sm:$0xff]
      %v780 = vld [vmem:[%s421 + $0x4a] sm:$0xff]
      %v781 = vld [vmem:[%s421 + $0x52] sm:$0xff]
      %v782 = vld [vmem:[%s421 + $0x62] sm:$0xff]
      %v783 = vld [vmem:[%s421 + $0x6a] sm:$0xff]
      %v784 = vld [vmem:[%s421 + $0x7a] sm:$0xff]
      %v785 = vld [vmem:[%s421 + $0x82] sm:$0xff]
      %v786 = vld [vmem:[%s421 + $0x92] sm:$0xff]
      %v787 = vld [vmem:[%s421 + $0x9a] sm:$0xff]
      %v788 = vld [vmem:[%s421 + $0xaa] sm:$0xff]
      %v789 = vld [vmem:[%s421 + $0xb2] sm:$0xff]
      %v790 = vld [vmem:[%s421 + $0xc2] sm:$0xff]
      %v791 = vld [vmem:[%s421 + $0xca] sm:$0xff]
      %v792 = vld [vmem:[%s421 + $0xda] sm:$0xff]
      %v793 = vld [vmem:[%s421 + $0xe2] sm:$0xff]
      %v794 = vld [vmem:[%s421 + $0xf2] sm:$0xff]
      %v795 = vld [vmem:[%s421 + $0xfa] sm:$0xff]
      %v796 = vld [vmem:[%s421 + $0x10a] sm:$0xff]
      %v797 = vld [vmem:[%s421 + $0x112] sm:$0xff]
      %v798 = vld [vmem:[%s421 + $0x122] sm:$0xff]
      %v799 = vld [vmem:[%s421 + $0x12a] sm:$0xff]
      %v800 = vld [vmem:[%s421 + $0x13a] sm:$0xff]
      %v801 = vld [vmem:[%s421 + $0x142] sm:$0xff]
      %v802 = vld [vmem:[%s421 + $0x152] sm:$0xff]
      %v803 = vld [vmem:[%s421 + $0x15a] sm:$0xff]
      %v804 = vld [vmem:[%s421 + $0x16a] sm:$0xff]
      %v805 = vld [vmem:[%s421 + $0x172] sm:$0xff]
      %806 = vst [vmem:[#allocation3 + $0x28] sm:$0xff] %v774
      %807 = vst [vmem:[#allocation3 + $0x70] sm:$0xff] %v775
      %808 = vst [vmem:[#allocation3 + $0xb8] sm:$0xff] %v776
      %809 = vst [vmem:[#allocation3 + $0x100] sm:$0xff] %v777
      %810 = vst [vmem:[#allocation3 + $0x148] sm:$0xff] %v778
      %811 = vst [vmem:[#allocation3 + $0x190] sm:$0xff] %v779
      %812 = vst [vmem:[#allocation3 + $0x1d8] sm:$0xff] %v780
      %813 = vst [vmem:[#allocation3 + $0x220] sm:$0xff] %v781
      %814 = vst [vmem:[#allocation3 + $0x268] sm:$0xff] %v782
      %815 = vst [vmem:[#allocation3 + $0x2b0] sm:$0xff] %v783
      %816 = vst [vmem:[#allocation3 + $0x2f8] sm:$0xff] %v784
      %817 = vst [vmem:[#allocation3 + $0x340] sm:$0xff] %v785
      %818 = vst [vmem:[#allocation3 + $0x388] sm:$0xff] %v786
      %819 = vst [vmem:[#allocation3 + $0x3d0] sm:$0xff] %v787
      %820 = vst [vmem:[#allocation3 + $0x418] sm:$0xff] %v788
      %821 = vst [vmem:[#allocation3 + $0x460] sm:$0xff] %v789
      %822 = vst [vmem:[#allocation3 + $0x4a8] sm:$0xff] %v790
      %823 = vst [vmem:[#allocation3 + $0x4f0] sm:$0xff] %v791
      %824 = vst [vmem:[#allocation3 + $0x538] sm:$0xff] %v792
      %825 = vst [vmem:[#allocation3 + $0x580] sm:$0xff] %v793
      %826 = vst [vmem:[#allocation3 + $0x5c8] sm:$0xff] %v794
      %827 = vst [vmem:[#allocation3 + $0x610] sm:$0xff] %v795
      %828 = vst [vmem:[#allocation3 + $0x658] sm:$0xff] %v796
      %829 = vst [vmem:[#allocation3 + $0x6a0] sm:$0xff] %v797
      %830 = vst [vmem:[#allocation3 + $0x6e8] sm:$0xff] %v798
      %831 = vst [vmem:[#allocation3 + $0x730] sm:$0xff] %v799
      %832 = vst [vmem:[#allocation3 + $0x778] sm:$0xff] %v800
      %833 = vst [vmem:[#allocation3 + $0x7c0] sm:$0xff] %v801
      %834 = vst [vmem:[#allocation3 + $0x808] sm:$0xff] %v802
      %835 = vst [vmem:[#allocation3 + $0x850] sm:$0xff] %v803
      %836 = vst [vmem:[#allocation3 + $0x898] sm:$0xff] %v804
      %837 = vst [vmem:[#allocation3 + $0x8e0] sm:$0xff] %v805
      %s838 = scalar_lea.vmem [#allocation2], 48
      %v839 = vld [vmem:[%s838] sm:$0xff]
      %v840 = vld [vmem:[%s838 + $0x8] sm:$0xff]
      %v841 = vld [vmem:[%s838 + $0x18] sm:$0xff]
      %v842 = vld [vmem:[%s838 + $0x20] sm:$0xff]
      %v843 = vld [vmem:[%s838 + $0x30] sm:$0xff]
      %v844 = vld [vmem:[%s838 + $0x38] sm:$0xff]
      %v845 = vld [vmem:[%s838 + $0x48] sm:$0xff]
      %v846 = vld [vmem:[%s838 + $0x50] sm:$0xff]
      %v847 = vld [vmem:[%s838 + $0x60] sm:$0xff]
      %v848 = vld [vmem:[%s838 + $0x68] sm:$0xff]
      %v849 = vld [vmem:[%s838 + $0x78] sm:$0xff]
      %v850 = vld [vmem:[%s838 + $0x80] sm:$0xff]
      %v851 = vld [vmem:[%s838 + $0x90] sm:$0xff]
      %v852 = vld [vmem:[%s838 + $0x98] sm:$0xff]
      %v853 = vld [vmem:[%s838 + $0xa8] sm:$0xff]
      %v854 = vld [vmem:[%s838 + $0xb0] sm:$0xff]
      %v855 = vld [vmem:[%s838 + $0xc0] sm:$0xff]
      %v856 = vld [vmem:[%s838 + $0xc8] sm:$0xff]
      %v857 = vld [vmem:[%s838 + $0xd8] sm:$0xff]
      %v858 = vld [vmem:[%s838 + $0xe0] sm:$0xff]
      %v859 = vld [vmem:[%s838 + $0xf0] sm:$0xff]
      %v860 = vld [vmem:[%s838 + $0xf8] sm:$0xff]
      %v861 = vld [vmem:[%s838 + $0x108] sm:$0xff]
      %v862 = vld [vmem:[%s838 + $0x110] sm:$0xff]
      %v863 = vld [vmem:[%s838 + $0x120] sm:$0xff]
      %v864 = vld [vmem:[%s838 + $0x128] sm:$0xff]
      %v865 = vld [vmem:[%s838 + $0x138] sm:$0xff]
      %v866 = vld [vmem:[%s838 + $0x140] sm:$0xff]
      %v867 = vld [vmem:[%s838 + $0x150] sm:$0xff]
      %v868 = vld [vmem:[%s838 + $0x158] sm:$0xff]
      %v869 = vld [vmem:[%s838 + $0x168] sm:$0xff]
      %v870 = vld [vmem:[%s838 + $0x170] sm:$0xff]
      %871 = vst [vmem:[#allocation3 + $0x30] sm:$0xff] %v839
      %872 = vst [vmem:[#allocation3 + $0x78] sm:$0xff] %v840
      %873 = vst [vmem:[#allocation3 + $0xc0] sm:$0xff] %v841
      %874 = vst [vmem:[#allocation3 + $0x108] sm:$0xff] %v842
      %875 = vst [vmem:[#allocation3 + $0x150] sm:$0xff] %v843
      %876 = vst [vmem:[#allocation3 + $0x198] sm:$0xff] %v844
      %877 = vst [vmem:[#allocation3 + $0x1e0] sm:$0xff] %v845
      %878 = vst [vmem:[#allocation3 + $0x228] sm:$0xff] %v846
      %879 = vst [vmem:[#allocation3 + $0x270] sm:$0xff] %v847
      %880 = vst [vmem:[#allocation3 + $0x2b8] sm:$0xff] %v848
      %881 = vst [vmem:[#allocation3 + $0x300] sm:$0xff] %v849
      %882 = vst [vmem:[#allocation3 + $0x348] sm:$0xff] %v850
      %883 = vst [vmem:[#allocation3 + $0x390] sm:$0xff] %v851
      %884 = vst [vmem:[#allocation3 + $0x3d8] sm:$0xff] %v852
      %885 = vst [vmem:[#allocation3 + $0x420] sm:$0xff] %v853
      %886 = vst [vmem:[#allocation3 + $0x468] sm:$0xff] %v854
      %887 = vst [vmem:[#allocation3 + $0x4b0] sm:$0xff] %v855
      %888 = vst [vmem:[#allocation3 + $0x4f8] sm:$0xff] %v856
      %889 = vst [vmem:[#allocation3 + $0x540] sm:$0xff] %v857
      %890 = vst [vmem:[#allocation3 + $0x588] sm:$0xff] %v858
      %891 = vst [vmem:[#allocation3 + $0x5d0] sm:$0xff] %v859
      %892 = vst [vmem:[#allocation3 + $0x618] sm:$0xff] %v860
      %893 = vst [vmem:[#allocation3 + $0x660] sm:$0xff] %v861
      %894 = vst [vmem:[#allocation3 + $0x6a8] sm:$0xff] %v862
      %895 = vst [vmem:[#allocation3 + $0x6f0] sm:$0xff] %v863
      %896 = vst [vmem:[#allocation3 + $0x738] sm:$0xff] %v864
      %897 = vst [vmem:[#allocation3 + $0x780] sm:$0xff] %v865
      %898 = vst [vmem:[#allocation3 + $0x7c8] sm:$0xff] %v866
      %899 = vst [vmem:[#allocation3 + $0x810] sm:$0xff] %v867
      %900 = vst [vmem:[#allocation3 + $0x858] sm:$0xff] %v868
      %901 = vst [vmem:[#allocation3 + $0x8a0] sm:$0xff] %v869
      %902 = vst [vmem:[#allocation3 + $0x8e8] sm:$0xff] %v870
      %v903 = vld [vmem:[%s838 + $0x1] sm:$0xff]
      %v904 = vld [vmem:[%s838 + $0x9] sm:$0xff]
      %v905 = vld [vmem:[%s838 + $0x19] sm:$0xff]
      %v906 = vld [vmem:[%s838 + $0x21] sm:$0xff]
      %v907 = vld [vmem:[%s838 + $0x31] sm:$0xff]
      %v908 = vld [vmem:[%s838 + $0x39] sm:$0xff]
      %v909 = vld [vmem:[%s838 + $0x49] sm:$0xff]
      %v910 = vld [vmem:[%s838 + $0x51] sm:$0xff]
      %v911 = vld [vmem:[%s838 + $0x61] sm:$0xff]
      %v912 = vld [vmem:[%s838 + $0x69] sm:$0xff]
      %v913 = vld [vmem:[%s838 + $0x79] sm:$0xff]
      %v914 = vld [vmem:[%s838 + $0x81] sm:$0xff]
      %v915 = vld [vmem:[%s838 + $0x91] sm:$0xff]
      %v916 = vld [vmem:[%s838 + $0x99] sm:$0xff]
      %v917 = vld [vmem:[%s838 + $0xa9] sm:$0xff]
      %v918 = vld [vmem:[%s838 + $0xb1] sm:$0xff]
      %v919 = vld [vmem:[%s838 + $0xc1] sm:$0xff]
      %v920 = vld [vmem:[%s838 + $0xc9] sm:$0xff]
      %v921 = vld [vmem:[%s838 + $0xd9] sm:$0xff]
      %v922 = vld [vmem:[%s838 + $0xe1] sm:$0xff]
      %v923 = vld [vmem:[%s838 + $0xf1] sm:$0xff]
      %v924 = vld [vmem:[%s838 + $0xf9] sm:$0xff]
      %v925 = vld [vmem:[%s838 + $0x109] sm:$0xff]
      %v926 = vld [vmem:[%s838 + $0x111] sm:$0xff]
      %v927 = vld [vmem:[%s838 + $0x121] sm:$0xff]
      %v928 = vld [vmem:[%s838 + $0x129] sm:$0xff]
      %v929 = vld [vmem:[%s838 + $0x139] sm:$0xff]
      %v930 = vld [vmem:[%s838 + $0x141] sm:$0xff]
      %v931 = vld [vmem:[%s838 + $0x151] sm:$0xff]
      %v932 = vld [vmem:[%s838 + $0x159] sm:$0xff]
      %v933 = vld [vmem:[%s838 + $0x169] sm:$0xff]
      %v934 = vld [vmem:[%s838 + $0x171] sm:$0xff]
      %935 = vst [vmem:[#allocation3 + $0x38] sm:$0xff] %v903
      %936 = vst [vmem:[#allocation3 + $0x80] sm:$0xff] %v904
      %937 = vst [vmem:[#allocation3 + $0xc8] sm:$0xff] %v905
      %938 = vst [vmem:[#allocation3 + $0x110] sm:$0xff] %v906
      %939 = vst [vmem:[#allocation3 + $0x158] sm:$0xff] %v907
      %940 = vst [vmem:[#allocation3 + $0x1a0] sm:$0xff] %v908
      %941 = vst [vmem:[#allocation3 + $0x1e8] sm:$0xff] %v909
      %942 = vst [vmem:[#allocation3 + $0x230] sm:$0xff] %v910
      %943 = vst [vmem:[#allocation3 + $0x278] sm:$0xff] %v911
      %944 = vst [vmem:[#allocation3 + $0x2c0] sm:$0xff] %v912
      %945 = vst [vmem:[#allocation3 + $0x308] sm:$0xff] %v913
      %946 = vst [vmem:[#allocation3 + $0x350] sm:$0xff] %v914
      %947 = vst [vmem:[#allocation3 + $0x398] sm:$0xff] %v915
      %948 = vst [vmem:[#allocation3 + $0x3e0] sm:$0xff] %v916
      %949 = vst [vmem:[#allocation3 + $0x428] sm:$0xff] %v917
      %950 = vst [vmem:[#allocation3 + $0x470] sm:$0xff] %v918
      %951 = vst [vmem:[#allocation3 + $0x4b8] sm:$0xff] %v919
      %952 = vst [vmem:[#allocation3 + $0x500] sm:$0xff] %v920
      %953 = vst [vmem:[#allocation3 + $0x548] sm:$0xff] %v921
      %954 = vst [vmem:[#allocation3 + $0x590] sm:$0xff] %v922
      %955 = vst [vmem:[#allocation3 + $0x5d8] sm:$0xff] %v923
      %956 = vst [vmem:[#allocation3 + $0x620] sm:$0xff] %v924
      %957 = vst [vmem:[#allocation3 + $0x668] sm:$0xff] %v925
      %958 = vst [vmem:[#allocation3 + $0x6b0] sm:$0xff] %v926
      %959 = vst [vmem:[#allocation3 + $0x6f8] sm:$0xff] %v927
      %960 = vst [vmem:[#allocation3 + $0x740] sm:$0xff] %v928
      %961 = vst [vmem:[#allocation3 + $0x788] sm:$0xff] %v929
      %962 = vst [vmem:[#allocation3 + $0x7d0] sm:$0xff] %v930
      %963 = vst [vmem:[#allocation3 + $0x818] sm:$0xff] %v931
      %964 = vst [vmem:[#allocation3 + $0x860] sm:$0xff] %v932
      %965 = vst [vmem:[#allocation3 + $0x8a8] sm:$0xff] %v933
      %966 = vst [vmem:[#allocation3 + $0x8f0] sm:$0xff] %v934
      %v967 = vld [vmem:[%s838 + $0x2] sm:$0xff]
      %v968 = vld [vmem:[%s838 + $0xa] sm:$0xff]
      %v969 = vld [vmem:[%s838 + $0x1a] sm:$0xff]
      %v970 = vld [vmem:[%s838 + $0x22] sm:$0xff]
      %v971 = vld [vmem:[%s838 + $0x32] sm:$0xff]
      %v972 = vld [vmem:[%s838 + $0x3a] sm:$0xff]
      %v973 = vld [vmem:[%s838 + $0x4a] sm:$0xff]
      %v974 = vld [vmem:[%s838 + $0x52] sm:$0xff]
      %v975 = vld [vmem:[%s838 + $0x62] sm:$0xff]
      %v976 = vld [vmem:[%s838 + $0x6a] sm:$0xff]
      %v977 = vld [vmem:[%s838 + $0x7a] sm:$0xff]
      %v978 = vld [vmem:[%s838 + $0x82] sm:$0xff]
      %v979 = vld [vmem:[%s838 + $0x92] sm:$0xff]
      %v980 = vld [vmem:[%s838 + $0x9a] sm:$0xff]
      %v981 = vld [vmem:[%s838 + $0xaa] sm:$0xff]
      %v982 = vld [vmem:[%s838 + $0xb2] sm:$0xff]
      %v983 = vld [vmem:[%s838 + $0xc2] sm:$0xff]
      %v984 = vld [vmem:[%s838 + $0xca] sm:$0xff]
      %v985 = vld [vmem:[%s838 + $0xda] sm:$0xff]
      %v986 = vld [vmem:[%s838 + $0xe2] sm:$0xff]
      %v987 = vld [vmem:[%s838 + $0xf2] sm:$0xff]
      %v988 = vld [vmem:[%s838 + $0xfa] sm:$0xff]
      %v989 = vld [vmem:[%s838 + $0x10a] sm:$0xff]
      %v990 = vld [vmem:[%s838 + $0x112] sm:$0xff]
      %v991 = vld [vmem:[%s838 + $0x122] sm:$0xff]
      %v992 = vld [vmem:[%s838 + $0x12a] sm:$0xff]
      %v993 = vld [vmem:[%s838 + $0x13a] sm:$0xff]
      %v994 = vld [vmem:[%s838 + $0x142] sm:$0xff]
      %v995 = vld [vmem:[%s838 + $0x152] sm:$0xff]
      %v996 = vld [vmem:[%s838 + $0x15a] sm:$0xff]
      %v997 = vld [vmem:[%s838 + $0x16a] sm:$0xff]
      %v998 = vld [vmem:[%s838 + $0x172] sm:$0xff]
      %999 = vst [vmem:[#allocation3 + $0x40] sm:$0xff] %v967
      %1000 = vst [vmem:[#allocation3 + $0x88] sm:$0xff] %v968
      %1001 = vst [vmem:[#allocation3 + $0xd0] sm:$0xff] %v969
      %1002 = vst [vmem:[#allocation3 + $0x118] sm:$0xff] %v970
      %1003 = vst [vmem:[#allocation3 + $0x160] sm:$0xff] %v971
      %1004 = vst [vmem:[#allocation3 + $0x1a8] sm:$0xff] %v972
      %1005 = vst [vmem:[#allocation3 + $0x1f0] sm:$0xff] %v973
      %1006 = vst [vmem:[#allocation3 + $0x238] sm:$0xff] %v974
      %1007 = vst [vmem:[#allocation3 + $0x280] sm:$0xff] %v975
      %1008 = vst [vmem:[#allocation3 + $0x2c8] sm:$0xff] %v976
      %1009 = vst [vmem:[#allocation3 + $0x310] sm:$0xff] %v977
      %1010 = vst [vmem:[#allocation3 + $0x358] sm:$0xff] %v978
      %1011 = vst [vmem:[#allocation3 + $0x3a0] sm:$0xff] %v979
      %1012 = vst [vmem:[#allocation3 + $0x3e8] sm:$0xff] %v980
      %1013 = vst [vmem:[#allocation3 + $0x430] sm:$0xff] %v981
      %1014 = vst [vmem:[#allocation3 + $0x478] sm:$0xff] %v982
      %1015 = vst [vmem:[#allocation3 + $0x4c0] sm:$0xff] %v983
      %1016 = vst [vmem:[#allocation3 + $0x508] sm:$0xff] %v984
      %1017 = vst [vmem:[#allocation3 + $0x550] sm:$0xff] %v985
      %1018 = vst [vmem:[#allocation3 + $0x598] sm:$0xff] %v986
      %1019 = vst [vmem:[#allocation3 + $0x5e0] sm:$0xff] %v987
      %1020 = vst [vmem:[#allocation3 + $0x628] sm:$0xff] %v988
      %1021 = vst [vmem:[#allocation3 + $0x670] sm:$0xff] %v989
      %1022 = vst [vmem:[#allocation3 + $0x6b8] sm:$0xff] %v990
      %1023 = vst [vmem:[#allocation3 + $0x700] sm:$0xff] %v991
      %1024 = vst [vmem:[#allocation3 + $0x748] sm:$0xff] %v992
      %1025 = vst [vmem:[#allocation3 + $0x790] sm:$0xff] %v993
      %1026 = vst [vmem:[#allocation3 + $0x7d8] sm:$0xff] %v994
      %1027 = vst [vmem:[#allocation3 + $0x820] sm:$0xff] %v995
      %1028 = vst [vmem:[#allocation3 + $0x868] sm:$0xff] %v996
      %1029 = vst [vmem:[#allocation3 + $0x8b0] sm:$0xff] %v997
      %1030 = vst [vmem:[#allocation3 + $0x8f8] sm:$0xff] %v998
      %v1031 = vld [vmem:[#allocation3] sm:$0xff]
      %v1032 = vld [vmem:[#allocation3 + $0x8] sm:$0xff]
      %v1033 = vld [vmem:[#allocation3 + $0x10] sm:$0xff]
      %v1034 = vld [vmem:[#allocation3 + $0x18] sm:$0xff]
      %v1035 = vld [vmem:[#allocation3 + $0x20] sm:$0xff]
      %v1036 = vld [vmem:[#allocation3 + $0x28] sm:$0xff]
      %v1037 = vld [vmem:[#allocation3 + $0x30] sm:$0xff]
      %v1038 = vld [vmem:[#allocation3 + $0x38] sm:$0xff]
      %v1039 = vld [vmem:[#allocation3 + $0x40] sm:$0xff]
      %v1040 = vld [vmem:[#allocation3 + $0x48] sm:$0xff]
      %v1041 = vld [vmem:[#allocation3 + $0x50] sm:$0xff]
      %v1042 = vld [vmem:[#allocation3 + $0x58] sm:$0xff]
      %v1043 = vld [vmem:[#allocation3 + $0x60] sm:$0xff]
      %v1044 = vld [vmem:[#allocation3 + $0x68] sm:$0xff]
      %v1045 = vld [vmem:[#allocation3 + $0x70] sm:$0xff]
      %v1046 = vld [vmem:[#allocation3 + $0x78] sm:$0xff]
      %v1047 = vld [vmem:[#allocation3 + $0x80] sm:$0xff]
      %v1048 = vld [vmem:[#allocation3 + $0x88] sm:$0xff]
      %v1049 = vld [vmem:[#allocation3 + $0x90] sm:$0xff]
      %v1050 = vld [vmem:[#allocation3 + $0x98] sm:$0xff]
      %v1051 = vld [vmem:[#allocation3 + $0xa0] sm:$0xff]
      %v1052 = vld [vmem:[#allocation3 + $0xa8] sm:$0xff]
      %v1053 = vld [vmem:[#allocation3 + $0xb0] sm:$0xff]
      %v1054 = vld [vmem:[#allocation3 + $0xb8] sm:$0xff]
      %v1055 = vld [vmem:[#allocation3 + $0xc0] sm:$0xff]
      %v1056 = vld [vmem:[#allocation3 + $0xc8] sm:$0xff]
      %v1057 = vld [vmem:[#allocation3 + $0xd0] sm:$0xff]
      %v1058 = vld [vmem:[#allocation3 + $0xd8] sm:$0xff]
      %v1059 = vld [vmem:[#allocation3 + $0xe0] sm:$0xff]
      %v1060 = vld [vmem:[#allocation3 + $0xe8] sm:$0xff]
      %v1061 = vld [vmem:[#allocation3 + $0xf0] sm:$0xff]
      %v1062 = vld [vmem:[#allocation3 + $0xf8] sm:$0xff]
      %v1063 = vld [vmem:[#allocation3 + $0x100] sm:$0xff]
      %v1064 = vld [vmem:[#allocation3 + $0x108] sm:$0xff]
      %v1065 = vld [vmem:[#allocation3 + $0x110] sm:$0xff]
      %v1066 = vld [vmem:[#allocation3 + $0x118] sm:$0xff]
      %v1067 = vld [vmem:[#allocation3 + $0x120] sm:$0xff]
      %v1068 = vld [vmem:[#allocation3 + $0x128] sm:$0xff]
      %v1069 = vld [vmem:[#allocation3 + $0x130] sm:$0xff]
      %v1070 = vld [vmem:[#allocation3 + $0x138] sm:$0xff]
      %v1071 = vld [vmem:[#allocation3 + $0x140] sm:$0xff]
      %v1072 = vld [vmem:[#allocation3 + $0x148] sm:$0xff]
      %v1073 = vld [vmem:[#allocation3 + $0x150] sm:$0xff]
      %v1074 = vld [vmem:[#allocation3 + $0x158] sm:$0xff]
      %v1075 = vld [vmem:[#allocation3 + $0x160] sm:$0xff]
      %v1076 = vld [vmem:[#allocation3 + $0x168] sm:$0xff]
      %v1077 = vld [vmem:[#allocation3 + $0x170] sm:$0xff]
      %v1078 = vld [vmem:[#allocation3 + $0x178] sm:$0xff]
      %v1079 = vld [vmem:[#allocation3 + $0x180] sm:$0xff]
      %v1080 = vld [vmem:[#allocation3 + $0x188] sm:$0xff]
      %v1081 = vld [vmem:[#allocation3 + $0x190] sm:$0xff]
      %v1082 = vld [vmem:[#allocation3 + $0x198] sm:$0xff]
      %v1083 = vld [vmem:[#allocation3 + $0x1a0] sm:$0xff]
      %v1084 = vld [vmem:[#allocation3 + $0x1a8] sm:$0xff]
      %v1085 = vld [vmem:[#allocation3 + $0x1b0] sm:$0xff]
      %v1086 = vld [vmem:[#allocation3 + $0x1b8] sm:$0xff]
      %v1087 = vld [vmem:[#allocation3 + $0x1c0] sm:$0xff]
      %v1088 = vld [vmem:[#allocation3 + $0x1c8] sm:$0xff]
      %v1089 = vld [vmem:[#allocation3 + $0x1d0] sm:$0xff]
      %v1090 = vld [vmem:[#allocation3 + $0x1d8] sm:$0xff]
      %v1091 = vld [vmem:[#allocation3 + $0x1e0] sm:$0xff]
      %v1092 = vld [vmem:[#allocation3 + $0x1e8] sm:$0xff]
      %v1093 = vld [vmem:[#allocation3 + $0x1f0] sm:$0xff]
      %v1094 = vld [vmem:[#allocation3 + $0x1f8] sm:$0xff]
      %v1095 = vld [vmem:[#allocation3 + $0x200] sm:$0xff]
      %v1096 = vld [vmem:[#allocation3 + $0x208] sm:$0xff]
      %v1097 = vld [vmem:[#allocation3 + $0x210] sm:$0xff]
      %v1098 = vld [vmem:[#allocation3 + $0x218] sm:$0xff]
      %v1099 = vld [vmem:[#allocation3 + $0x220] sm:$0xff]
      %v1100 = vld [vmem:[#allocation3 + $0x228] sm:$0xff]
      %v1101 = vld [vmem:[#allocation3 + $0x230] sm:$0xff]
      %v1102 = vld [vmem:[#allocation3 + $0x238] sm:$0xff]
      %v1103 = vld [vmem:[#allocation3 + $0x240] sm:$0xff]
      %v1104 = vld [vmem:[#allocation3 + $0x248] sm:$0xff]
      %v1105 = vld [vmem:[#allocation3 + $0x250] sm:$0xff]
      %v1106 = vld [vmem:[#allocation3 + $0x258] sm:$0xff]
      %v1107 = vld [vmem:[#allocation3 + $0x260] sm:$0xff]
      %v1108 = vld [vmem:[#allocation3 + $0x268] sm:$0xff]
      %v1109 = vld [vmem:[#allocation3 + $0x270] sm:$0xff]
      %v1110 = vld [vmem:[#allocation3 + $0x278] sm:$0xff]
      %v1111 = vld [vmem:[#allocation3 + $0x280] sm:$0xff]
      %v1112 = vld [vmem:[#allocation3 + $0x288] sm:$0xff]
      %v1113 = vld [vmem:[#allocation3 + $0x290] sm:$0xff]
      %v1114 = vld [vmem:[#allocation3 + $0x298] sm:$0xff]
      %v1115 = vld [vmem:[#allocation3 + $0x2a0] sm:$0xff]
      %v1116 = vld [vmem:[#allocation3 + $0x2a8] sm:$0xff]
      %v1117 = vld [vmem:[#allocation3 + $0x2b0] sm:$0xff]
      %v1118 = vld [vmem:[#allocation3 + $0x2b8] sm:$0xff]
      %v1119 = vld [vmem:[#allocation3 + $0x2c0] sm:$0xff]
      %v1120 = vld [vmem:[#allocation3 + $0x2c8] sm:$0xff]
      %v1121 = vld [vmem:[#allocation3 + $0x2d0] sm:$0xff]
      %v1122 = vld [vmem:[#allocation3 + $0x2d8] sm:$0xff]
      %v1123 = vld [vmem:[#allocation3 + $0x2e0] sm:$0xff]
      %v1124 = vld [vmem:[#allocation3 + $0x2e8] sm:$0xff]
      %v1125 = vld [vmem:[#allocation3 + $0x2f0] sm:$0xff]
      %v1126 = vld [vmem:[#allocation3 + $0x2f8] sm:$0xff]
      %v1127 = vld [vmem:[#allocation3 + $0x300] sm:$0xff]
      %v1128 = vld [vmem:[#allocation3 + $0x308] sm:$0xff]
      %v1129 = vld [vmem:[#allocation3 + $0x310] sm:$0xff]
      %v1130 = vld [vmem:[#allocation3 + $0x318] sm:$0xff]
      %v1131 = vld [vmem:[#allocation3 + $0x320] sm:$0xff]
      %v1132 = vld [vmem:[#allocation3 + $0x328] sm:$0xff]
      %v1133 = vld [vmem:[#allocation3 + $0x330] sm:$0xff]
      %v1134 = vld [vmem:[#allocation3 + $0x338] sm:$0xff]
      %v1135 = vld [vmem:[#allocation3 + $0x340] sm:$0xff]
      %v1136 = vld [vmem:[#allocation3 + $0x348] sm:$0xff]
      %v1137 = vld [vmem:[#allocation3 + $0x350] sm:$0xff]
      %v1138 = vld [vmem:[#allocation3 + $0x358] sm:$0xff]
      %v1139 = vld [vmem:[#allocation3 + $0x360] sm:$0xff]
      %v1140 = vld [vmem:[#allocation3 + $0x368] sm:$0xff]
      %v1141 = vld [vmem:[#allocation3 + $0x370] sm:$0xff]
      %v1142 = vld [vmem:[#allocation3 + $0x378] sm:$0xff]
      %v1143 = vld [vmem:[#allocation3 + $0x380] sm:$0xff]
      %v1144 = vld [vmem:[#allocation3 + $0x388] sm:$0xff]
      %v1145 = vld [vmem:[#allocation3 + $0x390] sm:$0xff]
      %v1146 = vld [vmem:[#allocation3 + $0x398] sm:$0xff]
      %v1147 = vld [vmem:[#allocation3 + $0x3a0] sm:$0xff]
      %v1148 = vld [vmem:[#allocation3 + $0x3a8] sm:$0xff]
      %v1149 = vld [vmem:[#allocation3 + $0x3b0] sm:$0xff]
      %v1150 = vld [vmem:[#allocation3 + $0x3b8] sm:$0xff]
      %v1151 = vld [vmem:[#allocation3 + $0x3c0] sm:$0xff]
      %v1152 = vld [vmem:[#allocation3 + $0x3c8] sm:$0xff]
      %v1153 = vld [vmem:[#allocation3 + $0x3d0] sm:$0xff]
      %v1154 = vld [vmem:[#allocation3 + $0x3d8] sm:$0xff]
      %v1155 = vld [vmem:[#allocation3 + $0x3e0] sm:$0xff]
      %v1156 = vld [vmem:[#allocation3 + $0x3e8] sm:$0xff]
      %v1157 = vld [vmem:[#allocation3 + $0x3f0] sm:$0xff]
      %v1158 = vld [vmem:[#allocation3 + $0x3f8] sm:$0xff]
      %v1159 = vld [vmem:[#allocation3 + $0x400] sm:$0xff]
      %v1160 = vld [vmem:[#allocation3 + $0x408] sm:$0xff]
      %v1161 = vld [vmem:[#allocation3 + $0x410] sm:$0xff]
      %v1162 = vld [vmem:[#allocation3 + $0x418] sm:$0xff]
      %v1163 = vld [vmem:[#allocation3 + $0x420] sm:$0xff]
      %v1164 = vld [vmem:[#allocation3 + $0x428] sm:$0xff]
      %v1165 = vld [vmem:[#allocation3 + $0x430] sm:$0xff]
      %v1166 = vld [vmem:[#allocation3 + $0x438] sm:$0xff]
      %v1167 = vld [vmem:[#allocation3 + $0x440] sm:$0xff]
      %v1168 = vld [vmem:[#allocation3 + $0x448] sm:$0xff]
      %v1169 = vld [vmem:[#allocation3 + $0x450] sm:$0xff]
      %v1170 = vld [vmem:[#allocation3 + $0x458] sm:$0xff]
      %v1171 = vld [vmem:[#allocation3 + $0x460] sm:$0xff]
      %v1172 = vld [vmem:[#allocation3 + $0x468] sm:$0xff]
      %v1173 = vld [vmem:[#allocation3 + $0x470] sm:$0xff]
      %v1174 = vld [vmem:[#allocation3 + $0x478] sm:$0xff]
      %v1175 = vld [vmem:[#allocation3 + $0x480] sm:$0xff]
      %v1176 = vld [vmem:[#allocation3 + $0x488] sm:$0xff]
      %v1177 = vld [vmem:[#allocation3 + $0x490] sm:$0xff]
      %v1178 = vld [vmem:[#allocation3 + $0x498] sm:$0xff]
      %v1179 = vld [vmem:[#allocation3 + $0x4a0] sm:$0xff]
      %v1180 = vld [vmem:[#allocation3 + $0x4a8] sm:$0xff]
      %v1181 = vld [vmem:[#allocation3 + $0x4b0] sm:$0xff]
      %v1182 = vld [vmem:[#allocation3 + $0x4b8] sm:$0xff]
      %v1183 = vld [vmem:[#allocation3 + $0x4c0] sm:$0xff]
      %v1184 = vld [vmem:[#allocation3 + $0x4c8] sm:$0xff]
      %v1185 = vld [vmem:[#allocation3 + $0x4d0] sm:$0xff]
      %v1186 = vld [vmem:[#allocation3 + $0x4d8] sm:$0xff]
      %v1187 = vld [vmem:[#allocation3 + $0x4e0] sm:$0xff]
      %v1188 = vld [vmem:[#allocation3 + $0x4e8] sm:$0xff]
      %v1189 = vld [vmem:[#allocation3 + $0x4f0] sm:$0xff]
      %v1190 = vld [vmem:[#allocation3 + $0x4f8] sm:$0xff]
      %v1191 = vld [vmem:[#allocation3 + $0x500] sm:$0xff]
      %v1192 = vld [vmem:[#allocation3 + $0x508] sm:$0xff]
      %v1193 = vld [vmem:[#allocation3 + $0x510] sm:$0xff]
      %v1194 = vld [vmem:[#allocation3 + $0x518] sm:$0xff]
      %v1195 = vld [vmem:[#allocation3 + $0x520] sm:$0xff]
      %v1196 = vld [vmem:[#allocation3 + $0x528] sm:$0xff]
      %v1197 = vld [vmem:[#allocation3 + $0x530] sm:$0xff]
      %v1198 = vld [vmem:[#allocation3 + $0x538] sm:$0xff]
      %v1199 = vld [vmem:[#allocation3 + $0x540] sm:$0xff]
      %v1200 = vld [vmem:[#allocation3 + $0x548] sm:$0xff]
      %v1201 = vld [vmem:[#allocation3 + $0x550] sm:$0xff]
      %v1202 = vld [vmem:[#allocation3 + $0x558] sm:$0xff]
      %v1203 = vld [vmem:[#allocation3 + $0x560] sm:$0xff]
      %v1204 = vld [vmem:[#allocation3 + $0x568] sm:$0xff]
      %v1205 = vld [vmem:[#allocation3 + $0x570] sm:$0xff]
      %v1206 = vld [vmem:[#allocation3 + $0x578] sm:$0xff]
      %v1207 = vld [vmem:[#allocation3 + $0x580] sm:$0xff]
      %v1208 = vld [vmem:[#allocation3 + $0x588] sm:$0xff]
      %v1209 = vld [vmem:[#allocation3 + $0x590] sm:$0xff]
      %v1210 = vld [vmem:[#allocation3 + $0x598] sm:$0xff]
      %v1211 = vld [vmem:[#allocation3 + $0x5a0] sm:$0xff]
      %v1212 = vld [vmem:[#allocation3 + $0x5a8] sm:$0xff]
      %v1213 = vld [vmem:[#allocation3 + $0x5b0] sm:$0xff]
      %v1214 = vld [vmem:[#allocation3 + $0x5b8] sm:$0xff]
      %v1215 = vld [vmem:[#allocation3 + $0x5c0] sm:$0xff]
      %v1216 = vld [vmem:[#allocation3 + $0x5c8] sm:$0xff]
      %v1217 = vld [vmem:[#allocation3 + $0x5d0] sm:$0xff]
      %v1218 = vld [vmem:[#allocation3 + $0x5d8] sm:$0xff]
      %v1219 = vld [vmem:[#allocation3 + $0x5e0] sm:$0xff]
      %v1220 = vld [vmem:[#allocation3 + $0x5e8] sm:$0xff]
      %v1221 = vld [vmem:[#allocation3 + $0x5f0] sm:$0xff]
      %v1222 = vld [vmem:[#allocation3 + $0x5f8] sm:$0xff]
      %v1223 = vld [vmem:[#allocation3 + $0x600] sm:$0xff]
      %v1224 = vld [vmem:[#allocation3 + $0x608] sm:$0xff]
      %v1225 = vld [vmem:[#allocation3 + $0x610] sm:$0xff]
      %v1226 = vld [vmem:[#allocation3 + $0x618] sm:$0xff]
      %v1227 = vld [vmem:[#allocation3 + $0x620] sm:$0xff]
      %v1228 = vld [vmem:[#allocation3 + $0x628] sm:$0xff]
      %v1229 = vld [vmem:[#allocation3 + $0x630] sm:$0xff]
      %v1230 = vld [vmem:[#allocation3 + $0x638] sm:$0xff]
      %v1231 = vld [vmem:[#allocation3 + $0x640] sm:$0xff]
      %v1232 = vld [vmem:[#allocation3 + $0x648] sm:$0xff]
      %v1233 = vld [vmem:[#allocation3 + $0x650] sm:$0xff]
      %v1234 = vld [vmem:[#allocation3 + $0x658] sm:$0xff]
      %v1235 = vld [vmem:[#allocation3 + $0x660] sm:$0xff]
      %v1236 = vld [vmem:[#allocation3 + $0x668] sm:$0xff]
      %v1237 = vld [vmem:[#allocation3 + $0x670] sm:$0xff]
      %v1238 = vld [vmem:[#allocation3 + $0x678] sm:$0xff]
      %v1239 = vld [vmem:[#allocation3 + $0x680] sm:$0xff]
      %v1240 = vld [vmem:[#allocation3 + $0x688] sm:$0xff]
      %v1241 = vld [vmem:[#allocation3 + $0x690] sm:$0xff]
      %v1242 = vld [vmem:[#allocation3 + $0x698] sm:$0xff]
      %v1243 = vld [vmem:[#allocation3 + $0x6a0] sm:$0xff]
      %v1244 = vld [vmem:[#allocation3 + $0x6a8] sm:$0xff]
      %v1245 = vld [vmem:[#allocation3 + $0x6b0] sm:$0xff]
      %v1246 = vld [vmem:[#allocation3 + $0x6b8] sm:$0xff]
      %v1247 = vld [vmem:[#allocation3 + $0x6c0] sm:$0xff]
      %v1248 = vld [vmem:[#allocation3 + $0x6c8] sm:$0xff]
      %v1249 = vld [vmem:[#allocation3 + $0x6d0] sm:$0xff]
      %v1250 = vld [vmem:[#allocation3 + $0x6d8] sm:$0xff]
      %v1251 = vld [vmem:[#allocation3 + $0x6e0] sm:$0xff]
      %v1252 = vld [vmem:[#allocation3 + $0x6e8] sm:$0xff]
      %v1253 = vld [vmem:[#allocation3 + $0x6f0] sm:$0xff]
      %v1254 = vld [vmem:[#allocation3 + $0x6f8] sm:$0xff]
      %v1255 = vld [vmem:[#allocation3 + $0x700] sm:$0xff]
      %v1256 = vld [vmem:[#allocation3 + $0x708] sm:$0xff]
      %v1257 = vld [vmem:[#allocation3 + $0x710] sm:$0xff]
      %v1258 = vld [vmem:[#allocation3 + $0x718] sm:$0xff]
      %v1259 = vld [vmem:[#allocation3 + $0x720] sm:$0xff]
      %v1260 = vld [vmem:[#allocation3 + $0x728] sm:$0xff]
      %v1261 = vld [vmem:[#allocation3 + $0x730] sm:$0xff]
      %v1262 = vld [vmem:[#allocation3 + $0x738] sm:$0xff]
      %v1263 = vld [vmem:[#allocation3 + $0x740] sm:$0xff]
      %v1264 = vld [vmem:[#allocation3 + $0x748] sm:$0xff]
      %v1265 = vld [vmem:[#allocation3 + $0x750] sm:$0xff]
      %v1266 = vld [vmem:[#allocation3 + $0x758] sm:$0xff]
      %v1267 = vld [vmem:[#allocation3 + $0x760] sm:$0xff]
      %v1268 = vld [vmem:[#allocation3 + $0x768] sm:$0xff]
      %v1269 = vld [vmem:[#allocation3 + $0x770] sm:$0xff]
      %v1270 = vld [vmem:[#allocation3 + $0x778] sm:$0xff]
      %v1271 = vld [vmem:[#allocation3 + $0x780] sm:$0xff]
      %v1272 = vld [vmem:[#allocation3 + $0x788] sm:$0xff]
      %v1273 = vld [vmem:[#allocation3 + $0x790] sm:$0xff]
      %v1274 = vld [vmem:[#allocation3 + $0x798] sm:$0xff]
      %v1275 = vld [vmem:[#allocation3 + $0x7a0] sm:$0xff]
      %v1276 = vld [vmem:[#allocation3 + $0x7a8] sm:$0xff]
      %v1277 = vld [vmem:[#allocation3 + $0x7b0] sm:$0xff]
      %v1278 = vld [vmem:[#allocation3 + $0x7b8] sm:$0xff]
      %v1279 = vld [vmem:[#allocation3 + $0x7c0] sm:$0xff]
      %v1280 = vld [vmem:[#allocation3 + $0x7c8] sm:$0xff]
      %v1281 = vld [vmem:[#allocation3 + $0x7d0] sm:$0xff]
      %v1282 = vld [vmem:[#allocation3 + $0x7d8] sm:$0xff]
      %v1283 = vld [vmem:[#allocation3 + $0x7e0] sm:$0xff]
      %v1284 = vld [vmem:[#allocation3 + $0x7e8] sm:$0xff]
      %v1285 = vld [vmem:[#allocation3 + $0x7f0] sm:$0xff]
      %v1286 = vld [vmem:[#allocation3 + $0x7f8] sm:$0xff]
      %v1287 = vld [vmem:[#allocation3 + $0x800] sm:$0xff]
      %v1288 = vld [vmem:[#allocation3 + $0x808] sm:$0xff]
      %v1289 = vld [vmem:[#allocation3 + $0x810] sm:$0xff]
      %v1290 = vld [vmem:[#allocation3 + $0x818] sm:$0xff]
      %v1291 = vld [vmem:[#allocation3 + $0x820] sm:$0xff]
      %v1292 = vld [vmem:[#allocation3 + $0x828] sm:$0xff]
      %v1293 = vld [vmem:[#allocation3 + $0x830] sm:$0xff]
      %v1294 = vld [vmem:[#allocation3 + $0x838] sm:$0xff]
      %v1295 = vld [vmem:[#allocation3 + $0x840] sm:$0xff]
      %v1296 = vld [vmem:[#allocation3 + $0x848] sm:$0xff]
      %v1297 = vld [vmem:[#allocation3 + $0x850] sm:$0xff]
      %v1298 = vld [vmem:[#allocation3 + $0x858] sm:$0xff]
      %v1299 = vld [vmem:[#allocation3 + $0x860] sm:$0xff]
      %v1300 = vld [vmem:[#allocation3 + $0x868] sm:$0xff]
      %v1301 = vld [vmem:[#allocation3 + $0x870] sm:$0xff]
      %v1302 = vld [vmem:[#allocation3 + $0x878] sm:$0xff]
      %v1303 = vld [vmem:[#allocation3 + $0x880] sm:$0xff]
      %v1304 = vld [vmem:[#allocation3 + $0x888] sm:$0xff]
      %v1305 = vld [vmem:[#allocation3 + $0x890] sm:$0xff]
      %v1306 = vld [vmem:[#allocation3 + $0x898] sm:$0xff]
      %v1307 = vld [vmem:[#allocation3 + $0x8a0] sm:$0xff]
      %v1308 = vld [vmem:[#allocation3 + $0x8a8] sm:$0xff]
      %v1309 = vld [vmem:[#allocation3 + $0x8b0] sm:$0xff]
      %v1310 = vld [vmem:[#allocation3 + $0x8b8] sm:$0xff]
      %v1311 = vld [vmem:[#allocation3 + $0x8c0] sm:$0xff]
      %v1312 = vld [vmem:[#allocation3 + $0x8c8] sm:$0xff]
      %v1313 = vld [vmem:[#allocation3 + $0x8d0] sm:$0xff]
      %v1314 = vld [vmem:[#allocation3 + $0x8d8] sm:$0xff]
      %v1315 = vld [vmem:[#allocation3 + $0x8e0] sm:$0xff]
      %v1316 = vld [vmem:[#allocation3 + $0x8e8] sm:$0xff]
      %v1317 = vld [vmem:[#allocation3 + $0x8f0] sm:$0xff]
      %v1318 = vld [vmem:[#allocation3 + $0x8f8] sm:$0xff]
      %v1319 = vld [vmem:[%s3] sm:$0xff]
      %v1320 = vld [vmem:[%s3 + $0x8] sm:$0xff]
      %v1321 = vld [vmem:[%s3 + $0x10] sm:$0xff]
      %v1322 = vld [vmem:[%s3 + $0x18] sm:$0xff]
      %v1323 = vld [vmem:[%s3 + $0x20] sm:$0xff]
      %v1324 = vld [vmem:[%s3 + $0x28] sm:$0xff]
      %v1325 = vld [vmem:[%s3 + $0x30] sm:$0xff]
      %v1326 = vld [vmem:[%s3 + $0x38] sm:$0xff]
      %v1327 = vld [vmem:[%s3 + $0x40] sm:$0xff]
      %v1328 = vld [vmem:[%s3 + $0x48] sm:$0xff]
      %v1329 = vld [vmem:[%s3 + $0x50] sm:$0xff]
      %v1330 = vld [vmem:[%s3 + $0x58] sm:$0xff]
      %v1331 = vld [vmem:[%s3 + $0x60] sm:$0xff]
      %v1332 = vld [vmem:[%s3 + $0x68] sm:$0xff]
      %v1333 = vld [vmem:[%s3 + $0x70] sm:$0xff]
      %v1334 = vld [vmem:[%s3 + $0x78] sm:$0xff]
      %v1335 = vld [vmem:[%s3 + $0x80] sm:$0xff]
      %v1336 = vld [vmem:[%s3 + $0x88] sm:$0xff]
      %v1337 = vld [vmem:[%s3 + $0x90] sm:$0xff]
      %v1338 = vld [vmem:[%s3 + $0x98] sm:$0xff]
      %v1339 = vld [vmem:[%s3 + $0xa0] sm:$0xff]
      %v1340 = vld [vmem:[%s3 + $0xa8] sm:$0xff]
      %v1341 = vld [vmem:[%s3 + $0xb0] sm:$0xff]
      %v1342 = vld [vmem:[%s3 + $0xb8] sm:$0xff]
      %v1343 = vld [vmem:[%s3 + $0xc0] sm:$0xff]
      %v1344 = vld [vmem:[%s3 + $0xc8] sm:$0xff]
      %v1345 = vld [vmem:[%s3 + $0xd0] sm:$0xff]
      %v1346 = vld [vmem:[%s3 + $0xd8] sm:$0xff]
      %v1347 = vld [vmem:[%s3 + $0xe0] sm:$0xff]
      %v1348 = vld [vmem:[%s3 + $0xe8] sm:$0xff]
      %v1349 = vld [vmem:[%s3 + $0xf0] sm:$0xff]
      %v1350 = vld [vmem:[%s3 + $0xf8] sm:$0xff]
      %v1351 = vld [vmem:[%s3 + $0x100] sm:$0xff]
      %v1352 = vld [vmem:[%s3 + $0x108] sm:$0xff]
      %v1353 = vld [vmem:[%s3 + $0x110] sm:$0xff]
      %v1354 = vld [vmem:[%s3 + $0x118] sm:$0xff]
      %v1355 = vld [vmem:[%s3 + $0x120] sm:$0xff]
      %v1356 = vld [vmem:[%s3 + $0x128] sm:$0xff]
      %v1357 = vld [vmem:[%s3 + $0x130] sm:$0xff]
      %v1358 = vld [vmem:[%s3 + $0x138] sm:$0xff]
      %v1359 = vld [vmem:[%s3 + $0x140] sm:$0xff]
      %v1360 = vld [vmem:[%s3 + $0x148] sm:$0xff]
      %v1361 = vld [vmem:[%s3 + $0x150] sm:$0xff]
      %v1362 = vld [vmem:[%s3 + $0x158] sm:$0xff]
      %v1363 = vld [vmem:[%s3 + $0x160] sm:$0xff]
      %v1364 = vld [vmem:[%s3 + $0x168] sm:$0xff]
      %v1365 = vld [vmem:[%s3 + $0x170] sm:$0xff]
      %v1366 = vld [vmem:[%s3 + $0x178] sm:$0xff]
      %v1367 = vld [vmem:[%s3 + $0x180] sm:$0xff]
      %v1368 = vld [vmem:[%s3 + $0x188] sm:$0xff]
      %v1369 = vld [vmem:[%s3 + $0x190] sm:$0xff]
      %v1370 = vld [vmem:[%s3 + $0x198] sm:$0xff]
      %v1371 = vld [vmem:[%s3 + $0x1a0] sm:$0xff]
      %v1372 = vld [vmem:[%s3 + $0x1a8] sm:$0xff]
      %v1373 = vld [vmem:[%s3 + $0x1b0] sm:$0xff]
      %v1374 = vld [vmem:[%s3 + $0x1b8] sm:$0xff]
      %v1375 = vld [vmem:[%s3 + $0x1c0] sm:$0xff]
      %v1376 = vld [vmem:[%s3 + $0x1c8] sm:$0xff]
      %v1377 = vld [vmem:[%s3 + $0x1d0] sm:$0xff]
      %v1378 = vld [vmem:[%s3 + $0x1d8] sm:$0xff]
      %v1379 = vld [vmem:[%s3 + $0x1e0] sm:$0xff]
      %v1380 = vld [vmem:[%s3 + $0x1e8] sm:$0xff]
      %v1381 = vld [vmem:[%s3 + $0x1f0] sm:$0xff]
      %v1382 = vld [vmem:[%s3 + $0x1f8] sm:$0xff]
      %v1383 = vld [vmem:[%s3 + $0x200] sm:$0xff]
      %v1384 = vld [vmem:[%s3 + $0x208] sm:$0xff]
      %v1385 = vld [vmem:[%s3 + $0x210] sm:$0xff]
      %v1386 = vld [vmem:[%s3 + $0x218] sm:$0xff]
      %v1387 = vld [vmem:[%s3 + $0x220] sm:$0xff]
      %v1388 = vld [vmem:[%s3 + $0x228] sm:$0xff]
      %v1389 = vld [vmem:[%s3 + $0x230] sm:$0xff]
      %v1390 = vld [vmem:[%s3 + $0x238] sm:$0xff]
      %v1391 = vld [vmem:[%s3 + $0x240] sm:$0xff]
      %v1392 = vld [vmem:[%s3 + $0x248] sm:$0xff]
      %v1393 = vld [vmem:[%s3 + $0x250] sm:$0xff]
      %v1394 = vld [vmem:[%s3 + $0x258] sm:$0xff]
      %v1395 = vld [vmem:[%s3 + $0x260] sm:$0xff]
      %v1396 = vld [vmem:[%s3 + $0x268] sm:$0xff]
      %v1397 = vld [vmem:[%s3 + $0x270] sm:$0xff]
      %v1398 = vld [vmem:[%s3 + $0x278] sm:$0xff]
      %v1399 = vld [vmem:[%s3 + $0x280] sm:$0xff]
      %v1400 = vld [vmem:[%s3 + $0x288] sm:$0xff]
      %v1401 = vld [vmem:[%s3 + $0x290] sm:$0xff]
      %v1402 = vld [vmem:[%s3 + $0x298] sm:$0xff]
      %v1403 = vld [vmem:[%s3 + $0x2a0] sm:$0xff]
      %v1404 = vld [vmem:[%s3 + $0x2a8] sm:$0xff]
      %v1405 = vld [vmem:[%s3 + $0x2b0] sm:$0xff]
      %v1406 = vld [vmem:[%s3 + $0x2b8] sm:$0xff]
      %v1407 = vld [vmem:[%s3 + $0x2c0] sm:$0xff]
      %v1408 = vld [vmem:[%s3 + $0x2c8] sm:$0xff]
      %v1409 = vld [vmem:[%s3 + $0x2d0] sm:$0xff]
      %v1410 = vld [vmem:[%s3 + $0x2d8] sm:$0xff]
      %v1411 = vld [vmem:[%s3 + $0x2e0] sm:$0xff]
      %v1412 = vld [vmem:[%s3 + $0x2e8] sm:$0xff]
      %v1413 = vld [vmem:[%s3 + $0x2f0] sm:$0xff]
      %v1414 = vld [vmem:[%s3 + $0x2f8] sm:$0xff]
      %v1415 = vld [vmem:[%s3 + $0x300] sm:$0xff]
      %v1416 = vld [vmem:[%s3 + $0x308] sm:$0xff]
      %v1417 = vld [vmem:[%s3 + $0x310] sm:$0xff]
      %v1418 = vld [vmem:[%s3 + $0x318] sm:$0xff]
      %v1419 = vld [vmem:[%s3 + $0x320] sm:$0xff]
      %v1420 = vld [vmem:[%s3 + $0x328] sm:$0xff]
      %v1421 = vld [vmem:[%s3 + $0x330] sm:$0xff]
      %v1422 = vld [vmem:[%s3 + $0x338] sm:$0xff]
      %v1423 = vld [vmem:[%s3 + $0x340] sm:$0xff]
      %v1424 = vld [vmem:[%s3 + $0x348] sm:$0xff]
      %v1425 = vld [vmem:[%s3 + $0x350] sm:$0xff]
      %v1426 = vld [vmem:[%s3 + $0x358] sm:$0xff]
      %v1427 = vld [vmem:[%s3 + $0x360] sm:$0xff]
      %v1428 = vld [vmem:[%s3 + $0x368] sm:$0xff]
      %v1429 = vld [vmem:[%s3 + $0x370] sm:$0xff]
      %v1430 = vld [vmem:[%s3 + $0x378] sm:$0xff]
      %v1431 = vld [vmem:[%s3 + $0x380] sm:$0xff]
      %v1432 = vld [vmem:[%s3 + $0x388] sm:$0xff]
      %v1433 = vld [vmem:[%s3 + $0x390] sm:$0xff]
      %v1434 = vld [vmem:[%s3 + $0x398] sm:$0xff]
      %v1435 = vld [vmem:[%s3 + $0x3a0] sm:$0xff]
      %v1436 = vld [vmem:[%s3 + $0x3a8] sm:$0xff]
      %v1437 = vld [vmem:[%s3 + $0x3b0] sm:$0xff]
      %v1438 = vld [vmem:[%s3 + $0x3b8] sm:$0xff]
      %v1439 = vld [vmem:[%s3 + $0x3c0] sm:$0xff]
      %v1440 = vld [vmem:[%s3 + $0x3c8] sm:$0xff]
      %v1441 = vld [vmem:[%s3 + $0x3d0] sm:$0xff]
      %v1442 = vld [vmem:[%s3 + $0x3d8] sm:$0xff]
      %v1443 = vld [vmem:[%s3 + $0x3e0] sm:$0xff]
      %v1444 = vld [vmem:[%s3 + $0x3e8] sm:$0xff]
      %v1445 = vld [vmem:[%s3 + $0x3f0] sm:$0xff]
      %v1446 = vld [vmem:[%s3 + $0x3f8] sm:$0xff]
      %v1447 = vld [vmem:[%s3 + $0x400] sm:$0xff]
      %v1448 = vld [vmem:[%s3 + $0x408] sm:$0xff]
      %v1449 = vld [vmem:[%s3 + $0x410] sm:$0xff]
      %v1450 = vld [vmem:[%s3 + $0x418] sm:$0xff]
      %v1451 = vld [vmem:[%s3 + $0x420] sm:$0xff]
      %v1452 = vld [vmem:[%s3 + $0x428] sm:$0xff]
      %v1453 = vld [vmem:[%s3 + $0x430] sm:$0xff]
      %v1454 = vld [vmem:[%s3 + $0x438] sm:$0xff]
      %v1455 = vld [vmem:[%s3 + $0x440] sm:$0xff]
      %v1456 = vld [vmem:[%s3 + $0x448] sm:$0xff]
      %v1457 = vld [vmem:[%s3 + $0x450] sm:$0xff]
      %v1458 = vld [vmem:[%s3 + $0x458] sm:$0xff]
      %v1459 = vld [vmem:[%s3 + $0x460] sm:$0xff]
      %v1460 = vld [vmem:[%s3 + $0x468] sm:$0xff]
      %v1461 = vld [vmem:[%s3 + $0x470] sm:$0xff]
      %v1462 = vld [vmem:[%s3 + $0x478] sm:$0xff]
      %1463 = vmatprep.subr.mxu0 0.0
      %1464 = vmatpush1.msra.mxu0 %v1319
      %1465 = vmatprep.subr.mxu0 0.0
      %1466 = vmatpush1.msra.mxu0 %v1320
      %1467 = vmatprep.subr.mxu0 0.0
      %1468 = vmatpush1.msra.mxu0 %v1321
      %1469 = vmatprep.subr.mxu0 0.0
      %1470 = vmatpush1.msra.mxu0 %v1322
      %1471 = vmatprep.subr.mxu0 0.0
      %1472 = vmatpush1.msra.mxu0 %v1323
      %1473 = vmatprep.subr.mxu0 0.0
      %1474 = vmatpush1.msra.mxu0 %v1324
      %1475 = vmatprep.subr.mxu0 0.0
      %1476 = vmatpush1.msra.mxu0 %v1325
      %1477 = vmatprep.subr.mxu0 0.0
      %1478 = vmatpush1.msra.mxu0 %v1326
      %1479 = vmatprep.subr.mxu0 0.0
      %1480 = vmatpush1.msra.mxu0 %v1327
      %1481 = vmatprep.subr.mxu0 0.0
      %1482 = vmatpush1.msra.mxu0 %v1328
      %1483 = vmatprep.subr.mxu0 0.0
      %1484 = vmatpush1.msra.mxu0 %v1329
      %1485 = vmatprep.subr.mxu0 0.0
      %1486 = vmatpush1.msra.mxu0 %v1330
      %1487 = vmatprep.subr.mxu0 0.0
      %1488 = vmatpush1.msra.mxu0 %v1331
      %1489 = vmatprep.subr.mxu0 0.0
      %1490 = vmatpush1.msra.mxu0 %v1332
      %1491 = vmatprep.subr.mxu0 0.0
      %1492 = vmatpush1.msra.mxu0 %v1333
      %1493 = vmatprep.subr.mxu0 0.0
      %1494 = vmatpush1.msra.mxu0 %v1334
      %1495 = vmatprep.subr.mxu0 0.0
      %1496 = vmatpush1.msra.mxu0 %v1335
      %1497 = vmatprep.subr.mxu0 0.0
      %1498 = vmatpush1.msra.mxu0 %v1336
      %1499 = vmatprep.subr.mxu0 0.0
      %1500 = vmatpush1.msra.mxu0 %v1337
      %1501 = vmatprep.subr.mxu0 0.0
      %1502 = vmatpush1.msra.mxu0 %v1338
      %1503 = vmatprep.subr.mxu0 0.0
      %1504 = vmatpush1.msra.mxu0 %v1339
      %1505 = vmatprep.subr.mxu0 0.0
      %1506 = vmatpush1.msra.mxu0 %v1340
      %1507 = vmatprep.subr.mxu0 0.0
      %1508 = vmatpush1.msra.mxu0 %v1341
      %1509 = vmatprep.subr.mxu0 0.0
      %1510 = vmatpush1.msra.mxu0 %v1342
      %1511 = vmatprep.subr.mxu0 0.0
      %1512 = vmatpush1.msra.mxu0 %v1343
      %1513 = vmatprep.subr.mxu0 0.0
      %1514 = vmatpush1.msra.mxu0 %v1344
      %1515 = vmatprep.subr.mxu0 0.0
      %1516 = vmatpush1.msra.mxu0 %v1345
      %1517 = vmatprep.subr.mxu0 0.0
      %1518 = vmatpush1.msra.mxu0 %v1346
      %1519 = vmatprep.subr.mxu0 0.0
      %1520 = vmatpush1.msra.mxu0 %v1347
      %1521 = vmatprep.subr.mxu0 0.0
      %1522 = vmatpush1.msra.mxu0 %v1348
      %1523 = vmatprep.subr.mxu0 0.0
      %1524 = vmatpush1.msra.mxu0 %v1349
      %1525 = vmatprep.subr.mxu0 0.0
      %1526 = vmatpush1.msra.mxu0 %v1350
      %1527 = vmatprep.mubr.f32.mxu0 %v1032
      %1528 = vmatmul.mubr.f32.gmra.mrb[0].mxu0 %v1031
      %v1529 = vpop.f32.mrb[0].mxu0
      %v1530 = vadd.f32 0.0, %v1529
      %v1531 = vpop.f32.mrb[0].mxu0
      %1532 = vmatprep.mubr.f32.mxu0 %v1041
      %1533 = vmatmul.mubr.f32.gmra.mrb[0].mxu0 %v1040
      %v1534 = vpop.f32.mrb[0].mxu0
      %v1535 = vadd.f32 0.0, %v1534
      %v1536 = vpop.f32.mrb[0].mxu0
      %1537 = vmatprep.mubr.f32.mxu0 %v1050
      %1538 = vmatmul.mubr.f32.gmra.mrb[0].mxu0 %v1049
      %v1539 = vpop.f32.mrb[0].mxu0
      %v1540 = vadd.f32 0.0, %v1539
      %v1541 = vpop.f32.mrb[0].mxu0
      %1542 = vmatprep.mubr.f32.mxu0 %v1059
      %1543 = vmatmul.mubr.f32.gmra.mrb[0].mxu0 %v1058
      %v1544 = vpop.f32.mrb[0].mxu0
      %v1545 = vadd.f32 0.0, %v1544
      %v1546 = vpop.f32.mrb[0].mxu0
      %1547 = vmatprep.mubr.f32.mxu0 %v1068
      %1548 = vmatmul.mubr.f32.gmra.mrb[0].mxu0 %v1067
      %v1549 = vpop.f32.mrb[0].mxu0
      %v1550 = vadd.f32 0.0, %v1549
      %v1551 = vpop.f32.mrb[0].mxu0
      %1552 = vmatprep.mubr.f32.mxu0 %v1077
      %1553 = vmatmul.mubr.f32.gmra.mrb[0].mxu0 %v1076
      %v1554 = vpop.f32.mrb[0].mxu0
      %v1555 = vadd.f32 0.0, %v1554
      %v1556 = vpop.f32.mrb[0].mxu0
      %1557 = vmatprep.mubr.f32.mxu0 %v1086
      %1558 = vmatmul.mubr.f32.gmra.mrb[0].mxu0 %v1085
      %v1559 = vpop.f32.mrb[0].mxu0
      %v1560 = vadd.f32 0.0, %v1559
      %v1561 = vpop.f32.mrb[0].mxu0
      %1562 = vmatprep.mubr.f32.mxu0 %v1095
      %1563 = vmatmul.mubr.f32.gmra.mrb[0].mxu0 %v1094
      %v1564 = vpop.f32.mrb[0].mxu0
      %v1565 = vadd.f32 0.0, %v1564
      %v1566 = vpop.f32.mrb[0].mxu0
      %1567 = vmatprep.mubr.f32.mxu0 %v1104
      %1568 = vmatmul.mubr.f32.gmra.mrb[0].mxu0 %v1103
      %v1569 = vpop.f32.mrb[0].mxu0
      %v1570 = vadd.f32 0.0, %v1569
      %v1571 = vpop.f32.mrb[0].mxu0
      %1572 = vmatprep.mubr.f32.mxu0 %v1113
      %1573 = vmatmul.mubr.f32.gmra.mrb[0].mxu0 %v1112
      %v1574 = vpop.f32.mrb[0].mxu0
      %v1575 = vadd.f32 0.0, %v1574
      %v1576 = vpop.f32.mrb[0].mxu0
      %1577 = vmatprep.mubr.f32.mxu0 %v1122
      %1578 = vmatmul.mubr.f32.gmra.mrb[0].mxu0 %v1121
      %v1579 = vpop.f32.mrb[0].mxu0
      %v1580 = vadd.f32 0.0, %v1579
      %v1581 = vpop.f32.mrb[0].mxu0
      %1582 = vmatprep.mubr.f32.mxu0 %v1131
      %1583 = vmatmul.mubr.f32.gmra.mrb[0].mxu0 %v1130
      %v1584 = vpop.f32.mrb[0].mxu0
      %v1585 = vadd.f32 0.0, %v1584
      %v1586 = vpop.f32.mrb[0].mxu0
      %1587 = vmatprep.mubr.f32.mxu0 %v1140
      %1588 = vmatmul.mubr.f32.gmra.mrb[0].mxu0 %v1139
      %v1589 = vpop.f32.mrb[0].mxu0
      %v1590 = vadd.f32 0.0, %v1589
      %v1591 = vpop.f32.mrb[0].mxu0
      %1592 = vmatprep.mubr.f32.mxu0 %v1149
      %1593 = vmatmul.mubr.f32.gmra.mrb[0].mxu0 %v1148
      %v1594 = vpop.f32.mrb[0].mxu0
      %v1595 = vadd.f32 0.0, %v1594
      %v1596 = vpop.f32.mrb[0].mxu0
      %1597 = vmatprep.mubr.f32.mxu0 %v1158
      %1598 = vmatmul.mubr.f32.gmra.mrb[0].mxu0 %v1157
      %v1599 = vpop.f32.mrb[0].mxu0
      %v1600 = vadd.f32 0.0, %v1599
      %v1601 = vpop.f32.mrb[0].mxu0
      %1602 = vmatprep.mubr.f32.mxu0 %v1167
      %1603 = vmatmul.mubr.f32.gmra.mrb[0].mxu0 %v1166
      %v1604 = vpop.f32.mrb[0].mxu0
      %v1605 = vadd.f32 0.0, %v1604
      %v1606 = vpop.f32.mrb[0].mxu0
      %1607 = vmatprep.mubr.f32.mxu0 %v1176
      %1608 = vmatmul.mubr.f32.gmra.mrb[0].mxu0 %v1175
      %v1609 = vpop.f32.mrb[0].mxu0
      %v1610 = vadd.f32 0.0, %v1609
      %v1611 = vpop.f32.mrb[0].mxu0
      %1612 = vmatprep.mubr.f32.mxu0 %v1185
      %1613 = vmatmul.mubr.f32.gmra.mrb[0].mxu0 %v1184
      %v1614 = vpop.f32.mrb[0].mxu0
      %v1615 = vadd.f32 0.0, %v1614
      %v1616 = vpop.f32.mrb[0].mxu0
      %1617 = vmatprep.mubr.f32.mxu0 %v1194
      %1618 = vmatmul.mubr.f32.gmra.mrb[0].mxu0 %v1193
      %v1619 = vpop.f32.mrb[0].mxu0
      %v1620 = vadd.f32 0.0, %v1619
      %v1621 = vpop.f32.mrb[0].mxu0
      %1622 = vmatprep.mubr.f32.mxu0 %v1203
      %1623 = vmatmul.mubr.f32.gmra.mrb[0].mxu0 %v1202
      %v1624 = vpop.f32.mrb[0].mxu0
      %v1625 = vadd.f32 0.0, %v1624
      %v1626 = vpop.f32.mrb[0].mxu0
      %1627 = vmatprep.mubr.f32.mxu0 %v1212
      %1628 = vmatmul.mubr.f32.gmra.mrb[0].mxu0 %v1211
      %v1629 = vpop.f32.mrb[0].mxu0
      %v1630 = vadd.f32 0.0, %v1629
      %v1631 = vpop.f32.mrb[0].mxu0
      %1632 = vmatprep.mubr.f32.mxu0 %v1221
      %1633 = vmatmul.mubr.f32.gmra.mrb[0].mxu0 %v1220
      %v1634 = vpop.f32.mrb[0].mxu0
      %v1635 = vadd.f32 0.0, %v1634
      %v1636 = vpop.f32.mrb[0].mxu0
      %1637 = vmatprep.mubr.f32.mxu0 %v1230
      %1638 = vmatmul.mubr.f32.gmra.mrb[0].mxu0 %v1229
      %v1639 = vpop.f32.mrb[0].mxu0
      %v1640 = vadd.f32 0.0, %v1639
      %v1641 = vpop.f32.mrb[0].mxu0
      %1642 = vmatprep.mubr.f32.mxu0 %v1239
      %1643 = vmatmul.mubr.f32.gmra.mrb[0].mxu0 %v1238
      %v1644 = vpop.f32.mrb[0].mxu0
      %v1645 = vadd.f32 0.0, %v1644
      %v1646 = vpop.f32.mrb[0].mxu0
      %1647 = vmatprep.mubr.f32.mxu0 %v1248
      %1648 = vmatmul.mubr.f32.gmra.mrb[0].mxu0 %v1247
      %v1649 = vpop.f32.mrb[0].mxu0
      %v1650 = vadd.f32 0.0, %v1649
      %v1651 = vpop.f32.mrb[0].mxu0
      %1652 = vmatprep.mubr.f32.mxu0 %v1257
      %1653 = vmatmul.mubr.f32.gmra.mrb[0].mxu0 %v1256
      %v1654 = vpop.f32.mrb[0].mxu0
      %v1655 = vadd.f32 0.0, %v1654
      %v1656 = vpop.f32.mrb[0].mxu0
      %1657 = vmatprep.mubr.f32.mxu0 %v1266
      %1658 = vmatmul.mubr.f32.gmra.mrb[0].mxu0 %v1265
      %v1659 = vpop.f32.mrb[0].mxu0
      %v1660 = vadd.f32 0.0, %v1659
      %v1661 = vpop.f32.mrb[0].mxu0
      %1662 = vmatprep.mubr.f32.mxu0 %v1275
      %1663 = vmatmul.mubr.f32.gmra.mrb[0].mxu0 %v1274
      %v1664 = vpop.f32.mrb[0].mxu0
      %v1665 = vadd.f32 0.0, %v1664
      %v1666 = vpop.f32.mrb[0].mxu0
      %1667 = vmatprep.mubr.f32.mxu0 %v1284
      %1668 = vmatmul.mubr.f32.gmra.mrb[0].mxu0 %v1283
      %v1669 = vpop.f32.mrb[0].mxu0
      %v1670 = vadd.f32 0.0, %v1669
      %v1671 = vpop.f32.mrb[0].mxu0
      %1672 = vmatprep.mubr.f32.mxu0 %v1293
      %1673 = vmatmul.mubr.f32.gmra.mrb[0].mxu0 %v1292
      %v1674 = vpop.f32.mrb[0].mxu0
      %v1675 = vadd.f32 0.0, %v1674
      %v1676 = vpop.f32.mrb[0].mxu0
      %1677 = vmatprep.mubr.f32.mxu0 %v1302
      %1678 = vmatmul.mubr.f32.gmra.mrb[0].mxu0 %v1301
      %v1679 = vpop.f32.mrb[0].mxu0
      %v1680 = vadd.f32 0.0, %v1679
      %v1681 = vpop.f32.mrb[0].mxu0
      %1682 = vmatprep.mubr.f32.mxu0 %v1311
      %1683 = vmatmul.mubr.f32.gmra.mrb[0].mxu0 %v1310
      %v1684 = vpop.f32.mrb[0].mxu0
      %v1685 = vadd.f32 0.0, %v1684
      %v1686 = vpop.f32.mrb[0].mxu0
      %1687 = vdwg.mxu0
      %1688 = vmatprep.subr.mxu0 0.0
      %1689 = vmatpush1.msra.mxu0 %v1351
      %1690 = vmatprep.subr.mxu0 0.0
      %1691 = vmatpush1.msra.mxu0 %v1352
      %1692 = vmatprep.subr.mxu0 0.0
      %1693 = vmatpush1.msra.mxu0 %v1353
      %1694 = vmatprep.subr.mxu0 0.0
      %1695 = vmatpush1.msra.mxu0 %v1354
      %1696 = vmatprep.subr.mxu0 0.0
      %1697 = vmatpush1.msra.mxu0 %v1355
      %1698 = vmatprep.subr.mxu0 0.0
      %1699 = vmatpush1.msra.mxu0 %v1356
      %1700 = vmatprep.subr.mxu0 0.0
      %1701 = vmatpush1.msra.mxu0 %v1357
      %1702 = vmatprep.subr.mxu0 0.0
      %1703 = vmatpush1.msra.mxu0 %v1358
      %1704 = vmatprep.subr.mxu0 0.0
      %1705 = vmatpush1.msra.mxu0 %v1359
      %1706 = vmatprep.subr.mxu0 0.0
      %1707 = vmatpush1.msra.mxu0 %v1360
      %1708 = vmatprep.subr.mxu0 0.0
      %1709 = vmatpush1.msra.mxu0 %v1361
      %1710 = vmatprep.subr.mxu0 0.0
      %1711 = vmatpush1.msra.mxu0 %v1362
      %1712 = vmatprep.subr.mxu0 0.0
      %1713 = vmatpush1.msra.mxu0 %v1363
      %1714 = vmatprep.subr.mxu0 0.0
      %1715 = vmatpush1.msra.mxu0 %v1364
      %1716 = vmatprep.subr.mxu0 0.0
      %1717 = vmatpush1.msra.mxu0 %v1365
      %1718 = vmatprep.subr.mxu0 0.0
      %1719 = vmatpush1.msra.mxu0 %v1366
      %1720 = vmatprep.subr.mxu0 0.0
      %1721 = vmatpush1.msra.mxu0 %v1367
      %1722 = vmatprep.subr.mxu0 0.0
      %1723 = vmatpush1.msra.mxu0 %v1368
      %1724 = vmatprep.subr.mxu0 0.0
      %1725 = vmatpush1.msra.mxu0 %v1369
      %1726 = vmatprep.subr.mxu0 0.0
      %1727 = vmatpush1.msra.mxu0 %v1370
      %1728 = vmatprep.subr.mxu0 0.0
      %1729 = vmatpush1.msra.mxu0 %v1371
      %1730 = vmatprep.subr.mxu0 0.0
      %1731 = vmatpush1.msra.mxu0 %v1372
      %1732 = vmatprep.subr.mxu0 0.0
      %1733 = vmatpush1.msra.mxu0 %v1373
      %1734 = vmatprep.subr.mxu0 0.0
      %1735 = vmatpush1.msra.mxu0 %v1374
      %1736 = vmatprep.subr.mxu0 0.0
      %1737 = vmatpush1.msra.mxu0 %v1375
      %1738 = vmatprep.subr.mxu0 0.0
      %1739 = vmatpush1.msra.mxu0 %v1376
      %1740 = vmatprep.subr.mxu0 0.0
      %1741 = vmatpush1.msra.mxu0 %v1377
      %1742 = vmatprep.subr.mxu0 0.0
      %1743 = vmatpush1.msra.mxu0 %v1378
      %1744 = vmatprep.subr.mxu0 0.0
      %1745 = vmatpush1.msra.mxu0 %v1379
      %1746 = vmatprep.subr.mxu0 0.0
      %1747 = vmatpush1.msra.mxu0 %v1380
      %1748 = vmatprep.subr.mxu0 0.0
      %1749 = vmatpush1.msra.mxu0 %v1381
      %1750 = vmatprep.subr.mxu0 0.0
      %1751 = vmatpush1.msra.mxu0 %v1382
      %1752 = vmatprep.mubr.f32.mxu0 %v1034
      %1753 = vmatmul.mubr.f32.gmra.mrb[0].mxu0 %v1033
      %v1754 = vpop.f32.mrb[0].mxu0
      %v1755 = vadd.f32 %v1530, %v1754
      %v1756 = vpop.f32.mrb[0].mxu0
      %1757 = vmatprep.mubr.f32.mxu0 %v1043
      %1758 = vmatmul.mubr.f32.gmra.mrb[0].mxu0 %v1042
      %v1759 = vpop.f32.mrb[0].mxu0
      %v1760 = vadd.f32 %v1535, %v1759
      %v1761 = vpop.f32.mrb[0].mxu0
      %1762 = vmatprep.mubr.f32.mxu0 %v1052
      %1763 = vmatmul.mubr.f32.gmra.mrb[0].mxu0 %v1051
      %v1764 = vpop.f32.mrb[0].mxu0
      %v1765 = vadd.f32 %v1540, %v1764
      %v1766 = vpop.f32.mrb[0].mxu0
      %1767 = vmatprep.mubr.f32.mxu0 %v1061
      %1768 = vmatmul.mubr.f32.gmra.mrb[0].mxu0 %v1060
      %v1769 = vpop.f32.mrb[0].mxu0
      %v1770 = vadd.f32 %v1545, %v1769
      %v1771 = vpop.f32.mrb[0].mxu0
      %1772 = vmatprep.mubr.f32.mxu0 %v1070
      %1773 = vmatmul.mubr.f32.gmra.mrb[0].mxu0 %v1069
      %v1774 = vpop.f32.mrb[0].mxu0
      %v1775 = vadd.f32 %v1550, %v1774
      %v1776 = vpop.f32.mrb[0].mxu0
      %1777 = vmatprep.mubr.f32.mxu0 %v1079
      %1778 = vmatmul.mubr.f32.gmra.mrb[0].mxu0 %v1078
      %v1779 = vpop.f32.mrb[0].mxu0
      %v1780 = vadd.f32 %v1555, %v1779
      %v1781 = vpop.f32.mrb[0].mxu0
      %1782 = vmatprep.mubr.f32.mxu0 %v1088
      %1783 = vmatmul.mubr.f32.gmra.mrb[0].mxu0 %v1087
      %v1784 = vpop.f32.mrb[0].mxu0
      %v1785 = vadd.f32 %v1560, %v1784
      %v1786 = vpop.f32.mrb[0].mxu0
      %1787 = vmatprep.mubr.f32.mxu0 %v1097
      %1788 = vmatmul.mubr.f32.gmra.mrb[0].mxu0 %v1096
      %v1789 = vpop.f32.mrb[0].mxu0
      %v1790 = vadd.f32 %v1565, %v1789
      %v1791 = vpop.f32.mrb[0].mxu0
      %1792 = vmatprep.mubr.f32.mxu0 %v1106
      %1793 = vmatmul.mubr.f32.gmra.mrb[0].mxu0 %v1105
      %v1794 = vpop.f32.mrb[0].mxu0
      %v1795 = vadd.f32 %v1570, %v1794
      %v1796 = vpop.f32.mrb[0].mxu0
      %1797 = vmatprep.mubr.f32.mxu0 %v1115
      %1798 = vmatmul.mubr.f32.gmra.mrb[0].mxu0 %v1114
      %v1799 = vpop.f32.mrb[0].mxu0
      %v1800 = vadd.f32 %v1575, %v1799
      %v1801 = vpop.f32.mrb[0].mxu0
      %1802 = vmatprep.mubr.f32.mxu0 %v1124
      %1803 = vmatmul.mubr.f32.gmra.mrb[0].mxu0 %v1123
      %v1804 = vpop.f32.mrb[0].mxu0
      %v1805 = vadd.f32 %v1580, %v1804
      %v1806 = vpop.f32.mrb[0].mxu0
      %1807 = vmatprep.mubr.f32.mxu0 %v1133
      %1808 = vmatmul.mubr.f32.gmra.mrb[0].mxu0 %v1132
      %v1809 = vpop.f32.mrb[0].mxu0
      %v1810 = vadd.f32 %v1585, %v1809
      %v1811 = vpop.f32.mrb[0].mxu0
      %1812 = vmatprep.mubr.f32.mxu0 %v1142
      %1813 = vmatmul.mubr.f32.gmra.mrb[0].mxu0 %v1141
      %v1814 = vpop.f32.mrb[0].mxu0
      %v1815 = vadd.f32 %v1590, %v1814
      %v1816 = vpop.f32.mrb[0].mxu0
      %1817 = vmatprep.mubr.f32.mxu0 %v1151
      %1818 = vmatmul.mubr.f32.gmra.mrb[0].mxu0 %v1150
      %v1819 = vpop.f32.mrb[0].mxu0
      %v1820 = vadd.f32 %v1595, %v1819
      %v1821 = vpop.f32.mrb[0].mxu0
      %1822 = vmatprep.mubr.f32.mxu0 %v1160
      %1823 = vmatmul.mubr.f32.gmra.mrb[0].mxu0 %v1159
      %v1824 = vpop.f32.mrb[0].mxu0
      %v1825 = vadd.f32 %v1600, %v1824
      %v1826 = vpop.f32.mrb[0].mxu0
      %1827 = vmatprep.mubr.f32.mxu0 %v1169
      %1828 = vmatmul.mubr.f32.gmra.mrb[0].mxu0 %v1168
      %v1829 = vpop.f32.mrb[0].mxu0
      %v1830 = vadd.f32 %v1605, %v1829
      %v1831 = vpop.f32.mrb[0].mxu0
      %1832 = vmatprep.mubr.f32.mxu0 %v1178
      %1833 = vmatmul.mubr.f32.gmra.mrb[0].mxu0 %v1177
      %v1834 = vpop.f32.mrb[0].mxu0
      %v1835 = vadd.f32 %v1610, %v1834
      %v1836 = vpop.f32.mrb[0].mxu0
      %1837 = vmatprep.mubr.f32.mxu0 %v1187
      %1838 = vmatmul.mubr.f32.gmra.mrb[0].mxu0 %v1186
      %v1839 = vpop.f32.mrb[0].mxu0
      %v1840 = vadd.f32 %v1615, %v1839
      %v1841 = vpop.f32.mrb[0].mxu0
      %1842 = vmatprep.mubr.f32.mxu0 %v1196
      %1843 = vmatmul.mubr.f32.gmra.mrb[0].mxu0 %v1195
      %v1844 = vpop.f32.mrb[0].mxu0
      %v1845 = vadd.f32 %v1620, %v1844
      %v1846 = vpop.f32.mrb[0].mxu0
      %1847 = vmatprep.mubr.f32.mxu0 %v1205
      %1848 = vmatmul.mubr.f32.gmra.mrb[0].mxu0 %v1204
      %v1849 = vpop.f32.mrb[0].mxu0
      %v1850 = vadd.f32 %v1625, %v1849
      %v1851 = vpop.f32.mrb[0].mxu0
      %1852 = vmatprep.mubr.f32.mxu0 %v1214
      %1853 = vmatmul.mubr.f32.gmra.mrb[0].mxu0 %v1213
      %v1854 = vpop.f32.mrb[0].mxu0
      %v1855 = vadd.f32 %v1630, %v1854
      %v1856 = vpop.f32.mrb[0].mxu0
      %1857 = vmatprep.mubr.f32.mxu0 %v1223
      %1858 = vmatmul.mubr.f32.gmra.mrb[0].mxu0 %v1222
      %v1859 = vpop.f32.mrb[0].mxu0
      %v1860 = vadd.f32 %v1635, %v1859
      %v1861 = vpop.f32.mrb[0].mxu0
      %1862 = vmatprep.mubr.f32.mxu0 %v1232
      %1863 = vmatmul.mubr.f32.gmra.mrb[0].mxu0 %v1231
      %v1864 = vpop.f32.mrb[0].mxu0
      %v1865 = vadd.f32 %v1640, %v1864
      %v1866 = vpop.f32.mrb[0].mxu0
      %1867 = vmatprep.mubr.f32.mxu0 %v1241
      %1868 = vmatmul.mubr.f32.gmra.mrb[0].mxu0 %v1240
      %v1869 = vpop.f32.mrb[0].mxu0
      %v1870 = vadd.f32 %v1645, %v1869
      %v1871 = vpop.f32.mrb[0].mxu0
      %1872 = vmatprep.mubr.f32.mxu0 %v1250
      %1873 = vmatmul.mubr.f32.gmra.mrb[0].mxu0 %v1249
      %v1874 = vpop.f32.mrb[0].mxu0
      %v1875 = vadd.f32 %v1650, %v1874
      %v1876 = vpop.f32.mrb[0].mxu0
      %1877 = vmatprep.mubr.f32.mxu0 %v1259
      %1878 = vmatmul.mubr.f32.gmra.mrb[0].mxu0 %v1258
      %v1879 = vpop.f32.mrb[0].mxu0
      %v1880 = vadd.f32 %v1655, %v1879
      %v1881 = vpop.f32.mrb[0].mxu0
      %1882 = vmatprep.mubr.f32.mxu0 %v1268
      %1883 = vmatmul.mubr.f32.gmra.mrb[0].mxu0 %v1267
      %v1884 = vpop.f32.mrb[0].mxu0
      %v1885 = vadd.f32 %v1660, %v1884
      %v1886 = vpop.f32.mrb[0].mxu0
      %1887 = vmatprep.mubr.f32.mxu0 %v1277
      %1888 = vmatmul.mubr.f32.gmra.mrb[0].mxu0 %v1276
      %v1889 = vpop.f32.mrb[0].mxu0
      %v1890 = vadd.f32 %v1665, %v1889
      %v1891 = vpop.f32.mrb[0].mxu0
      %1892 = vmatprep.mubr.f32.mxu0 %v1286
      %1893 = vmatmul.mubr.f32.gmra.mrb[0].mxu0 %v1285
      %v1894 = vpop.f32.mrb[0].mxu0
      %v1895 = vadd.f32 %v1670, %v1894
      %v1896 = vpop.f32.mrb[0].mxu0
      %1897 = vmatprep.mubr.f32.mxu0 %v1295
      %1898 = vmatmul.mubr.f32.gmra.mrb[0].mxu0 %v1294
      %v1899 = vpop.f32.mrb[0].mxu0
      %v1900 = vadd.f32 %v1675, %v1899
      %v1901 = vpop.f32.mrb[0].mxu0
      %1902 = vmatprep.mubr.f32.mxu0 %v1304
      %1903 = vmatmul.mubr.f32.gmra.mrb[0].mxu0 %v1303
      %v1904 = vpop.f32.mrb[0].mxu0
      %v1905 = vadd.f32 %v1680, %v1904
      %v1906 = vpop.f32.mrb[0].mxu0
      %1907 = vmatprep.mubr.f32.mxu0 %v1313
      %1908 = vmatmul.mubr.f32.gmra.mrb[0].mxu0 %v1312
      %v1909 = vpop.f32.mrb[0].mxu0
      %v1910 = vadd.f32 %v1685, %v1909
      %v1911 = vpop.f32.mrb[0].mxu0
      %1912 = vdwg.mxu0
      %1913 = vmatprep.subr.mxu0 0.0
      %1914 = vmatpush1.msra.mxu0 %v1383
      %1915 = vmatprep.subr.mxu0 0.0
      %1916 = vmatpush1.msra.mxu0 %v1384
      %1917 = vmatprep.subr.mxu0 0.0
      %1918 = vmatpush1.msra.mxu0 %v1385
      %1919 = vmatprep.subr.mxu0 0.0
      %1920 = vmatpush1.msra.mxu0 %v1386
      %1921 = vmatprep.subr.mxu0 0.0
      %1922 = vmatpush1.msra.mxu0 %v1387
      %1923 = vmatprep.subr.mxu0 0.0
      %1924 = vmatpush1.msra.mxu0 %v1388
      %1925 = vmatprep.subr.mxu0 0.0
      %1926 = vmatpush1.msra.mxu0 %v1389
      %1927 = vmatprep.subr.mxu0 0.0
      %1928 = vmatpush1.msra.mxu0 %v1390
      %1929 = vmatprep.subr.mxu0 0.0
      %1930 = vmatpush1.msra.mxu0 %v1391
      %1931 = vmatprep.subr.mxu0 0.0
      %1932 = vmatpush1.msra.mxu0 %v1392
      %1933 = vmatprep.subr.mxu0 0.0
      %1934 = vmatpush1.msra.mxu0 %v1393
      %1935 = vmatprep.subr.mxu0 0.0
      %1936 = vmatpush1.msra.mxu0 %v1394
      %1937 = vmatprep.subr.mxu0 0.0
      %1938 = vmatpush1.msra.mxu0 %v1395
      %1939 = vmatprep.subr.mxu0 0.0
      %1940 = vmatpush1.msra.mxu0 %v1396
      %1941 = vmatprep.subr.mxu0 0.0
      %1942 = vmatpush1.msra.mxu0 %v1397
      %1943 = vmatprep.subr.mxu0 0.0
      %1944 = vmatpush1.msra.mxu0 %v1398
      %1945 = vmatprep.subr.mxu0 0.0
      %1946 = vmatpush1.msra.mxu0 %v1399
      %1947 = vmatprep.subr.mxu0 0.0
      %1948 = vmatpush1.msra.mxu0 %v1400
      %1949 = vmatprep.subr.mxu0 0.0
      %1950 = vmatpush1.msra.mxu0 %v1401
      %1951 = vmatprep.subr.mxu0 0.0
      %1952 = vmatpush1.msra.mxu0 %v1402
      %1953 = vmatprep.subr.mxu0 0.0
      %1954 = vmatpush1.msra.mxu0 %v1403
      %1955 = vmatprep.subr.mxu0 0.0
      %1956 = vmatpush1.msra.mxu0 %v1404
      %1957 = vmatprep.subr.mxu0 0.0
      %1958 = vmatpush1.msra.mxu0 %v1405
      %1959 = vmatprep.subr.mxu0 0.0
      %1960 = vmatpush1.msra.mxu0 %v1406
      %1961 = vmatprep.subr.mxu0 0.0
      %1962 = vmatpush1.msra.mxu0 %v1407
      %1963 = vmatprep.subr.mxu0 0.0
      %1964 = vmatpush1.msra.mxu0 %v1408
      %1965 = vmatprep.subr.mxu0 0.0
      %1966 = vmatpush1.msra.mxu0 %v1409
      %1967 = vmatprep.subr.mxu0 0.0
      %1968 = vmatpush1.msra.mxu0 %v1410
      %1969 = vmatprep.subr.mxu0 0.0
      %1970 = vmatpush1.msra.mxu0 %v1411
      %1971 = vmatprep.subr.mxu0 0.0
      %1972 = vmatpush1.msra.mxu0 %v1412
      %1973 = vmatprep.subr.mxu0 0.0
      %1974 = vmatpush1.msra.mxu0 %v1413
      %1975 = vmatprep.subr.mxu0 0.0
      %1976 = vmatpush1.msra.mxu0 %v1414
      %1977 = vmatprep.mubr.f32.mxu0 %v1036
      %1978 = vmatmul.mubr.f32.gmra.mrb[0].mxu0 %v1035
      %v1979 = vpop.f32.mrb[0].mxu0
      %v1980 = vadd.f32 %v1755, %v1979
      %v1981 = vpop.f32.mrb[0].mxu0
      %1982 = vmatprep.mubr.f32.mxu0 %v1045
      %1983 = vmatmul.mubr.f32.gmra.mrb[0].mxu0 %v1044
      %v1984 = vpop.f32.mrb[0].mxu0
      %v1985 = vadd.f32 %v1760, %v1984
      %v1986 = vpop.f32.mrb[0].mxu0
      %1987 = vmatprep.mubr.f32.mxu0 %v1054
      %1988 = vmatmul.mubr.f32.gmra.mrb[0].mxu0 %v1053
      %v1989 = vpop.f32.mrb[0].mxu0
      %v1990 = vadd.f32 %v1765, %v1989
      %v1991 = vpop.f32.mrb[0].mxu0
      %1992 = vmatprep.mubr.f32.mxu0 %v1063
      %1993 = vmatmul.mubr.f32.gmra.mrb[0].mxu0 %v1062
      %v1994 = vpop.f32.mrb[0].mxu0
      %v1995 = vadd.f32 %v1770, %v1994
      %v1996 = vpop.f32.mrb[0].mxu0
      %1997 = vmatprep.mubr.f32.mxu0 %v1072
      %1998 = vmatmul.mubr.f32.gmra.mrb[0].mxu0 %v1071
      %v1999 = vpop.f32.mrb[0].mxu0
      %v2000 = vadd.f32 %v1775, %v1999
      %v2001 = vpop.f32.mrb[0].mxu0
      %2002 = vmatprep.mubr.f32.mxu0 %v1081
      %2003 = vmatmul.mubr.f32.gmra.mrb[0].mxu0 %v1080
      %v2004 = vpop.f32.mrb[0].mxu0
      %v2005 = vadd.f32 %v1780, %v2004
      %v2006 = vpop.f32.mrb[0].mxu0
      %2007 = vmatprep.mubr.f32.mxu0 %v1090
      %2008 = vmatmul.mubr.f32.gmra.mrb[0].mxu0 %v1089
      %v2009 = vpop.f32.mrb[0].mxu0
      %v2010 = vadd.f32 %v1785, %v2009
      %v2011 = vpop.f32.mrb[0].mxu0
      %2012 = vmatprep.mubr.f32.mxu0 %v1099
      %2013 = vmatmul.mubr.f32.gmra.mrb[0].mxu0 %v1098
      %v2014 = vpop.f32.mrb[0].mxu0
      %v2015 = vadd.f32 %v1790, %v2014
      %v2016 = vpop.f32.mrb[0].mxu0
      %2017 = vmatprep.mubr.f32.mxu0 %v1108
      %2018 = vmatmul.mubr.f32.gmra.mrb[0].mxu0 %v1107
      %v2019 = vpop.f32.mrb[0].mxu0
      %v2020 = vadd.f32 %v1795, %v2019
      %v2021 = vpop.f32.mrb[0].mxu0
      %2022 = vmatprep.mubr.f32.mxu0 %v1117
      %2023 = vmatmul.mubr.f32.gmra.mrb[0].mxu0 %v1116
      %v2024 = vpop.f32.mrb[0].mxu0
      %v2025 = vadd.f32 %v1800, %v2024
      %v2026 = vpop.f32.mrb[0].mxu0
      %2027 = vmatprep.mubr.f32.mxu0 %v1126
      %2028 = vmatmul.mubr.f32.gmra.mrb[0].mxu0 %v1125
      %v2029 = vpop.f32.mrb[0].mxu0
      %v2030 = vadd.f32 %v1805, %v2029
      %v2031 = vpop.f32.mrb[0].mxu0
      %2032 = vmatprep.mubr.f32.mxu0 %v1135
      %2033 = vmatmul.mubr.f32.gmra.mrb[0].mxu0 %v1134
      %v2034 = vpop.f32.mrb[0].mxu0
      %v2035 = vadd.f32 %v1810, %v2034
      %v2036 = vpop.f32.mrb[0].mxu0
      %2037 = vmatprep.mubr.f32.mxu0 %v1144
      %2038 = vmatmul.mubr.f32.gmra.mrb[0].mxu0 %v1143
      %v2039 = vpop.f32.mrb[0].mxu0
      %v2040 = vadd.f32 %v1815, %v2039
      %v2041 = vpop.f32.mrb[0].mxu0
      %2042 = vmatprep.mubr.f32.mxu0 %v1153
      %2043 = vmatmul.mubr.f32.gmra.mrb[0].mxu0 %v1152
      %v2044 = vpop.f32.mrb[0].mxu0
      %v2045 = vadd.f32 %v1820, %v2044
      %v2046 = vpop.f32.mrb[0].mxu0
      %2047 = vmatprep.mubr.f32.mxu0 %v1162
      %2048 = vmatmul.mubr.f32.gmra.mrb[0].mxu0 %v1161
      %v2049 = vpop.f32.mrb[0].mxu0
      %v2050 = vadd.f32 %v1825, %v2049
      %v2051 = vpop.f32.mrb[0].mxu0
      %2052 = vmatprep.mubr.f32.mxu0 %v1171
      %2053 = vmatmul.mubr.f32.gmra.mrb[0].mxu0 %v1170
      %v2054 = vpop.f32.mrb[0].mxu0
      %v2055 = vadd.f32 %v1830, %v2054
      %v2056 = vpop.f32.mrb[0].mxu0
      %2057 = vmatprep.mubr.f32.mxu0 %v1180
      %2058 = vmatmul.mubr.f32.gmra.mrb[0].mxu0 %v1179
      %v2059 = vpop.f32.mrb[0].mxu0
      %v2060 = vadd.f32 %v1835, %v2059
      %v2061 = vpop.f32.mrb[0].mxu0
      %2062 = vmatprep.mubr.f32.mxu0 %v1189
      %2063 = vmatmul.mubr.f32.gmra.mrb[0].mxu0 %v1188
      %v2064 = vpop.f32.mrb[0].mxu0
      %v2065 = vadd.f32 %v1840, %v2064
      %v2066 = vpop.f32.mrb[0].mxu0
      %2067 = vmatprep.mubr.f32.mxu0 %v1198
      %2068 = vmatmul.mubr.f32.gmra.mrb[0].mxu0 %v1197
      %v2069 = vpop.f32.mrb[0].mxu0
      %v2070 = vadd.f32 %v1845, %v2069
      %v2071 = vpop.f32.mrb[0].mxu0
      %2072 = vmatprep.mubr.f32.mxu0 %v1207
      %2073 = vmatmul.mubr.f32.gmra.mrb[0].mxu0 %v1206
      %v2074 = vpop.f32.mrb[0].mxu0
      %v2075 = vadd.f32 %v1850, %v2074
      %v2076 = vpop.f32.mrb[0].mxu0
      %2077 = vmatprep.mubr.f32.mxu0 %v1216
      %2078 = vmatmul.mubr.f32.gmra.mrb[0].mxu0 %v1215
      %v2079 = vpop.f32.mrb[0].mxu0
      %v2080 = vadd.f32 %v1855, %v2079
      %v2081 = vpop.f32.mrb[0].mxu0
      %2082 = vmatprep.mubr.f32.mxu0 %v1225
      %2083 = vmatmul.mubr.f32.gmra.mrb[0].mxu0 %v1224
      %v2084 = vpop.f32.mrb[0].mxu0
      %v2085 = vadd.f32 %v1860, %v2084
      %v2086 = vpop.f32.mrb[0].mxu0
      %2087 = vmatprep.mubr.f32.mxu0 %v1234
      %2088 = vmatmul.mubr.f32.gmra.mrb[0].mxu0 %v1233
      %v2089 = vpop.f32.mrb[0].mxu0
      %v2090 = vadd.f32 %v1865, %v2089
      %v2091 = vpop.f32.mrb[0].mxu0
      %2092 = vmatprep.mubr.f32.mxu0 %v1243
      %2093 = vmatmul.mubr.f32.gmra.mrb[0].mxu0 %v1242
      %v2094 = vpop.f32.mrb[0].mxu0
      %v2095 = vadd.f32 %v1870, %v2094
      %v2096 = vpop.f32.mrb[0].mxu0
      %2097 = vmatprep.mubr.f32.mxu0 %v1252
      %2098 = vmatmul.mubr.f32.gmra.mrb[0].mxu0 %v1251
      %v2099 = vpop.f32.mrb[0].mxu0
      %v2100 = vadd.f32 %v1875, %v2099
      %v2101 = vpop.f32.mrb[0].mxu0
      %2102 = vmatprep.mubr.f32.mxu0 %v1261
      %2103 = vmatmul.mubr.f32.gmra.mrb[0].mxu0 %v1260
      %v2104 = vpop.f32.mrb[0].mxu0
      %v2105 = vadd.f32 %v1880, %v2104
      %v2106 = vpop.f32.mrb[0].mxu0
      %2107 = vmatprep.mubr.f32.mxu0 %v1270
      %2108 = vmatmul.mubr.f32.gmra.mrb[0].mxu0 %v1269
      %v2109 = vpop.f32.mrb[0].mxu0
      %v2110 = vadd.f32 %v1885, %v2109
      %v2111 = vpop.f32.mrb[0].mxu0
      %2112 = vmatprep.mubr.f32.mxu0 %v1279
      %2113 = vmatmul.mubr.f32.gmra.mrb[0].mxu0 %v1278
      %v2114 = vpop.f32.mrb[0].mxu0
      %v2115 = vadd.f32 %v1890, %v2114
      %v2116 = vpop.f32.mrb[0].mxu0
      %2117 = vmatprep.mubr.f32.mxu0 %v1288
      %2118 = vmatmul.mubr.f32.gmra.mrb[0].mxu0 %v1287
      %v2119 = vpop.f32.mrb[0].mxu0
      %v2120 = vadd.f32 %v1895, %v2119
      %v2121 = vpop.f32.mrb[0].mxu0
      %2122 = vmatprep.mubr.f32.mxu0 %v1297
      %2123 = vmatmul.mubr.f32.gmra.mrb[0].mxu0 %v1296
      %v2124 = vpop.f32.mrb[0].mxu0
      %v2125 = vadd.f32 %v1900, %v2124
      %v2126 = vpop.f32.mrb[0].mxu0
      %2127 = vmatprep.mubr.f32.mxu0 %v1306
      %2128 = vmatmul.mubr.f32.gmra.mrb[0].mxu0 %v1305
      %v2129 = vpop.f32.mrb[0].mxu0
      %v2130 = vadd.f32 %v1905, %v2129
      %v2131 = vpop.f32.mrb[0].mxu0
      %2132 = vmatprep.mubr.f32.mxu0 %v1315
      %2133 = vmatmul.mubr.f32.gmra.mrb[0].mxu0 %v1314
      %v2134 = vpop.f32.mrb[0].mxu0
      %v2135 = vadd.f32 %v1910, %v2134
      %v2136 = vpop.f32.mrb[0].mxu0
      %2137 = vdwg.mxu0
      %2138 = vmatprep.subr.mxu0 0.0
      %2139 = vmatpush1.msra.mxu0 %v1415
      %2140 = vmatprep.subr.mxu0 0.0
      %2141 = vmatpush1.msra.mxu0 %v1416
      %2142 = vmatprep.subr.mxu0 0.0
      %2143 = vmatpush1.msra.mxu0 %v1417
      %2144 = vmatprep.subr.mxu0 0.0
      %2145 = vmatpush1.msra.mxu0 %v1418
      %2146 = vmatprep.subr.mxu0 0.0
      %2147 = vmatpush1.msra.mxu0 %v1419
      %2148 = vmatprep.subr.mxu0 0.0
      %2149 = vmatpush1.msra.mxu0 %v1420
      %2150 = vmatprep.subr.mxu0 0.0
      %2151 = vmatpush1.msra.mxu0 %v1421
      %2152 = vmatprep.subr.mxu0 0.0
      %2153 = vmatpush1.msra.mxu0 %v1422
      %2154 = vmatprep.subr.mxu0 0.0
      %2155 = vmatpush1.msra.mxu0 %v1423
      %2156 = vmatprep.subr.mxu0 0.0
      %2157 = vmatpush1.msra.mxu0 %v1424
      %2158 = vmatprep.subr.mxu0 0.0
      %2159 = vmatpush1.msra.mxu0 %v1425
      %2160 = vmatprep.subr.mxu0 0.0
      %2161 = vmatpush1.msra.mxu0 %v1426
      %2162 = vmatprep.subr.mxu0 0.0
      %2163 = vmatpush1.msra.mxu0 %v1427
      %2164 = vmatprep.subr.mxu0 0.0
      %2165 = vmatpush1.msra.mxu0 %v1428
      %2166 = vmatprep.subr.mxu0 0.0
      %2167 = vmatpush1.msra.mxu0 %v1429
      %2168 = vmatprep.subr.mxu0 0.0
      %2169 = vmatpush1.msra.mxu0 %v1430
      %2170 = vmatprep.subr.mxu0 0.0
      %2171 = vmatpush1.msra.mxu0 %v1431
      %2172 = vmatprep.subr.mxu0 0.0
      %2173 = vmatpush1.msra.mxu0 %v1432
      %2174 = vmatprep.subr.mxu0 0.0
      %2175 = vmatpush1.msra.mxu0 %v1433
      %2176 = vmatprep.subr.mxu0 0.0
      %2177 = vmatpush1.msra.mxu0 %v1434
      %2178 = vmatprep.subr.mxu0 0.0
      %2179 = vmatpush1.msra.mxu0 %v1435
      %2180 = vmatprep.subr.mxu0 0.0
      %2181 = vmatpush1.msra.mxu0 %v1436
      %2182 = vmatprep.subr.mxu0 0.0
      %2183 = vmatpush1.msra.mxu0 %v1437
      %2184 = vmatprep.subr.mxu0 0.0
      %2185 = vmatpush1.msra.mxu0 %v1438
      %2186 = vmatprep.subr.mxu0 0.0
      %2187 = vmatpush1.msra.mxu0 %v1439
      %2188 = vmatprep.subr.mxu0 0.0
      %2189 = vmatpush1.msra.mxu0 %v1440
      %2190 = vmatprep.subr.mxu0 0.0
      %2191 = vmatpush1.msra.mxu0 %v1441
      %2192 = vmatprep.subr.mxu0 0.0
      %2193 = vmatpush1.msra.mxu0 %v1442
      %2194 = vmatprep.subr.mxu0 0.0
      %2195 = vmatpush1.msra.mxu0 %v1443
      %2196 = vmatprep.subr.mxu0 0.0
      %2197 = vmatpush1.msra.mxu0 %v1444
      %2198 = vmatprep.subr.mxu0 0.0
      %2199 = vmatpush1.msra.mxu0 %v1445
      %2200 = vmatprep.subr.mxu0 0.0
      %2201 = vmatpush1.msra.mxu0 %v1446
      %2202 = vmatprep.mubr.f32.mxu0 %v1038
      %2203 = vmatmul.mubr.f32.gmra.mrb[0].mxu0 %v1037
      %v2204 = vpop.f32.mrb[0].mxu0
      %v2205 = vadd.f32 %v1980, %v2204
      %v2206 = vpop.f32.mrb[0].mxu0
      %2207 = vmatprep.mubr.f32.mxu0 %v1047
      %2208 = vmatmul.mubr.f32.gmra.mrb[0].mxu0 %v1046
      %v2209 = vpop.f32.mrb[0].mxu0
      %v2210 = vadd.f32 %v1985, %v2209
      %v2211 = vpop.f32.mrb[0].mxu0
      %2212 = vmatprep.mubr.f32.mxu0 %v1056
      %2213 = vmatmul.mubr.f32.gmra.mrb[0].mxu0 %v1055
      %v2214 = vpop.f32.mrb[0].mxu0
      %v2215 = vadd.f32 %v1990, %v2214
      %v2216 = vpop.f32.mrb[0].mxu0
      %2217 = vmatprep.mubr.f32.mxu0 %v1065
      %2218 = vmatmul.mubr.f32.gmra.mrb[0].mxu0 %v1064
      %v2219 = vpop.f32.mrb[0].mxu0
      %v2220 = vadd.f32 %v1995, %v2219
      %v2221 = vpop.f32.mrb[0].mxu0
      %2222 = vmatprep.mubr.f32.mxu0 %v1074
      %2223 = vmatmul.mubr.f32.gmra.mrb[0].mxu0 %v1073
      %v2224 = vpop.f32.mrb[0].mxu0
      %v2225 = vadd.f32 %v2000, %v2224
      %v2226 = vpop.f32.mrb[0].mxu0
      %2227 = vmatprep.mubr.f32.mxu0 %v1083
      %2228 = vmatmul.mubr.f32.gmra.mrb[0].mxu0 %v1082
      %v2229 = vpop.f32.mrb[0].mxu0
      %v2230 = vadd.f32 %v2005, %v2229
      %v2231 = vpop.f32.mrb[0].mxu0
      %2232 = vmatprep.mubr.f32.mxu0 %v1092
      %2233 = vmatmul.mubr.f32.gmra.mrb[0].mxu0 %v1091
      %v2234 = vpop.f32.mrb[0].mxu0
      %v2235 = vadd.f32 %v2010, %v2234
      %v2236 = vpop.f32.mrb[0].mxu0
      %2237 = vmatprep.mubr.f32.mxu0 %v1101
      %2238 = vmatmul.mubr.f32.gmra.mrb[0].mxu0 %v1100
      %v2239 = vpop.f32.mrb[0].mxu0
      %v2240 = vadd.f32 %v2015, %v2239
      %v2241 = vpop.f32.mrb[0].mxu0
      %2242 = vmatprep.mubr.f32.mxu0 %v1110
      %2243 = vmatmul.mubr.f32.gmra.mrb[0].mxu0 %v1109
      %v2244 = vpop.f32.mrb[0].mxu0
      %v2245 = vadd.f32 %v2020, %v2244
      %v2246 = vpop.f32.mrb[0].mxu0
      %2247 = vmatprep.mubr.f32.mxu0 %v1119
      %2248 = vmatmul.mubr.f32.gmra.mrb[0].mxu0 %v1118
      %v2249 = vpop.f32.mrb[0].mxu0
      %v2250 = vadd.f32 %v2025, %v2249
      %v2251 = vpop.f32.mrb[0].mxu0
      %2252 = vmatprep.mubr.f32.mxu0 %v1128
      %2253 = vmatmul.mubr.f32.gmra.mrb[0].mxu0 %v1127
      %v2254 = vpop.f32.mrb[0].mxu0
      %v2255 = vadd.f32 %v2030, %v2254
      %v2256 = vpop.f32.mrb[0].mxu0
      %2257 = vmatprep.mubr.f32.mxu0 %v1137
      %2258 = vmatmul.mubr.f32.gmra.mrb[0].mxu0 %v1136
      %v2259 = vpop.f32.mrb[0].mxu0
      %v2260 = vadd.f32 %v2035, %v2259
      %v2261 = vpop.f32.mrb[0].mxu0
      %2262 = vmatprep.mubr.f32.mxu0 %v1146
      %2263 = vmatmul.mubr.f32.gmra.mrb[0].mxu0 %v1145
      %v2264 = vpop.f32.mrb[0].mxu0
      %v2265 = vadd.f32 %v2040, %v2264
      %v2266 = vpop.f32.mrb[0].mxu0
      %2267 = vmatprep.mubr.f32.mxu0 %v1155
      %2268 = vmatmul.mubr.f32.gmra.mrb[0].mxu0 %v1154
      %v2269 = vpop.f32.mrb[0].mxu0
      %v2270 = vadd.f32 %v2045, %v2269
      %v2271 = vpop.f32.mrb[0].mxu0
      %2272 = vmatprep.mubr.f32.mxu0 %v1164
      %2273 = vmatmul.mubr.f32.gmra.mrb[0].mxu0 %v1163
      %v2274 = vpop.f32.mrb[0].mxu0
      %v2275 = vadd.f32 %v2050, %v2274
      %v2276 = vpop.f32.mrb[0].mxu0
      %2277 = vmatprep.mubr.f32.mxu0 %v1173
      %2278 = vmatmul.mubr.f32.gmra.mrb[0].mxu0 %v1172
      %v2279 = vpop.f32.mrb[0].mxu0
      %v2280 = vadd.f32 %v2055, %v2279
      %v2281 = vpop.f32.mrb[0].mxu0
      %2282 = vmatprep.mubr.f32.mxu0 %v1182
      %2283 = vmatmul.mubr.f32.gmra.mrb[0].mxu0 %v1181
      %v2284 = vpop.f32.mrb[0].mxu0
      %v2285 = vadd.f32 %v2060, %v2284
      %v2286 = vpop.f32.mrb[0].mxu0
      %2287 = vmatprep.mubr.f32.mxu0 %v1191
      %2288 = vmatmul.mubr.f32.gmra.mrb[0].mxu0 %v1190
      %v2289 = vpop.f32.mrb[0].mxu0
      %v2290 = vadd.f32 %v2065, %v2289
      %v2291 = vpop.f32.mrb[0].mxu0
      %2292 = vmatprep.mubr.f32.mxu0 %v1200
      %2293 = vmatmul.mubr.f32.gmra.mrb[0].mxu0 %v1199
      %v2294 = vpop.f32.mrb[0].mxu0
      %v2295 = vadd.f32 %v2070, %v2294
      %v2296 = vpop.f32.mrb[0].mxu0
      %2297 = vmatprep.mubr.f32.mxu0 %v1209
      %2298 = vmatmul.mubr.f32.gmra.mrb[0].mxu0 %v1208
      %v2299 = vpop.f32.mrb[0].mxu0
      %v2300 = vadd.f32 %v2075, %v2299
      %v2301 = vpop.f32.mrb[0].mxu0
      %2302 = vmatprep.mubr.f32.mxu0 %v1218
      %2303 = vmatmul.mubr.f32.gmra.mrb[0].mxu0 %v1217
      %v2304 = vpop.f32.mrb[0].mxu0
      %v2305 = vadd.f32 %v2080, %v2304
      %v2306 = vpop.f32.mrb[0].mxu0
      %2307 = vmatprep.mubr.f32.mxu0 %v1227
      %2308 = vmatmul.mubr.f32.gmra.mrb[0].mxu0 %v1226
      %v2309 = vpop.f32.mrb[0].mxu0
      %v2310 = vadd.f32 %v2085, %v2309
      %v2311 = vpop.f32.mrb[0].mxu0
      %2312 = vmatprep.mubr.f32.mxu0 %v1236
      %2313 = vmatmul.mubr.f32.gmra.mrb[0].mxu0 %v1235
      %v2314 = vpop.f32.mrb[0].mxu0
      %v2315 = vadd.f32 %v2090, %v2314
      %v2316 = vpop.f32.mrb[0].mxu0
      %2317 = vmatprep.mubr.f32.mxu0 %v1245
      %2318 = vmatmul.mubr.f32.gmra.mrb[0].mxu0 %v1244
      %v2319 = vpop.f32.mrb[0].mxu0
      %v2320 = vadd.f32 %v2095, %v2319
      %v2321 = vpop.f32.mrb[0].mxu0
      %2322 = vmatprep.mubr.f32.mxu0 %v1254
      %2323 = vmatmul.mubr.f32.gmra.mrb[0].mxu0 %v1253
      %v2324 = vpop.f32.mrb[0].mxu0
      %v2325 = vadd.f32 %v2100, %v2324
      %v2326 = vpop.f32.mrb[0].mxu0
      %2327 = vmatprep.mubr.f32.mxu0 %v1263
      %2328 = vmatmul.mubr.f32.gmra.mrb[0].mxu0 %v1262
      %v2329 = vpop.f32.mrb[0].mxu0
      %v2330 = vadd.f32 %v2105, %v2329
      %v2331 = vpop.f32.mrb[0].mxu0
      %2332 = vmatprep.mubr.f32.mxu0 %v1272
      %2333 = vmatmul.mubr.f32.gmra.mrb[0].mxu0 %v1271
      %v2334 = vpop.f32.mrb[0].mxu0
      %v2335 = vadd.f32 %v2110, %v2334
      %v2336 = vpop.f32.mrb[0].mxu0
      %2337 = vmatprep.mubr.f32.mxu0 %v1281
      %2338 = vmatmul.mubr.f32.gmra.mrb[0].mxu0 %v1280
      %v2339 = vpop.f32.mrb[0].mxu0
      %v2340 = vadd.f32 %v2115, %v2339
      %v2341 = vpop.f32.mrb[0].mxu0
      %2342 = vmatprep.mubr.f32.mxu0 %v1290
      %2343 = vmatmul.mubr.f32.gmra.mrb[0].mxu0 %v1289
      %v2344 = vpop.f32.mrb[0].mxu0
      %v2345 = vadd.f32 %v2120, %v2344
      %v2346 = vpop.f32.mrb[0].mxu0
      %2347 = vmatprep.mubr.f32.mxu0 %v1299
      %2348 = vmatmul.mubr.f32.gmra.mrb[0].mxu0 %v1298
      %v2349 = vpop.f32.mrb[0].mxu0
      %v2350 = vadd.f32 %v2125, %v2349
      %v2351 = vpop.f32.mrb[0].mxu0
      %2352 = vmatprep.mubr.f32.mxu0 %v1308
      %2353 = vmatmul.mubr.f32.gmra.mrb[0].mxu0 %v1307
      %v2354 = vpop.f32.mrb[0].mxu0
      %v2355 = vadd.f32 %v2130, %v2354
      %v2356 = vpop.f32.mrb[0].mxu0
      %2357 = vmatprep.mubr.f32.mxu0 %v1317
      %2358 = vmatmul.mubr.f32.gmra.mrb[0].mxu0 %v1316
      %v2359 = vpop.f32.mrb[0].mxu0
      %v2360 = vadd.f32 %v2135, %v2359
      %v2361 = vpop.f32.mrb[0].mxu0
      %2362 = vdwg.mxu0
      %2363 = vmatprep.subr.mxu0 0.0
      %2364 = vmatpush1.msra.mxu0 %v1447
      %2365 = vmatprep.subr.mxu0 0.0
      %2366 = vmatpush1.msra.mxu0 %v1448
      %2367 = vmatprep.subr.mxu0 0.0
      %2368 = vmatpush1.msra.mxu0 %v1449
      %2369 = vmatprep.subr.mxu0 0.0
      %2370 = vmatpush1.msra.mxu0 %v1450
      %2371 = vmatprep.subr.mxu0 0.0
      %2372 = vmatpush1.msra.mxu0 %v1451
      %2373 = vmatprep.subr.mxu0 0.0
      %2374 = vmatpush1.msra.mxu0 %v1452
      %2375 = vmatprep.subr.mxu0 0.0
      %2376 = vmatpush1.msra.mxu0 %v1453
      %2377 = vmatprep.subr.mxu0 0.0
      %2378 = vmatpush1.msra.mxu0 %v1454
      %2379 = vmatprep.subr.mxu0 0.0
      %2380 = vmatpush1.msra.mxu0 %v1455
      %2381 = vmatprep.subr.mxu0 0.0
      %2382 = vmatpush1.msra.mxu0 %v1456
      %2383 = vmatprep.subr.mxu0 0.0
      %2384 = vmatpush1.msra.mxu0 %v1457
      %2385 = vmatprep.subr.mxu0 0.0
      %2386 = vmatpush1.msra.mxu0 %v1458
      %2387 = vmatprep.subr.mxu0 0.0
      %2388 = vmatpush1.msra.mxu0 %v1459
      %2389 = vmatprep.subr.mxu0 0.0
      %2390 = vmatpush1.msra.mxu0 %v1460
      %2391 = vmatprep.subr.mxu0 0.0
      %2392 = vmatpush1.msra.mxu0 %v1461
      %2393 = vmatprep.subr.mxu0 0.0
      %2394 = vmatpush1.msra.mxu0 %v1462
      %2395 = vmatprep.subr.mxu0 0.0
      %2396 = vmatpush1.msra.mxu0 0.0
      %2397 = vmatprep.subr.mxu0 0.0
      %2398 = vmatpush1.msra.mxu0 0.0
      %2399 = vmatprep.subr.mxu0 0.0
      %2400 = vmatpush1.msra.mxu0 0.0
      %2401 = vmatprep.subr.mxu0 0.0
      %2402 = vmatpush1.msra.mxu0 0.0
      %2403 = vmatprep.subr.mxu0 0.0
      %2404 = vmatpush1.msra.mxu0 0.0
      %2405 = vmatprep.subr.mxu0 0.0
      %2406 = vmatpush1.msra.mxu0 0.0
      %2407 = vmatprep.subr.mxu0 0.0
      %2408 = vmatpush1.msra.mxu0 0.0
      %2409 = vmatprep.subr.mxu0 0.0
      %2410 = vmatpush1.msra.mxu0 0.0
      %2411 = vmatprep.subr.mxu0 0.0
      %2412 = vmatpush1.msra.mxu0 0.0
      %2413 = vmatprep.subr.mxu0 0.0
      %2414 = vmatpush1.msra.mxu0 0.0
      %2415 = vmatprep.subr.mxu0 0.0
      %2416 = vmatpush1.msra.mxu0 0.0
      %2417 = vmatprep.subr.mxu0 0.0
      %2418 = vmatpush1.msra.mxu0 0.0
      %2419 = vmatprep.subr.mxu0 0.0
      %2420 = vmatpush1.msra.mxu0 0.0
      %2421 = vmatprep.subr.mxu0 0.0
      %2422 = vmatpush1.msra.mxu0 0.0
      %2423 = vmatprep.subr.mxu0 0.0
      %2424 = vmatpush1.msra.mxu0 0.0
      %2425 = vmatprep.subr.mxu0 0.0
      %2426 = vmatpush1.msra.mxu0 0.0
      %2427 = vmatprep.mubr.f32.mxu0 0.0
      %2428 = vmatmul.mubr.f32.gmra.mrb[0].mxu0 %v1039
      %v2429 = vpop.f32.mrb[0].mxu0
      %v2430 = vadd.f32 %v2205, %v2429
      %v2431 = vpop.f32.mrb[0].mxu0
      %2432 = vmatprep.mubr.f32.mxu0 0.0
      %2433 = vmatmul.mubr.f32.gmra.mrb[0].mxu0 %v1048
      %v2434 = vpop.f32.mrb[0].mxu0
      %v2435 = vadd.f32 %v2210, %v2434
      %v2436 = vpop.f32.mrb[0].mxu0
      %2437 = vmatprep.mubr.f32.mxu0 0.0
      %2438 = vmatmul.mubr.f32.gmra.mrb[0].mxu0 %v1057
      %v2439 = vpop.f32.mrb[0].mxu0
      %v2440 = vadd.f32 %v2215, %v2439
      %v2441 = vpop.f32.mrb[0].mxu0
      %2442 = vmatprep.mubr.f32.mxu0 0.0
      %2443 = vmatmul.mubr.f32.gmra.mrb[0].mxu0 %v1066
      %v2444 = vpop.f32.mrb[0].mxu0
      %v2445 = vadd.f32 %v2220, %v2444
      %v2446 = vpop.f32.mrb[0].mxu0
      %2447 = vmatprep.mubr.f32.mxu0 0.0
      %2448 = vmatmul.mubr.f32.gmra.mrb[0].mxu0 %v1075
      %v2449 = vpop.f32.mrb[0].mxu0
      %v2450 = vadd.f32 %v2225, %v2449
      %v2451 = vpop.f32.mrb[0].mxu0
      %2452 = vmatprep.mubr.f32.mxu0 0.0
      %2453 = vmatmul.mubr.f32.gmra.mrb[0].mxu0 %v1084
      %v2454 = vpop.f32.mrb[0].mxu0
      %v2455 = vadd.f32 %v2230, %v2454
      %v2456 = vpop.f32.mrb[0].mxu0
      %2457 = vmatprep.mubr.f32.mxu0 0.0
      %2458 = vmatmul.mubr.f32.gmra.mrb[0].mxu0 %v1093
      %v2459 = vpop.f32.mrb[0].mxu0
      %v2460 = vadd.f32 %v2235, %v2459
      %v2461 = vpop.f32.mrb[0].mxu0
      %2462 = vmatprep.mubr.f32.mxu0 0.0
      %2463 = vmatmul.mubr.f32.gmra.mrb[0].mxu0 %v1102
      %v2464 = vpop.f32.mrb[0].mxu0
      %v2465 = vadd.f32 %v2240, %v2464
      %v2466 = vpop.f32.mrb[0].mxu0
      %2467 = vmatprep.mubr.f32.mxu0 0.0
      %2468 = vmatmul.mubr.f32.gmra.mrb[0].mxu0 %v1111
      %v2469 = vpop.f32.mrb[0].mxu0
      %v2470 = vadd.f32 %v2245, %v2469
      %v2471 = vpop.f32.mrb[0].mxu0
      %2472 = vmatprep.mubr.f32.mxu0 0.0
      %2473 = vmatmul.mubr.f32.gmra.mrb[0].mxu0 %v1120
      %v2474 = vpop.f32.mrb[0].mxu0
      %v2475 = vadd.f32 %v2250, %v2474
      %v2476 = vpop.f32.mrb[0].mxu0
      %2477 = vmatprep.mubr.f32.mxu0 0.0
      %2478 = vmatmul.mubr.f32.gmra.mrb[0].mxu0 %v1129
      %v2479 = vpop.f32.mrb[0].mxu0
      %v2480 = vadd.f32 %v2255, %v2479
      %v2481 = vpop.f32.mrb[0].mxu0
      %2482 = vmatprep.mubr.f32.mxu0 0.0
      %2483 = vmatmul.mubr.f32.gmra.mrb[0].mxu0 %v1138
      %v2484 = vpop.f32.mrb[0].mxu0
      %v2485 = vadd.f32 %v2260, %v2484
      %v2486 = vpop.f32.mrb[0].mxu0
      %2487 = vmatprep.mubr.f32.mxu0 0.0
      %2488 = vmatmul.mubr.f32.gmra.mrb[0].mxu0 %v1147
      %v2489 = vpop.f32.mrb[0].mxu0
      %v2490 = vadd.f32 %v2265, %v2489
      %v2491 = vpop.f32.mrb[0].mxu0
      %2492 = vmatprep.mubr.f32.mxu0 0.0
      %2493 = vmatmul.mubr.f32.gmra.mrb[0].mxu0 %v1156
      %v2494 = vpop.f32.mrb[0].mxu0
      %v2495 = vadd.f32 %v2270, %v2494
      %v2496 = vpop.f32.mrb[0].mxu0
      %2497 = vmatprep.mubr.f32.mxu0 0.0
      %2498 = vmatmul.mubr.f32.gmra.mrb[0].mxu0 %v1165
      %v2499 = vpop.f32.mrb[0].mxu0
      %v2500 = vadd.f32 %v2275, %v2499
      %v2501 = vpop.f32.mrb[0].mxu0
      %2502 = vmatprep.mubr.f32.mxu0 0.0
      %2503 = vmatmul.mubr.f32.gmra.mrb[0].mxu0 %v1174
      %v2504 = vpop.f32.mrb[0].mxu0
      %v2505 = vadd.f32 %v2280, %v2504
      %v2506 = vpop.f32.mrb[0].mxu0
      %2507 = vmatprep.mubr.f32.mxu0 0.0
      %2508 = vmatmul.mubr.f32.gmra.mrb[0].mxu0 %v1183
      %v2509 = vpop.f32.mrb[0].mxu0
      %v2510 = vadd.f32 %v2285, %v2509
      %v2511 = vpop.f32.mrb[0].mxu0
      %2512 = vmatprep.mubr.f32.mxu0 0.0
      %2513 = vmatmul.mubr.f32.gmra.mrb[0].mxu0 %v1192
      %v2514 = vpop.f32.mrb[0].mxu0
      %v2515 = vadd.f32 %v2290, %v2514
      %v2516 = vpop.f32.mrb[0].mxu0
      %2517 = vmatprep.mubr.f32.mxu0 0.0
      %2518 = vmatmul.mubr.f32.gmra.mrb[0].mxu0 %v1201
      %v2519 = vpop.f32.mrb[0].mxu0
      %v2520 = vadd.f32 %v2295, %v2519
      %v2521 = vpop.f32.mrb[0].mxu0
      %2522 = vmatprep.mubr.f32.mxu0 0.0
      %2523 = vmatmul.mubr.f32.gmra.mrb[0].mxu0 %v1210
      %v2524 = vpop.f32.mrb[0].mxu0
      %v2525 = vadd.f32 %v2300, %v2524
      %v2526 = vpop.f32.mrb[0].mxu0
      %2527 = vmatprep.mubr.f32.mxu0 0.0
      %2528 = vmatmul.mubr.f32.gmra.mrb[0].mxu0 %v1219
      %v2529 = vpop.f32.mrb[0].mxu0
      %v2530 = vadd.f32 %v2305, %v2529
      %v2531 = vpop.f32.mrb[0].mxu0
      %2532 = vmatprep.mubr.f32.mxu0 0.0
      %2533 = vmatmul.mubr.f32.gmra.mrb[0].mxu0 %v1228
      %v2534 = vpop.f32.mrb[0].mxu0
      %v2535 = vadd.f32 %v2310, %v2534
      %v2536 = vpop.f32.mrb[0].mxu0
      %2537 = vmatprep.mubr.f32.mxu0 0.0
      %2538 = vmatmul.mubr.f32.gmra.mrb[0].mxu0 %v1237
      %v2539 = vpop.f32.mrb[0].mxu0
      %v2540 = vadd.f32 %v2315, %v2539
      %v2541 = vpop.f32.mrb[0].mxu0
      %2542 = vmatprep.mubr.f32.mxu0 0.0
      %2543 = vmatmul.mubr.f32.gmra.mrb[0].mxu0 %v1246
      %v2544 = vpop.f32.mrb[0].mxu0
      %v2545 = vadd.f32 %v2320, %v2544
      %v2546 = vpop.f32.mrb[0].mxu0
      %2547 = vmatprep.mubr.f32.mxu0 0.0
      %2548 = vmatmul.mubr.f32.gmra.mrb[0].mxu0 %v1255
      %v2549 = vpop.f32.mrb[0].mxu0
      %v2550 = vadd.f32 %v2325, %v2549
      %v2551 = vpop.f32.mrb[0].mxu0
      %2552 = vmatprep.mubr.f32.mxu0 0.0
      %2553 = vmatmul.mubr.f32.gmra.mrb[0].mxu0 %v1264
      %v2554 = vpop.f32.mrb[0].mxu0
      %v2555 = vadd.f32 %v2330, %v2554
      %v2556 = vpop.f32.mrb[0].mxu0
      %2557 = vmatprep.mubr.f32.mxu0 0.0
      %2558 = vmatmul.mubr.f32.gmra.mrb[0].mxu0 %v1273
      %v2559 = vpop.f32.mrb[0].mxu0
      %v2560 = vadd.f32 %v2335, %v2559
      %v2561 = vpop.f32.mrb[0].mxu0
      %2562 = vmatprep.mubr.f32.mxu0 0.0
      %2563 = vmatmul.mubr.f32.gmra.mrb[0].mxu0 %v1282
      %v2564 = vpop.f32.mrb[0].mxu0
      %v2565 = vadd.f32 %v2340, %v2564
      %v2566 = vpop.f32.mrb[0].mxu0
      %2567 = vmatprep.mubr.f32.mxu0 0.0
      %2568 = vmatmul.mubr.f32.gmra.mrb[0].mxu0 %v1291
      %v2569 = vpop.f32.mrb[0].mxu0
      %v2570 = vadd.f32 %v2345, %v2569
      %v2571 = vpop.f32.mrb[0].mxu0
      %2572 = vmatprep.mubr.f32.mxu0 0.0
      %2573 = vmatmul.mubr.f32.gmra.mrb[0].mxu0 %v1300
      %v2574 = vpop.f32.mrb[0].mxu0
      %v2575 = vadd.f32 %v2350, %v2574
      %v2576 = vpop.f32.mrb[0].mxu0
      %2577 = vmatprep.mubr.f32.mxu0 0.0
      %2578 = vmatmul.mubr.f32.gmra.mrb[0].mxu0 %v1309
      %v2579 = vpop.f32.mrb[0].mxu0
      %v2580 = vadd.f32 %v2355, %v2579
      %v2581 = vpop.f32.mrb[0].mxu0
      %2582 = vmatprep.mubr.f32.mxu0 0.0
      %2583 = vmatmul.mubr.f32.gmra.mrb[0].mxu0 %v1318
      %v2584 = vpop.f32.mrb[0].mxu0
      %v2585 = vadd.f32 %v2360, %v2584
      %v2586 = vpop.f32.mrb[0].mxu0
      %2587 = vdwg.mxu0
      %2588 = vst [vmem:[%s231] sm:$0xff] %v2430
      %2589 = vst [vmem:[%s231 + $0x8] sm:$0xff] %v2435
      %2590 = vst [vmem:[%s231 + $0x10] sm:$0xff] %v2440
      %2591 = vst [vmem:[%s231 + $0x18] sm:$0xff] %v2445
      %2592 = vst [vmem:[%s231 + $0x20] sm:$0xff] %v2450
      %2593 = vst [vmem:[%s231 + $0x28] sm:$0xff] %v2455
      %2594 = vst [vmem:[%s231 + $0x30] sm:$0xff] %v2460
      %2595 = vst [vmem:[%s231 + $0x38] sm:$0xff] %v2465
      %2596 = vst [vmem:[%s231 + $0x40] sm:$0xff] %v2470
      %2597 = vst [vmem:[%s231 + $0x48] sm:$0xff] %v2475
      %2598 = vst [vmem:[%s231 + $0x50] sm:$0xff] %v2480
      %2599 = vst [vmem:[%s231 + $0x58] sm:$0xff] %v2485
      %2600 = vst [vmem:[%s231 + $0x60] sm:$0xff] %v2490
      %2601 = vst [vmem:[%s231 + $0x68] sm:$0xff] %v2495
      %2602 = vst [vmem:[%s231 + $0x70] sm:$0xff] %v2500
      %2603 = vst [vmem:[%s231 + $0x78] sm:$0xff] %v2505
      %2604 = vst [vmem:[%s231 + $0x80] sm:$0xff] %v2510
      %2605 = vst [vmem:[%s231 + $0x88] sm:$0xff] %v2515
      %2606 = vst [vmem:[%s231 + $0x90] sm:$0xff] %v2520
      %2607 = vst [vmem:[%s231 + $0x98] sm:$0xff] %v2525
      %2608 = vst [vmem:[%s231 + $0xa0] sm:$0xff] %v2530
      %2609 = vst [vmem:[%s231 + $0xa8] sm:$0xff] %v2535
      %2610 = vst [vmem:[%s231 + $0xb0] sm:$0xff] %v2540
      %2611 = vst [vmem:[%s231 + $0xb8] sm:$0xff] %v2545
      %2612 = vst [vmem:[%s231 + $0xc0] sm:$0xff] %v2550
      %2613 = vst [vmem:[%s231 + $0xc8] sm:$0xff] %v2555
      %2614 = vst [vmem:[%s231 + $0xd0] sm:$0xff] %v2560
      %2615 = vst [vmem:[%s231 + $0xd8] sm:$0xff] %v2565
      %2616 = vst [vmem:[%s231 + $0xe0] sm:$0xff] %v2570
      %2617 = vst [vmem:[%s231 + $0xe8] sm:$0xff] %v2575
      %2618 = vst [vmem:[%s231 + $0xf0] sm:$0xff] %v2580
      %2619 = vst [vmem:[%s231 + $0xf8] sm:$0xff] %v2585
      %v2620 = vadd.f32 %v2430, %v2435
      %v2621 = vadd.f32 %v2620, %v2440
      %v2622 = vadd.f32 %v2621, %v2445
      %v2623 = vadd.f32 %v2622, %v2450
      %v2624 = vadd.f32 %v2623, %v2455
      %v2625 = vadd.f32 %v2624, %v2460
      %v2626 = vadd.f32 %v2625, %v2465
      %v2627 = vadd.f32 %v2626, %v2470
      %v2628 = vadd.f32 %v2627, %v2475
      %v2629 = vadd.f32 %v2628, %v2480
      %v2630 = vadd.f32 %v2629, %v2485
      %v2631 = vadd.f32 %v2630, %v2490
      %v2632 = vadd.f32 %v2631, %v2495
      %v2633 = vadd.f32 %v2632, %v2500
      %v2634 = vadd.f32 %v2633, %v2505
      %v2635 = vadd.f32 %v2634, %v2510
      %v2636 = vadd.f32 %v2635, %v2515
      %v2637 = vadd.f32 %v2636, %v2520
      %v2638 = vadd.f32 %v2637, %v2525
      %v2639 = vadd.f32 %v2638, %v2530
      %v2640 = vadd.f32 %v2639, %v2535
      %v2641 = vadd.f32 %v2640, %v2540
      %v2642 = vadd.f32 %v2641, %v2545
      %v2643 = vadd.f32 %v2642, %v2550
      %v2644 = vadd.f32 %v2643, %v2555
      %v2645 = vadd.f32 %v2644, %v2560
      %v2646 = vadd.f32 %v2645, %v2565
      %v2647 = vadd.f32 %v2646, %v2570
      %v2648 = vadd.f32 %v2647, %v2575
      %v2649 = vadd.f32 %v2648, %v2580
      %v2650 = vadd.f32 %v2649, %v2585
      %v2651 = vrot.slane %v2650, 4
      %v2652 = vadd.f32 %v2650, %v2651
      %v2653 = vrot.slane %v2652, 2
      %v2654 = vadd.f32 %v2652, %v2653
      %v2655 = vrot.slane %v2654, 1
      %v2656 = vadd.f32 %v2654, %v2655
      %2657 = vst [vmem:[%s235] sm:$0x1] %v2656
      %v2658 = vmul.f32 %v2430, %v2430
      %v2659 = vmul.f32 %v2435, %v2435
      %v2660 = vmul.f32 %v2440, %v2440
      %v2661 = vmul.f32 %v2445, %v2445
      %v2662 = vmul.f32 %v2450, %v2450
      %v2663 = vmul.f32 %v2455, %v2455
      %v2664 = vmul.f32 %v2460, %v2460
      %v2665 = vmul.f32 %v2465, %v2465
      %v2666 = vmul.f32 %v2470, %v2470
      %v2667 = vmul.f32 %v2475, %v2475
      %v2668 = vmul.f32 %v2480, %v2480
      %v2669 = vmul.f32 %v2485, %v2485
      %v2670 = vmul.f32 %v2490, %v2490
      %v2671 = vmul.f32 %v2495, %v2495
      %v2672 = vmul.f32 %v2500, %v2500
      %v2673 = vmul.f32 %v2505, %v2505
      %v2674 = vmul.f32 %v2510, %v2510
      %v2675 = vmul.f32 %v2515, %v2515
      %v2676 = vmul.f32 %v2520, %v2520
      %v2677 = vmul.f32 %v2525, %v2525
      %v2678 = vmul.f32 %v2530, %v2530
      %v2679 = vmul.f32 %v2535, %v2535
      %v2680 = vmul.f32 %v2540, %v2540
      %v2681 = vmul.f32 %v2545, %v2545
      %v2682 = vmul.f32 %v2550, %v2550
      %v2683 = vmul.f32 %v2555, %v2555
      %v2684 = vmul.f32 %v2560, %v2560
      %v2685 = vmul.f32 %v2565, %v2565
      %v2686 = vmul.f32 %v2570, %v2570
      %v2687 = vmul.f32 %v2575, %v2575
      %v2688 = vmul.f32 %v2580, %v2580
      %v2689 = vmul.f32 %v2585, %v2585
      %v2690 = vadd.f32 %v2658, %v2659
      %v2691 = vadd.f32 %v2690, %v2660
      %v2692 = vadd.f32 %v2691, %v2661
      %v2693 = vadd.f32 %v2692, %v2662
      %v2694 = vadd.f32 %v2693, %v2663
      %v2695 = vadd.f32 %v2694, %v2664
      %v2696 = vadd.f32 %v2695, %v2665
      %v2697 = vadd.f32 %v2696, %v2666
      %v2698 = vadd.f32 %v2697, %v2667
      %v2699 = vadd.f32 %v2698, %v2668
      %v2700 = vadd.f32 %v2699, %v2669
      %v2701 = vadd.f32 %v2700, %v2670
      %v2702 = vadd.f32 %v2701, %v2671
      %v2703 = vadd.f32 %v2702, %v2672
      %v2704 = vadd.f32 %v2703, %v2673
      %v2705 = vadd.f32 %v2704, %v2674
      %v2706 = vadd.f32 %v2705, %v2675
      %v2707 = vadd.f32 %v2706, %v2676
      %v2708 = vadd.f32 %v2707, %v2677
      %v2709 = vadd.f32 %v2708, %v2678
      %v2710 = vadd.f32 %v2709, %v2679
      %v2711 = vadd.f32 %v2710, %v2680
      %v2712 = vadd.f32 %v2711, %v2681
      %v2713 = vadd.f32 %v2712, %v2682
      %v2714 = vadd.f32 %v2713, %v2683
      %v2715 = vadd.f32 %v2714, %v2684
      %v2716 = vadd.f32 %v2715, %v2685
      %v2717 = vadd.f32 %v2716, %v2686
      %v2718 = vadd.f32 %v2717, %v2687
      %v2719 = vadd.f32 %v2718, %v2688
      %v2720 = vadd.f32 %v2719, %v2689
      %v2721 = vrot.slane %v2720, 4
      %v2722 = vadd.f32 %v2720, %v2721
      %v2723 = vrot.slane %v2722, 2
      %v2724 = vadd.f32 %v2722, %v2723
      %v2725 = vrot.slane %v2724, 1
      %v2726 = vadd.f32 %v2724, %v2725
      %2727 = vst [vmem:[%s235 + $0x1] sm:$0x1] %v2726
      %p2728 = scmp.lt.s32.totalorder %s17, 1
      %s2729 = scalar_select %p2728, %s17, 1
      %s2730 = smul.addr %s2729, 32
      %s2731 = smul.addr %s2730, 8
      %s2732 = scalar_lea.vmem %s4, %s2731
      %p2733 = scmp.lt.s32.totalorder %s17, 1
      %s2734 = scalar_select %p2733, %s17, 1
      %s2735 = smul.addr %s2734, 2
      %s2736 = scalar_lea.vmem %s5, %s2735
      // Predicated region
      $region37: #{double_conv_forward.4} parent=35 // pred_check
        %p2737 = pneg %p124
      $region38: #{double_conv_forward.4} parent=35 // pred_check_branch
        %2739 = sbr.rel (%p2737) target = $region40
      $region39: #{double_conv_forward.4} parent=35 // pred_region
        _
      $region40: #{double_conv_forward.4} parent=35 // pred_fallthru
        _
      // Predicated region
      $region41: #{double_conv_forward.4} parent=35 // pred_check
        %p2740 = pneg %p150
      $region42: #{double_conv_forward.4} parent=35 // pred_check_branch
        %2742 = sbr.rel (%p2740) target = $region44
      $region43: #{double_conv_forward.4} parent=35 // pred_region
        _
      $region44: #{double_conv_forward.4} parent=35 // pred_fallthru
        _
    $region36: #{double_conv_forward.4} parent=5 // pred_fallthru
      _
    %p2743 = scmp.le.s32.totalorder 2, %s12
    // Predicated region
    $region45: #{double_conv_forward.4} parent=5 // pred_check
      %p2744 = pneg %p2743
    $region46: #{double_conv_forward.4} parent=5 // pred_check_branch
      %2746 = sbr.rel (%p2744) target = $region48
    $region47: #{double_conv_forward.4} parent=5 // pred_region
      %s2747 = ssub.s32 %s12, 2
      // Predicated region
      $region49: #{double_conv_forward.4} parent=47 // pred_check
        %p2748 = pneg %p130
      $region50: #{double_conv_forward.4} parent=47 // pred_check_branch
        %2750 = sbr.rel (%p2748) target = $region52
      $region51: #{double_conv_forward.4} parent=47 // pred_region
        %p2751 = scmp.lt.s32.totalorder %s18, 1
        %s2752 = scalar_select %p2751, %s18, 1
        %s2753 = smul.addr %s2752, 32
        %s2754 = smul.addr %s2753, 8
        %s2755 = scalar_lea.vmem %s4, %s2754
      $region52: #{double_conv_forward.4} parent=47 // pred_fallthru
        _
      // Predicated region
      $region53: #{double_conv_forward.4} parent=47 // pred_check
        %p2756 = pneg %p156
      $region54: #{double_conv_forward.4} parent=47 // pred_check_branch
        %2758 = sbr.rel (%p2756) target = $region56
      $region55: #{double_conv_forward.4} parent=47 // pred_region
        %p2759 = scmp.lt.s32.totalorder %s18, 1
        %s2760 = scalar_select %p2759, %s18, 1
        %s2761 = smul.addr %s2760, 2
        %s2762 = scalar_lea.vmem %s5, %s2761
      $region56: #{double_conv_forward.4} parent=47 // pred_fallthru
        _
    $region48: #{double_conv_forward.4} parent=5 // pred_fallthru
      _
  $region6: #{double_conv_forward.4} parent=0 // loop_footer
    %s16 = sadd.s32 1, %s12
  $region7: #{double_conv_forward.4} parent=0 // loop_footer_branch
    %11 = sbr.rel target = $region3
  $region8: #{double_conv_forward.4} parent=0 // loop_exit
    _

</llo_original>
